<compile_context>
chip_gen: v6e
topology: v6e:2x2x1
jax: 0.10.0
libtpu: 0.0.40
codegen_flags: <defaults>
</compile_context>

<pallas_src>
import functools

import jax
import jax.numpy as jnp
from jax.experimental import pallas as pl
from jax.experimental.pallas import tpu as pltpu

BN_EPS = 1e-5


# ------------------------------ fused kernel ------------------------------- #

def _fused_cnn_kernel(*refs, block_dims, fc_dims, eps):
    """Entire CNNModel forward in one kernel; all intermediates stay in VMEM.

    Ref order:
      inputs : x_nhwc, [w_taps, bias, gamma, beta] * nblk, wf1, bf1, wf2, bf2
      outputs: out (N, num_classes)
      scratch: [pad_i, act_i] * nblk, feat
    """
    nblk = len(block_dims)
    x_ref = refs[0]
    conv_refs = refs[1:1 + 4 * nblk]
    wf1_ref, bf1_ref, wf2_ref, bf2_ref = refs[1 + 4 * nblk:5 + 4 * nblk]
    o_ref = refs[5 + 4 * nblk]
    scratch = refs[6 + 4 * nblk:]
    feat_ref = scratch[2 * nblk]

    N = x_ref.shape[0]
    src = x_ref[...]                                        # (N, H, W, Cin), NHWC f32

    for i, (H, W, Cin, Cout, KH, KW, Ho, Wo, p) in enumerate(block_dims):
        w_ref, b_ref, g_ref, be_ref = conv_refs[4 * i:4 * i + 4]
        pad_ref = scratch[2 * i]
        act_ref = scratch[2 * i + 1]
        R = N * Ho * Wo

        # ---- Conv2d(KxK, padding=1): zero-pad into VMEM scratch, then accumulate one
        #      small MXU matmul per filter tap (in-kernel im2col; input read once). ----
        pad_ref[...] = jnp.zeros_like(pad_ref)
        pad_ref[:, 1:H + 1, 1:W + 1, :] = src
        acc = jnp.zeros((R, Cout), jnp.float32)
        for t in range(KH * KW):
            dy, dx = divmod(t, KW)
            patch = pad_ref[:, dy:dy + Ho, dx:dx + Wo, :]   # (N, Ho, Wo, Cin)
            acc = acc + jnp.dot(patch.reshape(R, Cin), w_ref[t],
                                preferred_element_type=jnp.float32)
        acc = acc + b_ref[...]          # conv bias (cancels in train-mode BN, kept for parity)

        # ---- BatchNorm2d, training-mode (biased) batch statistics over the N*Ho*Wo
        #      rows, single traversal: var = E[y^2] - E[y]^2. ----
        inv_r = 1.0 / float(R)
        mu = jnp.sum(acc, axis=0, keepdims=True) * inv_r
        var = jnp.sum(acc * acc, axis=0, keepdims=True) * inv_r - mu * mu
        y = (acc - mu) * jax.lax.rsqrt(var + eps) * g_ref[...] + be_ref[...]
        # TODO(synk): running_mean / running_var buffer updates (training side effects)
        #             are not modeled.

        # ---- ReLU ----
        y = jnp.maximum(y, 0.0)

        # ---- MaxPool2d(p): strided reads along W (sublane dim), then split-major
        #      reshape + max along H.  Stays entirely in VMEM. ----
        act_ref[...] = y.reshape(N, Ho, Wo, Cout)
        Hp, Wp = Ho // p, Wo // p
        wmax = act_ref[:, :, pl.ds(0, Wp, stride=p), :]
        for j in range(1, p):
            wmax = jnp.maximum(wmax, act_ref[:, :, pl.ds(j, Wp, stride=p), :])
        src = jnp.max(wmax.reshape(N, Hp, p, Wp, Cout), axis=2)   # (N, Hp, Wp, Cout)

    # ---- Flatten -> Linear -> ReLU -> Linear.  torch's NCHW flatten order is already
    #      folded into wf1's (Hf, Wf, Cf, U) layout, so no transpose / relayout here. ----
    _, Hf, Wf, Cf, U, ncls = fc_dims
    feat_ref[...] = src
    h = jnp.zeros((N, U), jnp.float32)
    for hh in range(Hf):
        for ww in range(Wf):
            h = h + jnp.dot(feat_ref[:, hh, ww, :], wf1_ref[hh, ww],
                            preferred_element_type=jnp.float32)
    h = jnp.maximum(h + bf1_ref[...], 0.0)
    o_ref[...] = (jnp.dot(h, wf2_ref[...], preferred_element_type=jnp.float32)
                  + bf2_ref[...])


# ------------------------------ host wrapper -------------------------------- #

def cnn_forward(x_nchw, kparams, *, filter_size, pool_size):
    """Forward pass matching torch CNNModel.forward (train-mode BatchNorm)."""
    N, C0, H0, W0 = x_nchw.shape
    conv_p = kparams["conv"]
    wf1, bf1, wf2, bf2 = kparams["fc"]

    # Static per-block geometry (padding=1, stride=1 convs, then p x p max-pool).
    block_dims = []
    H, W, Cin = H0, W0, C0
    for (w_taps, _b, _g, _be) in conv_p:
        K2, wc_in, Cout = w_taps.shape
        KH = KW = filter_size
        assert wc_in == Cin and K2 == KH * KW
        Ho, Wo = H + 2 - KH + 1, W + 2 - KW + 1
        assert Ho % pool_size == 0 and Wo % pool_size == 0, (
            "MaxPool with non-divisible spatial dims (torch floors) not supported")
        block_dims.append((H, W, Cin, Cout, KH, KW, Ho, Wo, pool_size))
        H, W, Cin = Ho // pool_size, Wo // pool_size, Cout
    Hf, Wf, Cf = H, W, Cin
    U = wf1.shape[-1]
    ncls = wf2.shape[-1]
    assert wf1.shape == (Hf, Wf, Cf, U)
    fc_dims = (N, Hf, Wf, Cf, U, ncls)

    # NCHW -> NHWC once on the host side; everything else happens inside the kernel.
    x_nhwc = jnp.transpose(x_nchw, (0, 2, 3, 1))

    # Flat input list in the order the kernel unpacks it.
    inputs = [x_nhwc]
    for (w_taps, b, g, be) in conv_p:
        inputs += [w_taps, b, g, be]
    inputs += [wf1, bf1, wf2, bf2]

    def full_spec(a):
        nd = a.ndim
        return pl.BlockSpec(a.shape, lambda i, _z=(0,) * nd: _z)

    scratch_shapes = []
    for (Hb, Wb, Cib, Cob, KH, KW, Ho, Wo, _p) in block_dims:
        scratch_shapes.append(pltpu.VMEM((N, Hb + 2, Wb + 2, Cib), jnp.float32))
        scratch_shapes.append(pltpu.VMEM((N, Ho, Wo, Cob), jnp.float32))
    scratch_shapes.append(pltpu.VMEM((N, Hf, Wf, Cf), jnp.float32))

    # Advisory cost estimate (scheduling hygiene).
    flops = 0
    for (Hb, Wb, Cib, Cob, KH, KW, Ho, Wo, _p) in block_dims:
        flops += 2 * N * Ho * Wo * KH * KW * Cib * Cob
    flops += 2 * N * Hf * Wf * Cf * U + 2 * N * U * ncls
    bytes_accessed = sum(int(a.size) * 4 for a in inputs) + N * ncls * 4
    transcendentals = sum(bd[3] for bd in block_dims)       # one rsqrt per channel

    kernel = functools.partial(_fused_cnn_kernel,
                               block_dims=tuple(block_dims),
                               fc_dims=fc_dims, eps=BN_EPS)

    return pl.pallas_call(
        kernel,
        out_shape=jax.ShapeDtypeStruct((N, ncls), jnp.float32),
        grid=(1,),
        in_specs=[full_spec(a) for a in inputs],
        out_specs=pl.BlockSpec((N, ncls), lambda i: (0, 0)),
        scratch_shapes=scratch_shapes,
        compiler_params=pltpu.CompilerParams(
            dimension_semantics=("arbitrary",)),
        cost_estimate=pl.CostEstimate(flops=int(flops),
                                      transcendentals=int(transcendentals),
                                      bytes_accessed=int(bytes_accessed)),
    )(*inputs)


# --------------------------- deterministic init ----------------------------- #

def init_params(key, in_channels, conv_filters, filter_size, dense_units,
                num_classes, flatten_size):
    """Canonical (torch-equivalent) parameter shapes, deterministic."""
    params = {"conv": [], "fc": None}
    cin = in_channels
    for cout in conv_filters:
        key, k1, k2, k3, k4 = jax.random.split(key, 5)
        fan_in = cin * filter_size * filter_size
        w = jax.random.normal(k1, (filter_size, filter_size, cin, cout),
                              jnp.float32) / jnp.sqrt(float(fan_in))
        b = 0.1 * jax.random.normal(k2, (cout,), jnp.float32)
        gamma = 1.0 + 0.1 * jax.random.normal(k3, (cout,), jnp.float32)
        beta = 0.1 * jax.random.normal(k4, (cout,), jnp.float32)
        params["conv"].append((w, b, gamma, beta))
        cin = cout
    key, k1, k2, k3, k4 = jax.random.split(key, 5)
    # w1 rows follow torch.nn.Flatten's NCHW order: index = c*Hf*Wf + h*Wf + w.
    w1 = jax.random.normal(k1, (flatten_size, dense_units),
                           jnp.float32) / jnp.sqrt(float(flatten_size))
    b1 = 0.1 * jax.random.normal(k2, (dense_units,), jnp.float32)
    w2 = jax.random.normal(k3, (dense_units, num_classes),
                           jnp.float32) / jnp.sqrt(float(dense_units))
    b2 = 0.1 * jax.random.normal(k4, (num_classes,), jnp.float32)
    params["fc"] = (w1, b1, w2, b2)
    return params


def pack_params(params, input_shape, filter_size, pool_size):
    """One-time host-side repack into the layouts the fused kernel consumes.

    Conv weights -> (KH*KW, Cin, Cout) tap matrices; bias/gamma/beta -> (1, C);
    fc1 weight  -> (Hf, Wf, Cf, U), i.e. torch's NCHW flatten order folded in so the
    kernel never transposes / flattens activations at runtime.
    """
    C, H, W = input_shape
    packed_conv = []
    cin = C
    for (w, b, g, be) in params["conv"]:
        KH, KW, _wc_in, cout = w.shape
        packed_conv.append((w.reshape(KH * KW, w.shape[2], cout),
                            b.reshape(1, cout), g.reshape(1, cout),
                            be.reshape(1, cout)))
        Ho, Wo = H + 2 - KH + 1, W + 2 - KW + 1
        H, W, cin = Ho // pool_size, Wo // pool_size, cout
    w1, b1, w2, b2 = params["fc"]
    Hf, Wf, Cf = H, W, cin
    U = w1.shape[1]
    ncls = w2.shape[1]
    # (Cf*Hf*Wf, U) with NCHW flatten order  ->  (Hf, Wf, Cf, U)
    wf1 = w1.reshape(Cf, Hf, Wf, U).transpose(1, 2, 0, 3)
    return {"conv": packed_conv,
            "fc": (wf1, b1.reshape(1, U), w2, b2.reshape(1, ncls))}


# --------------------------------- main ------------------------------------ #

if __name__ == "__main__":
    key = jax.random.PRNGKey(0)

    # module hyper-parameters (small, consistent with the torch module)
    input_shape = (4, 16, 16)       # (C, H, W)
    num_classes = 10
    conv_filters = (8, 16)
    filter_size = 3                 # padding=1 keeps H, W
    pool_size = 2
    dense_units = 32
    batch = 2

    C, H, W = input_shape
    h, w = H, W
    for _ in conv_filters:
        ho, wo = h + 2 - filter_size + 1, w + 2 - filter_size + 1
        h, w = ho // pool_size, wo // pool_size
    flatten_size = conv_filters[-1] * h * w   # mirrors _initialize_flatten_size -> 256

    key, kx, kp = jax.random.split(key, 3)
    x = jax.random.normal(kx, (batch, C, H, W), jnp.float32)
    params = init_params(kp, C, conv_filters, filter_size, dense_units,
                         num_classes, flatten_size)
    kparams = pack_params(params, input_shape, filter_size, pool_size)

    fwd = jax.jit(functools.partial(cnn_forward, filter_size=filter_size,
                                    pool_size=pool_size))
    out = fwd(x, kparams)
    jax.block_until_ready(out)
    assert out.shape == (batch, num_classes), out.shape
    print("KERNEL_OK")
</pallas_src>

<mosaic_0001>
module attributes {stable_mosaic.version = 11 : i64} {
  func.func @_fused_cnn_kernel(%arg0: i32, %arg1: memref<2x16x16x4xf32, #tpu.memory_space<vmem>>, %arg2: memref<9x4x8xf32, #tpu.memory_space<vmem>>, %arg3: memref<1x8xf32, #tpu.memory_space<vmem>>, %arg4: memref<1x8xf32, #tpu.memory_space<vmem>>, %arg5: memref<1x8xf32, #tpu.memory_space<vmem>>, %arg6: memref<9x8x16xf32, #tpu.memory_space<vmem>>, %arg7: memref<1x16xf32, #tpu.memory_space<vmem>>, %arg8: memref<1x16xf32, #tpu.memory_space<vmem>>, %arg9: memref<1x16xf32, #tpu.memory_space<vmem>>, %arg10: memref<4x4x16x32xf32, #tpu.memory_space<vmem>>, %arg11: memref<1x32xf32, #tpu.memory_space<vmem>>, %arg12: memref<32x10xf32, #tpu.memory_space<vmem>>, %arg13: memref<1x10xf32, #tpu.memory_space<vmem>>, %arg14: memref<2x10xf32, #tpu.memory_space<vmem>>, %arg15: memref<2x18x18x4xf32, #tpu.memory_space<vmem>>, %arg16: memref<2x16x16x8xf32, #tpu.memory_space<vmem>>, %arg17: memref<2x10x10x8xf32, #tpu.memory_space<vmem>>, %arg18: memref<2x8x8x16xf32, #tpu.memory_space<vmem>>, %arg19: memref<2x4x4x16xf32, #tpu.memory_space<vmem>>) attributes {dimension_semantics = [#tpu.dimension_semantics<arbitrary>], iteration_bounds = array<i64: 1>, scalar_prefetch = 0 : i64, scratch_operands = 5 : i64, tpu.core_type = #tpu.core_type<tc>, window_params = [{pipeline_mode = #tpu.pipeline_mode<synchronous>, transform_indices = @transform_0, window_bounds = array<i64: 2, 16, 16, 4>}, {pipeline_mode = #tpu.pipeline_mode<synchronous>, transform_indices = @transform_1, window_bounds = array<i64: 9, 4, 8>}, {pipeline_mode = #tpu.pipeline_mode<synchronous>, transform_indices = @transform_2, window_bounds = array<i64: 1, 8>}, {pipeline_mode = #tpu.pipeline_mode<synchronous>, transform_indices = @transform_3, window_bounds = array<i64: 1, 8>}, {pipeline_mode = #tpu.pipeline_mode<synchronous>, transform_indices = @transform_4, window_bounds = array<i64: 1, 8>}, {pipeline_mode = #tpu.pipeline_mode<synchronous>, transform_indices = @transform_5, window_bounds = array<i64: 9, 8, 16>}, {pipeline_mode = #tpu.pipeline_mode<synchronous>, transform_indices = @transform_6, window_bounds = array<i64: 1, 16>}, {pipeline_mode = #tpu.pipeline_mode<synchronous>, transform_indices = @transform_7, window_bounds = array<i64: 1, 16>}, {pipeline_mode = #tpu.pipeline_mode<synchronous>, transform_indices = @transform_8, window_bounds = array<i64: 1, 16>}, {pipeline_mode = #tpu.pipeline_mode<synchronous>, transform_indices = @transform_9, window_bounds = array<i64: 4, 4, 16, 32>}, {pipeline_mode = #tpu.pipeline_mode<synchronous>, transform_indices = @transform_10, window_bounds = array<i64: 1, 32>}, {pipeline_mode = #tpu.pipeline_mode<synchronous>, transform_indices = @transform_11, window_bounds = array<i64: 32, 10>}, {pipeline_mode = #tpu.pipeline_mode<synchronous>, transform_indices = @transform_12, window_bounds = array<i64: 1, 10>}, {pipeline_mode = #tpu.pipeline_mode<synchronous>, transform_indices = @transform_13, window_bounds = array<i64: 2, 10>}]} {
    %c0 = arith.constant 0 : index
    %c0_0 = arith.constant 0 : index
    %c0_1 = arith.constant 0 : index
    %c0_2 = arith.constant 0 : index
    %0 = vector.load %arg1[%c0, %c0_0, %c0_1, %c0_2] : memref<2x16x16x4xf32, #tpu.memory_space<vmem>>, vector<2x16x16x4xf32>
    %cst = arith.constant 0.000000e+00 : f32
    %1 = vector.broadcast %cst : f32 to vector<2x18x18x4xf32>
    %c0_3 = arith.constant 0 : index
    %c0_4 = arith.constant 0 : index
    %c0_5 = arith.constant 0 : index
    %c0_6 = arith.constant 0 : index
    %2 = vector.load %arg15[%c0_3, %c0_4, %c0_5, %c0_6] : memref<2x18x18x4xf32, #tpu.memory_space<vmem>>, vector<2x18x18x4xf32>
    tpu.vector_store %arg15[%c0_3, %c0_4, %c0_5, %c0_6], %1 {strides = array<i32>} : memref<2x18x18x4xf32, #tpu.memory_space<vmem>>, vector<2x18x18x4xf32>,
    %c0_7 = arith.constant 0 : index
    %c1 = arith.constant 1 : index
    %c1_8 = arith.constant 1 : index
    %c0_9 = arith.constant 0 : index
    %3 = vector.load %arg15[%c0_7, %c1, %c1_8, %c0_9] : memref<2x18x18x4xf32, #tpu.memory_space<vmem>>, vector<2x16x16x4xf32>
    tpu.vector_store %arg15[%c0_7, %c1, %c1_8, %c0_9], %0 {strides = array<i32>} : memref<2x18x18x4xf32, #tpu.memory_space<vmem>>, vector<2x16x16x4xf32>,
    %cst_10 = arith.constant 0.000000e+00 : f32
    %4 = vector.broadcast %cst_10 : f32 to vector<512x8xf32>
    %c0_11 = arith.constant 0 : index
    %c0_12 = arith.constant 0 : index
    %c0_13 = arith.constant 0 : index
    %c0_14 = arith.constant 0 : index
    %5 = vector.load %arg15[%c0_11, %c0_12, %c0_13, %c0_14] : memref<2x18x18x4xf32, #tpu.memory_space<vmem>>, vector<2x16x16x4xf32>
    %6 = vector.shape_cast %5 : vector<2x16x16x4xf32> to vector<512x4xf32>
    %c0_15 = arith.constant 0 : index
    %c0_16 = arith.constant 0 : index
    %c0_17 = arith.constant 0 : index
    %7 = vector.load %arg2[%c0_15, %c0_16, %c0_17] : memref<9x4x8xf32, #tpu.memory_space<vmem>>, vector<1x4x8xf32>
    %8 = vector.shape_cast %7 : vector<1x4x8xf32> to vector<4x8xf32>
    %cst_18 = arith.constant dense<0.000000e+00> : vector<512x8xf32>
    %9 = tpu.matmul %6, %8, %cst_18 {dimension_numbers = #tpu.dot_dimension_numbers<[1], [0], [0], [1], [0, 0, 1, 1], [], []>} : vector<512x4xf32>, vector<4x8xf32>, vector<512x8xf32> -> vector<512x8xf32>
    %10 = arith.addf %4, %9 : vector<512x8xf32>
    %c0_19 = arith.constant 0 : index
    %c0_20 = arith.constant 0 : index
    %c1_21 = arith.constant 1 : index
    %c0_22 = arith.constant 0 : index
    %11 = vector.load %arg15[%c0_19, %c0_20, %c1_21, %c0_22] : memref<2x18x18x4xf32, #tpu.memory_space<vmem>>, vector<2x16x16x4xf32>
    %12 = vector.shape_cast %11 : vector<2x16x16x4xf32> to vector<512x4xf32>
    %c1_23 = arith.constant 1 : index
    %c0_24 = arith.constant 0 : index
    %c0_25 = arith.constant 0 : index
    %13 = vector.load %arg2[%c1_23, %c0_24, %c0_25] : memref<9x4x8xf32, #tpu.memory_space<vmem>>, vector<1x4x8xf32>
    %14 = vector.shape_cast %13 : vector<1x4x8xf32> to vector<4x8xf32>
    %cst_26 = arith.constant dense<0.000000e+00> : vector<512x8xf32>
    %15 = tpu.matmul %12, %14, %cst_26 {dimension_numbers = #tpu.dot_dimension_numbers<[1], [0], [0], [1], [0, 0, 1, 1], [], []>} : vector<512x4xf32>, vector<4x8xf32>, vector<512x8xf32> -> vector<512x8xf32>
    %16 = arith.addf %10, %15 : vector<512x8xf32>
    %c0_27 = arith.constant 0 : index
    %c0_28 = arith.constant 0 : index
    %c2 = arith.constant 2 : index
    %c0_29 = arith.constant 0 : index
    %17 = vector.load %arg15[%c0_27, %c0_28, %c2, %c0_29] : memref<2x18x18x4xf32, #tpu.memory_space<vmem>>, vector<2x16x16x4xf32>
    %18 = vector.shape_cast %17 : vector<2x16x16x4xf32> to vector<512x4xf32>
    %c2_30 = arith.constant 2 : index
    %c0_31 = arith.constant 0 : index
    %c0_32 = arith.constant 0 : index
    %19 = vector.load %arg2[%c2_30, %c0_31, %c0_32] : memref<9x4x8xf32, #tpu.memory_space<vmem>>, vector<1x4x8xf32>
    %20 = vector.shape_cast %19 : vector<1x4x8xf32> to vector<4x8xf32>
    %cst_33 = arith.constant dense<0.000000e+00> : vector<512x8xf32>
    %21 = tpu.matmul %18, %20, %cst_33 {dimension_numbers = #tpu.dot_dimension_numbers<[1], [0], [0], [1], [0, 0, 1, 1], [], []>} : vector<512x4xf32>, vector<4x8xf32>, vector<512x8xf32> -> vector<512x8xf32>
    %22 = arith.addf %16, %21 : vector<512x8xf32>
    %c0_34 = arith.constant 0 : index
    %c1_35 = arith.constant 1 : index
    %c0_36 = arith.constant 0 : index
    %c0_37 = arith.constant 0 : index
    %23 = vector.load %arg15[%c0_34, %c1_35, %c0_36, %c0_37] : memref<2x18x18x4xf32, #tpu.memory_space<vmem>>, vector<2x16x16x4xf32>
    %24 = vector.shape_cast %23 : vector<2x16x16x4xf32> to vector<512x4xf32>
    %c3 = arith.constant 3 : index
    %c0_38 = arith.constant 0 : index
    %c0_39 = arith.constant 0 : index
    %25 = vector.load %arg2[%c3, %c0_38, %c0_39] : memref<9x4x8xf32, #tpu.memory_space<vmem>>, vector<1x4x8xf32>
    %26 = vector.shape_cast %25 : vector<1x4x8xf32> to vector<4x8xf32>
    %cst_40 = arith.constant dense<0.000000e+00> : vector<512x8xf32>
    %27 = tpu.matmul %24, %26, %cst_40 {dimension_numbers = #tpu.dot_dimension_numbers<[1], [0], [0], [1], [0, 0, 1, 1], [], []>} : vector<512x4xf32>, vector<4x8xf32>, vector<512x8xf32> -> vector<512x8xf32>
    %28 = arith.addf %22, %27 : vector<512x8xf32>
    %c0_41 = arith.constant 0 : index
    %c1_42 = arith.constant 1 : index
    %c1_43 = arith.constant 1 : index
    %c0_44 = arith.constant 0 : index
    %29 = vector.load %arg15[%c0_41, %c1_42, %c1_43, %c0_44] : memref<2x18x18x4xf32, #tpu.memory_space<vmem>>, vector<2x16x16x4xf32>
    %30 = vector.shape_cast %29 : vector<2x16x16x4xf32> to vector<512x4xf32>
    %c4 = arith.constant 4 : index
    %c0_45 = arith.constant 0 : index
    %c0_46 = arith.constant 0 : index
    %31 = vector.load %arg2[%c4, %c0_45, %c0_46] : memref<9x4x8xf32, #tpu.memory_space<vmem>>, vector<1x4x8xf32>
    %32 = vector.shape_cast %31 : vector<1x4x8xf32> to vector<4x8xf32>
    %cst_47 = arith.constant dense<0.000000e+00> : vector<512x8xf32>
    %33 = tpu.matmul %30, %32, %cst_47 {dimension_numbers = #tpu.dot_dimension_numbers<[1], [0], [0], [1], [0, 0, 1, 1], [], []>} : vector<512x4xf32>, vector<4x8xf32>, vector<512x8xf32> -> vector<512x8xf32>
    %34 = arith.addf %28, %33 : vector<512x8xf32>
    %c0_48 = arith.constant 0 : index
    %c1_49 = arith.constant 1 : index
    %c2_50 = arith.constant 2 : index
    %c0_51 = arith.constant 0 : index
    %35 = vector.load %arg15[%c0_48, %c1_49, %c2_50, %c0_51] : memref<2x18x18x4xf32, #tpu.memory_space<vmem>>, vector<2x16x16x4xf32>
    %36 = vector.shape_cast %35 : vector<2x16x16x4xf32> to vector<512x4xf32>
    %c5 = arith.constant 5 : index
    %c0_52 = arith.constant 0 : index
    %c0_53 = arith.constant 0 : index
    %37 = vector.load %arg2[%c5, %c0_52, %c0_53] : memref<9x4x8xf32, #tpu.memory_space<vmem>>, vector<1x4x8xf32>
    %38 = vector.shape_cast %37 : vector<1x4x8xf32> to vector<4x8xf32>
    %cst_54 = arith.constant dense<0.000000e+00> : vector<512x8xf32>
    %39 = tpu.matmul %36, %38, %cst_54 {dimension_numbers = #tpu.dot_dimension_numbers<[1], [0], [0], [1], [0, 0, 1, 1], [], []>} : vector<512x4xf32>, vector<4x8xf32>, vector<512x8xf32> -> vector<512x8xf32>
    %40 = arith.addf %34, %39 : vector<512x8xf32>
    %c0_55 = arith.constant 0 : index
    %c2_56 = arith.constant 2 : index
    %c0_57 = arith.constant 0 : index
    %c0_58 = arith.constant 0 : index
    %41 = vector.load %arg15[%c0_55, %c2_56, %c0_57, %c0_58] : memref<2x18x18x4xf32, #tpu.memory_space<vmem>>, vector<2x16x16x4xf32>
    %42 = vector.shape_cast %41 : vector<2x16x16x4xf32> to vector<512x4xf32>
    %c6 = arith.constant 6 : index
    %c0_59 = arith.constant 0 : index
    %c0_60 = arith.constant 0 : index
    %43 = vector.load %arg2[%c6, %c0_59, %c0_60] : memref<9x4x8xf32, #tpu.memory_space<vmem>>, vector<1x4x8xf32>
    %44 = vector.shape_cast %43 : vector<1x4x8xf32> to vector<4x8xf32>
    %cst_61 = arith.constant dense<0.000000e+00> : vector<512x8xf32>
    %45 = tpu.matmul %42, %44, %cst_61 {dimension_numbers = #tpu.dot_dimension_numbers<[1], [0], [0], [1], [0, 0, 1, 1], [], []>} : vector<512x4xf32>, vector<4x8xf32>, vector<512x8xf32> -> vector<512x8xf32>
    %46 = arith.addf %40, %45 : vector<512x8xf32>
    %c0_62 = arith.constant 0 : index
    %c2_63 = arith.constant 2 : index
    %c1_64 = arith.constant 1 : index
    %c0_65 = arith.constant 0 : index
    %47 = vector.load %arg15[%c0_62, %c2_63, %c1_64, %c0_65] : memref<2x18x18x4xf32, #tpu.memory_space<vmem>>, vector<2x16x16x4xf32>
    %48 = vector.shape_cast %47 : vector<2x16x16x4xf32> to vector<512x4xf32>
    %c7 = arith.constant 7 : index
    %c0_66 = arith.constant 0 : index
    %c0_67 = arith.constant 0 : index
    %49 = vector.load %arg2[%c7, %c0_66, %c0_67] : memref<9x4x8xf32, #tpu.memory_space<vmem>>, vector<1x4x8xf32>
    %50 = vector.shape_cast %49 : vector<1x4x8xf32> to vector<4x8xf32>
    %cst_68 = arith.constant dense<0.000000e+00> : vector<512x8xf32>
    %51 = tpu.matmul %48, %50, %cst_68 {dimension_numbers = #tpu.dot_dimension_numbers<[1], [0], [0], [1], [0, 0, 1, 1], [], []>} : vector<512x4xf32>, vector<4x8xf32>, vector<512x8xf32> -> vector<512x8xf32>
    %52 = arith.addf %46, %51 : vector<512x8xf32>
    %c0_69 = arith.constant 0 : index
    %c2_70 = arith.constant 2 : index
    %c2_71 = arith.constant 2 : index
    %c0_72 = arith.constant 0 : index
    %53 = vector.load %arg15[%c0_69, %c2_70, %c2_71, %c0_72] : memref<2x18x18x4xf32, #tpu.memory_space<vmem>>, vector<2x16x16x4xf32>
    %54 = vector.shape_cast %53 : vector<2x16x16x4xf32> to vector<512x4xf32>
    %c8 = arith.constant 8 : index
    %c0_73 = arith.constant 0 : index
    %c0_74 = arith.constant 0 : index
    %55 = vector.load %arg2[%c8, %c0_73, %c0_74] : memref<9x4x8xf32, #tpu.memory_space<vmem>>, vector<1x4x8xf32>
    %56 = vector.shape_cast %55 : vector<1x4x8xf32> to vector<4x8xf32>
    %cst_75 = arith.constant dense<0.000000e+00> : vector<512x8xf32>
    %57 = tpu.matmul %54, %56, %cst_75 {dimension_numbers = #tpu.dot_dimension_numbers<[1], [0], [0], [1], [0, 0, 1, 1], [], []>} : vector<512x4xf32>, vector<4x8xf32>, vector<512x8xf32> -> vector<512x8xf32>
    %58 = arith.addf %52, %57 : vector<512x8xf32>
    %c0_76 = arith.constant 0 : index
    %c0_77 = arith.constant 0 : index
    %59 = vector.load %arg3[%c0_76, %c0_77] : memref<1x8xf32, #tpu.memory_space<vmem>>, vector<1x8xf32>
    %60 = vector.broadcast %59 : vector<1x8xf32> to vector<512x8xf32>
    %61 = arith.addf %58, %60 : vector<512x8xf32>
    %cst_78 = arith.constant dense<0.000000e+00> : vector<8xf32>
    %62 = vector.multi_reduction <add>, %61, %cst_78 [0] : vector<512x8xf32> to vector<8xf32>
    %63 = vector.shape_cast %62 : vector<8xf32> to vector<1x8xf32>
    %cst_79 = arith.constant 0.001953125 : f32
    %64 = vector.broadcast %cst_79 : f32 to vector<1x8xf32>
    %65 = arith.mulf %63, %64 : vector<1x8xf32>
    %66 = arith.mulf %61, %61 : vector<512x8xf32>
    %cst_80 = arith.constant dense<0.000000e+00> : vector<8xf32>
    %67 = vector.multi_reduction <add>, %66, %cst_80 [0] : vector<512x8xf32> to vector<8xf32>
    %68 = vector.shape_cast %67 : vector<8xf32> to vector<1x8xf32>
    %cst_81 = arith.constant 0.001953125 : f32
    %69 = vector.broadcast %cst_81 : f32 to vector<1x8xf32>
    %70 = arith.mulf %68, %69 : vector<1x8xf32>
    %71 = arith.mulf %65, %65 : vector<1x8xf32>
    %72 = arith.subf %70, %71 : vector<1x8xf32>
    %73 = vector.broadcast %65 : vector<1x8xf32> to vector<512x8xf32>
    %74 = arith.subf %61, %73 : vector<512x8xf32>
    %cst_82 = arith.constant 9.99999974E-6 : f32
    %75 = vector.broadcast %cst_82 : f32 to vector<1x8xf32>
    %76 = arith.addf %72, %75 : vector<1x8xf32>
    %77 = math.rsqrt %76 : vector<1x8xf32>
    %78 = vector.broadcast %77 : vector<1x8xf32> to vector<512x8xf32>
    %79 = arith.mulf %74, %78 : vector<512x8xf32>
    %c0_83 = arith.constant 0 : index
    %c0_84 = arith.constant 0 : index
    %80 = vector.load %arg4[%c0_83, %c0_84] : memref<1x8xf32, #tpu.memory_space<vmem>>, vector<1x8xf32>
    %81 = vector.broadcast %80 : vector<1x8xf32> to vector<512x8xf32>
    %82 = arith.mulf %79, %81 : vector<512x8xf32>
    %c0_85 = arith.constant 0 : index
    %c0_86 = arith.constant 0 : index
    %83 = vector.load %arg5[%c0_85, %c0_86] : memref<1x8xf32, #tpu.memory_space<vmem>>, vector<1x8xf32>
    %84 = vector.broadcast %83 : vector<1x8xf32> to vector<512x8xf32>
    %85 = arith.addf %82, %84 : vector<512x8xf32>
    %cst_87 = arith.constant 0.000000e+00 : f32
    %86 = vector.broadcast %cst_87 : f32 to vector<512x8xf32>
    %87 = arith.maximumf %85, %86 : vector<512x8xf32>
    %88 = vector.shape_cast %87 : vector<512x8xf32> to vector<2x16x16x8xf32>
    %c0_88 = arith.constant 0 : index
    %c0_89 = arith.constant 0 : index
    %c0_90 = arith.constant 0 : index
    %c0_91 = arith.constant 0 : index
    %89 = vector.load %arg16[%c0_88, %c0_89, %c0_90, %c0_91] : memref<2x16x16x8xf32, #tpu.memory_space<vmem>>, vector<2x16x16x8xf32>
    tpu.vector_store %arg16[%c0_88, %c0_89, %c0_90, %c0_91], %88 {strides = array<i32>} : memref<2x16x16x8xf32, #tpu.memory_space<vmem>>, vector<2x16x16x8xf32>,
    %c0_92 = arith.constant 0 : index
    %c0_93 = arith.constant 0 : index
    %c0_94 = arith.constant 0 : index
    %c0_95 = arith.constant 0 : index
    %90 = tpu.strided_load %arg16[%c0_92, %c0_93, %c0_94, %c0_95] {strides = array<i32: 1, 1, 2, 1>} : memref<2x16x16x8xf32, #tpu.memory_space<vmem>>, vector<2x16x8x8xf32>
    %c0_96 = arith.constant 0 : index
    %c0_97 = arith.constant 0 : index
    %c1_98 = arith.constant 1 : index
    %c0_99 = arith.constant 0 : index
    %91 = tpu.strided_load %arg16[%c0_96, %c0_97, %c1_98, %c0_99] {strides = array<i32: 1, 1, 2, 1>} : memref<2x16x16x8xf32, #tpu.memory_space<vmem>>, vector<2x16x8x8xf32>
    %92 = arith.maximumf %90, %91 : vector<2x16x8x8xf32>
    %93 = vector.shape_cast %92 : vector<2x16x8x8xf32> to vector<2x8x2x8x8xf32>
    %cst_100 = arith.constant dense<0xFF800000> : vector<2x8x8x8xf32>
    %94 = vector.multi_reduction <maximumf>, %93, %cst_100 [2] : vector<2x8x2x8x8xf32> to vector<2x8x8x8xf32>
    %cst_101 = arith.constant 0.000000e+00 : f32
    %95 = vector.broadcast %cst_101 : f32 to vector<2x10x10x8xf32>
    %c0_102 = arith.constant 0 : index
    %c0_103 = arith.constant 0 : index
    %c0_104 = arith.constant 0 : index
    %c0_105 = arith.constant 0 : index
    %96 = vector.load %arg17[%c0_102, %c0_103, %c0_104, %c0_105] : memref<2x10x10x8xf32, #tpu.memory_space<vmem>>, vector<2x10x10x8xf32>
    tpu.vector_store %arg17[%c0_102, %c0_103, %c0_104, %c0_105], %95 {strides = array<i32>} : memref<2x10x10x8xf32, #tpu.memory_space<vmem>>, vector<2x10x10x8xf32>,
    %c0_106 = arith.constant 0 : index
    %c1_107 = arith.constant 1 : index
    %c1_108 = arith.constant 1 : index
    %c0_109 = arith.constant 0 : index
    %97 = vector.load %arg17[%c0_106, %c1_107, %c1_108, %c0_109] : memref<2x10x10x8xf32, #tpu.memory_space<vmem>>, vector<2x8x8x8xf32>
    tpu.vector_store %arg17[%c0_106, %c1_107, %c1_108, %c0_109], %94 {strides = array<i32>} : memref<2x10x10x8xf32, #tpu.memory_space<vmem>>, vector<2x8x8x8xf32>,
    %cst_110 = arith.constant 0.000000e+00 : f32
    %98 = vector.broadcast %cst_110 : f32 to vector<128x16xf32>
    %c0_111 = arith.constant 0 : index
    %c0_112 = arith.constant 0 : index
    %c0_113 = arith.constant 0 : index
    %c0_114 = arith.constant 0 : index
    %99 = vector.load %arg17[%c0_111, %c0_112, %c0_113, %c0_114] : memref<2x10x10x8xf32, #tpu.memory_space<vmem>>, vector<2x8x8x8xf32>
    %100 = vector.shape_cast %99 : vector<2x8x8x8xf32> to vector<128x8xf32>
    %c0_115 = arith.constant 0 : index
    %c0_116 = arith.constant 0 : index
    %c0_117 = arith.constant 0 : index
    %101 = vector.load %arg6[%c0_115, %c0_116, %c0_117] : memref<9x8x16xf32, #tpu.memory_space<vmem>>, vector<1x8x16xf32>
    %102 = vector.shape_cast %101 : vector<1x8x16xf32> to vector<8x16xf32>
    %cst_118 = arith.constant dense<0.000000e+00> : vector<128x16xf32>
    %103 = tpu.matmul %100, %102, %cst_118 {dimension_numbers = #tpu.dot_dimension_numbers<[1], [0], [0], [1], [0, 0, 1, 1], [], []>} : vector<128x8xf32>, vector<8x16xf32>, vector<128x16xf32> -> vector<128x16xf32>
    %104 = arith.addf %98, %103 : vector<128x16xf32>
    %c0_119 = arith.constant 0 : index
    %c0_120 = arith.constant 0 : index
    %c1_121 = arith.constant 1 : index
    %c0_122 = arith.constant 0 : index
    %105 = vector.load %arg17[%c0_119, %c0_120, %c1_121, %c0_122] : memref<2x10x10x8xf32, #tpu.memory_space<vmem>>, vector<2x8x8x8xf32>
    %106 = vector.shape_cast %105 : vector<2x8x8x8xf32> to vector<128x8xf32>
    %c1_123 = arith.constant 1 : index
    %c0_124 = arith.constant 0 : index
    %c0_125 = arith.constant 0 : index
    %107 = vector.load %arg6[%c1_123, %c0_124, %c0_125] : memref<9x8x16xf32, #tpu.memory_space<vmem>>, vector<1x8x16xf32>
    %108 = vector.shape_cast %107 : vector<1x8x16xf32> to vector<8x16xf32>
    %cst_126 = arith.constant dense<0.000000e+00> : vector<128x16xf32>
    %109 = tpu.matmul %106, %108, %cst_126 {dimension_numbers = #tpu.dot_dimension_numbers<[1], [0], [0], [1], [0, 0, 1, 1], [], []>} : vector<128x8xf32>, vector<8x16xf32>, vector<128x16xf32> -> vector<128x16xf32>
    %110 = arith.addf %104, %109 : vector<128x16xf32>
    %c0_127 = arith.constant 0 : index
    %c0_128 = arith.constant 0 : index
    %c2_129 = arith.constant 2 : index
    %c0_130 = arith.constant 0 : index
    %111 = vector.load %arg17[%c0_127, %c0_128, %c2_129, %c0_130] : memref<2x10x10x8xf32, #tpu.memory_space<vmem>>, vector<2x8x8x8xf32>
    %112 = vector.shape_cast %111 : vector<2x8x8x8xf32> to vector<128x8xf32>
    %c2_131 = arith.constant 2 : index
    %c0_132 = arith.constant 0 : index
    %c0_133 = arith.constant 0 : index
    %113 = vector.load %arg6[%c2_131, %c0_132, %c0_133] : memref<9x8x16xf32, #tpu.memory_space<vmem>>, vector<1x8x16xf32>
    %114 = vector.shape_cast %113 : vector<1x8x16xf32> to vector<8x16xf32>
    %cst_134 = arith.constant dense<0.000000e+00> : vector<128x16xf32>
    %115 = tpu.matmul %112, %114, %cst_134 {dimension_numbers = #tpu.dot_dimension_numbers<[1], [0], [0], [1], [0, 0, 1, 1], [], []>} : vector<128x8xf32>, vector<8x16xf32>, vector<128x16xf32> -> vector<128x16xf32>
    %116 = arith.addf %110, %115 : vector<128x16xf32>
    %c0_135 = arith.constant 0 : index
    %c1_136 = arith.constant 1 : index
    %c0_137 = arith.constant 0 : index
    %c0_138 = arith.constant 0 : index
    %117 = vector.load %arg17[%c0_135, %c1_136, %c0_137, %c0_138] : memref<2x10x10x8xf32, #tpu.memory_space<vmem>>, vector<2x8x8x8xf32>
    %118 = vector.shape_cast %117 : vector<2x8x8x8xf32> to vector<128x8xf32>
    %c3_139 = arith.constant 3 : index
    %c0_140 = arith.constant 0 : index
    %c0_141 = arith.constant 0 : index
    %119 = vector.load %arg6[%c3_139, %c0_140, %c0_141] : memref<9x8x16xf32, #tpu.memory_space<vmem>>, vector<1x8x16xf32>
    %120 = vector.shape_cast %119 : vector<1x8x16xf32> to vector<8x16xf32>
    %cst_142 = arith.constant dense<0.000000e+00> : vector<128x16xf32>
    %121 = tpu.matmul %118, %120, %cst_142 {dimension_numbers = #tpu.dot_dimension_numbers<[1], [0], [0], [1], [0, 0, 1, 1], [], []>} : vector<128x8xf32>, vector<8x16xf32>, vector<128x16xf32> -> vector<128x16xf32>
    %122 = arith.addf %116, %121 : vector<128x16xf32>
    %c0_143 = arith.constant 0 : index
    %c1_144 = arith.constant 1 : index
    %c1_145 = arith.constant 1 : index
    %c0_146 = arith.constant 0 : index
    %123 = vector.load %arg17[%c0_143, %c1_144, %c1_145, %c0_146] : memref<2x10x10x8xf32, #tpu.memory_space<vmem>>, vector<2x8x8x8xf32>
    %124 = vector.shape_cast %123 : vector<2x8x8x8xf32> to vector<128x8xf32>
    %c4_147 = arith.constant 4 : index
    %c0_148 = arith.constant 0 : index
    %c0_149 = arith.constant 0 : index
    %125 = vector.load %arg6[%c4_147, %c0_148, %c0_149] : memref<9x8x16xf32, #tpu.memory_space<vmem>>, vector<1x8x16xf32>
    %126 = vector.shape_cast %125 : vector<1x8x16xf32> to vector<8x16xf32>
    %cst_150 = arith.constant dense<0.000000e+00> : vector<128x16xf32>
    %127 = tpu.matmul %124, %126, %cst_150 {dimension_numbers = #tpu.dot_dimension_numbers<[1], [0], [0], [1], [0, 0, 1, 1], [], []>} : vector<128x8xf32>, vector<8x16xf32>, vector<128x16xf32> -> vector<128x16xf32>
    %128 = arith.addf %122, %127 : vector<128x16xf32>
    %c0_151 = arith.constant 0 : index
    %c1_152 = arith.constant 1 : index
    %c2_153 = arith.constant 2 : index
    %c0_154 = arith.constant 0 : index
    %129 = vector.load %arg17[%c0_151, %c1_152, %c2_153, %c0_154] : memref<2x10x10x8xf32, #tpu.memory_space<vmem>>, vector<2x8x8x8xf32>
    %130 = vector.shape_cast %129 : vector<2x8x8x8xf32> to vector<128x8xf32>
    %c5_155 = arith.constant 5 : index
    %c0_156 = arith.constant 0 : index
    %c0_157 = arith.constant 0 : index
    %131 = vector.load %arg6[%c5_155, %c0_156, %c0_157] : memref<9x8x16xf32, #tpu.memory_space<vmem>>, vector<1x8x16xf32>
    %132 = vector.shape_cast %131 : vector<1x8x16xf32> to vector<8x16xf32>
    %cst_158 = arith.constant dense<0.000000e+00> : vector<128x16xf32>
    %133 = tpu.matmul %130, %132, %cst_158 {dimension_numbers = #tpu.dot_dimension_numbers<[1], [0], [0], [1], [0, 0, 1, 1], [], []>} : vector<128x8xf32>, vector<8x16xf32>, vector<128x16xf32> -> vector<128x16xf32>
    %134 = arith.addf %128, %133 : vector<128x16xf32>
    %c0_159 = arith.constant 0 : index
    %c2_160 = arith.constant 2 : index
    %c0_161 = arith.constant 0 : index
    %c0_162 = arith.constant 0 : index
    %135 = vector.load %arg17[%c0_159, %c2_160, %c0_161, %c0_162] : memref<2x10x10x8xf32, #tpu.memory_space<vmem>>, vector<2x8x8x8xf32>
    %136 = vector.shape_cast %135 : vector<2x8x8x8xf32> to vector<128x8xf32>
    %c6_163 = arith.constant 6 : index
    %c0_164 = arith.constant 0 : index
    %c0_165 = arith.constant 0 : index
    %137 = vector.load %arg6[%c6_163, %c0_164, %c0_165] : memref<9x8x16xf32, #tpu.memory_space<vmem>>, vector<1x8x16xf32>
    %138 = vector.shape_cast %137 : vector<1x8x16xf32> to vector<8x16xf32>
    %cst_166 = arith.constant dense<0.000000e+00> : vector<128x16xf32>
    %139 = tpu.matmul %136, %138, %cst_166 {dimension_numbers = #tpu.dot_dimension_numbers<[1], [0], [0], [1], [0, 0, 1, 1], [], []>} : vector<128x8xf32>, vector<8x16xf32>, vector<128x16xf32> -> vector<128x16xf32>
    %140 = arith.addf %134, %139 : vector<128x16xf32>
    %c0_167 = arith.constant 0 : index
    %c2_168 = arith.constant 2 : index
    %c1_169 = arith.constant 1 : index
    %c0_170 = arith.constant 0 : index
    %141 = vector.load %arg17[%c0_167, %c2_168, %c1_169, %c0_170] : memref<2x10x10x8xf32, #tpu.memory_space<vmem>>, vector<2x8x8x8xf32>
    %142 = vector.shape_cast %141 : vector<2x8x8x8xf32> to vector<128x8xf32>
    %c7_171 = arith.constant 7 : index
    %c0_172 = arith.constant 0 : index
    %c0_173 = arith.constant 0 : index
    %143 = vector.load %arg6[%c7_171, %c0_172, %c0_173] : memref<9x8x16xf32, #tpu.memory_space<vmem>>, vector<1x8x16xf32>
    %144 = vector.shape_cast %143 : vector<1x8x16xf32> to vector<8x16xf32>
    %cst_174 = arith.constant dense<0.000000e+00> : vector<128x16xf32>
    %145 = tpu.matmul %142, %144, %cst_174 {dimension_numbers = #tpu.dot_dimension_numbers<[1], [0], [0], [1], [0, 0, 1, 1], [], []>} : vector<128x8xf32>, vector<8x16xf32>, vector<128x16xf32> -> vector<128x16xf32>
    %146 = arith.addf %140, %145 : vector<128x16xf32>
    %c0_175 = arith.constant 0 : index
    %c2_176 = arith.constant 2 : index
    %c2_177 = arith.constant 2 : index
    %c0_178 = arith.constant 0 : index
    %147 = vector.load %arg17[%c0_175, %c2_176, %c2_177, %c0_178] : memref<2x10x10x8xf32, #tpu.memory_space<vmem>>, vector<2x8x8x8xf32>
    %148 = vector.shape_cast %147 : vector<2x8x8x8xf32> to vector<128x8xf32>
    %c8_179 = arith.constant 8 : index
    %c0_180 = arith.constant 0 : index
    %c0_181 = arith.constant 0 : index
    %149 = vector.load %arg6[%c8_179, %c0_180, %c0_181] : memref<9x8x16xf32, #tpu.memory_space<vmem>>, vector<1x8x16xf32>
    %150 = vector.shape_cast %149 : vector<1x8x16xf32> to vector<8x16xf32>
    %cst_182 = arith.constant dense<0.000000e+00> : vector<128x16xf32>
    %151 = tpu.matmul %148, %150, %cst_182 {dimension_numbers = #tpu.dot_dimension_numbers<[1], [0], [0], [1], [0, 0, 1, 1], [], []>} : vector<128x8xf32>, vector<8x16xf32>, vector<128x16xf32> -> vector<128x16xf32>
    %152 = arith.addf %146, %151 : vector<128x16xf32>
    %c0_183 = arith.constant 0 : index
    %c0_184 = arith.constant 0 : index
    %153 = vector.load %arg7[%c0_183, %c0_184] : memref<1x16xf32, #tpu.memory_space<vmem>>, vector<1x16xf32>
    %154 = vector.broadcast %153 : vector<1x16xf32> to vector<128x16xf32>
    %155 = arith.addf %152, %154 : vector<128x16xf32>
    %cst_185 = arith.constant dense<0.000000e+00> : vector<16xf32>
    %156 = vector.multi_reduction <add>, %155, %cst_185 [0] : vector<128x16xf32> to vector<16xf32>
    %157 = vector.shape_cast %156 : vector<16xf32> to vector<1x16xf32>
    %cst_186 = arith.constant 7.812500e-03 : f32
    %158 = vector.broadcast %cst_186 : f32 to vector<1x16xf32>
    %159 = arith.mulf %157, %158 : vector<1x16xf32>
    %160 = arith.mulf %155, %155 : vector<128x16xf32>
    %cst_187 = arith.constant dense<0.000000e+00> : vector<16xf32>
    %161 = vector.multi_reduction <add>, %160, %cst_187 [0] : vector<128x16xf32> to vector<16xf32>
    %162 = vector.shape_cast %161 : vector<16xf32> to vector<1x16xf32>
    %cst_188 = arith.constant 7.812500e-03 : f32
    %163 = vector.broadcast %cst_188 : f32 to vector<1x16xf32>
    %164 = arith.mulf %162, %163 : vector<1x16xf32>
    %165 = arith.mulf %159, %159 : vector<1x16xf32>
    %166 = arith.subf %164, %165 : vector<1x16xf32>
    %167 = vector.broadcast %159 : vector<1x16xf32> to vector<128x16xf32>
    %168 = arith.subf %155, %167 : vector<128x16xf32>
    %cst_189 = arith.constant 9.99999974E-6 : f32
    %169 = vector.broadcast %cst_189 : f32 to vector<1x16xf32>
    %170 = arith.addf %166, %169 : vector<1x16xf32>
    %171 = math.rsqrt %170 : vector<1x16xf32>
    %172 = vector.broadcast %171 : vector<1x16xf32> to vector<128x16xf32>
    %173 = arith.mulf %168, %172 : vector<128x16xf32>
    %c0_190 = arith.constant 0 : index
    %c0_191 = arith.constant 0 : index
    %174 = vector.load %arg8[%c0_190, %c0_191] : memref<1x16xf32, #tpu.memory_space<vmem>>, vector<1x16xf32>
    %175 = vector.broadcast %174 : vector<1x16xf32> to vector<128x16xf32>
    %176 = arith.mulf %173, %175 : vector<128x16xf32>
    %c0_192 = arith.constant 0 : index
    %c0_193 = arith.constant 0 : index
    %177 = vector.load %arg9[%c0_192, %c0_193] : memref<1x16xf32, #tpu.memory_space<vmem>>, vector<1x16xf32>
    %178 = vector.broadcast %177 : vector<1x16xf32> to vector<128x16xf32>
    %179 = arith.addf %176, %178 : vector<128x16xf32>
    %cst_194 = arith.constant 0.000000e+00 : f32
    %180 = vector.broadcast %cst_194 : f32 to vector<128x16xf32>
    %181 = arith.maximumf %179, %180 : vector<128x16xf32>
    %182 = vector.shape_cast %181 : vector<128x16xf32> to vector<2x8x8x16xf32>
    %c0_195 = arith.constant 0 : index
    %c0_196 = arith.constant 0 : index
    %c0_197 = arith.constant 0 : index
    %c0_198 = arith.constant 0 : index
    %183 = vector.load %arg18[%c0_195, %c0_196, %c0_197, %c0_198] : memref<2x8x8x16xf32, #tpu.memory_space<vmem>>, vector<2x8x8x16xf32>
    tpu.vector_store %arg18[%c0_195, %c0_196, %c0_197, %c0_198], %182 {strides = array<i32>} : memref<2x8x8x16xf32, #tpu.memory_space<vmem>>, vector<2x8x8x16xf32>,
    %c0_199 = arith.constant 0 : index
    %c0_200 = arith.constant 0 : index
    %c0_201 = arith.constant 0 : index
    %c0_202 = arith.constant 0 : index
    %184 = tpu.strided_load %arg18[%c0_199, %c0_200, %c0_201, %c0_202] {strides = array<i32: 1, 1, 2, 1>} : memref<2x8x8x16xf32, #tpu.memory_space<vmem>>, vector<2x8x4x16xf32>
    %c0_203 = arith.constant 0 : index
    %c0_204 = arith.constant 0 : index
    %c1_205 = arith.constant 1 : index
    %c0_206 = arith.constant 0 : index
    %185 = tpu.strided_load %arg18[%c0_203, %c0_204, %c1_205, %c0_206] {strides = array<i32: 1, 1, 2, 1>} : memref<2x8x8x16xf32, #tpu.memory_space<vmem>>, vector<2x8x4x16xf32>
    %186 = arith.maximumf %184, %185 : vector<2x8x4x16xf32>
    %187 = vector.shape_cast %186 : vector<2x8x4x16xf32> to vector<2x4x2x4x16xf32>
    %cst_207 = arith.constant dense<0xFF800000> : vector<2x4x4x16xf32>
    %188 = vector.multi_reduction <maximumf>, %187, %cst_207 [2] : vector<2x4x2x4x16xf32> to vector<2x4x4x16xf32>
    %c0_208 = arith.constant 0 : index
    %c0_209 = arith.constant 0 : index
    %c0_210 = arith.constant 0 : index
    %c0_211 = arith.constant 0 : index
    %189 = vector.load %arg19[%c0_208, %c0_209, %c0_210, %c0_211] : memref<2x4x4x16xf32, #tpu.memory_space<vmem>>, vector<2x4x4x16xf32>
    tpu.vector_store %arg19[%c0_208, %c0_209, %c0_210, %c0_211], %188 {strides = array<i32>} : memref<2x4x4x16xf32, #tpu.memory_space<vmem>>, vector<2x4x4x16xf32>,
    %cst_212 = arith.constant 0.000000e+00 : f32
    %190 = vector.broadcast %cst_212 : f32 to vector<2x32xf32>
    %c0_213 = arith.constant 0 : index
    %c0_214 = arith.constant 0 : index
    %c0_215 = arith.constant 0 : index
    %c0_216 = arith.constant 0 : index
    %191 = vector.load %arg19[%c0_213, %c0_214, %c0_215, %c0_216] : memref<2x4x4x16xf32, #tpu.memory_space<vmem>>, vector<2x1x1x16xf32>
    %192 = vector.shape_cast %191 : vector<2x1x1x16xf32> to vector<2x16xf32>
    %c0_217 = arith.constant 0 : index
    %c0_218 = arith.constant 0 : index
    %c0_219 = arith.constant 0 : index
    %c0_220 = arith.constant 0 : index
    %193 = vector.load %arg10[%c0_217, %c0_218, %c0_219, %c0_220] : memref<4x4x16x32xf32, #tpu.memory_space<vmem>>, vector<1x1x16x32xf32>
    %194 = vector.shape_cast %193 : vector<1x1x16x32xf32> to vector<16x32xf32>
    %cst_221 = arith.constant dense<0.000000e+00> : vector<2x32xf32>
    %195 = tpu.matmul %192, %194, %cst_221 {dimension_numbers = #tpu.dot_dimension_numbers<[1], [0], [0], [1], [0, 0, 1, 1], [], []>} : vector<2x16xf32>, vector<16x32xf32>, vector<2x32xf32> -> vector<2x32xf32>
    %196 = arith.addf %190, %195 : vector<2x32xf32>
    %c0_222 = arith.constant 0 : index
    %c0_223 = arith.constant 0 : index
    %c1_224 = arith.constant 1 : index
    %c0_225 = arith.constant 0 : index
    %197 = vector.load %arg19[%c0_222, %c0_223, %c1_224, %c0_225] : memref<2x4x4x16xf32, #tpu.memory_space<vmem>>, vector<2x1x1x16xf32>
    %198 = vector.shape_cast %197 : vector<2x1x1x16xf32> to vector<2x16xf32>
    %c0_226 = arith.constant 0 : index
    %c1_227 = arith.constant 1 : index
    %c0_228 = arith.constant 0 : index
    %c0_229 = arith.constant 0 : index
    %199 = vector.load %arg10[%c0_226, %c1_227, %c0_228, %c0_229] : memref<4x4x16x32xf32, #tpu.memory_space<vmem>>, vector<1x1x16x32xf32>
    %200 = vector.shape_cast %199 : vector<1x1x16x32xf32> to vector<16x32xf32>
    %cst_230 = arith.constant dense<0.000000e+00> : vector<2x32xf32>
    %201 = tpu.matmul %198, %200, %cst_230 {dimension_numbers = #tpu.dot_dimension_numbers<[1], [0], [0], [1], [0, 0, 1, 1], [], []>} : vector<2x16xf32>, vector<16x32xf32>, vector<2x32xf32> -> vector<2x32xf32>
    %202 = arith.addf %196, %201 : vector<2x32xf32>
    %c0_231 = arith.constant 0 : index
    %c0_232 = arith.constant 0 : index
    %c2_233 = arith.constant 2 : index
    %c0_234 = arith.constant 0 : index
    %203 = vector.load %arg19[%c0_231, %c0_232, %c2_233, %c0_234] : memref<2x4x4x16xf32, #tpu.memory_space<vmem>>, vector<2x1x1x16xf32>
    %204 = vector.shape_cast %203 : vector<2x1x1x16xf32> to vector<2x16xf32>
    %c0_235 = arith.constant 0 : index
    %c2_236 = arith.constant 2 : index
    %c0_237 = arith.constant 0 : index
    %c0_238 = arith.constant 0 : index
    %205 = vector.load %arg10[%c0_235, %c2_236, %c0_237, %c0_238] : memref<4x4x16x32xf32, #tpu.memory_space<vmem>>, vector<1x1x16x32xf32>
    %206 = vector.shape_cast %205 : vector<1x1x16x32xf32> to vector<16x32xf32>
    %cst_239 = arith.constant dense<0.000000e+00> : vector<2x32xf32>
    %207 = tpu.matmul %204, %206, %cst_239 {dimension_numbers = #tpu.dot_dimension_numbers<[1], [0], [0], [1], [0, 0, 1, 1], [], []>} : vector<2x16xf32>, vector<16x32xf32>, vector<2x32xf32> -> vector<2x32xf32>
    %208 = arith.addf %202, %207 : vector<2x32xf32>
    %c0_240 = arith.constant 0 : index
    %c0_241 = arith.constant 0 : index
    %c3_242 = arith.constant 3 : index
    %c0_243 = arith.constant 0 : index
    %209 = vector.load %arg19[%c0_240, %c0_241, %c3_242, %c0_243] : memref<2x4x4x16xf32, #tpu.memory_space<vmem>>, vector<2x1x1x16xf32>
    %210 = vector.shape_cast %209 : vector<2x1x1x16xf32> to vector<2x16xf32>
    %c0_244 = arith.constant 0 : index
    %c3_245 = arith.constant 3 : index
    %c0_246 = arith.constant 0 : index
    %c0_247 = arith.constant 0 : index
    %211 = vector.load %arg10[%c0_244, %c3_245, %c0_246, %c0_247] : memref<4x4x16x32xf32, #tpu.memory_space<vmem>>, vector<1x1x16x32xf32>
    %212 = vector.shape_cast %211 : vector<1x1x16x32xf32> to vector<16x32xf32>
    %cst_248 = arith.constant dense<0.000000e+00> : vector<2x32xf32>
    %213 = tpu.matmul %210, %212, %cst_248 {dimension_numbers = #tpu.dot_dimension_numbers<[1], [0], [0], [1], [0, 0, 1, 1], [], []>} : vector<2x16xf32>, vector<16x32xf32>, vector<2x32xf32> -> vector<2x32xf32>
    %214 = arith.addf %208, %213 : vector<2x32xf32>
    %c0_249 = arith.constant 0 : index
    %c1_250 = arith.constant 1 : index
    %c0_251 = arith.constant 0 : index
    %c0_252 = arith.constant 0 : index
    %215 = vector.load %arg19[%c0_249, %c1_250, %c0_251, %c0_252] : memref<2x4x4x16xf32, #tpu.memory_space<vmem>>, vector<2x1x1x16xf32>
    %216 = vector.shape_cast %215 : vector<2x1x1x16xf32> to vector<2x16xf32>
    %c1_253 = arith.constant 1 : index
    %c0_254 = arith.constant 0 : index
    %c0_255 = arith.constant 0 : index
    %c0_256 = arith.constant 0 : index
    %217 = vector.load %arg10[%c1_253, %c0_254, %c0_255, %c0_256] : memref<4x4x16x32xf32, #tpu.memory_space<vmem>>, vector<1x1x16x32xf32>
    %218 = vector.shape_cast %217 : vector<1x1x16x32xf32> to vector<16x32xf32>
    %cst_257 = arith.constant dense<0.000000e+00> : vector<2x32xf32>
    %219 = tpu.matmul %216, %218, %cst_257 {dimension_numbers = #tpu.dot_dimension_numbers<[1], [0], [0], [1], [0, 0, 1, 1], [], []>} : vector<2x16xf32>, vector<16x32xf32>, vector<2x32xf32> -> vector<2x32xf32>
    %220 = arith.addf %214, %219 : vector<2x32xf32>
    %c0_258 = arith.constant 0 : index
    %c1_259 = arith.constant 1 : index
    %c1_260 = arith.constant 1 : index
    %c0_261 = arith.constant 0 : index
    %221 = vector.load %arg19[%c0_258, %c1_259, %c1_260, %c0_261] : memref<2x4x4x16xf32, #tpu.memory_space<vmem>>, vector<2x1x1x16xf32>
    %222 = vector.shape_cast %221 : vector<2x1x1x16xf32> to vector<2x16xf32>
    %c1_262 = arith.constant 1 : index
    %c1_263 = arith.constant 1 : index
    %c0_264 = arith.constant 0 : index
    %c0_265 = arith.constant 0 : index
    %223 = vector.load %arg10[%c1_262, %c1_263, %c0_264, %c0_265] : memref<4x4x16x32xf32, #tpu.memory_space<vmem>>, vector<1x1x16x32xf32>
    %224 = vector.shape_cast %223 : vector<1x1x16x32xf32> to vector<16x32xf32>
    %cst_266 = arith.constant dense<0.000000e+00> : vector<2x32xf32>
    %225 = tpu.matmul %222, %224, %cst_266 {dimension_numbers = #tpu.dot_dimension_numbers<[1], [0], [0], [1], [0, 0, 1, 1], [], []>} : vector<2x16xf32>, vector<16x32xf32>, vector<2x32xf32> -> vector<2x32xf32>
    %226 = arith.addf %220, %225 : vector<2x32xf32>
    %c0_267 = arith.constant 0 : index
    %c1_268 = arith.constant 1 : index
    %c2_269 = arith.constant 2 : index
    %c0_270 = arith.constant 0 : index
    %227 = vector.load %arg19[%c0_267, %c1_268, %c2_269, %c0_270] : memref<2x4x4x16xf32, #tpu.memory_space<vmem>>, vector<2x1x1x16xf32>
    %228 = vector.shape_cast %227 : vector<2x1x1x16xf32> to vector<2x16xf32>
    %c1_271 = arith.constant 1 : index
    %c2_272 = arith.constant 2 : index
    %c0_273 = arith.constant 0 : index
    %c0_274 = arith.constant 0 : index
    %229 = vector.load %arg10[%c1_271, %c2_272, %c0_273, %c0_274] : memref<4x4x16x32xf32, #tpu.memory_space<vmem>>, vector<1x1x16x32xf32>
    %230 = vector.shape_cast %229 : vector<1x1x16x32xf32> to vector<16x32xf32>
    %cst_275 = arith.constant dense<0.000000e+00> : vector<2x32xf32>
    %231 = tpu.matmul %228, %230, %cst_275 {dimension_numbers = #tpu.dot_dimension_numbers<[1], [0], [0], [1], [0, 0, 1, 1], [], []>} : vector<2x16xf32>, vector<16x32xf32>, vector<2x32xf32> -> vector<2x32xf32>
    %232 = arith.addf %226, %231 : vector<2x32xf32>
    %c0_276 = arith.constant 0 : index
    %c1_277 = arith.constant 1 : index
    %c3_278 = arith.constant 3 : index
    %c0_279 = arith.constant 0 : index
    %233 = vector.load %arg19[%c0_276, %c1_277, %c3_278, %c0_279] : memref<2x4x4x16xf32, #tpu.memory_space<vmem>>, vector<2x1x1x16xf32>
    %234 = vector.shape_cast %233 : vector<2x1x1x16xf32> to vector<2x16xf32>
    %c1_280 = arith.constant 1 : index
    %c3_281 = arith.constant 3 : index
    %c0_282 = arith.constant 0 : index
    %c0_283 = arith.constant 0 : index
    %235 = vector.load %arg10[%c1_280, %c3_281, %c0_282, %c0_283] : memref<4x4x16x32xf32, #tpu.memory_space<vmem>>, vector<1x1x16x32xf32>
    %236 = vector.shape_cast %235 : vector<1x1x16x32xf32> to vector<16x32xf32>
    %cst_284 = arith.constant dense<0.000000e+00> : vector<2x32xf32>
    %237 = tpu.matmul %234, %236, %cst_284 {dimension_numbers = #tpu.dot_dimension_numbers<[1], [0], [0], [1], [0, 0, 1, 1], [], []>} : vector<2x16xf32>, vector<16x32xf32>, vector<2x32xf32> -> vector<2x32xf32>
    %238 = arith.addf %232, %237 : vector<2x32xf32>
    %c0_285 = arith.constant 0 : index
    %c2_286 = arith.constant 2 : index
    %c0_287 = arith.constant 0 : index
    %c0_288 = arith.constant 0 : index
    %239 = vector.load %arg19[%c0_285, %c2_286, %c0_287, %c0_288] : memref<2x4x4x16xf32, #tpu.memory_space<vmem>>, vector<2x1x1x16xf32>
    %240 = vector.shape_cast %239 : vector<2x1x1x16xf32> to vector<2x16xf32>
    %c2_289 = arith.constant 2 : index
    %c0_290 = arith.constant 0 : index
    %c0_291 = arith.constant 0 : index
    %c0_292 = arith.constant 0 : index
    %241 = vector.load %arg10[%c2_289, %c0_290, %c0_291, %c0_292] : memref<4x4x16x32xf32, #tpu.memory_space<vmem>>, vector<1x1x16x32xf32>
    %242 = vector.shape_cast %241 : vector<1x1x16x32xf32> to vector<16x32xf32>
    %cst_293 = arith.constant dense<0.000000e+00> : vector<2x32xf32>
    %243 = tpu.matmul %240, %242, %cst_293 {dimension_numbers = #tpu.dot_dimension_numbers<[1], [0], [0], [1], [0, 0, 1, 1], [], []>} : vector<2x16xf32>, vector<16x32xf32>, vector<2x32xf32> -> vector<2x32xf32>
    %244 = arith.addf %238, %243 : vector<2x32xf32>
    %c0_294 = arith.constant 0 : index
    %c2_295 = arith.constant 2 : index
    %c1_296 = arith.constant 1 : index
    %c0_297 = arith.constant 0 : index
    %245 = vector.load %arg19[%c0_294, %c2_295, %c1_296, %c0_297] : memref<2x4x4x16xf32, #tpu.memory_space<vmem>>, vector<2x1x1x16xf32>
    %246 = vector.shape_cast %245 : vector<2x1x1x16xf32> to vector<2x16xf32>
    %c2_298 = arith.constant 2 : index
    %c1_299 = arith.constant 1 : index
    %c0_300 = arith.constant 0 : index
    %c0_301 = arith.constant 0 : index
    %247 = vector.load %arg10[%c2_298, %c1_299, %c0_300, %c0_301] : memref<4x4x16x32xf32, #tpu.memory_space<vmem>>, vector<1x1x16x32xf32>
    %248 = vector.shape_cast %247 : vector<1x1x16x32xf32> to vector<16x32xf32>
    %cst_302 = arith.constant dense<0.000000e+00> : vector<2x32xf32>
    %249 = tpu.matmul %246, %248, %cst_302 {dimension_numbers = #tpu.dot_dimension_numbers<[1], [0], [0], [1], [0, 0, 1, 1], [], []>} : vector<2x16xf32>, vector<16x32xf32>, vector<2x32xf32> -> vector<2x32xf32>
    %250 = arith.addf %244, %249 : vector<2x32xf32>
    %c0_303 = arith.constant 0 : index
    %c2_304 = arith.constant 2 : index
    %c2_305 = arith.constant 2 : index
    %c0_306 = arith.constant 0 : index
    %251 = vector.load %arg19[%c0_303, %c2_304, %c2_305, %c0_306] : memref<2x4x4x16xf32, #tpu.memory_space<vmem>>, vector<2x1x1x16xf32>
    %252 = vector.shape_cast %251 : vector<2x1x1x16xf32> to vector<2x16xf32>
    %c2_307 = arith.constant 2 : index
    %c2_308 = arith.constant 2 : index
    %c0_309 = arith.constant 0 : index
    %c0_310 = arith.constant 0 : index
    %253 = vector.load %arg10[%c2_307, %c2_308, %c0_309, %c0_310] : memref<4x4x16x32xf32, #tpu.memory_space<vmem>>, vector<1x1x16x32xf32>
    %254 = vector.shape_cast %253 : vector<1x1x16x32xf32> to vector<16x32xf32>
    %cst_311 = arith.constant dense<0.000000e+00> : vector<2x32xf32>
    %255 = tpu.matmul %252, %254, %cst_311 {dimension_numbers = #tpu.dot_dimension_numbers<[1], [0], [0], [1], [0, 0, 1, 1], [], []>} : vector<2x16xf32>, vector<16x32xf32>, vector<2x32xf32> -> vector<2x32xf32>
    %256 = arith.addf %250, %255 : vector<2x32xf32>
    %c0_312 = arith.constant 0 : index
    %c2_313 = arith.constant 2 : index
    %c3_314 = arith.constant 3 : index
    %c0_315 = arith.constant 0 : index
    %257 = vector.load %arg19[%c0_312, %c2_313, %c3_314, %c0_315] : memref<2x4x4x16xf32, #tpu.memory_space<vmem>>, vector<2x1x1x16xf32>
    %258 = vector.shape_cast %257 : vector<2x1x1x16xf32> to vector<2x16xf32>
    %c2_316 = arith.constant 2 : index
    %c3_317 = arith.constant 3 : index
    %c0_318 = arith.constant 0 : index
    %c0_319 = arith.constant 0 : index
    %259 = vector.load %arg10[%c2_316, %c3_317, %c0_318, %c0_319] : memref<4x4x16x32xf32, #tpu.memory_space<vmem>>, vector<1x1x16x32xf32>
    %260 = vector.shape_cast %259 : vector<1x1x16x32xf32> to vector<16x32xf32>
    %cst_320 = arith.constant dense<0.000000e+00> : vector<2x32xf32>
    %261 = tpu.matmul %258, %260, %cst_320 {dimension_numbers = #tpu.dot_dimension_numbers<[1], [0], [0], [1], [0, 0, 1, 1], [], []>} : vector<2x16xf32>, vector<16x32xf32>, vector<2x32xf32> -> vector<2x32xf32>
    %262 = arith.addf %256, %261 : vector<2x32xf32>
    %c0_321 = arith.constant 0 : index
    %c3_322 = arith.constant 3 : index
    %c0_323 = arith.constant 0 : index
    %c0_324 = arith.constant 0 : index
    %263 = vector.load %arg19[%c0_321, %c3_322, %c0_323, %c0_324] : memref<2x4x4x16xf32, #tpu.memory_space<vmem>>, vector<2x1x1x16xf32>
    %264 = vector.shape_cast %263 : vector<2x1x1x16xf32> to vector<2x16xf32>
    %c3_325 = arith.constant 3 : index
    %c0_326 = arith.constant 0 : index
    %c0_327 = arith.constant 0 : index
    %c0_328 = arith.constant 0 : index
    %265 = vector.load %arg10[%c3_325, %c0_326, %c0_327, %c0_328] : memref<4x4x16x32xf32, #tpu.memory_space<vmem>>, vector<1x1x16x32xf32>
    %266 = vector.shape_cast %265 : vector<1x1x16x32xf32> to vector<16x32xf32>
    %cst_329 = arith.constant dense<0.000000e+00> : vector<2x32xf32>
    %267 = tpu.matmul %264, %266, %cst_329 {dimension_numbers = #tpu.dot_dimension_numbers<[1], [0], [0], [1], [0, 0, 1, 1], [], []>} : vector<2x16xf32>, vector<16x32xf32>, vector<2x32xf32> -> vector<2x32xf32>
    %268 = arith.addf %262, %267 : vector<2x32xf32>
    %c0_330 = arith.constant 0 : index
    %c3_331 = arith.constant 3 : index
    %c1_332 = arith.constant 1 : index
    %c0_333 = arith.constant 0 : index
    %269 = vector.load %arg19[%c0_330, %c3_331, %c1_332, %c0_333] : memref<2x4x4x16xf32, #tpu.memory_space<vmem>>, vector<2x1x1x16xf32>
    %270 = vector.shape_cast %269 : vector<2x1x1x16xf32> to vector<2x16xf32>
    %c3_334 = arith.constant 3 : index
    %c1_335 = arith.constant 1 : index
    %c0_336 = arith.constant 0 : index
    %c0_337 = arith.constant 0 : index
    %271 = vector.load %arg10[%c3_334, %c1_335, %c0_336, %c0_337] : memref<4x4x16x32xf32, #tpu.memory_space<vmem>>, vector<1x1x16x32xf32>
    %272 = vector.shape_cast %271 : vector<1x1x16x32xf32> to vector<16x32xf32>
    %cst_338 = arith.constant dense<0.000000e+00> : vector<2x32xf32>
    %273 = tpu.matmul %270, %272, %cst_338 {dimension_numbers = #tpu.dot_dimension_numbers<[1], [0], [0], [1], [0, 0, 1, 1], [], []>} : vector<2x16xf32>, vector<16x32xf32>, vector<2x32xf32> -> vector<2x32xf32>
    %274 = arith.addf %268, %273 : vector<2x32xf32>
    %c0_339 = arith.constant 0 : index
    %c3_340 = arith.constant 3 : index
    %c2_341 = arith.constant 2 : index
    %c0_342 = arith.constant 0 : index
    %275 = vector.load %arg19[%c0_339, %c3_340, %c2_341, %c0_342] : memref<2x4x4x16xf32, #tpu.memory_space<vmem>>, vector<2x1x1x16xf32>
    %276 = vector.shape_cast %275 : vector<2x1x1x16xf32> to vector<2x16xf32>
    %c3_343 = arith.constant 3 : index
    %c2_344 = arith.constant 2 : index
    %c0_345 = arith.constant 0 : index
    %c0_346 = arith.constant 0 : index
    %277 = vector.load %arg10[%c3_343, %c2_344, %c0_345, %c0_346] : memref<4x4x16x32xf32, #tpu.memory_space<vmem>>, vector<1x1x16x32xf32>
    %278 = vector.shape_cast %277 : vector<1x1x16x32xf32> to vector<16x32xf32>
    %cst_347 = arith.constant dense<0.000000e+00> : vector<2x32xf32>
    %279 = tpu.matmul %276, %278, %cst_347 {dimension_numbers = #tpu.dot_dimension_numbers<[1], [0], [0], [1], [0, 0, 1, 1], [], []>} : vector<2x16xf32>, vector<16x32xf32>, vector<2x32xf32> -> vector<2x32xf32>
    %280 = arith.addf %274, %279 : vector<2x32xf32>
    %c0_348 = arith.constant 0 : index
    %c3_349 = arith.constant 3 : index
    %c3_350 = arith.constant 3 : index
    %c0_351 = arith.constant 0 : index
    %281 = vector.load %arg19[%c0_348, %c3_349, %c3_350, %c0_351] : memref<2x4x4x16xf32, #tpu.memory_space<vmem>>, vector<2x1x1x16xf32>
    %282 = vector.shape_cast %281 : vector<2x1x1x16xf32> to vector<2x16xf32>
    %c3_352 = arith.constant 3 : index
    %c3_353 = arith.constant 3 : index
    %c0_354 = arith.constant 0 : index
    %c0_355 = arith.constant 0 : index
    %283 = vector.load %arg10[%c3_352, %c3_353, %c0_354, %c0_355] : memref<4x4x16x32xf32, #tpu.memory_space<vmem>>, vector<1x1x16x32xf32>
    %284 = vector.shape_cast %283 : vector<1x1x16x32xf32> to vector<16x32xf32>
    %cst_356 = arith.constant dense<0.000000e+00> : vector<2x32xf32>
    %285 = tpu.matmul %282, %284, %cst_356 {dimension_numbers = #tpu.dot_dimension_numbers<[1], [0], [0], [1], [0, 0, 1, 1], [], []>} : vector<2x16xf32>, vector<16x32xf32>, vector<2x32xf32> -> vector<2x32xf32>
    %286 = arith.addf %280, %285 : vector<2x32xf32>
    %c0_357 = arith.constant 0 : index
    %c0_358 = arith.constant 0 : index
    %287 = vector.load %arg11[%c0_357, %c0_358] : memref<1x32xf32, #tpu.memory_space<vmem>>, vector<1x32xf32>
    %288 = vector.broadcast %287 : vector<1x32xf32> to vector<2x32xf32>
    %289 = arith.addf %286, %288 : vector<2x32xf32>
    %cst_359 = arith.constant 0.000000e+00 : f32
    %290 = vector.broadcast %cst_359 : f32 to vector<2x32xf32>
    %291 = arith.maximumf %289, %290 : vector<2x32xf32>
    %c0_360 = arith.constant 0 : index
    %c0_361 = arith.constant 0 : index
    %292 = vector.load %arg12[%c0_360, %c0_361] : memref<32x10xf32, #tpu.memory_space<vmem>>, vector<32x10xf32>
    %cst_362 = arith.constant dense<0.000000e+00> : vector<2x10xf32>
    %293 = tpu.matmul %291, %292, %cst_362 {dimension_numbers = #tpu.dot_dimension_numbers<[1], [0], [0], [1], [0, 0, 1, 1], [], []>} : vector<2x32xf32>, vector<32x10xf32>, vector<2x10xf32> -> vector<2x10xf32>
    %c0_363 = arith.constant 0 : index
    %c0_364 = arith.constant 0 : index
    %294 = vector.load %arg13[%c0_363, %c0_364] : memref<1x10xf32, #tpu.memory_space<vmem>>, vector<1x10xf32>
    %295 = vector.broadcast %294 : vector<1x10xf32> to vector<2x10xf32>
    %296 = arith.addf %293, %295 : vector<2x10xf32>
    %c0_365 = arith.constant 0 : index
    %c0_366 = arith.constant 0 : index
    %297 = vector.load %arg14[%c0_365, %c0_366] : memref<2x10xf32, #tpu.memory_space<vmem>>, vector<2x10xf32>
    tpu.vector_store %arg14[%c0_365, %c0_366], %296 {strides = array<i32>} : memref<2x10xf32, #tpu.memory_space<vmem>>, vector<2x10xf32>,
    return
  }
  func.func @transform_0(%arg0: i32) -> (i32, i32, i32, i32) {
    %c0_i32 = arith.constant 0 : i32
    %c0_i32_0 = arith.constant 0 : i32
    %c0_i32_1 = arith.constant 0 : i32
    %c0_i32_2 = arith.constant 0 : i32
    %c0_i32_3 = arith.constant 0 : i32
    return %c0_i32, %c0_i32_0, %c0_i32_1, %c0_i32_2 : i32, i32, i32, i32
  }
  func.func @transform_1(%arg0: i32) -> (i32, i32, i32) {
    %c0_i32 = arith.constant 0 : i32
    %c0_i32_0 = arith.constant 0 : i32
    %c0_i32_1 = arith.constant 0 : i32
    %c0_i32_2 = arith.constant 0 : i32
    return %c0_i32, %c0_i32_0, %c0_i32_1 : i32, i32, i32
  }
  func.func @transform_2(%arg0: i32) -> (i32, i32) {
    %c0_i32 = arith.constant 0 : i32
    %c0_i32_0 = arith.constant 0 : i32
    %c0_i32_1 = arith.constant 0 : i32
    return %c0_i32, %c0_i32_0 : i32, i32
  }
  func.func @transform_3(%arg0: i32) -> (i32, i32) {
    %c0_i32 = arith.constant 0 : i32
    %c0_i32_0 = arith.constant 0 : i32
    %c0_i32_1 = arith.constant 0 : i32
    return %c0_i32, %c0_i32_0 : i32, i32
  }
  func.func @transform_4(%arg0: i32) -> (i32, i32) {
    %c0_i32 = arith.constant 0 : i32
    %c0_i32_0 = arith.constant 0 : i32
    %c0_i32_1 = arith.constant 0 : i32
    return %c0_i32, %c0_i32_0 : i32, i32
  }
  func.func @transform_5(%arg0: i32) -> (i32, i32, i32) {
    %c0_i32 = arith.constant 0 : i32
    %c0_i32_0 = arith.constant 0 : i32
    %c0_i32_1 = arith.constant 0 : i32
    %c0_i32_2 = arith.constant 0 : i32
    return %c0_i32, %c0_i32_0, %c0_i32_1 : i32, i32, i32
  }
  func.func @transform_6(%arg0: i32) -> (i32, i32) {
    %c0_i32 = arith.constant 0 : i32
    %c0_i32_0 = arith.constant 0 : i32
    %c0_i32_1 = arith.constant 0 : i32
    return %c0_i32, %c0_i32_0 : i32, i32
  }
  func.func @transform_7(%arg0: i32) -> (i32, i32) {
    %c0_i32 = arith.constant 0 : i32
    %c0_i32_0 = arith.constant 0 : i32
    %c0_i32_1 = arith.constant 0 : i32
    return %c0_i32, %c0_i32_0 : i32, i32
  }
  func.func @transform_8(%arg0: i32) -> (i32, i32) {
    %c0_i32 = arith.constant 0 : i32
    %c0_i32_0 = arith.constant 0 : i32
    %c0_i32_1 = arith.constant 0 : i32
    return %c0_i32, %c0_i32_0 : i32, i32
  }
  func.func @transform_9(%arg0: i32) -> (i32, i32, i32, i32) {
    %c0_i32 = arith.constant 0 : i32
    %c0_i32_0 = arith.constant 0 : i32
    %c0_i32_1 = arith.constant 0 : i32
    %c0_i32_2 = arith.constant 0 : i32
    %c0_i32_3 = arith.constant 0 : i32
    return %c0_i32, %c0_i32_0, %c0_i32_1, %c0_i32_2 : i32, i32, i32, i32
  }
  func.func @transform_10(%arg0: i32) -> (i32, i32) {
    %c0_i32 = arith.constant 0 : i32
    %c0_i32_0 = arith.constant 0 : i32
    %c0_i32_1 = arith.constant 0 : i32
    return %c0_i32, %c0_i32_0 : i32, i32
  }
  func.func @transform_11(%arg0: i32) -> (i32, i32) {
    %c0_i32 = arith.constant 0 : i32
    %c0_i32_0 = arith.constant 0 : i32
    %c0_i32_1 = arith.constant 0 : i32
    return %c0_i32, %c0_i32_0 : i32, i32
  }
  func.func @transform_12(%arg0: i32) -> (i32, i32) {
    %c0_i32 = arith.constant 0 : i32
    %c0_i32_0 = arith.constant 0 : i32
    %c0_i32_1 = arith.constant 0 : i32
    return %c0_i32, %c0_i32_0 : i32, i32
  }
  func.func @transform_13(%arg0: i32) -> (i32, i32) {
    %c0_i32 = arith.constant 0 : i32
    %c0_i32_0 = arith.constant 0 : i32
    %c0_i32_1 = arith.constant 0 : i32
    return %c0_i32, %c0_i32_0 : i32, i32
  }
}

</mosaic_0001>

<llo_original>
// kernel: cnn_forward.1
$region0: #{cnn_forward.1}
  #allocation0 [shape = 'u32[]', space=smem, size = 0x4, offset = 0x4, fixed_abs, tag = 'smem constant byte address 0x4 - core index']
  #allocation1 [shape = 'u32[144,128]{1,0:T(1,128)}', space=vmem, size = 0x12000, scoped, tag = 'internal scratch']
  #allocation2 [shape = 'f32[2,18,18,4]{3,2,1,0:T(8,128)}', space=vmem, size = 0x6c000, scoped, tag = 'scratch operand']
  #allocation3 [shape = 'f32[2,16,16,8]{3,2,1,0:T(8,128)}', space=vmem, size = 0x40000, scoped, tag = 'scratch operand']
  #allocation4 [shape = 'f32[2,10,10,8]{3,2,1,0:T(8,128)}', space=vmem, size = 0x28000, scoped, tag = 'scratch operand']
  #allocation5 [shape = 'f32[2,8,8,16]{3,2,1,0:T(8,128)}', space=vmem, size = 0x10000, scoped, tag = 'scratch operand']
  #allocation6 [shape = 'f32[2,4,4,16]{3,2,1,0:T(4,128)}', space=vmem, size = 0x4000, scoped, tag = 'scratch operand']
  %s0 = inlined_call_operand.vmem [shape: f32[2,16,16,4], index: 0, kind: input, shape index: {}]
  %s1 = inlined_call_operand.vmem [shape: f32[9,4,8], index: 1, kind: input, shape index: {}]
  %s2 = inlined_call_operand.vmem [shape: f32[1,8], index: 2, kind: input, shape index: {}]
  %s3 = inlined_call_operand.vmem [shape: f32[1,8], index: 3, kind: input, shape index: {}]
  %s4 = inlined_call_operand.vmem [shape: f32[1,8], index: 4, kind: input, shape index: {}]
  %s5 = inlined_call_operand.vmem [shape: f32[9,8,16], index: 5, kind: input, shape index: {}]
  %s6 = inlined_call_operand.vmem [shape: f32[1,16], index: 6, kind: input, shape index: {}]
  %s7 = inlined_call_operand.vmem [shape: f32[1,16], index: 7, kind: input, shape index: {}]
  %s8 = inlined_call_operand.vmem [shape: f32[1,16], index: 8, kind: input, shape index: {}]
  %s9 = inlined_call_operand.vmem [shape: f32[4,4,16,32], index: 9, kind: input, shape index: {}]
  %s10 = inlined_call_operand.vmem [shape: f32[1,32], index: 10, kind: input, shape index: {}]
  %s11 = inlined_call_operand.vmem [shape: f32[32,10], index: 11, kind: input, shape index: {}]
  %s12 = inlined_call_operand.vmem [shape: f32[1,10], index: 12, kind: input, shape index: {}]
  %s13 = inlined_call_operand.hbm [shape: f32[2,10], index: 13, kind: output, shape index: {}]
  %s14 = sld [smem:[#allocation0]]
  $region62: #{cnn_forward.1} parent=0
    _
  %s16 = ssub.s32 1, %s14
  %s17 = scalar_select 0, %s16, %s14
  $region1: #{cnn_forward.1} parent=0
    #allocation7 [shape = 'u8[1024]{0}', space=vmem, size = 0x400, scoped, tag = 'output window, operand 0, single buffered']
    #allocation8 [shape = 's32[1]{0}', space=sflag, size = 0x4, scoped, tag = 'scoped memory for cnn_forward.1']
    %18 = vsyncpa [#allocation8], 0
    // Predicated region
    $region2: #{cnn_forward.1} parent=1 // pred_check
      _
    $region3: #{cnn_forward.1} parent=1 // pred_check_branch
      %20 = sbr.rel (0) target = $region5
    $region4: #{cnn_forward.1} parent=1 // pred_region
      _
    $region5: #{cnn_forward.1} parent=1 // pred_fallthru
      _
    // Predicated region
    $region6: #{cnn_forward.1} parent=1 // pred_check
      _
    $region7: #{cnn_forward.1} parent=1 // pred_check_branch
      %22 = sbr.rel (0) target = $region9
    $region8: #{cnn_forward.1} parent=1 // pred_region
      _
    $region9: #{cnn_forward.1} parent=1 // pred_fallthru
      _
    // Predicated region
    $region10: #{cnn_forward.1} parent=1 // pred_check
      _
    $region11: #{cnn_forward.1} parent=1 // pred_check_branch
      %24 = sbr.rel (0) target = $region13
    $region12: #{cnn_forward.1} parent=1 // pred_region
      _
    $region13: #{cnn_forward.1} parent=1 // pred_fallthru
      _
    // Predicated region
    $region14: #{cnn_forward.1} parent=1 // pred_check
      _
    $region15: #{cnn_forward.1} parent=1 // pred_check_branch
      %26 = sbr.rel (0) target = $region17
    $region16: #{cnn_forward.1} parent=1 // pred_region
      _
    $region17: #{cnn_forward.1} parent=1 // pred_fallthru
      _
    // Predicated region
    $region18: #{cnn_forward.1} parent=1 // pred_check
      _
    $region19: #{cnn_forward.1} parent=1 // pred_check_branch
      %28 = sbr.rel (0) target = $region21
    $region20: #{cnn_forward.1} parent=1 // pred_region
      _
    $region21: #{cnn_forward.1} parent=1 // pred_fallthru
      _
    // Predicated region
    $region22: #{cnn_forward.1} parent=1 // pred_check
      _
    $region23: #{cnn_forward.1} parent=1 // pred_check_branch
      %30 = sbr.rel (0) target = $region25
    $region24: #{cnn_forward.1} parent=1 // pred_region
      _
    $region25: #{cnn_forward.1} parent=1 // pred_fallthru
      _
    // Predicated region
    $region26: #{cnn_forward.1} parent=1 // pred_check
      _
    $region27: #{cnn_forward.1} parent=1 // pred_check_branch
      %32 = sbr.rel (0) target = $region29
    $region28: #{cnn_forward.1} parent=1 // pred_region
      _
    $region29: #{cnn_forward.1} parent=1 // pred_fallthru
      _
    // Predicated region
    $region30: #{cnn_forward.1} parent=1 // pred_check
      _
    $region31: #{cnn_forward.1} parent=1 // pred_check_branch
      %34 = sbr.rel (0) target = $region33
    $region32: #{cnn_forward.1} parent=1 // pred_region
      _
    $region33: #{cnn_forward.1} parent=1 // pred_fallthru
      _
    // Predicated region
    $region34: #{cnn_forward.1} parent=1 // pred_check
      _
    $region35: #{cnn_forward.1} parent=1 // pred_check_branch
      %36 = sbr.rel (0) target = $region37
    $region36: #{cnn_forward.1} parent=1 // pred_region
      _
    $region37: #{cnn_forward.1} parent=1 // pred_fallthru
      _
    // Predicated region
    $region38: #{cnn_forward.1} parent=1 // pred_check
      _
    $region39: #{cnn_forward.1} parent=1 // pred_check_branch
      %38 = sbr.rel (0) target = $region41
    $region40: #{cnn_forward.1} parent=1 // pred_region
      _
    $region41: #{cnn_forward.1} parent=1 // pred_fallthru
      _
    // Predicated region
    $region42: #{cnn_forward.1} parent=1 // pred_check
      _
    $region43: #{cnn_forward.1} parent=1 // pred_check_branch
      %40 = sbr.rel (0) target = $region45
    $region44: #{cnn_forward.1} parent=1 // pred_region
      _
    $region45: #{cnn_forward.1} parent=1 // pred_fallthru
      _
    // Predicated region
    $region46: #{cnn_forward.1} parent=1 // pred_check
      _
    $region47: #{cnn_forward.1} parent=1 // pred_check_branch
      %42 = sbr.rel (0) target = $region49
    $region48: #{cnn_forward.1} parent=1 // pred_region
      _
    $region49: #{cnn_forward.1} parent=1 // pred_fallthru
      _
    // Predicated region
    $region50: #{cnn_forward.1} parent=1 // pred_check
      _
    $region51: #{cnn_forward.1} parent=1 // pred_check_branch
      %44 = sbr.rel (0) target = $region53
    $region52: #{cnn_forward.1} parent=1 // pred_region
      _
    $region53: #{cnn_forward.1} parent=1 // pred_fallthru
      _
    %v45 = vld [vmem:[%s0] sm:$0xff]
    %v46 = vld [vmem:[%s0 + $0x8] sm:$0xff]
    %v47 = vld [vmem:[%s0 + $0x10] sm:$0xff]
    %v48 = vld [vmem:[%s0 + $0x18] sm:$0xff]
    %v49 = vld [vmem:[%s0 + $0x20] sm:$0xff]
    %v50 = vld [vmem:[%s0 + $0x28] sm:$0xff]
    %v51 = vld [vmem:[%s0 + $0x30] sm:$0xff]
    %v52 = vld [vmem:[%s0 + $0x38] sm:$0xff]
    %v53 = vld [vmem:[%s0 + $0x40] sm:$0xff]
    %v54 = vld [vmem:[%s0 + $0x48] sm:$0xff]
    %v55 = vld [vmem:[%s0 + $0x50] sm:$0xff]
    %v56 = vld [vmem:[%s0 + $0x58] sm:$0xff]
    %v57 = vld [vmem:[%s0 + $0x60] sm:$0xff]
    %v58 = vld [vmem:[%s0 + $0x68] sm:$0xff]
    %v59 = vld [vmem:[%s0 + $0x70] sm:$0xff]
    %v60 = vld [vmem:[%s0 + $0x78] sm:$0xff]
    %v61 = vld [vmem:[%s0 + $0x80] sm:$0xff]
    %v62 = vld [vmem:[%s0 + $0x88] sm:$0xff]
    %v63 = vld [vmem:[%s0 + $0x90] sm:$0xff]
    %v64 = vld [vmem:[%s0 + $0x98] sm:$0xff]
    %v65 = vld [vmem:[%s0 + $0xa0] sm:$0xff]
    %v66 = vld [vmem:[%s0 + $0xa8] sm:$0xff]
    %v67 = vld [vmem:[%s0 + $0xb0] sm:$0xff]
    %v68 = vld [vmem:[%s0 + $0xb8] sm:$0xff]
    %v69 = vld [vmem:[%s0 + $0xc0] sm:$0xff]
    %v70 = vld [vmem:[%s0 + $0xc8] sm:$0xff]
    %v71 = vld [vmem:[%s0 + $0xd0] sm:$0xff]
    %v72 = vld [vmem:[%s0 + $0xd8] sm:$0xff]
    %v73 = vld [vmem:[%s0 + $0xe0] sm:$0xff]
    %v74 = vld [vmem:[%s0 + $0xe8] sm:$0xff]
    %v75 = vld [vmem:[%s0 + $0xf0] sm:$0xff]
    %v76 = vld [vmem:[%s0 + $0xf8] sm:$0xff]
    %v77 = vld [vmem:[%s0 + $0x100] sm:$0xff]
    %v78 = vld [vmem:[%s0 + $0x108] sm:$0xff]
    %v79 = vld [vmem:[%s0 + $0x110] sm:$0xff]
    %v80 = vld [vmem:[%s0 + $0x118] sm:$0xff]
    %v81 = vld [vmem:[%s0 + $0x120] sm:$0xff]
    %v82 = vld [vmem:[%s0 + $0x128] sm:$0xff]
    %v83 = vld [vmem:[%s0 + $0x130] sm:$0xff]
    %v84 = vld [vmem:[%s0 + $0x138] sm:$0xff]
    %v85 = vld [vmem:[%s0 + $0x140] sm:$0xff]
    %v86 = vld [vmem:[%s0 + $0x148] sm:$0xff]
    %v87 = vld [vmem:[%s0 + $0x150] sm:$0xff]
    %v88 = vld [vmem:[%s0 + $0x158] sm:$0xff]
    %v89 = vld [vmem:[%s0 + $0x160] sm:$0xff]
    %v90 = vld [vmem:[%s0 + $0x168] sm:$0xff]
    %v91 = vld [vmem:[%s0 + $0x170] sm:$0xff]
    %v92 = vld [vmem:[%s0 + $0x178] sm:$0xff]
    %v93 = vld [vmem:[%s0 + $0x180] sm:$0xff]
    %v94 = vld [vmem:[%s0 + $0x188] sm:$0xff]
    %v95 = vld [vmem:[%s0 + $0x190] sm:$0xff]
    %v96 = vld [vmem:[%s0 + $0x198] sm:$0xff]
    %v97 = vld [vmem:[%s0 + $0x1a0] sm:$0xff]
    %v98 = vld [vmem:[%s0 + $0x1a8] sm:$0xff]
    %v99 = vld [vmem:[%s0 + $0x1b0] sm:$0xff]
    %v100 = vld [vmem:[%s0 + $0x1b8] sm:$0xff]
    %v101 = vld [vmem:[%s0 + $0x1c0] sm:$0xff]
    %v102 = vld [vmem:[%s0 + $0x1c8] sm:$0xff]
    %v103 = vld [vmem:[%s0 + $0x1d0] sm:$0xff]
    %v104 = vld [vmem:[%s0 + $0x1d8] sm:$0xff]
    %v105 = vld [vmem:[%s0 + $0x1e0] sm:$0xff]
    %v106 = vld [vmem:[%s0 + $0x1e8] sm:$0xff]
    %v107 = vld [vmem:[%s0 + $0x1f0] sm:$0xff]
    %v108 = vld [vmem:[%s0 + $0x1f8] sm:$0xff]
    %vm109 = vcmask 31744
    %110 = vst.msk [vmem:[#allocation2] sm:$0xff] %vm109, 0.0
    %111 = vst.msk [vmem:[#allocation2 + $0x8] sm:$0xff] %vm109, 0.0
    %vm112 = vcmask 25600
    %113 = vst.msk [vmem:[#allocation2 + $0x10] sm:$0x3] %vm112, 0.0
    %114 = vst.msk [vmem:[#allocation2 + $0x18] sm:$0xff] %vm109, 0.0
    %115 = vst.msk [vmem:[#allocation2 + $0x20] sm:$0xff] %vm109, 0.0
    %116 = vst.msk [vmem:[#allocation2 + $0x28] sm:$0x3] %vm112, 0.0
    %117 = vst.msk [vmem:[#allocation2 + $0x30] sm:$0xff] %vm109, 0.0
    %118 = vst.msk [vmem:[#allocation2 + $0x38] sm:$0xff] %vm109, 0.0
    %119 = vst.msk [vmem:[#allocation2 + $0x40] sm:$0x3] %vm112, 0.0
    %120 = vst.msk [vmem:[#allocation2 + $0x48] sm:$0xff] %vm109, 0.0
    %121 = vst.msk [vmem:[#allocation2 + $0x50] sm:$0xff] %vm109, 0.0
    %122 = vst.msk [vmem:[#allocation2 + $0x58] sm:$0x3] %vm112, 0.0
    %123 = vst.msk [vmem:[#allocation2 + $0x60] sm:$0xff] %vm109, 0.0
    %124 = vst.msk [vmem:[#allocation2 + $0x68] sm:$0xff] %vm109, 0.0
    %125 = vst.msk [vmem:[#allocation2 + $0x70] sm:$0x3] %vm112, 0.0
    %126 = vst.msk [vmem:[#allocation2 + $0x78] sm:$0xff] %vm109, 0.0
    %127 = vst.msk [vmem:[#allocation2 + $0x80] sm:$0xff] %vm109, 0.0
    %128 = vst.msk [vmem:[#allocation2 + $0x88] sm:$0x3] %vm112, 0.0
    %129 = vst.msk [vmem:[#allocation2 + $0x90] sm:$0xff] %vm109, 0.0
    %130 = vst.msk [vmem:[#allocation2 + $0x98] sm:$0xff] %vm109, 0.0
    %131 = vst.msk [vmem:[#allocation2 + $0xa0] sm:$0x3] %vm112, 0.0
    %132 = vst.msk [vmem:[#allocation2 + $0xa8] sm:$0xff] %vm109, 0.0
    %133 = vst.msk [vmem:[#allocation2 + $0xb0] sm:$0xff] %vm109, 0.0
    %134 = vst.msk [vmem:[#allocation2 + $0xb8] sm:$0x3] %vm112, 0.0
    %135 = vst.msk [vmem:[#allocation2 + $0xc0] sm:$0xff] %vm109, 0.0
    %136 = vst.msk [vmem:[#allocation2 + $0xc8] sm:$0xff] %vm109, 0.0
    %137 = vst.msk [vmem:[#allocation2 + $0xd0] sm:$0x3] %vm112, 0.0
    %138 = vst.msk [vmem:[#allocation2 + $0xd8] sm:$0xff] %vm109, 0.0
    %139 = vst.msk [vmem:[#allocation2 + $0xe0] sm:$0xff] %vm109, 0.0
    %140 = vst.msk [vmem:[#allocation2 + $0xe8] sm:$0x3] %vm112, 0.0
    %141 = vst.msk [vmem:[#allocation2 + $0xf0] sm:$0xff] %vm109, 0.0
    %142 = vst.msk [vmem:[#allocation2 + $0xf8] sm:$0xff] %vm109, 0.0
    %143 = vst.msk [vmem:[#allocation2 + $0x100] sm:$0x3] %vm112, 0.0
    %144 = vst.msk [vmem:[#allocation2 + $0x108] sm:$0xff] %vm109, 0.0
    %145 = vst.msk [vmem:[#allocation2 + $0x110] sm:$0xff] %vm109, 0.0
    %146 = vst.msk [vmem:[#allocation2 + $0x118] sm:$0x3] %vm112, 0.0
    %147 = vst.msk [vmem:[#allocation2 + $0x120] sm:$0xff] %vm109, 0.0
    %148 = vst.msk [vmem:[#allocation2 + $0x128] sm:$0xff] %vm109, 0.0
    %149 = vst.msk [vmem:[#allocation2 + $0x130] sm:$0x3] %vm112, 0.0
    %150 = vst.msk [vmem:[#allocation2 + $0x138] sm:$0xff] %vm109, 0.0
    %151 = vst.msk [vmem:[#allocation2 + $0x140] sm:$0xff] %vm109, 0.0
    %152 = vst.msk [vmem:[#allocation2 + $0x148] sm:$0x3] %vm112, 0.0
    %153 = vst.msk [vmem:[#allocation2 + $0x150] sm:$0xff] %vm109, 0.0
    %154 = vst.msk [vmem:[#allocation2 + $0x158] sm:$0xff] %vm109, 0.0
    %155 = vst.msk [vmem:[#allocation2 + $0x160] sm:$0x3] %vm112, 0.0
    %156 = vst.msk [vmem:[#allocation2 + $0x168] sm:$0xff] %vm109, 0.0
    %157 = vst.msk [vmem:[#allocation2 + $0x170] sm:$0xff] %vm109, 0.0
    %158 = vst.msk [vmem:[#allocation2 + $0x178] sm:$0x3] %vm112, 0.0
    %159 = vst.msk [vmem:[#allocation2 + $0x180] sm:$0xff] %vm109, 0.0
    %160 = vst.msk [vmem:[#allocation2 + $0x188] sm:$0xff] %vm109, 0.0
    %161 = vst.msk [vmem:[#allocation2 + $0x190] sm:$0x3] %vm112, 0.0
    %162 = vst.msk [vmem:[#allocation2 + $0x198] sm:$0xff] %vm109, 0.0
    %163 = vst.msk [vmem:[#allocation2 + $0x1a0] sm:$0xff] %vm109, 0.0
    %164 = vst.msk [vmem:[#allocation2 + $0x1a8] sm:$0x3] %vm112, 0.0
    %165 = vst.msk [vmem:[#allocation2 + $0x1b0] sm:$0xff] %vm109, 0.0
    %166 = vst.msk [vmem:[#allocation2 + $0x1b8] sm:$0xff] %vm109, 0.0
    %167 = vst.msk [vmem:[#allocation2 + $0x1c0] sm:$0x3] %vm112, 0.0
    %168 = vst.msk [vmem:[#allocation2 + $0x1c8] sm:$0xff] %vm109, 0.0
    %169 = vst.msk [vmem:[#allocation2 + $0x1d0] sm:$0xff] %vm109, 0.0
    %170 = vst.msk [vmem:[#allocation2 + $0x1d8] sm:$0x3] %vm112, 0.0
    %171 = vst.msk [vmem:[#allocation2 + $0x1e0] sm:$0xff] %vm109, 0.0
    %172 = vst.msk [vmem:[#allocation2 + $0x1e8] sm:$0xff] %vm109, 0.0
    %173 = vst.msk [vmem:[#allocation2 + $0x1f0] sm:$0x3] %vm112, 0.0
    %174 = vst.msk [vmem:[#allocation2 + $0x1f8] sm:$0xff] %vm109, 0.0
    %175 = vst.msk [vmem:[#allocation2 + $0x200] sm:$0xff] %vm109, 0.0
    %176 = vst.msk [vmem:[#allocation2 + $0x208] sm:$0x3] %vm112, 0.0
    %177 = vst.msk [vmem:[#allocation2 + $0x210] sm:$0xff] %vm109, 0.0
    %178 = vst.msk [vmem:[#allocation2 + $0x218] sm:$0xff] %vm109, 0.0
    %179 = vst.msk [vmem:[#allocation2 + $0x220] sm:$0x3] %vm112, 0.0
    %180 = vst.msk [vmem:[#allocation2 + $0x228] sm:$0xff] %vm109, 0.0
    %181 = vst.msk [vmem:[#allocation2 + $0x230] sm:$0xff] %vm109, 0.0
    %182 = vst.msk [vmem:[#allocation2 + $0x238] sm:$0x3] %vm112, 0.0
    %183 = vst.msk [vmem:[#allocation2 + $0x240] sm:$0xff] %vm109, 0.0
    %184 = vst.msk [vmem:[#allocation2 + $0x248] sm:$0xff] %vm109, 0.0
    %185 = vst.msk [vmem:[#allocation2 + $0x250] sm:$0x3] %vm112, 0.0
    %186 = vst.msk [vmem:[#allocation2 + $0x258] sm:$0xff] %vm109, 0.0
    %187 = vst.msk [vmem:[#allocation2 + $0x260] sm:$0xff] %vm109, 0.0
    %188 = vst.msk [vmem:[#allocation2 + $0x268] sm:$0x3] %vm112, 0.0
    %189 = vst.msk [vmem:[#allocation2 + $0x270] sm:$0xff] %vm109, 0.0
    %190 = vst.msk [vmem:[#allocation2 + $0x278] sm:$0xff] %vm109, 0.0
    %191 = vst.msk [vmem:[#allocation2 + $0x280] sm:$0x3] %vm112, 0.0
    %192 = vst.msk [vmem:[#allocation2 + $0x288] sm:$0xff] %vm109, 0.0
    %193 = vst.msk [vmem:[#allocation2 + $0x290] sm:$0xff] %vm109, 0.0
    %194 = vst.msk [vmem:[#allocation2 + $0x298] sm:$0x3] %vm112, 0.0
    %195 = vst.msk [vmem:[#allocation2 + $0x2a0] sm:$0xff] %vm109, 0.0
    %196 = vst.msk [vmem:[#allocation2 + $0x2a8] sm:$0xff] %vm109, 0.0
    %197 = vst.msk [vmem:[#allocation2 + $0x2b0] sm:$0x3] %vm112, 0.0
    %198 = vst.msk [vmem:[#allocation2 + $0x2b8] sm:$0xff] %vm109, 0.0
    %199 = vst.msk [vmem:[#allocation2 + $0x2c0] sm:$0xff] %vm109, 0.0
    %200 = vst.msk [vmem:[#allocation2 + $0x2c8] sm:$0x3] %vm112, 0.0
    %201 = vst.msk [vmem:[#allocation2 + $0x2d0] sm:$0xff] %vm109, 0.0
    %202 = vst.msk [vmem:[#allocation2 + $0x2d8] sm:$0xff] %vm109, 0.0
    %203 = vst.msk [vmem:[#allocation2 + $0x2e0] sm:$0x3] %vm112, 0.0
    %204 = vst.msk [vmem:[#allocation2 + $0x2e8] sm:$0xff] %vm109, 0.0
    %205 = vst.msk [vmem:[#allocation2 + $0x2f0] sm:$0xff] %vm109, 0.0
    %206 = vst.msk [vmem:[#allocation2 + $0x2f8] sm:$0x3] %vm112, 0.0
    %207 = vst.msk [vmem:[#allocation2 + $0x300] sm:$0xff] %vm109, 0.0
    %208 = vst.msk [vmem:[#allocation2 + $0x308] sm:$0xff] %vm109, 0.0
    %209 = vst.msk [vmem:[#allocation2 + $0x310] sm:$0x3] %vm112, 0.0
    %210 = vst.msk [vmem:[#allocation2 + $0x318] sm:$0xff] %vm109, 0.0
    %211 = vst.msk [vmem:[#allocation2 + $0x320] sm:$0xff] %vm109, 0.0
    %212 = vst.msk [vmem:[#allocation2 + $0x328] sm:$0x3] %vm112, 0.0
    %213 = vst.msk [vmem:[#allocation2 + $0x330] sm:$0xff] %vm109, 0.0
    %214 = vst.msk [vmem:[#allocation2 + $0x338] sm:$0xff] %vm109, 0.0
    %215 = vst.msk [vmem:[#allocation2 + $0x340] sm:$0x3] %vm112, 0.0
    %216 = vst.msk [vmem:[#allocation2 + $0x348] sm:$0xff] %vm109, 0.0
    %217 = vst.msk [vmem:[#allocation2 + $0x350] sm:$0xff] %vm109, 0.0
    %218 = vst.msk [vmem:[#allocation2 + $0x358] sm:$0x3] %vm112, 0.0
    %s219 = scalar_lea.vmem [#allocation2], 24
    %220 = vst.msk [vmem:[%s219 + $0x1] sm:$0xff] %vm109, %v45
    %221 = vst.msk [vmem:[%s219 + $0x9] sm:$0xff] %vm109, %v46
    %222 = vst.msk [vmem:[%s219 + $0x19] sm:$0xff] %vm109, %v47
    %223 = vst.msk [vmem:[%s219 + $0x21] sm:$0xff] %vm109, %v48
    %224 = vst.msk [vmem:[%s219 + $0x31] sm:$0xff] %vm109, %v49
    %225 = vst.msk [vmem:[%s219 + $0x39] sm:$0xff] %vm109, %v50
    %226 = vst.msk [vmem:[%s219 + $0x49] sm:$0xff] %vm109, %v51
    %227 = vst.msk [vmem:[%s219 + $0x51] sm:$0xff] %vm109, %v52
    %228 = vst.msk [vmem:[%s219 + $0x61] sm:$0xff] %vm109, %v53
    %229 = vst.msk [vmem:[%s219 + $0x69] sm:$0xff] %vm109, %v54
    %230 = vst.msk [vmem:[%s219 + $0x79] sm:$0xff] %vm109, %v55
    %231 = vst.msk [vmem:[%s219 + $0x81] sm:$0xff] %vm109, %v56
    %232 = vst.msk [vmem:[%s219 + $0x91] sm:$0xff] %vm109, %v57
    %233 = vst.msk [vmem:[%s219 + $0x99] sm:$0xff] %vm109, %v58
    %234 = vst.msk [vmem:[%s219 + $0xa9] sm:$0xff] %vm109, %v59
    %235 = vst.msk [vmem:[%s219 + $0xb1] sm:$0xff] %vm109, %v60
    %236 = vst.msk [vmem:[%s219 + $0xc1] sm:$0xff] %vm109, %v61
    %237 = vst.msk [vmem:[%s219 + $0xc9] sm:$0xff] %vm109, %v62
    %238 = vst.msk [vmem:[%s219 + $0xd9] sm:$0xff] %vm109, %v63
    %239 = vst.msk [vmem:[%s219 + $0xe1] sm:$0xff] %vm109, %v64
    %240 = vst.msk [vmem:[%s219 + $0xf1] sm:$0xff] %vm109, %v65
    %241 = vst.msk [vmem:[%s219 + $0xf9] sm:$0xff] %vm109, %v66
    %242 = vst.msk [vmem:[%s219 + $0x109] sm:$0xff] %vm109, %v67
    %243 = vst.msk [vmem:[%s219 + $0x111] sm:$0xff] %vm109, %v68
    %244 = vst.msk [vmem:[%s219 + $0x121] sm:$0xff] %vm109, %v69
    %245 = vst.msk [vmem:[%s219 + $0x129] sm:$0xff] %vm109, %v70
    %246 = vst.msk [vmem:[%s219 + $0x139] sm:$0xff] %vm109, %v71
    %247 = vst.msk [vmem:[%s219 + $0x141] sm:$0xff] %vm109, %v72
    %248 = vst.msk [vmem:[%s219 + $0x151] sm:$0xff] %vm109, %v73
    %249 = vst.msk [vmem:[%s219 + $0x159] sm:$0xff] %vm109, %v74
    %250 = vst.msk [vmem:[%s219 + $0x169] sm:$0xff] %vm109, %v75
    %251 = vst.msk [vmem:[%s219 + $0x171] sm:$0xff] %vm109, %v76
    %252 = vst.msk [vmem:[%s219 + $0x1b1] sm:$0xff] %vm109, %v77
    %253 = vst.msk [vmem:[%s219 + $0x1b9] sm:$0xff] %vm109, %v78
    %254 = vst.msk [vmem:[%s219 + $0x1c9] sm:$0xff] %vm109, %v79
    %255 = vst.msk [vmem:[%s219 + $0x1d1] sm:$0xff] %vm109, %v80
    %256 = vst.msk [vmem:[%s219 + $0x1e1] sm:$0xff] %vm109, %v81
    %257 = vst.msk [vmem:[%s219 + $0x1e9] sm:$0xff] %vm109, %v82
    %258 = vst.msk [vmem:[%s219 + $0x1f9] sm:$0xff] %vm109, %v83
    %259 = vst.msk [vmem:[%s219 + $0x201] sm:$0xff] %vm109, %v84
    %260 = vst.msk [vmem:[%s219 + $0x211] sm:$0xff] %vm109, %v85
    %261 = vst.msk [vmem:[%s219 + $0x219] sm:$0xff] %vm109, %v86
    %262 = vst.msk [vmem:[%s219 + $0x229] sm:$0xff] %vm109, %v87
    %263 = vst.msk [vmem:[%s219 + $0x231] sm:$0xff] %vm109, %v88
    %264 = vst.msk [vmem:[%s219 + $0x241] sm:$0xff] %vm109, %v89
    %265 = vst.msk [vmem:[%s219 + $0x249] sm:$0xff] %vm109, %v90
    %266 = vst.msk [vmem:[%s219 + $0x259] sm:$0xff] %vm109, %v91
    %267 = vst.msk [vmem:[%s219 + $0x261] sm:$0xff] %vm109, %v92
    %268 = vst.msk [vmem:[%s219 + $0x271] sm:$0xff] %vm109, %v93
    %269 = vst.msk [vmem:[%s219 + $0x279] sm:$0xff] %vm109, %v94
    %270 = vst.msk [vmem:[%s219 + $0x289] sm:$0xff] %vm109, %v95
    %271 = vst.msk [vmem:[%s219 + $0x291] sm:$0xff] %vm109, %v96
    %272 = vst.msk [vmem:[%s219 + $0x2a1] sm:$0xff] %vm109, %v97
    %273 = vst.msk [vmem:[%s219 + $0x2a9] sm:$0xff] %vm109, %v98
    %274 = vst.msk [vmem:[%s219 + $0x2b9] sm:$0xff] %vm109, %v99
    %275 = vst.msk [vmem:[%s219 + $0x2c1] sm:$0xff] %vm109, %v100
    %276 = vst.msk [vmem:[%s219 + $0x2d1] sm:$0xff] %vm109, %v101
    %277 = vst.msk [vmem:[%s219 + $0x2d9] sm:$0xff] %vm109, %v102
    %278 = vst.msk [vmem:[%s219 + $0x2e9] sm:$0xff] %vm109, %v103
    %279 = vst.msk [vmem:[%s219 + $0x2f1] sm:$0xff] %vm109, %v104
    %280 = vst.msk [vmem:[%s219 + $0x301] sm:$0xff] %vm109, %v105
    %281 = vst.msk [vmem:[%s219 + $0x309] sm:$0xff] %vm109, %v106
    %282 = vst.msk [vmem:[%s219 + $0x319] sm:$0xff] %vm109, %v107
    %283 = vst.msk [vmem:[%s219 + $0x321] sm:$0xff] %vm109, %v108
    %v284 = vld [vmem:[#allocation2] sm:$0xff]
    %v285 = vld [vmem:[#allocation2 + $0x8] sm:$0xff]
    %v286 = vld [vmem:[#allocation2 + $0x18] sm:$0xff]
    %v287 = vld [vmem:[#allocation2 + $0x20] sm:$0xff]
    %v288 = vld [vmem:[#allocation2 + $0x30] sm:$0xff]
    %v289 = vld [vmem:[#allocation2 + $0x38] sm:$0xff]
    %v290 = vld [vmem:[#allocation2 + $0x48] sm:$0xff]
    %v291 = vld [vmem:[#allocation2 + $0x50] sm:$0xff]
    %v292 = vld [vmem:[#allocation2 + $0x60] sm:$0xff]
    %v293 = vld [vmem:[#allocation2 + $0x68] sm:$0xff]
    %v294 = vld [vmem:[#allocation2 + $0x78] sm:$0xff]
    %v295 = vld [vmem:[#allocation2 + $0x80] sm:$0xff]
    %v296 = vld [vmem:[#allocation2 + $0x90] sm:$0xff]
    %v297 = vld [vmem:[#allocation2 + $0x98] sm:$0xff]
    %v298 = vld [vmem:[#allocation2 + $0xa8] sm:$0xff]
    %v299 = vld [vmem:[#allocation2 + $0xb0] sm:$0xff]
    %v300 = vld [vmem:[#allocation2 + $0xc0] sm:$0xff]
    %v301 = vld [vmem:[#allocation2 + $0xc8] sm:$0xff]
    %v302 = vld [vmem:[#allocation2 + $0xd8] sm:$0xff]
    %v303 = vld [vmem:[#allocation2 + $0xe0] sm:$0xff]
    %v304 = vld [vmem:[#allocation2 + $0xf0] sm:$0xff]
    %v305 = vld [vmem:[#allocation2 + $0xf8] sm:$0xff]
    %v306 = vld [vmem:[#allocation2 + $0x108] sm:$0xff]
    %v307 = vld [vmem:[#allocation2 + $0x110] sm:$0xff]
    %v308 = vld [vmem:[#allocation2 + $0x120] sm:$0xff]
    %v309 = vld [vmem:[#allocation2 + $0x128] sm:$0xff]
    %v310 = vld [vmem:[#allocation2 + $0x138] sm:$0xff]
    %v311 = vld [vmem:[#allocation2 + $0x140] sm:$0xff]
    %v312 = vld [vmem:[#allocation2 + $0x150] sm:$0xff]
    %v313 = vld [vmem:[#allocation2 + $0x158] sm:$0xff]
    %v314 = vld [vmem:[#allocation2 + $0x168] sm:$0xff]
    %v315 = vld [vmem:[#allocation2 + $0x170] sm:$0xff]
    %v316 = vld [vmem:[#allocation2 + $0x1b0] sm:$0xff]
    %v317 = vld [vmem:[#allocation2 + $0x1b8] sm:$0xff]
    %v318 = vld [vmem:[#allocation2 + $0x1c8] sm:$0xff]
    %v319 = vld [vmem:[#allocation2 + $0x1d0] sm:$0xff]
    %v320 = vld [vmem:[#allocation2 + $0x1e0] sm:$0xff]
    %v321 = vld [vmem:[#allocation2 + $0x1e8] sm:$0xff]
    %v322 = vld [vmem:[#allocation2 + $0x1f8] sm:$0xff]
    %v323 = vld [vmem:[#allocation2 + $0x200] sm:$0xff]
    %v324 = vld [vmem:[#allocation2 + $0x210] sm:$0xff]
    %v325 = vld [vmem:[#allocation2 + $0x218] sm:$0xff]
    %v326 = vld [vmem:[#allocation2 + $0x228] sm:$0xff]
    %v327 = vld [vmem:[#allocation2 + $0x230] sm:$0xff]
    %v328 = vld [vmem:[#allocation2 + $0x240] sm:$0xff]
    %v329 = vld [vmem:[#allocation2 + $0x248] sm:$0xff]
    %v330 = vld [vmem:[#allocation2 + $0x258] sm:$0xff]
    %v331 = vld [vmem:[#allocation2 + $0x260] sm:$0xff]
    %v332 = vld [vmem:[#allocation2 + $0x270] sm:$0xff]
    %v333 = vld [vmem:[#allocation2 + $0x278] sm:$0xff]
    %v334 = vld [vmem:[#allocation2 + $0x288] sm:$0xff]
    %v335 = vld [vmem:[#allocation2 + $0x290] sm:$0xff]
    %v336 = vld [vmem:[#allocation2 + $0x2a0] sm:$0xff]
    %v337 = vld [vmem:[#allocation2 + $0x2a8] sm:$0xff]
    %v338 = vld [vmem:[#allocation2 + $0x2b8] sm:$0xff]
    %v339 = vld [vmem:[#allocation2 + $0x2c0] sm:$0xff]
    %v340 = vld [vmem:[#allocation2 + $0x2d0] sm:$0xff]
    %v341 = vld [vmem:[#allocation2 + $0x2d8] sm:$0xff]
    %v342 = vld [vmem:[#allocation2 + $0x2e8] sm:$0xff]
    %v343 = vld [vmem:[#allocation2 + $0x2f0] sm:$0xff]
    %v344 = vld [vmem:[#allocation2 + $0x300] sm:$0xff]
    %v345 = vld [vmem:[#allocation2 + $0x308] sm:$0xff]
    %v346 = vld [vmem:[#allocation2 + $0x318] sm:$0xff]
    %v347 = vld [vmem:[#allocation2 + $0x320] sm:$0xff]
    %v348 = vld [vmem:[%s1] sm:$0xf]
    %v349 = vld [vmem:[#allocation2 + $0x1] sm:$0xff]
    %v350 = vld [vmem:[#allocation2 + $0x9] sm:$0xff]
    %v351 = vld [vmem:[#allocation2 + $0x19] sm:$0xff]
    %v352 = vld [vmem:[#allocation2 + $0x21] sm:$0xff]
    %v353 = vld [vmem:[#allocation2 + $0x31] sm:$0xff]
    %v354 = vld [vmem:[#allocation2 + $0x39] sm:$0xff]
    %v355 = vld [vmem:[#allocation2 + $0x49] sm:$0xff]
    %v356 = vld [vmem:[#allocation2 + $0x51] sm:$0xff]
    %v357 = vld [vmem:[#allocation2 + $0x61] sm:$0xff]
    %v358 = vld [vmem:[#allocation2 + $0x69] sm:$0xff]
    %v359 = vld [vmem:[#allocation2 + $0x79] sm:$0xff]
    %v360 = vld [vmem:[#allocation2 + $0x81] sm:$0xff]
    %v361 = vld [vmem:[#allocation2 + $0x91] sm:$0xff]
    %v362 = vld [vmem:[#allocation2 + $0x99] sm:$0xff]
    %v363 = vld [vmem:[#allocation2 + $0xa9] sm:$0xff]
    %v364 = vld [vmem:[#allocation2 + $0xb1] sm:$0xff]
    %v365 = vld [vmem:[#allocation2 + $0xc1] sm:$0xff]
    %v366 = vld [vmem:[#allocation2 + $0xc9] sm:$0xff]
    %v367 = vld [vmem:[#allocation2 + $0xd9] sm:$0xff]
    %v368 = vld [vmem:[#allocation2 + $0xe1] sm:$0xff]
    %v369 = vld [vmem:[#allocation2 + $0xf1] sm:$0xff]
    %v370 = vld [vmem:[#allocation2 + $0xf9] sm:$0xff]
    %v371 = vld [vmem:[#allocation2 + $0x109] sm:$0xff]
    %v372 = vld [vmem:[#allocation2 + $0x111] sm:$0xff]
    %v373 = vld [vmem:[#allocation2 + $0x121] sm:$0xff]
    %v374 = vld [vmem:[#allocation2 + $0x129] sm:$0xff]
    %v375 = vld [vmem:[#allocation2 + $0x139] sm:$0xff]
    %v376 = vld [vmem:[#allocation2 + $0x141] sm:$0xff]
    %v377 = vld [vmem:[#allocation2 + $0x151] sm:$0xff]
    %v378 = vld [vmem:[#allocation2 + $0x159] sm:$0xff]
    %v379 = vld [vmem:[#allocation2 + $0x169] sm:$0xff]
    %v380 = vld [vmem:[#allocation2 + $0x171] sm:$0xff]
    %v381 = vld [vmem:[#allocation2 + $0x1b1] sm:$0xff]
    %v382 = vld [vmem:[#allocation2 + $0x1b9] sm:$0xff]
    %v383 = vld [vmem:[#allocation2 + $0x1c9] sm:$0xff]
    %v384 = vld [vmem:[#allocation2 + $0x1d1] sm:$0xff]
    %v385 = vld [vmem:[#allocation2 + $0x1e1] sm:$0xff]
    %v386 = vld [vmem:[#allocation2 + $0x1e9] sm:$0xff]
    %v387 = vld [vmem:[#allocation2 + $0x1f9] sm:$0xff]
    %v388 = vld [vmem:[#allocation2 + $0x201] sm:$0xff]
    %v389 = vld [vmem:[#allocation2 + $0x211] sm:$0xff]
    %v390 = vld [vmem:[#allocation2 + $0x219] sm:$0xff]
    %v391 = vld [vmem:[#allocation2 + $0x229] sm:$0xff]
    %v392 = vld [vmem:[#allocation2 + $0x231] sm:$0xff]
    %v393 = vld [vmem:[#allocation2 + $0x241] sm:$0xff]
    %v394 = vld [vmem:[#allocation2 + $0x249] sm:$0xff]
    %v395 = vld [vmem:[#allocation2 + $0x259] sm:$0xff]
    %v396 = vld [vmem:[#allocation2 + $0x261] sm:$0xff]
    %v397 = vld [vmem:[#allocation2 + $0x271] sm:$0xff]
    %v398 = vld [vmem:[#allocation2 + $0x279] sm:$0xff]
    %v399 = vld [vmem:[#allocation2 + $0x289] sm:$0xff]
    %v400 = vld [vmem:[#allocation2 + $0x291] sm:$0xff]
    %v401 = vld [vmem:[#allocation2 + $0x2a1] sm:$0xff]
    %v402 = vld [vmem:[#allocation2 + $0x2a9] sm:$0xff]
    %v403 = vld [vmem:[#allocation2 + $0x2b9] sm:$0xff]
    %v404 = vld [vmem:[#allocation2 + $0x2c1] sm:$0xff]
    %v405 = vld [vmem:[#allocation2 + $0x2d1] sm:$0xff]
    %v406 = vld [vmem:[#allocation2 + $0x2d9] sm:$0xff]
    %v407 = vld [vmem:[#allocation2 + $0x2e9] sm:$0xff]
    %v408 = vld [vmem:[#allocation2 + $0x2f1] sm:$0xff]
    %v409 = vld [vmem:[#allocation2 + $0x301] sm:$0xff]
    %v410 = vld [vmem:[#allocation2 + $0x309] sm:$0xff]
    %v411 = vld [vmem:[#allocation2 + $0x319] sm:$0xff]
    %v412 = vld [vmem:[#allocation2 + $0x321] sm:$0xff]
    %s413 = scalar_lea.vmem %s1, 4
    %v414 = vld [vmem:[%s413] sm:$0xf]
    %v416 = vsel %vm109, %v349, 0
    %v419 = vsel %vm109, %v350, 0
    %v422 = vsel %vm109, %v351, 0
    %v425 = vsel %vm109, %v352, 0
    %v428 = vsel %vm109, %v353, 0
    %v431 = vsel %vm109, %v354, 0
    %v434 = vsel %vm109, %v355, 0
    %v437 = vsel %vm109, %v356, 0
    %v440 = vsel %vm109, %v357, 0
    %v443 = vsel %vm109, %v358, 0
    %v446 = vsel %vm109, %v359, 0
    %v449 = vsel %vm109, %v360, 0
    %v452 = vsel %vm109, %v361, 0
    %v455 = vsel %vm109, %v362, 0
    %v458 = vsel %vm109, %v363, 0
    %v461 = vsel %vm109, %v364, 0
    %v464 = vsel %vm109, %v365, 0
    %v467 = vsel %vm109, %v366, 0
    %v470 = vsel %vm109, %v367, 0
    %v473 = vsel %vm109, %v368, 0
    %v476 = vsel %vm109, %v369, 0
    %v479 = vsel %vm109, %v370, 0
    %v482 = vsel %vm109, %v371, 0
    %v485 = vsel %vm109, %v372, 0
    %v488 = vsel %vm109, %v373, 0
    %v491 = vsel %vm109, %v374, 0
    %v494 = vsel %vm109, %v375, 0
    %v497 = vsel %vm109, %v376, 0
    %v500 = vsel %vm109, %v377, 0
    %v503 = vsel %vm109, %v378, 0
    %v506 = vsel %vm109, %v379, 0
    %v509 = vsel %vm109, %v380, 0
    %v512 = vsel %vm109, %v381, 0
    %v515 = vsel %vm109, %v382, 0
    %v518 = vsel %vm109, %v383, 0
    %v521 = vsel %vm109, %v384, 0
    %v524 = vsel %vm109, %v385, 0
    %v527 = vsel %vm109, %v386, 0
    %v530 = vsel %vm109, %v387, 0
    %v533 = vsel %vm109, %v388, 0
    %v536 = vsel %vm109, %v389, 0
    %v539 = vsel %vm109, %v390, 0
    %v542 = vsel %vm109, %v391, 0
    %v545 = vsel %vm109, %v392, 0
    %v548 = vsel %vm109, %v393, 0
    %v551 = vsel %vm109, %v394, 0
    %v554 = vsel %vm109, %v395, 0
    %v557 = vsel %vm109, %v396, 0
    %v560 = vsel %vm109, %v397, 0
    %v563 = vsel %vm109, %v398, 0
    %v566 = vsel %vm109, %v399, 0
    %v569 = vsel %vm109, %v400, 0
    %v572 = vsel %vm109, %v401, 0
    %v575 = vsel %vm109, %v402, 0
    %v578 = vsel %vm109, %v403, 0
    %v581 = vsel %vm109, %v404, 0
    %v584 = vsel %vm109, %v405, 0
    %v587 = vsel %vm109, %v406, 0
    %v590 = vsel %vm109, %v407, 0
    %v593 = vsel %vm109, %v408, 0
    %v596 = vsel %vm109, %v409, 0
    %v599 = vsel %vm109, %v410, 0
    %v602 = vsel %vm109, %v411, 0
    %v605 = vsel %vm109, %v412, 0
    %vm607 = vcmask 1043456
    %v609 = vsel %vm607, %v414, 0
    %611 = vmatprep.subr.mxu0 0.0
    %612 = vmatpush1.msra.mxu0 0.0
    %613 = vmatprep.subr.mxu0 0.0
    %614 = vmatpush1.msra.mxu0 0.0
    %615 = vmatprep.subr.mxu0 0.0
    %616 = vmatpush1.msra.mxu0 0.0
    %617 = vmatprep.subr.mxu0 0.0
    %618 = vmatpush1.msra.mxu0 0.0
    %619 = vmatprep.subr.mxu0 0.0
    %620 = vmatpush1.msra.mxu0 0.0
    %621 = vmatprep.subr.mxu0 0.0
    %622 = vmatpush1.msra.mxu0 0.0
    %623 = vmatprep.subr.mxu0 0.0
    %624 = vmatpush1.msra.mxu0 0.0
    %625 = vmatprep.subr.mxu0 0.0
    %626 = vmatpush1.msra.mxu0 0.0
    %627 = vmatprep.subr.mxu0 0.0
    %628 = vmatpush1.msra.mxu0 0.0
    %629 = vmatprep.subr.mxu0 0.0
    %630 = vmatpush1.msra.mxu0 0.0
    %631 = vmatprep.subr.mxu0 0.0
    %632 = vmatpush1.msra.mxu0 0.0
    %633 = vmatprep.subr.mxu0 0.0
    %634 = vmatpush1.msra.mxu0 0.0
    %635 = vmatprep.subr.mxu0 0.0
    %636 = vmatpush1.msra.mxu0 0.0
    %637 = vmatprep.subr.mxu0 0.0
    %638 = vmatpush1.msra.mxu0 0.0
    %639 = vmatprep.subr.mxu0 0.0
    %640 = vmatpush1.msra.mxu0 0.0
    %641 = vmatprep.subr.mxu0 0.0
    %642 = vmatpush1.msra.mxu0 %v609
    %643 = vmatprep.subr.mxu0 0.0
    %644 = vmatpush2.msra.mxu0 0.0
    %645 = vmatprep.subr.mxu0 0.0
    %646 = vmatpush2.msra.mxu0 0.0
    %647 = vmatprep.subr.mxu0 0.0
    %648 = vmatpush2.msra.mxu0 0.0
    %649 = vmatprep.subr.mxu0 0.0
    %650 = vmatpush2.msra.mxu0 0.0
    %651 = vmatprep.subr.mxu0 0.0
    %652 = vmatpush2.msra.mxu0 0.0
    %653 = vmatprep.subr.mxu0 0.0
    %654 = vmatpush2.msra.mxu0 0.0
    %655 = vmatprep.subr.mxu0 0.0
    %656 = vmatpush2.msra.mxu0 0.0
    %657 = vmatprep.subr.mxu0 0.0
    %658 = vmatpush2.msra.mxu0 0.0
    %659 = vmatprep.subr.mxu0 0.0
    %660 = vmatpush2.msra.mxu0 0.0
    %661 = vmatprep.subr.mxu0 0.0
    %662 = vmatpush2.msra.mxu0 0.0
    %663 = vmatprep.subr.mxu0 0.0
    %664 = vmatpush2.msra.mxu0 0.0
    %665 = vmatprep.subr.mxu0 0.0
    %666 = vmatpush2.msra.mxu0 0.0
    %667 = vmatprep.subr.mxu0 0.0
    %668 = vmatpush2.msra.mxu0 0.0
    %669 = vmatprep.subr.mxu0 0.0
    %670 = vmatpush2.msra.mxu0 0.0
    %671 = vmatprep.subr.mxu0 0.0
    %672 = vmatpush2.msra.mxu0 0.0
    %673 = vmatprep.subr.mxu0 0.0
    %674 = vmatpush2.msra.mxu0 0.0
    %675 = vmatprep.mubr.f32.mxu0 0.0
    %676 = vmatmul.mubr.f32.gmra.mxu0 %v416
    %v677 = vpop.f32.mrf.mxu0
    %v678 = vadd.f32 0.0, %v677
    %v679 = vpop.f32.mrf.mxu0
    %680 = vmatprep.mubr.f32.mxu0 0.0
    %681 = vmatmul.mubr.f32.gmra.mxu0 %v419
    %v682 = vpop.f32.mrf.mxu0
    %v683 = vadd.f32 0.0, %v682
    %v684 = vpop.f32.mrf.mxu0
    %685 = vmatprep.mubr.f32.mxu0 0.0
    %686 = vmatmul.mubr.f32.gmra.mxu0 %v422
    %v687 = vpop.f32.mrf.mxu0
    %v688 = vadd.f32 0.0, %v687
    %v689 = vpop.f32.mrf.mxu0
    %690 = vmatprep.mubr.f32.mxu0 0.0
    %691 = vmatmul.mubr.f32.gmra.mxu0 %v425
    %v692 = vpop.f32.mrf.mxu0
    %v693 = vadd.f32 0.0, %v692
    %v694 = vpop.f32.mrf.mxu0
    %695 = vmatprep.mubr.f32.mxu0 0.0
    %696 = vmatmul.mubr.f32.gmra.mxu0 %v428
    %v697 = vpop.f32.mrf.mxu0
    %v698 = vadd.f32 0.0, %v697
    %v699 = vpop.f32.mrf.mxu0
    %700 = vmatprep.mubr.f32.mxu0 0.0
    %701 = vmatmul.mubr.f32.gmra.mxu0 %v431
    %v702 = vpop.f32.mrf.mxu0
    %v703 = vadd.f32 0.0, %v702
    %v704 = vpop.f32.mrf.mxu0
    %705 = vmatprep.mubr.f32.mxu0 0.0
    %706 = vmatmul.mubr.f32.gmra.mxu0 %v434
    %v707 = vpop.f32.mrf.mxu0
    %v708 = vadd.f32 0.0, %v707
    %v709 = vpop.f32.mrf.mxu0
    %710 = vmatprep.mubr.f32.mxu0 0.0
    %711 = vmatmul.mubr.f32.gmra.mxu0 %v437
    %v712 = vpop.f32.mrf.mxu0
    %v713 = vadd.f32 0.0, %v712
    %v714 = vpop.f32.mrf.mxu0
    %715 = vmatprep.mubr.f32.mxu0 0.0
    %716 = vmatmul.mubr.f32.gmra.mxu0 %v440
    %v717 = vpop.f32.mrf.mxu0
    %v718 = vadd.f32 0.0, %v717
    %v719 = vpop.f32.mrf.mxu0
    %720 = vmatprep.mubr.f32.mxu0 0.0
    %721 = vmatmul.mubr.f32.gmra.mxu0 %v443
    %v722 = vpop.f32.mrf.mxu0
    %v723 = vadd.f32 0.0, %v722
    %v724 = vpop.f32.mrf.mxu0
    %725 = vmatprep.mubr.f32.mxu0 0.0
    %726 = vmatmul.mubr.f32.gmra.mxu0 %v446
    %v727 = vpop.f32.mrf.mxu0
    %v728 = vadd.f32 0.0, %v727
    %v729 = vpop.f32.mrf.mxu0
    %730 = vmatprep.mubr.f32.mxu0 0.0
    %731 = vmatmul.mubr.f32.gmra.mxu0 %v449
    %v732 = vpop.f32.mrf.mxu0
    %v733 = vadd.f32 0.0, %v732
    %v734 = vpop.f32.mrf.mxu0
    %735 = vmatprep.mubr.f32.mxu0 0.0
    %736 = vmatmul.mubr.f32.gmra.mxu0 %v452
    %v737 = vpop.f32.mrf.mxu0
    %v738 = vadd.f32 0.0, %v737
    %v739 = vpop.f32.mrf.mxu0
    %740 = vmatprep.mubr.f32.mxu0 0.0
    %741 = vmatmul.mubr.f32.gmra.mxu0 %v455
    %v742 = vpop.f32.mrf.mxu0
    %v743 = vadd.f32 0.0, %v742
    %v744 = vpop.f32.mrf.mxu0
    %745 = vmatprep.mubr.f32.mxu0 0.0
    %746 = vmatmul.mubr.f32.gmra.mxu0 %v458
    %v747 = vpop.f32.mrf.mxu0
    %v748 = vadd.f32 0.0, %v747
    %v749 = vpop.f32.mrf.mxu0
    %750 = vmatprep.mubr.f32.mxu0 0.0
    %751 = vmatmul.mubr.f32.gmra.mxu0 %v461
    %v752 = vpop.f32.mrf.mxu0
    %v753 = vadd.f32 0.0, %v752
    %v754 = vpop.f32.mrf.mxu0
    %755 = vmatprep.mubr.f32.mxu0 0.0
    %756 = vmatmul.mubr.f32.gmra.mxu0 %v464
    %v757 = vpop.f32.mrf.mxu0
    %v758 = vadd.f32 0.0, %v757
    %v759 = vpop.f32.mrf.mxu0
    %760 = vmatprep.mubr.f32.mxu0 0.0
    %761 = vmatmul.mubr.f32.gmra.mxu0 %v467
    %v762 = vpop.f32.mrf.mxu0
    %v763 = vadd.f32 0.0, %v762
    %v764 = vpop.f32.mrf.mxu0
    %765 = vmatprep.mubr.f32.mxu0 0.0
    %766 = vmatmul.mubr.f32.gmra.mxu0 %v470
    %v767 = vpop.f32.mrf.mxu0
    %v768 = vadd.f32 0.0, %v767
    %v769 = vpop.f32.mrf.mxu0
    %770 = vmatprep.mubr.f32.mxu0 0.0
    %771 = vmatmul.mubr.f32.gmra.mxu0 %v473
    %v772 = vpop.f32.mrf.mxu0
    %v773 = vadd.f32 0.0, %v772
    %v774 = vpop.f32.mrf.mxu0
    %775 = vmatprep.mubr.f32.mxu0 0.0
    %776 = vmatmul.mubr.f32.gmra.mxu0 %v476
    %v777 = vpop.f32.mrf.mxu0
    %v778 = vadd.f32 0.0, %v777
    %v779 = vpop.f32.mrf.mxu0
    %780 = vmatprep.mubr.f32.mxu0 0.0
    %781 = vmatmul.mubr.f32.gmra.mxu0 %v479
    %v782 = vpop.f32.mrf.mxu0
    %v783 = vadd.f32 0.0, %v782
    %v784 = vpop.f32.mrf.mxu0
    %785 = vmatprep.mubr.f32.mxu0 0.0
    %786 = vmatmul.mubr.f32.gmra.mxu0 %v482
    %v787 = vpop.f32.mrf.mxu0
    %v788 = vadd.f32 0.0, %v787
    %v789 = vpop.f32.mrf.mxu0
    %790 = vmatprep.mubr.f32.mxu0 0.0
    %791 = vmatmul.mubr.f32.gmra.mxu0 %v485
    %v792 = vpop.f32.mrf.mxu0
    %v793 = vadd.f32 0.0, %v792
    %v794 = vpop.f32.mrf.mxu0
    %795 = vmatprep.mubr.f32.mxu0 0.0
    %796 = vmatmul.mubr.f32.gmra.mxu0 %v488
    %v797 = vpop.f32.mrf.mxu0
    %v798 = vadd.f32 0.0, %v797
    %v799 = vpop.f32.mrf.mxu0
    %800 = vmatprep.mubr.f32.mxu0 0.0
    %801 = vmatmul.mubr.f32.gmra.mxu0 %v491
    %v802 = vpop.f32.mrf.mxu0
    %v803 = vadd.f32 0.0, %v802
    %v804 = vpop.f32.mrf.mxu0
    %805 = vmatprep.mubr.f32.mxu0 0.0
    %806 = vmatmul.mubr.f32.gmra.mxu0 %v494
    %v807 = vpop.f32.mrf.mxu0
    %v808 = vadd.f32 0.0, %v807
    %v809 = vpop.f32.mrf.mxu0
    %810 = vmatprep.mubr.f32.mxu0 0.0
    %811 = vmatmul.mubr.f32.gmra.mxu0 %v497
    %v812 = vpop.f32.mrf.mxu0
    %v813 = vadd.f32 0.0, %v812
    %v814 = vpop.f32.mrf.mxu0
    %815 = vmatprep.mubr.f32.mxu0 0.0
    %816 = vmatmul.mubr.f32.gmra.mxu0 %v500
    %v817 = vpop.f32.mrf.mxu0
    %v818 = vadd.f32 0.0, %v817
    %v819 = vpop.f32.mrf.mxu0
    %820 = vmatprep.mubr.f32.mxu0 0.0
    %821 = vmatmul.mubr.f32.gmra.mxu0 %v503
    %v822 = vpop.f32.mrf.mxu0
    %v823 = vadd.f32 0.0, %v822
    %v824 = vpop.f32.mrf.mxu0
    %825 = vmatprep.mubr.f32.mxu0 0.0
    %826 = vmatmul.mubr.f32.gmra.mxu0 %v506
    %v827 = vpop.f32.mrf.mxu0
    %v828 = vadd.f32 0.0, %v827
    %v829 = vpop.f32.mrf.mxu0
    %830 = vmatprep.mubr.f32.mxu0 0.0
    %831 = vmatmul.mubr.f32.gmra.mxu0 %v509
    %v832 = vpop.f32.mrf.mxu0
    %v833 = vadd.f32 0.0, %v832
    %v834 = vpop.f32.mrf.mxu0
    %835 = vmatprep.mubr.f32.mxu0 0.0
    %836 = vmatmul.mubr.f32.gmra.mxu0 %v512
    %v837 = vpop.f32.mrf.mxu0
    %v838 = vadd.f32 0.0, %v837
    %v839 = vpop.f32.mrf.mxu0
    %840 = vmatprep.mubr.f32.mxu0 0.0
    %841 = vmatmul.mubr.f32.gmra.mxu0 %v515
    %v842 = vpop.f32.mrf.mxu0
    %v843 = vadd.f32 0.0, %v842
    %v844 = vpop.f32.mrf.mxu0
    %845 = vmatprep.mubr.f32.mxu0 0.0
    %846 = vmatmul.mubr.f32.gmra.mxu0 %v518
    %v847 = vpop.f32.mrf.mxu0
    %v848 = vadd.f32 0.0, %v847
    %v849 = vpop.f32.mrf.mxu0
    %850 = vmatprep.mubr.f32.mxu0 0.0
    %851 = vmatmul.mubr.f32.gmra.mxu0 %v521
    %v852 = vpop.f32.mrf.mxu0
    %v853 = vadd.f32 0.0, %v852
    %v854 = vpop.f32.mrf.mxu0
    %855 = vmatprep.mubr.f32.mxu0 0.0
    %856 = vmatmul.mubr.f32.gmra.mxu0 %v524
    %v857 = vpop.f32.mrf.mxu0
    %v858 = vadd.f32 0.0, %v857
    %v859 = vpop.f32.mrf.mxu0
    %860 = vmatprep.mubr.f32.mxu0 0.0
    %861 = vmatmul.mubr.f32.gmra.mxu0 %v527
    %v862 = vpop.f32.mrf.mxu0
    %v863 = vadd.f32 0.0, %v862
    %v864 = vpop.f32.mrf.mxu0
    %865 = vmatprep.mubr.f32.mxu0 0.0
    %866 = vmatmul.mubr.f32.gmra.mxu0 %v530
    %v867 = vpop.f32.mrf.mxu0
    %v868 = vadd.f32 0.0, %v867
    %v869 = vpop.f32.mrf.mxu0
    %870 = vmatprep.mubr.f32.mxu0 0.0
    %871 = vmatmul.mubr.f32.gmra.mxu0 %v533
    %v872 = vpop.f32.mrf.mxu0
    %v873 = vadd.f32 0.0, %v872
    %v874 = vpop.f32.mrf.mxu0
    %875 = vmatprep.mubr.f32.mxu0 0.0
    %876 = vmatmul.mubr.f32.gmra.mxu0 %v536
    %v877 = vpop.f32.mrf.mxu0
    %v878 = vadd.f32 0.0, %v877
    %v879 = vpop.f32.mrf.mxu0
    %880 = vmatprep.mubr.f32.mxu0 0.0
    %881 = vmatmul.mubr.f32.gmra.mxu0 %v539
    %v882 = vpop.f32.mrf.mxu0
    %v883 = vadd.f32 0.0, %v882
    %v884 = vpop.f32.mrf.mxu0
    %885 = vmatprep.mubr.f32.mxu0 0.0
    %886 = vmatmul.mubr.f32.gmra.mxu0 %v542
    %v887 = vpop.f32.mrf.mxu0
    %v888 = vadd.f32 0.0, %v887
    %v889 = vpop.f32.mrf.mxu0
    %890 = vmatprep.mubr.f32.mxu0 0.0
    %891 = vmatmul.mubr.f32.gmra.mxu0 %v545
    %v892 = vpop.f32.mrf.mxu0
    %v893 = vadd.f32 0.0, %v892
    %v894 = vpop.f32.mrf.mxu0
    %895 = vmatprep.mubr.f32.mxu0 0.0
    %896 = vmatmul.mubr.f32.gmra.mxu0 %v548
    %v897 = vpop.f32.mrf.mxu0
    %v898 = vadd.f32 0.0, %v897
    %v899 = vpop.f32.mrf.mxu0
    %900 = vmatprep.mubr.f32.mxu0 0.0
    %901 = vmatmul.mubr.f32.gmra.mxu0 %v551
    %v902 = vpop.f32.mrf.mxu0
    %v903 = vadd.f32 0.0, %v902
    %v904 = vpop.f32.mrf.mxu0
    %905 = vmatprep.mubr.f32.mxu0 0.0
    %906 = vmatmul.mubr.f32.gmra.mxu0 %v554
    %v907 = vpop.f32.mrf.mxu0
    %v908 = vadd.f32 0.0, %v907
    %v909 = vpop.f32.mrf.mxu0
    %910 = vmatprep.mubr.f32.mxu0 0.0
    %911 = vmatmul.mubr.f32.gmra.mxu0 %v557
    %v912 = vpop.f32.mrf.mxu0
    %v913 = vadd.f32 0.0, %v912
    %v914 = vpop.f32.mrf.mxu0
    %915 = vmatprep.mubr.f32.mxu0 0.0
    %916 = vmatmul.mubr.f32.gmra.mxu0 %v560
    %v917 = vpop.f32.mrf.mxu0
    %v918 = vadd.f32 0.0, %v917
    %v919 = vpop.f32.mrf.mxu0
    %920 = vmatprep.mubr.f32.mxu0 0.0
    %921 = vmatmul.mubr.f32.gmra.mxu0 %v563
    %v922 = vpop.f32.mrf.mxu0
    %v923 = vadd.f32 0.0, %v922
    %v924 = vpop.f32.mrf.mxu0
    %925 = vmatprep.mubr.f32.mxu0 0.0
    %926 = vmatmul.mubr.f32.gmra.mxu0 %v566
    %v927 = vpop.f32.mrf.mxu0
    %v928 = vadd.f32 0.0, %v927
    %v929 = vpop.f32.mrf.mxu0
    %930 = vmatprep.mubr.f32.mxu0 0.0
    %931 = vmatmul.mubr.f32.gmra.mxu0 %v569
    %v932 = vpop.f32.mrf.mxu0
    %v933 = vadd.f32 0.0, %v932
    %v934 = vpop.f32.mrf.mxu0
    %935 = vmatprep.mubr.f32.mxu0 0.0
    %936 = vmatmul.mubr.f32.gmra.mxu0 %v572
    %v937 = vpop.f32.mrf.mxu0
    %v938 = vadd.f32 0.0, %v937
    %v939 = vpop.f32.mrf.mxu0
    %940 = vmatprep.mubr.f32.mxu0 0.0
    %941 = vmatmul.mubr.f32.gmra.mxu0 %v575
    %v942 = vpop.f32.mrf.mxu0
    %v943 = vadd.f32 0.0, %v942
    %v944 = vpop.f32.mrf.mxu0
    %945 = vmatprep.mubr.f32.mxu0 0.0
    %946 = vmatmul.mubr.f32.gmra.mxu0 %v578
    %v947 = vpop.f32.mrf.mxu0
    %v948 = vadd.f32 0.0, %v947
    %v949 = vpop.f32.mrf.mxu0
    %950 = vmatprep.mubr.f32.mxu0 0.0
    %951 = vmatmul.mubr.f32.gmra.mxu0 %v581
    %v952 = vpop.f32.mrf.mxu0
    %v953 = vadd.f32 0.0, %v952
    %v954 = vpop.f32.mrf.mxu0
    %955 = vmatprep.mubr.f32.mxu0 0.0
    %956 = vmatmul.mubr.f32.gmra.mxu0 %v584
    %v957 = vpop.f32.mrf.mxu0
    %v958 = vadd.f32 0.0, %v957
    %v959 = vpop.f32.mrf.mxu0
    %960 = vmatprep.mubr.f32.mxu0 0.0
    %961 = vmatmul.mubr.f32.gmra.mxu0 %v587
    %v962 = vpop.f32.mrf.mxu0
    %v963 = vadd.f32 0.0, %v962
    %v964 = vpop.f32.mrf.mxu0
    %965 = vmatprep.mubr.f32.mxu0 0.0
    %966 = vmatmul.mubr.f32.gmra.mxu0 %v590
    %v967 = vpop.f32.mrf.mxu0
    %v968 = vadd.f32 0.0, %v967
    %v969 = vpop.f32.mrf.mxu0
    %970 = vmatprep.mubr.f32.mxu0 0.0
    %971 = vmatmul.mubr.f32.gmra.mxu0 %v593
    %v972 = vpop.f32.mrf.mxu0
    %v973 = vadd.f32 0.0, %v972
    %v974 = vpop.f32.mrf.mxu0
    %975 = vmatprep.mubr.f32.mxu0 0.0
    %976 = vmatmul.mubr.f32.gmra.mxu0 %v596
    %v977 = vpop.f32.mrf.mxu0
    %v978 = vadd.f32 0.0, %v977
    %v979 = vpop.f32.mrf.mxu0
    %980 = vmatprep.mubr.f32.mxu0 0.0
    %981 = vmatmul.mubr.f32.gmra.mxu0 %v599
    %v982 = vpop.f32.mrf.mxu0
    %v983 = vadd.f32 0.0, %v982
    %v984 = vpop.f32.mrf.mxu0
    %985 = vmatprep.mubr.f32.mxu0 0.0
    %986 = vmatmul.mubr.f32.gmra.mxu0 %v602
    %v987 = vpop.f32.mrf.mxu0
    %v988 = vadd.f32 0.0, %v987
    %v989 = vpop.f32.mrf.mxu0
    %990 = vmatprep.mubr.f32.mxu0 0.0
    %991 = vmatmul.mubr.f32.gmra.mxu0 %v605
    %v992 = vpop.f32.mrf.mxu0
    %v993 = vadd.f32 0.0, %v992
    %v994 = vpop.f32.mrf.mxu0
    %995 = vdwg.mxu0
    %v997 = vsel %vm109, %v284, 0
    %v1000 = vsel %vm109, %v285, 0
    %v1003 = vsel %vm109, %v286, 0
    %v1006 = vsel %vm109, %v287, 0
    %v1009 = vsel %vm109, %v288, 0
    %v1012 = vsel %vm109, %v289, 0
    %v1015 = vsel %vm109, %v290, 0
    %v1018 = vsel %vm109, %v291, 0
    %v1021 = vsel %vm109, %v292, 0
    %v1024 = vsel %vm109, %v293, 0
    %v1027 = vsel %vm109, %v294, 0
    %v1030 = vsel %vm109, %v295, 0
    %v1033 = vsel %vm109, %v296, 0
    %v1036 = vsel %vm109, %v297, 0
    %v1039 = vsel %vm109, %v298, 0
    %v1042 = vsel %vm109, %v299, 0
    %v1045 = vsel %vm109, %v300, 0
    %v1048 = vsel %vm109, %v301, 0
    %v1051 = vsel %vm109, %v302, 0
    %v1054 = vsel %vm109, %v303, 0
    %v1057 = vsel %vm109, %v304, 0
    %v1060 = vsel %vm109, %v305, 0
    %v1063 = vsel %vm109, %v306, 0
    %v1066 = vsel %vm109, %v307, 0
    %v1069 = vsel %vm109, %v308, 0
    %v1072 = vsel %vm109, %v309, 0
    %v1075 = vsel %vm109, %v310, 0
    %v1078 = vsel %vm109, %v311, 0
    %v1081 = vsel %vm109, %v312, 0
    %v1084 = vsel %vm109, %v313, 0
    %v1087 = vsel %vm109, %v314, 0
    %v1090 = vsel %vm109, %v315, 0
    %v1093 = vsel %vm109, %v316, 0
    %v1096 = vsel %vm109, %v317, 0
    %v1099 = vsel %vm109, %v318, 0
    %v1102 = vsel %vm109, %v319, 0
    %v1105 = vsel %vm109, %v320, 0
    %v1108 = vsel %vm109, %v321, 0
    %v1111 = vsel %vm109, %v322, 0
    %v1114 = vsel %vm109, %v323, 0
    %v1117 = vsel %vm109, %v324, 0
    %v1120 = vsel %vm109, %v325, 0
    %v1123 = vsel %vm109, %v326, 0
    %v1126 = vsel %vm109, %v327, 0
    %v1129 = vsel %vm109, %v328, 0
    %v1132 = vsel %vm109, %v329, 0
    %v1135 = vsel %vm109, %v330, 0
    %v1138 = vsel %vm109, %v331, 0
    %v1141 = vsel %vm109, %v332, 0
    %v1144 = vsel %vm109, %v333, 0
    %v1147 = vsel %vm109, %v334, 0
    %v1150 = vsel %vm109, %v335, 0
    %v1153 = vsel %vm109, %v336, 0
    %v1156 = vsel %vm109, %v337, 0
    %v1159 = vsel %vm109, %v338, 0
    %v1162 = vsel %vm109, %v339, 0
    %v1165 = vsel %vm109, %v340, 0
    %v1168 = vsel %vm109, %v341, 0
    %v1171 = vsel %vm109, %v342, 0
    %v1174 = vsel %vm109, %v343, 0
    %v1177 = vsel %vm109, %v344, 0
    %v1180 = vsel %vm109, %v345, 0
    %v1183 = vsel %vm109, %v346, 0
    %v1186 = vsel %vm109, %v347, 0
    %v1189 = vsel %vm607, %v348, 0
    %1191 = vmatprep.subr.mxu0 0.0
    %1192 = vmatpush1.msra.mxu0 0.0
    %1193 = vmatprep.subr.mxu0 0.0
    %1194 = vmatpush1.msra.mxu0 0.0
    %1195 = vmatprep.subr.mxu0 0.0
    %1196 = vmatpush1.msra.mxu0 0.0
    %1197 = vmatprep.subr.mxu0 0.0
    %1198 = vmatpush1.msra.mxu0 0.0
    %1199 = vmatprep.subr.mxu0 0.0
    %1200 = vmatpush1.msra.mxu0 0.0
    %1201 = vmatprep.subr.mxu0 0.0
    %1202 = vmatpush1.msra.mxu0 0.0
    %1203 = vmatprep.subr.mxu0 0.0
    %1204 = vmatpush1.msra.mxu0 0.0
    %1205 = vmatprep.subr.mxu0 0.0
    %1206 = vmatpush1.msra.mxu0 0.0
    %1207 = vmatprep.subr.mxu0 0.0
    %1208 = vmatpush1.msra.mxu0 0.0
    %1209 = vmatprep.subr.mxu0 0.0
    %1210 = vmatpush1.msra.mxu0 0.0
    %1211 = vmatprep.subr.mxu0 0.0
    %1212 = vmatpush1.msra.mxu0 0.0
    %1213 = vmatprep.subr.mxu0 0.0
    %1214 = vmatpush1.msra.mxu0 0.0
    %1215 = vmatprep.subr.mxu0 0.0
    %1216 = vmatpush1.msra.mxu0 0.0
    %1217 = vmatprep.subr.mxu0 0.0
    %1218 = vmatpush1.msra.mxu0 0.0
    %1219 = vmatprep.subr.mxu0 0.0
    %1220 = vmatpush1.msra.mxu0 0.0
    %1221 = vmatprep.subr.mxu0 0.0
    %1222 = vmatpush1.msra.mxu0 %v1189
    %1223 = vmatprep.subr.mxu0 0.0
    %1224 = vmatpush2.msra.mxu0 0.0
    %1225 = vmatprep.subr.mxu0 0.0
    %1226 = vmatpush2.msra.mxu0 0.0
    %1227 = vmatprep.subr.mxu0 0.0
    %1228 = vmatpush2.msra.mxu0 0.0
    %1229 = vmatprep.subr.mxu0 0.0
    %1230 = vmatpush2.msra.mxu0 0.0
    %1231 = vmatprep.subr.mxu0 0.0
    %1232 = vmatpush2.msra.mxu0 0.0
    %1233 = vmatprep.subr.mxu0 0.0
    %1234 = vmatpush2.msra.mxu0 0.0
    %1235 = vmatprep.subr.mxu0 0.0
    %1236 = vmatpush2.msra.mxu0 0.0
    %1237 = vmatprep.subr.mxu0 0.0
    %1238 = vmatpush2.msra.mxu0 0.0
    %1239 = vmatprep.subr.mxu0 0.0
    %1240 = vmatpush2.msra.mxu0 0.0
    %1241 = vmatprep.subr.mxu0 0.0
    %1242 = vmatpush2.msra.mxu0 0.0
    %1243 = vmatprep.subr.mxu0 0.0
    %1244 = vmatpush2.msra.mxu0 0.0
    %1245 = vmatprep.subr.mxu0 0.0
    %1246 = vmatpush2.msra.mxu0 0.0
    %1247 = vmatprep.subr.mxu0 0.0
    %1248 = vmatpush2.msra.mxu0 0.0
    %1249 = vmatprep.subr.mxu0 0.0
    %1250 = vmatpush2.msra.mxu0 0.0
    %1251 = vmatprep.subr.mxu0 0.0
    %1252 = vmatpush2.msra.mxu0 0.0
    %1253 = vmatprep.subr.mxu0 0.0
    %1254 = vmatpush2.msra.mxu0 0.0
    %1255 = vmatprep.mubr.f32.mxu0 0.0
    %1256 = vmatmul.mubr.f32.gmra.mxu0 %v997
    %v1257 = vpop.f32.mrf.mxu0
    %v1258 = vadd.f32 %v678, %v1257
    %v1259 = vpop.f32.mrf.mxu0
    %1260 = vmatprep.mubr.f32.mxu0 0.0
    %1261 = vmatmul.mubr.f32.gmra.mxu0 %v1000
    %v1262 = vpop.f32.mrf.mxu0
    %v1263 = vadd.f32 %v683, %v1262
    %v1264 = vpop.f32.mrf.mxu0
    %1265 = vmatprep.mubr.f32.mxu0 0.0
    %1266 = vmatmul.mubr.f32.gmra.mxu0 %v1003
    %v1267 = vpop.f32.mrf.mxu0
    %v1268 = vadd.f32 %v688, %v1267
    %v1269 = vpop.f32.mrf.mxu0
    %1270 = vmatprep.mubr.f32.mxu0 0.0
    %1271 = vmatmul.mubr.f32.gmra.mxu0 %v1006
    %v1272 = vpop.f32.mrf.mxu0
    %v1273 = vadd.f32 %v693, %v1272
    %v1274 = vpop.f32.mrf.mxu0
    %1275 = vmatprep.mubr.f32.mxu0 0.0
    %1276 = vmatmul.mubr.f32.gmra.mxu0 %v1009
    %v1277 = vpop.f32.mrf.mxu0
    %v1278 = vadd.f32 %v698, %v1277
    %v1279 = vpop.f32.mrf.mxu0
    %1280 = vmatprep.mubr.f32.mxu0 0.0
    %1281 = vmatmul.mubr.f32.gmra.mxu0 %v1012
    %v1282 = vpop.f32.mrf.mxu0
    %v1283 = vadd.f32 %v703, %v1282
    %v1284 = vpop.f32.mrf.mxu0
    %1285 = vmatprep.mubr.f32.mxu0 0.0
    %1286 = vmatmul.mubr.f32.gmra.mxu0 %v1015
    %v1287 = vpop.f32.mrf.mxu0
    %v1288 = vadd.f32 %v708, %v1287
    %v1289 = vpop.f32.mrf.mxu0
    %1290 = vmatprep.mubr.f32.mxu0 0.0
    %1291 = vmatmul.mubr.f32.gmra.mxu0 %v1018
    %v1292 = vpop.f32.mrf.mxu0
    %v1293 = vadd.f32 %v713, %v1292
    %v1294 = vpop.f32.mrf.mxu0
    %1295 = vmatprep.mubr.f32.mxu0 0.0
    %1296 = vmatmul.mubr.f32.gmra.mxu0 %v1021
    %v1297 = vpop.f32.mrf.mxu0
    %v1298 = vadd.f32 %v718, %v1297
    %v1299 = vpop.f32.mrf.mxu0
    %1300 = vmatprep.mubr.f32.mxu0 0.0
    %1301 = vmatmul.mubr.f32.gmra.mxu0 %v1024
    %v1302 = vpop.f32.mrf.mxu0
    %v1303 = vadd.f32 %v723, %v1302
    %v1304 = vpop.f32.mrf.mxu0
    %1305 = vmatprep.mubr.f32.mxu0 0.0
    %1306 = vmatmul.mubr.f32.gmra.mxu0 %v1027
    %v1307 = vpop.f32.mrf.mxu0
    %v1308 = vadd.f32 %v728, %v1307
    %v1309 = vpop.f32.mrf.mxu0
    %1310 = vmatprep.mubr.f32.mxu0 0.0
    %1311 = vmatmul.mubr.f32.gmra.mxu0 %v1030
    %v1312 = vpop.f32.mrf.mxu0
    %v1313 = vadd.f32 %v733, %v1312
    %v1314 = vpop.f32.mrf.mxu0
    %1315 = vmatprep.mubr.f32.mxu0 0.0
    %1316 = vmatmul.mubr.f32.gmra.mxu0 %v1033
    %v1317 = vpop.f32.mrf.mxu0
    %v1318 = vadd.f32 %v738, %v1317
    %v1319 = vpop.f32.mrf.mxu0
    %1320 = vmatprep.mubr.f32.mxu0 0.0
    %1321 = vmatmul.mubr.f32.gmra.mxu0 %v1036
    %v1322 = vpop.f32.mrf.mxu0
    %v1323 = vadd.f32 %v743, %v1322
    %v1324 = vpop.f32.mrf.mxu0
    %1325 = vmatprep.mubr.f32.mxu0 0.0
    %1326 = vmatmul.mubr.f32.gmra.mxu0 %v1039
    %v1327 = vpop.f32.mrf.mxu0
    %v1328 = vadd.f32 %v748, %v1327
    %v1329 = vpop.f32.mrf.mxu0
    %1330 = vmatprep.mubr.f32.mxu0 0.0
    %1331 = vmatmul.mubr.f32.gmra.mxu0 %v1042
    %v1332 = vpop.f32.mrf.mxu0
    %v1333 = vadd.f32 %v753, %v1332
    %v1334 = vpop.f32.mrf.mxu0
    %1335 = vmatprep.mubr.f32.mxu0 0.0
    %1336 = vmatmul.mubr.f32.gmra.mxu0 %v1045
    %v1337 = vpop.f32.mrf.mxu0
    %v1338 = vadd.f32 %v758, %v1337
    %v1339 = vpop.f32.mrf.mxu0
    %1340 = vmatprep.mubr.f32.mxu0 0.0
    %1341 = vmatmul.mubr.f32.gmra.mxu0 %v1048
    %v1342 = vpop.f32.mrf.mxu0
    %v1343 = vadd.f32 %v763, %v1342
    %v1344 = vpop.f32.mrf.mxu0
    %1345 = vmatprep.mubr.f32.mxu0 0.0
    %1346 = vmatmul.mubr.f32.gmra.mxu0 %v1051
    %v1347 = vpop.f32.mrf.mxu0
    %v1348 = vadd.f32 %v768, %v1347
    %v1349 = vpop.f32.mrf.mxu0
    %1350 = vmatprep.mubr.f32.mxu0 0.0
    %1351 = vmatmul.mubr.f32.gmra.mxu0 %v1054
    %v1352 = vpop.f32.mrf.mxu0
    %v1353 = vadd.f32 %v773, %v1352
    %v1354 = vpop.f32.mrf.mxu0
    %1355 = vmatprep.mubr.f32.mxu0 0.0
    %1356 = vmatmul.mubr.f32.gmra.mxu0 %v1057
    %v1357 = vpop.f32.mrf.mxu0
    %v1358 = vadd.f32 %v778, %v1357
    %v1359 = vpop.f32.mrf.mxu0
    %1360 = vmatprep.mubr.f32.mxu0 0.0
    %1361 = vmatmul.mubr.f32.gmra.mxu0 %v1060
    %v1362 = vpop.f32.mrf.mxu0
    %v1363 = vadd.f32 %v783, %v1362
    %v1364 = vpop.f32.mrf.mxu0
    %1365 = vmatprep.mubr.f32.mxu0 0.0
    %1366 = vmatmul.mubr.f32.gmra.mxu0 %v1063
    %v1367 = vpop.f32.mrf.mxu0
    %v1368 = vadd.f32 %v788, %v1367
    %v1369 = vpop.f32.mrf.mxu0
    %1370 = vmatprep.mubr.f32.mxu0 0.0
    %1371 = vmatmul.mubr.f32.gmra.mxu0 %v1066
    %v1372 = vpop.f32.mrf.mxu0
    %v1373 = vadd.f32 %v793, %v1372
    %v1374 = vpop.f32.mrf.mxu0
    %1375 = vmatprep.mubr.f32.mxu0 0.0
    %1376 = vmatmul.mubr.f32.gmra.mxu0 %v1069
    %v1377 = vpop.f32.mrf.mxu0
    %v1378 = vadd.f32 %v798, %v1377
    %v1379 = vpop.f32.mrf.mxu0
    %1380 = vmatprep.mubr.f32.mxu0 0.0
    %1381 = vmatmul.mubr.f32.gmra.mxu0 %v1072
    %v1382 = vpop.f32.mrf.mxu0
    %v1383 = vadd.f32 %v803, %v1382
    %v1384 = vpop.f32.mrf.mxu0
    %1385 = vmatprep.mubr.f32.mxu0 0.0
    %1386 = vmatmul.mubr.f32.gmra.mxu0 %v1075
    %v1387 = vpop.f32.mrf.mxu0
    %v1388 = vadd.f32 %v808, %v1387
    %v1389 = vpop.f32.mrf.mxu0
    %1390 = vmatprep.mubr.f32.mxu0 0.0
    %1391 = vmatmul.mubr.f32.gmra.mxu0 %v1078
    %v1392 = vpop.f32.mrf.mxu0
    %v1393 = vadd.f32 %v813, %v1392
    %v1394 = vpop.f32.mrf.mxu0
    %1395 = vmatprep.mubr.f32.mxu0 0.0
    %1396 = vmatmul.mubr.f32.gmra.mxu0 %v1081
    %v1397 = vpop.f32.mrf.mxu0
    %v1398 = vadd.f32 %v818, %v1397
    %v1399 = vpop.f32.mrf.mxu0
    %1400 = vmatprep.mubr.f32.mxu0 0.0
    %1401 = vmatmul.mubr.f32.gmra.mxu0 %v1084
    %v1402 = vpop.f32.mrf.mxu0
    %v1403 = vadd.f32 %v823, %v1402
    %v1404 = vpop.f32.mrf.mxu0
    %1405 = vmatprep.mubr.f32.mxu0 0.0
    %1406 = vmatmul.mubr.f32.gmra.mxu0 %v1087
    %v1407 = vpop.f32.mrf.mxu0
    %v1408 = vadd.f32 %v828, %v1407
    %v1409 = vpop.f32.mrf.mxu0
    %1410 = vmatprep.mubr.f32.mxu0 0.0
    %1411 = vmatmul.mubr.f32.gmra.mxu0 %v1090
    %v1412 = vpop.f32.mrf.mxu0
    %v1413 = vadd.f32 %v833, %v1412
    %v1414 = vpop.f32.mrf.mxu0
    %1415 = vmatprep.mubr.f32.mxu0 0.0
    %1416 = vmatmul.mubr.f32.gmra.mxu0 %v1093
    %v1417 = vpop.f32.mrf.mxu0
    %v1418 = vadd.f32 %v838, %v1417
    %v1419 = vpop.f32.mrf.mxu0
    %1420 = vmatprep.mubr.f32.mxu0 0.0
    %1421 = vmatmul.mubr.f32.gmra.mxu0 %v1096
    %v1422 = vpop.f32.mrf.mxu0
    %v1423 = vadd.f32 %v843, %v1422
    %v1424 = vpop.f32.mrf.mxu0
    %1425 = vmatprep.mubr.f32.mxu0 0.0
    %1426 = vmatmul.mubr.f32.gmra.mxu0 %v1099
    %v1427 = vpop.f32.mrf.mxu0
    %v1428 = vadd.f32 %v848, %v1427
    %v1429 = vpop.f32.mrf.mxu0
    %1430 = vmatprep.mubr.f32.mxu0 0.0
    %1431 = vmatmul.mubr.f32.gmra.mxu0 %v1102
    %v1432 = vpop.f32.mrf.mxu0
    %v1433 = vadd.f32 %v853, %v1432
    %v1434 = vpop.f32.mrf.mxu0
    %1435 = vmatprep.mubr.f32.mxu0 0.0
    %1436 = vmatmul.mubr.f32.gmra.mxu0 %v1105
    %v1437 = vpop.f32.mrf.mxu0
    %v1438 = vadd.f32 %v858, %v1437
    %v1439 = vpop.f32.mrf.mxu0
    %1440 = vmatprep.mubr.f32.mxu0 0.0
    %1441 = vmatmul.mubr.f32.gmra.mxu0 %v1108
    %v1442 = vpop.f32.mrf.mxu0
    %v1443 = vadd.f32 %v863, %v1442
    %v1444 = vpop.f32.mrf.mxu0
    %1445 = vmatprep.mubr.f32.mxu0 0.0
    %1446 = vmatmul.mubr.f32.gmra.mxu0 %v1111
    %v1447 = vpop.f32.mrf.mxu0
    %v1448 = vadd.f32 %v868, %v1447
    %v1449 = vpop.f32.mrf.mxu0
    %1450 = vmatprep.mubr.f32.mxu0 0.0
    %1451 = vmatmul.mubr.f32.gmra.mxu0 %v1114
    %v1452 = vpop.f32.mrf.mxu0
    %v1453 = vadd.f32 %v873, %v1452
    %v1454 = vpop.f32.mrf.mxu0
    %1455 = vmatprep.mubr.f32.mxu0 0.0
    %1456 = vmatmul.mubr.f32.gmra.mxu0 %v1117
    %v1457 = vpop.f32.mrf.mxu0
    %v1458 = vadd.f32 %v878, %v1457
    %v1459 = vpop.f32.mrf.mxu0
    %1460 = vmatprep.mubr.f32.mxu0 0.0
    %1461 = vmatmul.mubr.f32.gmra.mxu0 %v1120
    %v1462 = vpop.f32.mrf.mxu0
    %v1463 = vadd.f32 %v883, %v1462
    %v1464 = vpop.f32.mrf.mxu0
    %1465 = vmatprep.mubr.f32.mxu0 0.0
    %1466 = vmatmul.mubr.f32.gmra.mxu0 %v1123
    %v1467 = vpop.f32.mrf.mxu0
    %v1468 = vadd.f32 %v888, %v1467
    %v1469 = vpop.f32.mrf.mxu0
    %1470 = vmatprep.mubr.f32.mxu0 0.0
    %1471 = vmatmul.mubr.f32.gmra.mxu0 %v1126
    %v1472 = vpop.f32.mrf.mxu0
    %v1473 = vadd.f32 %v893, %v1472
    %v1474 = vpop.f32.mrf.mxu0
    %1475 = vmatprep.mubr.f32.mxu0 0.0
    %1476 = vmatmul.mubr.f32.gmra.mxu0 %v1129
    %v1477 = vpop.f32.mrf.mxu0
    %v1478 = vadd.f32 %v898, %v1477
    %v1479 = vpop.f32.mrf.mxu0
    %1480 = vmatprep.mubr.f32.mxu0 0.0
    %1481 = vmatmul.mubr.f32.gmra.mxu0 %v1132
    %v1482 = vpop.f32.mrf.mxu0
    %v1483 = vadd.f32 %v903, %v1482
    %v1484 = vpop.f32.mrf.mxu0
    %1485 = vmatprep.mubr.f32.mxu0 0.0
    %1486 = vmatmul.mubr.f32.gmra.mxu0 %v1135
    %v1487 = vpop.f32.mrf.mxu0
    %v1488 = vadd.f32 %v908, %v1487
    %v1489 = vpop.f32.mrf.mxu0
    %1490 = vmatprep.mubr.f32.mxu0 0.0
    %1491 = vmatmul.mubr.f32.gmra.mxu0 %v1138
    %v1492 = vpop.f32.mrf.mxu0
    %v1493 = vadd.f32 %v913, %v1492
    %v1494 = vpop.f32.mrf.mxu0
    %1495 = vmatprep.mubr.f32.mxu0 0.0
    %1496 = vmatmul.mubr.f32.gmra.mxu0 %v1141
    %v1497 = vpop.f32.mrf.mxu0
    %v1498 = vadd.f32 %v918, %v1497
    %v1499 = vpop.f32.mrf.mxu0
    %1500 = vmatprep.mubr.f32.mxu0 0.0
    %1501 = vmatmul.mubr.f32.gmra.mxu0 %v1144
    %v1502 = vpop.f32.mrf.mxu0
    %v1503 = vadd.f32 %v923, %v1502
    %v1504 = vpop.f32.mrf.mxu0
    %1505 = vmatprep.mubr.f32.mxu0 0.0
    %1506 = vmatmul.mubr.f32.gmra.mxu0 %v1147
    %v1507 = vpop.f32.mrf.mxu0
    %v1508 = vadd.f32 %v928, %v1507
    %v1509 = vpop.f32.mrf.mxu0
    %1510 = vmatprep.mubr.f32.mxu0 0.0
    %1511 = vmatmul.mubr.f32.gmra.mxu0 %v1150
    %v1512 = vpop.f32.mrf.mxu0
    %v1513 = vadd.f32 %v933, %v1512
    %v1514 = vpop.f32.mrf.mxu0
    %1515 = vmatprep.mubr.f32.mxu0 0.0
    %1516 = vmatmul.mubr.f32.gmra.mxu0 %v1153
    %v1517 = vpop.f32.mrf.mxu0
    %v1518 = vadd.f32 %v938, %v1517
    %v1519 = vpop.f32.mrf.mxu0
    %1520 = vmatprep.mubr.f32.mxu0 0.0
    %1521 = vmatmul.mubr.f32.gmra.mxu0 %v1156
    %v1522 = vpop.f32.mrf.mxu0
    %v1523 = vadd.f32 %v943, %v1522
    %v1524 = vpop.f32.mrf.mxu0
    %1525 = vmatprep.mubr.f32.mxu0 0.0
    %1526 = vmatmul.mubr.f32.gmra.mxu0 %v1159
    %v1527 = vpop.f32.mrf.mxu0
    %v1528 = vadd.f32 %v948, %v1527
    %v1529 = vpop.f32.mrf.mxu0
    %1530 = vmatprep.mubr.f32.mxu0 0.0
    %1531 = vmatmul.mubr.f32.gmra.mxu0 %v1162
    %v1532 = vpop.f32.mrf.mxu0
    %v1533 = vadd.f32 %v953, %v1532
    %v1534 = vpop.f32.mrf.mxu0
    %1535 = vmatprep.mubr.f32.mxu0 0.0
    %1536 = vmatmul.mubr.f32.gmra.mxu0 %v1165
    %v1537 = vpop.f32.mrf.mxu0
    %v1538 = vadd.f32 %v958, %v1537
    %v1539 = vpop.f32.mrf.mxu0
    %1540 = vmatprep.mubr.f32.mxu0 0.0
    %1541 = vmatmul.mubr.f32.gmra.mxu0 %v1168
    %v1542 = vpop.f32.mrf.mxu0
    %v1543 = vadd.f32 %v963, %v1542
    %v1544 = vpop.f32.mrf.mxu0
    %1545 = vmatprep.mubr.f32.mxu0 0.0
    %1546 = vmatmul.mubr.f32.gmra.mxu0 %v1171
    %v1547 = vpop.f32.mrf.mxu0
    %v1548 = vadd.f32 %v968, %v1547
    %v1549 = vpop.f32.mrf.mxu0
    %1550 = vmatprep.mubr.f32.mxu0 0.0
    %1551 = vmatmul.mubr.f32.gmra.mxu0 %v1174
    %v1552 = vpop.f32.mrf.mxu0
    %v1553 = vadd.f32 %v973, %v1552
    %v1554 = vpop.f32.mrf.mxu0
    %1555 = vmatprep.mubr.f32.mxu0 0.0
    %1556 = vmatmul.mubr.f32.gmra.mxu0 %v1177
    %v1557 = vpop.f32.mrf.mxu0
    %v1558 = vadd.f32 %v978, %v1557
    %v1559 = vpop.f32.mrf.mxu0
    %1560 = vmatprep.mubr.f32.mxu0 0.0
    %1561 = vmatmul.mubr.f32.gmra.mxu0 %v1180
    %v1562 = vpop.f32.mrf.mxu0
    %v1563 = vadd.f32 %v983, %v1562
    %v1564 = vpop.f32.mrf.mxu0
    %1565 = vmatprep.mubr.f32.mxu0 0.0
    %1566 = vmatmul.mubr.f32.gmra.mxu0 %v1183
    %v1567 = vpop.f32.mrf.mxu0
    %v1568 = vadd.f32 %v988, %v1567
    %v1569 = vpop.f32.mrf.mxu0
    %1570 = vmatprep.mubr.f32.mxu0 0.0
    %1571 = vmatmul.mubr.f32.gmra.mxu0 %v1186
    %v1572 = vpop.f32.mrf.mxu0
    %v1573 = vadd.f32 %v993, %v1572
    %v1574 = vpop.f32.mrf.mxu0
    %1575 = vdwg.mxu0
    %v1576 = vld [vmem:[#allocation2 + $0x2] sm:$0xff]
    %v1577 = vld [vmem:[#allocation2 + $0xa] sm:$0xff]
    %v1578 = vld [vmem:[#allocation2 + $0x1a] sm:$0xff]
    %v1579 = vld [vmem:[#allocation2 + $0x22] sm:$0xff]
    %v1580 = vld [vmem:[#allocation2 + $0x32] sm:$0xff]
    %v1581 = vld [vmem:[#allocation2 + $0x3a] sm:$0xff]
    %v1582 = vld [vmem:[#allocation2 + $0x4a] sm:$0xff]
    %v1583 = vld [vmem:[#allocation2 + $0x52] sm:$0xff]
    %v1584 = vld [vmem:[#allocation2 + $0x62] sm:$0xff]
    %v1585 = vld [vmem:[#allocation2 + $0x6a] sm:$0xff]
    %v1586 = vld [vmem:[#allocation2 + $0x7a] sm:$0xff]
    %v1587 = vld [vmem:[#allocation2 + $0x82] sm:$0xff]
    %v1588 = vld [vmem:[#allocation2 + $0x92] sm:$0xff]
    %v1589 = vld [vmem:[#allocation2 + $0x9a] sm:$0xff]
    %v1590 = vld [vmem:[#allocation2 + $0xaa] sm:$0xff]
    %v1591 = vld [vmem:[#allocation2 + $0xb2] sm:$0xff]
    %v1592 = vld [vmem:[#allocation2 + $0xc2] sm:$0xff]
    %v1593 = vld [vmem:[#allocation2 + $0xca] sm:$0xff]
    %v1594 = vld [vmem:[#allocation2 + $0xda] sm:$0xff]
    %v1595 = vld [vmem:[#allocation2 + $0xe2] sm:$0xff]
    %v1596 = vld [vmem:[#allocation2 + $0xf2] sm:$0xff]
    %v1597 = vld [vmem:[#allocation2 + $0xfa] sm:$0xff]
    %v1598 = vld [vmem:[#allocation2 + $0x10a] sm:$0xff]
    %v1599 = vld [vmem:[#allocation2 + $0x112] sm:$0xff]
    %v1600 = vld [vmem:[#allocation2 + $0x122] sm:$0xff]
    %v1601 = vld [vmem:[#allocation2 + $0x12a] sm:$0xff]
    %v1602 = vld [vmem:[#allocation2 + $0x13a] sm:$0xff]
    %v1603 = vld [vmem:[#allocation2 + $0x142] sm:$0xff]
    %v1604 = vld [vmem:[#allocation2 + $0x152] sm:$0xff]
    %v1605 = vld [vmem:[#allocation2 + $0x15a] sm:$0xff]
    %v1606 = vld [vmem:[#allocation2 + $0x16a] sm:$0xff]
    %v1607 = vld [vmem:[#allocation2 + $0x172] sm:$0xff]
    %v1608 = vld [vmem:[#allocation2 + $0x1b2] sm:$0xff]
    %v1609 = vld [vmem:[#allocation2 + $0x1ba] sm:$0xff]
    %v1610 = vld [vmem:[#allocation2 + $0x1ca] sm:$0xff]
    %v1611 = vld [vmem:[#allocation2 + $0x1d2] sm:$0xff]
    %v1612 = vld [vmem:[#allocation2 + $0x1e2] sm:$0xff]
    %v1613 = vld [vmem:[#allocation2 + $0x1ea] sm:$0xff]
    %v1614 = vld [vmem:[#allocation2 + $0x1fa] sm:$0xff]
    %v1615 = vld [vmem:[#allocation2 + $0x202] sm:$0xff]
    %v1616 = vld [vmem:[#allocation2 + $0x212] sm:$0xff]
    %v1617 = vld [vmem:[#allocation2 + $0x21a] sm:$0xff]
    %v1618 = vld [vmem:[#allocation2 + $0x22a] sm:$0xff]
    %v1619 = vld [vmem:[#allocation2 + $0x232] sm:$0xff]
    %v1620 = vld [vmem:[#allocation2 + $0x242] sm:$0xff]
    %v1621 = vld [vmem:[#allocation2 + $0x24a] sm:$0xff]
    %v1622 = vld [vmem:[#allocation2 + $0x25a] sm:$0xff]
    %v1623 = vld [vmem:[#allocation2 + $0x262] sm:$0xff]
    %v1624 = vld [vmem:[#allocation2 + $0x272] sm:$0xff]
    %v1625 = vld [vmem:[#allocation2 + $0x27a] sm:$0xff]
    %v1626 = vld [vmem:[#allocation2 + $0x28a] sm:$0xff]
    %v1627 = vld [vmem:[#allocation2 + $0x292] sm:$0xff]
    %v1628 = vld [vmem:[#allocation2 + $0x2a2] sm:$0xff]
    %v1629 = vld [vmem:[#allocation2 + $0x2aa] sm:$0xff]
    %v1630 = vld [vmem:[#allocation2 + $0x2ba] sm:$0xff]
    %v1631 = vld [vmem:[#allocation2 + $0x2c2] sm:$0xff]
    %v1632 = vld [vmem:[#allocation2 + $0x2d2] sm:$0xff]
    %v1633 = vld [vmem:[#allocation2 + $0x2da] sm:$0xff]
    %v1634 = vld [vmem:[#allocation2 + $0x2ea] sm:$0xff]
    %v1635 = vld [vmem:[#allocation2 + $0x2f2] sm:$0xff]
    %v1636 = vld [vmem:[#allocation2 + $0x302] sm:$0xff]
    %v1637 = vld [vmem:[#allocation2 + $0x30a] sm:$0xff]
    %v1638 = vld [vmem:[#allocation2 + $0x31a] sm:$0xff]
    %v1639 = vld [vmem:[#allocation2 + $0x322] sm:$0xff]
    %s1640 = scalar_lea.vmem %s1, 8
    %v1641 = vld [vmem:[%s1640] sm:$0xf]
    %v1643 = vsel %vm109, %v1576, 0
    %v1646 = vsel %vm109, %v1577, 0
    %v1649 = vsel %vm109, %v1578, 0
    %v1652 = vsel %vm109, %v1579, 0
    %v1655 = vsel %vm109, %v1580, 0
    %v1658 = vsel %vm109, %v1581, 0
    %v1661 = vsel %vm109, %v1582, 0
    %v1664 = vsel %vm109, %v1583, 0
    %v1667 = vsel %vm109, %v1584, 0
    %v1670 = vsel %vm109, %v1585, 0
    %v1673 = vsel %vm109, %v1586, 0
    %v1676 = vsel %vm109, %v1587, 0
    %v1679 = vsel %vm109, %v1588, 0
    %v1682 = vsel %vm109, %v1589, 0
    %v1685 = vsel %vm109, %v1590, 0
    %v1688 = vsel %vm109, %v1591, 0
    %v1691 = vsel %vm109, %v1592, 0
    %v1694 = vsel %vm109, %v1593, 0
    %v1697 = vsel %vm109, %v1594, 0
    %v1700 = vsel %vm109, %v1595, 0
    %v1703 = vsel %vm109, %v1596, 0
    %v1706 = vsel %vm109, %v1597, 0
    %v1709 = vsel %vm109, %v1598, 0
    %v1712 = vsel %vm109, %v1599, 0
    %v1715 = vsel %vm109, %v1600, 0
    %v1718 = vsel %vm109, %v1601, 0
    %v1721 = vsel %vm109, %v1602, 0
    %v1724 = vsel %vm109, %v1603, 0
    %v1727 = vsel %vm109, %v1604, 0
    %v1730 = vsel %vm109, %v1605, 0
    %v1733 = vsel %vm109, %v1606, 0
    %v1736 = vsel %vm109, %v1607, 0
    %v1739 = vsel %vm109, %v1608, 0
    %v1742 = vsel %vm109, %v1609, 0
    %v1745 = vsel %vm109, %v1610, 0
    %v1748 = vsel %vm109, %v1611, 0
    %v1751 = vsel %vm109, %v1612, 0
    %v1754 = vsel %vm109, %v1613, 0
    %v1757 = vsel %vm109, %v1614, 0
    %v1760 = vsel %vm109, %v1615, 0
    %v1763 = vsel %vm109, %v1616, 0
    %v1766 = vsel %vm109, %v1617, 0
    %v1769 = vsel %vm109, %v1618, 0
    %v1772 = vsel %vm109, %v1619, 0
    %v1775 = vsel %vm109, %v1620, 0
    %v1778 = vsel %vm109, %v1621, 0
    %v1781 = vsel %vm109, %v1622, 0
    %v1784 = vsel %vm109, %v1623, 0
    %v1787 = vsel %vm109, %v1624, 0
    %v1790 = vsel %vm109, %v1625, 0
    %v1793 = vsel %vm109, %v1626, 0
    %v1796 = vsel %vm109, %v1627, 0
    %v1799 = vsel %vm109, %v1628, 0
    %v1802 = vsel %vm109, %v1629, 0
    %v1805 = vsel %vm109, %v1630, 0
    %v1808 = vsel %vm109, %v1631, 0
    %v1811 = vsel %vm109, %v1632, 0
    %v1814 = vsel %vm109, %v1633, 0
    %v1817 = vsel %vm109, %v1634, 0
    %v1820 = vsel %vm109, %v1635, 0
    %v1823 = vsel %vm109, %v1636, 0
    %v1826 = vsel %vm109, %v1637, 0
    %v1829 = vsel %vm109, %v1638, 0
    %v1832 = vsel %vm109, %v1639, 0
    %v1835 = vsel %vm607, %v1641, 0
    %1837 = vmatprep.subr.mxu0 0.0
    %1838 = vmatpush1.msra.mxu0 0.0
    %1839 = vmatprep.subr.mxu0 0.0
    %1840 = vmatpush1.msra.mxu0 0.0
    %1841 = vmatprep.subr.mxu0 0.0
    %1842 = vmatpush1.msra.mxu0 0.0
    %1843 = vmatprep.subr.mxu0 0.0
    %1844 = vmatpush1.msra.mxu0 0.0
    %1845 = vmatprep.subr.mxu0 0.0
    %1846 = vmatpush1.msra.mxu0 0.0
    %1847 = vmatprep.subr.mxu0 0.0
    %1848 = vmatpush1.msra.mxu0 0.0
    %1849 = vmatprep.subr.mxu0 0.0
    %1850 = vmatpush1.msra.mxu0 0.0
    %1851 = vmatprep.subr.mxu0 0.0
    %1852 = vmatpush1.msra.mxu0 0.0
    %1853 = vmatprep.subr.mxu0 0.0
    %1854 = vmatpush1.msra.mxu0 0.0
    %1855 = vmatprep.subr.mxu0 0.0
    %1856 = vmatpush1.msra.mxu0 0.0
    %1857 = vmatprep.subr.mxu0 0.0
    %1858 = vmatpush1.msra.mxu0 0.0
    %1859 = vmatprep.subr.mxu0 0.0
    %1860 = vmatpush1.msra.mxu0 0.0
    %1861 = vmatprep.subr.mxu0 0.0
    %1862 = vmatpush1.msra.mxu0 0.0
    %1863 = vmatprep.subr.mxu0 0.0
    %1864 = vmatpush1.msra.mxu0 0.0
    %1865 = vmatprep.subr.mxu0 0.0
    %1866 = vmatpush1.msra.mxu0 0.0
    %1867 = vmatprep.subr.mxu0 0.0
    %1868 = vmatpush1.msra.mxu0 %v1835
    %1869 = vmatprep.subr.mxu0 0.0
    %1870 = vmatpush2.msra.mxu0 0.0
    %1871 = vmatprep.subr.mxu0 0.0
    %1872 = vmatpush2.msra.mxu0 0.0
    %1873 = vmatprep.subr.mxu0 0.0
    %1874 = vmatpush2.msra.mxu0 0.0
    %1875 = vmatprep.subr.mxu0 0.0
    %1876 = vmatpush2.msra.mxu0 0.0
    %1877 = vmatprep.subr.mxu0 0.0
    %1878 = vmatpush2.msra.mxu0 0.0
    %1879 = vmatprep.subr.mxu0 0.0
    %1880 = vmatpush2.msra.mxu0 0.0
    %1881 = vmatprep.subr.mxu0 0.0
    %1882 = vmatpush2.msra.mxu0 0.0
    %1883 = vmatprep.subr.mxu0 0.0
    %1884 = vmatpush2.msra.mxu0 0.0
    %1885 = vmatprep.subr.mxu0 0.0
    %1886 = vmatpush2.msra.mxu0 0.0
    %1887 = vmatprep.subr.mxu0 0.0
    %1888 = vmatpush2.msra.mxu0 0.0
    %1889 = vmatprep.subr.mxu0 0.0
    %1890 = vmatpush2.msra.mxu0 0.0
    %1891 = vmatprep.subr.mxu0 0.0
    %1892 = vmatpush2.msra.mxu0 0.0
    %1893 = vmatprep.subr.mxu0 0.0
    %1894 = vmatpush2.msra.mxu0 0.0
    %1895 = vmatprep.subr.mxu0 0.0
    %1896 = vmatpush2.msra.mxu0 0.0
    %1897 = vmatprep.subr.mxu0 0.0
    %1898 = vmatpush2.msra.mxu0 0.0
    %1899 = vmatprep.subr.mxu0 0.0
    %1900 = vmatpush2.msra.mxu0 0.0
    %1901 = vmatprep.mubr.f32.mxu0 0.0
    %1902 = vmatmul.mubr.f32.gmra.mxu0 %v1643
    %v1903 = vpop.f32.mrf.mxu0
    %v1904 = vadd.f32 0.0, %v1903
    %v1905 = vpop.f32.mrf.mxu0
    %1906 = vmatprep.mubr.f32.mxu0 0.0
    %1907 = vmatmul.mubr.f32.gmra.mxu0 %v1646
    %v1908 = vpop.f32.mrf.mxu0
    %v1909 = vadd.f32 0.0, %v1908
    %v1910 = vpop.f32.mrf.mxu0
    %1911 = vmatprep.mubr.f32.mxu0 0.0
    %1912 = vmatmul.mubr.f32.gmra.mxu0 %v1649
    %v1913 = vpop.f32.mrf.mxu0
    %v1914 = vadd.f32 0.0, %v1913
    %v1915 = vpop.f32.mrf.mxu0
    %1916 = vmatprep.mubr.f32.mxu0 0.0
    %1917 = vmatmul.mubr.f32.gmra.mxu0 %v1652
    %v1918 = vpop.f32.mrf.mxu0
    %v1919 = vadd.f32 0.0, %v1918
    %v1920 = vpop.f32.mrf.mxu0
    %1921 = vmatprep.mubr.f32.mxu0 0.0
    %1922 = vmatmul.mubr.f32.gmra.mxu0 %v1655
    %v1923 = vpop.f32.mrf.mxu0
    %v1924 = vadd.f32 0.0, %v1923
    %v1925 = vpop.f32.mrf.mxu0
    %1926 = vmatprep.mubr.f32.mxu0 0.0
    %1927 = vmatmul.mubr.f32.gmra.mxu0 %v1658
    %v1928 = vpop.f32.mrf.mxu0
    %v1929 = vadd.f32 0.0, %v1928
    %v1930 = vpop.f32.mrf.mxu0
    %1931 = vmatprep.mubr.f32.mxu0 0.0
    %1932 = vmatmul.mubr.f32.gmra.mxu0 %v1661
    %v1933 = vpop.f32.mrf.mxu0
    %v1934 = vadd.f32 0.0, %v1933
    %v1935 = vpop.f32.mrf.mxu0
    %1936 = vmatprep.mubr.f32.mxu0 0.0
    %1937 = vmatmul.mubr.f32.gmra.mxu0 %v1664
    %v1938 = vpop.f32.mrf.mxu0
    %v1939 = vadd.f32 0.0, %v1938
    %v1940 = vpop.f32.mrf.mxu0
    %1941 = vmatprep.mubr.f32.mxu0 0.0
    %1942 = vmatmul.mubr.f32.gmra.mxu0 %v1667
    %v1943 = vpop.f32.mrf.mxu0
    %v1944 = vadd.f32 0.0, %v1943
    %v1945 = vpop.f32.mrf.mxu0
    %1946 = vmatprep.mubr.f32.mxu0 0.0
    %1947 = vmatmul.mubr.f32.gmra.mxu0 %v1670
    %v1948 = vpop.f32.mrf.mxu0
    %v1949 = vadd.f32 0.0, %v1948
    %v1950 = vpop.f32.mrf.mxu0
    %1951 = vmatprep.mubr.f32.mxu0 0.0
    %1952 = vmatmul.mubr.f32.gmra.mxu0 %v1673
    %v1953 = vpop.f32.mrf.mxu0
    %v1954 = vadd.f32 0.0, %v1953
    %v1955 = vpop.f32.mrf.mxu0
    %1956 = vmatprep.mubr.f32.mxu0 0.0
    %1957 = vmatmul.mubr.f32.gmra.mxu0 %v1676
    %v1958 = vpop.f32.mrf.mxu0
    %v1959 = vadd.f32 0.0, %v1958
    %v1960 = vpop.f32.mrf.mxu0
    %1961 = vmatprep.mubr.f32.mxu0 0.0
    %1962 = vmatmul.mubr.f32.gmra.mxu0 %v1679
    %v1963 = vpop.f32.mrf.mxu0
    %v1964 = vadd.f32 0.0, %v1963
    %v1965 = vpop.f32.mrf.mxu0
    %1966 = vmatprep.mubr.f32.mxu0 0.0
    %1967 = vmatmul.mubr.f32.gmra.mxu0 %v1682
    %v1968 = vpop.f32.mrf.mxu0
    %v1969 = vadd.f32 0.0, %v1968
    %v1970 = vpop.f32.mrf.mxu0
    %1971 = vmatprep.mubr.f32.mxu0 0.0
    %1972 = vmatmul.mubr.f32.gmra.mxu0 %v1685
    %v1973 = vpop.f32.mrf.mxu0
    %v1974 = vadd.f32 0.0, %v1973
    %v1975 = vpop.f32.mrf.mxu0
    %1976 = vmatprep.mubr.f32.mxu0 0.0
    %1977 = vmatmul.mubr.f32.gmra.mxu0 %v1688
    %v1978 = vpop.f32.mrf.mxu0
    %v1979 = vadd.f32 0.0, %v1978
    %v1980 = vpop.f32.mrf.mxu0
    %1981 = vmatprep.mubr.f32.mxu0 0.0
    %1982 = vmatmul.mubr.f32.gmra.mxu0 %v1691
    %v1983 = vpop.f32.mrf.mxu0
    %v1984 = vadd.f32 0.0, %v1983
    %v1985 = vpop.f32.mrf.mxu0
    %1986 = vmatprep.mubr.f32.mxu0 0.0
    %1987 = vmatmul.mubr.f32.gmra.mxu0 %v1694
    %v1988 = vpop.f32.mrf.mxu0
    %v1989 = vadd.f32 0.0, %v1988
    %v1990 = vpop.f32.mrf.mxu0
    %1991 = vmatprep.mubr.f32.mxu0 0.0
    %1992 = vmatmul.mubr.f32.gmra.mxu0 %v1697
    %v1993 = vpop.f32.mrf.mxu0
    %v1994 = vadd.f32 0.0, %v1993
    %v1995 = vpop.f32.mrf.mxu0
    %1996 = vmatprep.mubr.f32.mxu0 0.0
    %1997 = vmatmul.mubr.f32.gmra.mxu0 %v1700
    %v1998 = vpop.f32.mrf.mxu0
    %v1999 = vadd.f32 0.0, %v1998
    %v2000 = vpop.f32.mrf.mxu0
    %2001 = vmatprep.mubr.f32.mxu0 0.0
    %2002 = vmatmul.mubr.f32.gmra.mxu0 %v1703
    %v2003 = vpop.f32.mrf.mxu0
    %v2004 = vadd.f32 0.0, %v2003
    %v2005 = vpop.f32.mrf.mxu0
    %2006 = vmatprep.mubr.f32.mxu0 0.0
    %2007 = vmatmul.mubr.f32.gmra.mxu0 %v1706
    %v2008 = vpop.f32.mrf.mxu0
    %v2009 = vadd.f32 0.0, %v2008
    %v2010 = vpop.f32.mrf.mxu0
    %2011 = vmatprep.mubr.f32.mxu0 0.0
    %2012 = vmatmul.mubr.f32.gmra.mxu0 %v1709
    %v2013 = vpop.f32.mrf.mxu0
    %v2014 = vadd.f32 0.0, %v2013
    %v2015 = vpop.f32.mrf.mxu0
    %2016 = vmatprep.mubr.f32.mxu0 0.0
    %2017 = vmatmul.mubr.f32.gmra.mxu0 %v1712
    %v2018 = vpop.f32.mrf.mxu0
    %v2019 = vadd.f32 0.0, %v2018
    %v2020 = vpop.f32.mrf.mxu0
    %2021 = vmatprep.mubr.f32.mxu0 0.0
    %2022 = vmatmul.mubr.f32.gmra.mxu0 %v1715
    %v2023 = vpop.f32.mrf.mxu0
    %v2024 = vadd.f32 0.0, %v2023
    %v2025 = vpop.f32.mrf.mxu0
    %2026 = vmatprep.mubr.f32.mxu0 0.0
    %2027 = vmatmul.mubr.f32.gmra.mxu0 %v1718
    %v2028 = vpop.f32.mrf.mxu0
    %v2029 = vadd.f32 0.0, %v2028
    %v2030 = vpop.f32.mrf.mxu0
    %2031 = vmatprep.mubr.f32.mxu0 0.0
    %2032 = vmatmul.mubr.f32.gmra.mxu0 %v1721
    %v2033 = vpop.f32.mrf.mxu0
    %v2034 = vadd.f32 0.0, %v2033
    %v2035 = vpop.f32.mrf.mxu0
    %2036 = vmatprep.mubr.f32.mxu0 0.0
    %2037 = vmatmul.mubr.f32.gmra.mxu0 %v1724
    %v2038 = vpop.f32.mrf.mxu0
    %v2039 = vadd.f32 0.0, %v2038
    %v2040 = vpop.f32.mrf.mxu0
    %2041 = vmatprep.mubr.f32.mxu0 0.0
    %2042 = vmatmul.mubr.f32.gmra.mxu0 %v1727
    %v2043 = vpop.f32.mrf.mxu0
    %v2044 = vadd.f32 0.0, %v2043
    %v2045 = vpop.f32.mrf.mxu0
    %2046 = vmatprep.mubr.f32.mxu0 0.0
    %2047 = vmatmul.mubr.f32.gmra.mxu0 %v1730
    %v2048 = vpop.f32.mrf.mxu0
    %v2049 = vadd.f32 0.0, %v2048
    %v2050 = vpop.f32.mrf.mxu0
    %2051 = vmatprep.mubr.f32.mxu0 0.0
    %2052 = vmatmul.mubr.f32.gmra.mxu0 %v1733
    %v2053 = vpop.f32.mrf.mxu0
    %v2054 = vadd.f32 0.0, %v2053
    %v2055 = vpop.f32.mrf.mxu0
    %2056 = vmatprep.mubr.f32.mxu0 0.0
    %2057 = vmatmul.mubr.f32.gmra.mxu0 %v1736
    %v2058 = vpop.f32.mrf.mxu0
    %v2059 = vadd.f32 0.0, %v2058
    %v2060 = vpop.f32.mrf.mxu0
    %2061 = vmatprep.mubr.f32.mxu0 0.0
    %2062 = vmatmul.mubr.f32.gmra.mxu0 %v1739
    %v2063 = vpop.f32.mrf.mxu0
    %v2064 = vadd.f32 0.0, %v2063
    %v2065 = vpop.f32.mrf.mxu0
    %2066 = vmatprep.mubr.f32.mxu0 0.0
    %2067 = vmatmul.mubr.f32.gmra.mxu0 %v1742
    %v2068 = vpop.f32.mrf.mxu0
    %v2069 = vadd.f32 0.0, %v2068
    %v2070 = vpop.f32.mrf.mxu0
    %2071 = vmatprep.mubr.f32.mxu0 0.0
    %2072 = vmatmul.mubr.f32.gmra.mxu0 %v1745
    %v2073 = vpop.f32.mrf.mxu0
    %v2074 = vadd.f32 0.0, %v2073
    %v2075 = vpop.f32.mrf.mxu0
    %2076 = vmatprep.mubr.f32.mxu0 0.0
    %2077 = vmatmul.mubr.f32.gmra.mxu0 %v1748
    %v2078 = vpop.f32.mrf.mxu0
    %v2079 = vadd.f32 0.0, %v2078
    %v2080 = vpop.f32.mrf.mxu0
    %2081 = vmatprep.mubr.f32.mxu0 0.0
    %2082 = vmatmul.mubr.f32.gmra.mxu0 %v1751
    %v2083 = vpop.f32.mrf.mxu0
    %v2084 = vadd.f32 0.0, %v2083
    %v2085 = vpop.f32.mrf.mxu0
    %2086 = vmatprep.mubr.f32.mxu0 0.0
    %2087 = vmatmul.mubr.f32.gmra.mxu0 %v1754
    %v2088 = vpop.f32.mrf.mxu0
    %v2089 = vadd.f32 0.0, %v2088
    %v2090 = vpop.f32.mrf.mxu0
    %2091 = vmatprep.mubr.f32.mxu0 0.0
    %2092 = vmatmul.mubr.f32.gmra.mxu0 %v1757
    %v2093 = vpop.f32.mrf.mxu0
    %v2094 = vadd.f32 0.0, %v2093
    %v2095 = vpop.f32.mrf.mxu0
    %2096 = vmatprep.mubr.f32.mxu0 0.0
    %2097 = vmatmul.mubr.f32.gmra.mxu0 %v1760
    %v2098 = vpop.f32.mrf.mxu0
    %v2099 = vadd.f32 0.0, %v2098
    %v2100 = vpop.f32.mrf.mxu0
    %2101 = vmatprep.mubr.f32.mxu0 0.0
    %2102 = vmatmul.mubr.f32.gmra.mxu0 %v1763
    %v2103 = vpop.f32.mrf.mxu0
    %v2104 = vadd.f32 0.0, %v2103
    %v2105 = vpop.f32.mrf.mxu0
    %2106 = vmatprep.mubr.f32.mxu0 0.0
    %2107 = vmatmul.mubr.f32.gmra.mxu0 %v1766
    %v2108 = vpop.f32.mrf.mxu0
    %v2109 = vadd.f32 0.0, %v2108
    %v2110 = vpop.f32.mrf.mxu0
    %2111 = vmatprep.mubr.f32.mxu0 0.0
    %2112 = vmatmul.mubr.f32.gmra.mxu0 %v1769
    %v2113 = vpop.f32.mrf.mxu0
    %v2114 = vadd.f32 0.0, %v2113
    %v2115 = vpop.f32.mrf.mxu0
    %2116 = vmatprep.mubr.f32.mxu0 0.0
    %2117 = vmatmul.mubr.f32.gmra.mxu0 %v1772
    %v2118 = vpop.f32.mrf.mxu0
    %v2119 = vadd.f32 0.0, %v2118
    %v2120 = vpop.f32.mrf.mxu0
    %2121 = vmatprep.mubr.f32.mxu0 0.0
    %2122 = vmatmul.mubr.f32.gmra.mxu0 %v1775
    %v2123 = vpop.f32.mrf.mxu0
    %v2124 = vadd.f32 0.0, %v2123
    %v2125 = vpop.f32.mrf.mxu0
    %2126 = vmatprep.mubr.f32.mxu0 0.0
    %2127 = vmatmul.mubr.f32.gmra.mxu0 %v1778
    %v2128 = vpop.f32.mrf.mxu0
    %v2129 = vadd.f32 0.0, %v2128
    %v2130 = vpop.f32.mrf.mxu0
    %2131 = vmatprep.mubr.f32.mxu0 0.0
    %2132 = vmatmul.mubr.f32.gmra.mxu0 %v1781
    %v2133 = vpop.f32.mrf.mxu0
    %v2134 = vadd.f32 0.0, %v2133
    %v2135 = vpop.f32.mrf.mxu0
    %2136 = vmatprep.mubr.f32.mxu0 0.0
    %2137 = vmatmul.mubr.f32.gmra.mxu0 %v1784
    %v2138 = vpop.f32.mrf.mxu0
    %v2139 = vadd.f32 0.0, %v2138
    %v2140 = vpop.f32.mrf.mxu0
    %2141 = vmatprep.mubr.f32.mxu0 0.0
    %2142 = vmatmul.mubr.f32.gmra.mxu0 %v1787
    %v2143 = vpop.f32.mrf.mxu0
    %v2144 = vadd.f32 0.0, %v2143
    %v2145 = vpop.f32.mrf.mxu0
    %2146 = vmatprep.mubr.f32.mxu0 0.0
    %2147 = vmatmul.mubr.f32.gmra.mxu0 %v1790
    %v2148 = vpop.f32.mrf.mxu0
    %v2149 = vadd.f32 0.0, %v2148
    %v2150 = vpop.f32.mrf.mxu0
    %2151 = vmatprep.mubr.f32.mxu0 0.0
    %2152 = vmatmul.mubr.f32.gmra.mxu0 %v1793
    %v2153 = vpop.f32.mrf.mxu0
    %v2154 = vadd.f32 0.0, %v2153
    %v2155 = vpop.f32.mrf.mxu0
    %2156 = vmatprep.mubr.f32.mxu0 0.0
    %2157 = vmatmul.mubr.f32.gmra.mxu0 %v1796
    %v2158 = vpop.f32.mrf.mxu0
    %v2159 = vadd.f32 0.0, %v2158
    %v2160 = vpop.f32.mrf.mxu0
    %2161 = vmatprep.mubr.f32.mxu0 0.0
    %2162 = vmatmul.mubr.f32.gmra.mxu0 %v1799
    %v2163 = vpop.f32.mrf.mxu0
    %v2164 = vadd.f32 0.0, %v2163
    %v2165 = vpop.f32.mrf.mxu0
    %2166 = vmatprep.mubr.f32.mxu0 0.0
    %2167 = vmatmul.mubr.f32.gmra.mxu0 %v1802
    %v2168 = vpop.f32.mrf.mxu0
    %v2169 = vadd.f32 0.0, %v2168
    %v2170 = vpop.f32.mrf.mxu0
    %2171 = vmatprep.mubr.f32.mxu0 0.0
    %2172 = vmatmul.mubr.f32.gmra.mxu0 %v1805
    %v2173 = vpop.f32.mrf.mxu0
    %v2174 = vadd.f32 0.0, %v2173
    %v2175 = vpop.f32.mrf.mxu0
    %2176 = vmatprep.mubr.f32.mxu0 0.0
    %2177 = vmatmul.mubr.f32.gmra.mxu0 %v1808
    %v2178 = vpop.f32.mrf.mxu0
    %v2179 = vadd.f32 0.0, %v2178
    %v2180 = vpop.f32.mrf.mxu0
    %2181 = vmatprep.mubr.f32.mxu0 0.0
    %2182 = vmatmul.mubr.f32.gmra.mxu0 %v1811
    %v2183 = vpop.f32.mrf.mxu0
    %v2184 = vadd.f32 0.0, %v2183
    %v2185 = vpop.f32.mrf.mxu0
    %2186 = vmatprep.mubr.f32.mxu0 0.0
    %2187 = vmatmul.mubr.f32.gmra.mxu0 %v1814
    %v2188 = vpop.f32.mrf.mxu0
    %v2189 = vadd.f32 0.0, %v2188
    %v2190 = vpop.f32.mrf.mxu0
    %2191 = vmatprep.mubr.f32.mxu0 0.0
    %2192 = vmatmul.mubr.f32.gmra.mxu0 %v1817
    %v2193 = vpop.f32.mrf.mxu0
    %v2194 = vadd.f32 0.0, %v2193
    %v2195 = vpop.f32.mrf.mxu0
    %2196 = vmatprep.mubr.f32.mxu0 0.0
    %2197 = vmatmul.mubr.f32.gmra.mxu0 %v1820
    %v2198 = vpop.f32.mrf.mxu0
    %v2199 = vadd.f32 0.0, %v2198
    %v2200 = vpop.f32.mrf.mxu0
    %2201 = vmatprep.mubr.f32.mxu0 0.0
    %2202 = vmatmul.mubr.f32.gmra.mxu0 %v1823
    %v2203 = vpop.f32.mrf.mxu0
    %v2204 = vadd.f32 0.0, %v2203
    %v2205 = vpop.f32.mrf.mxu0
    %2206 = vmatprep.mubr.f32.mxu0 0.0
    %2207 = vmatmul.mubr.f32.gmra.mxu0 %v1826
    %v2208 = vpop.f32.mrf.mxu0
    %v2209 = vadd.f32 0.0, %v2208
    %v2210 = vpop.f32.mrf.mxu0
    %2211 = vmatprep.mubr.f32.mxu0 0.0
    %2212 = vmatmul.mubr.f32.gmra.mxu0 %v1829
    %v2213 = vpop.f32.mrf.mxu0
    %v2214 = vadd.f32 0.0, %v2213
    %v2215 = vpop.f32.mrf.mxu0
    %2216 = vmatprep.mubr.f32.mxu0 0.0
    %2217 = vmatmul.mubr.f32.gmra.mxu0 %v1832
    %v2218 = vpop.f32.mrf.mxu0
    %v2219 = vadd.f32 0.0, %v2218
    %v2220 = vpop.f32.mrf.mxu0
    %2221 = vdwg.mxu0
    %v2222 = vadd.f32 %v1258, %v1904
    %v2223 = vadd.f32 %v1263, %v1909
    %v2224 = vadd.f32 %v1268, %v1914
    %v2225 = vadd.f32 %v1273, %v1919
    %v2226 = vadd.f32 %v1278, %v1924
    %v2227 = vadd.f32 %v1283, %v1929
    %v2228 = vadd.f32 %v1288, %v1934
    %v2229 = vadd.f32 %v1293, %v1939
    %v2230 = vadd.f32 %v1298, %v1944
    %v2231 = vadd.f32 %v1303, %v1949
    %v2232 = vadd.f32 %v1308, %v1954
    %v2233 = vadd.f32 %v1313, %v1959
    %v2234 = vadd.f32 %v1318, %v1964
    %v2235 = vadd.f32 %v1323, %v1969
    %v2236 = vadd.f32 %v1328, %v1974
    %v2237 = vadd.f32 %v1333, %v1979
    %v2238 = vadd.f32 %v1338, %v1984
    %v2239 = vadd.f32 %v1343, %v1989
    %v2240 = vadd.f32 %v1348, %v1994
    %v2241 = vadd.f32 %v1353, %v1999
    %v2242 = vadd.f32 %v1358, %v2004
    %v2243 = vadd.f32 %v1363, %v2009
    %v2244 = vadd.f32 %v1368, %v2014
    %v2245 = vadd.f32 %v1373, %v2019
    %v2246 = vadd.f32 %v1378, %v2024
    %v2247 = vadd.f32 %v1383, %v2029
    %v2248 = vadd.f32 %v1388, %v2034
    %v2249 = vadd.f32 %v1393, %v2039
    %v2250 = vadd.f32 %v1398, %v2044
    %v2251 = vadd.f32 %v1403, %v2049
    %v2252 = vadd.f32 %v1408, %v2054
    %v2253 = vadd.f32 %v1413, %v2059
    %v2254 = vadd.f32 %v1418, %v2064
    %v2255 = vadd.f32 %v1423, %v2069
    %v2256 = vadd.f32 %v1428, %v2074
    %v2257 = vadd.f32 %v1433, %v2079
    %v2258 = vadd.f32 %v1438, %v2084
    %v2259 = vadd.f32 %v1443, %v2089
    %v2260 = vadd.f32 %v1448, %v2094
    %v2261 = vadd.f32 %v1453, %v2099
    %v2262 = vadd.f32 %v1458, %v2104
    %v2263 = vadd.f32 %v1463, %v2109
    %v2264 = vadd.f32 %v1468, %v2114
    %v2265 = vadd.f32 %v1473, %v2119
    %v2266 = vadd.f32 %v1478, %v2124
    %v2267 = vadd.f32 %v1483, %v2129
    %v2268 = vadd.f32 %v1488, %v2134
    %v2269 = vadd.f32 %v1493, %v2139
    %v2270 = vadd.f32 %v1498, %v2144
    %v2271 = vadd.f32 %v1503, %v2149
    %v2272 = vadd.f32 %v1508, %v2154
    %v2273 = vadd.f32 %v1513, %v2159
    %v2274 = vadd.f32 %v1518, %v2164
    %v2275 = vadd.f32 %v1523, %v2169
    %v2276 = vadd.f32 %v1528, %v2174
    %v2277 = vadd.f32 %v1533, %v2179
    %v2278 = vadd.f32 %v1538, %v2184
    %v2279 = vadd.f32 %v1543, %v2189
    %v2280 = vadd.f32 %v1548, %v2194
    %v2281 = vadd.f32 %v1553, %v2199
    %v2282 = vadd.f32 %v1558, %v2204
    %v2283 = vadd.f32 %v1563, %v2209
    %v2284 = vadd.f32 %v1568, %v2214
    %v2285 = vadd.f32 %v1573, %v2219
    %v2286 = vld [vmem:[%s219] sm:$0xff]
    %v2287 = vld [vmem:[%s219 + $0x8] sm:$0xff]
    %v2288 = vld [vmem:[%s219 + $0x18] sm:$0xff]
    %v2289 = vld [vmem:[%s219 + $0x20] sm:$0xff]
    %v2290 = vld [vmem:[%s219 + $0x30] sm:$0xff]
    %v2291 = vld [vmem:[%s219 + $0x38] sm:$0xff]
    %v2292 = vld [vmem:[%s219 + $0x48] sm:$0xff]
    %v2293 = vld [vmem:[%s219 + $0x50] sm:$0xff]
    %v2294 = vld [vmem:[%s219 + $0x60] sm:$0xff]
    %v2295 = vld [vmem:[%s219 + $0x68] sm:$0xff]
    %v2296 = vld [vmem:[%s219 + $0x78] sm:$0xff]
    %v2297 = vld [vmem:[%s219 + $0x80] sm:$0xff]
    %v2298 = vld [vmem:[%s219 + $0x90] sm:$0xff]
    %v2299 = vld [vmem:[%s219 + $0x98] sm:$0xff]
    %v2300 = vld [vmem:[%s219 + $0xa8] sm:$0xff]
    %v2301 = vld [vmem:[%s219 + $0xb0] sm:$0xff]
    %v2302 = vld [vmem:[%s219 + $0xc0] sm:$0xff]
    %v2303 = vld [vmem:[%s219 + $0xc8] sm:$0xff]
    %v2304 = vld [vmem:[%s219 + $0xd8] sm:$0xff]
    %v2305 = vld [vmem:[%s219 + $0xe0] sm:$0xff]
    %v2306 = vld [vmem:[%s219 + $0xf0] sm:$0xff]
    %v2307 = vld [vmem:[%s219 + $0xf8] sm:$0xff]
    %v2308 = vld [vmem:[%s219 + $0x108] sm:$0xff]
    %v2309 = vld [vmem:[%s219 + $0x110] sm:$0xff]
    %v2310 = vld [vmem:[%s219 + $0x120] sm:$0xff]
    %v2311 = vld [vmem:[%s219 + $0x128] sm:$0xff]
    %v2312 = vld [vmem:[%s219 + $0x138] sm:$0xff]
    %v2313 = vld [vmem:[%s219 + $0x140] sm:$0xff]
    %v2314 = vld [vmem:[%s219 + $0x150] sm:$0xff]
    %v2315 = vld [vmem:[%s219 + $0x158] sm:$0xff]
    %v2316 = vld [vmem:[%s219 + $0x168] sm:$0xff]
    %v2317 = vld [vmem:[%s219 + $0x170] sm:$0xff]
    %v2318 = vld [vmem:[%s219 + $0x1b0] sm:$0xff]
    %v2319 = vld [vmem:[%s219 + $0x1b8] sm:$0xff]
    %v2320 = vld [vmem:[%s219 + $0x1c8] sm:$0xff]
    %v2321 = vld [vmem:[%s219 + $0x1d0] sm:$0xff]
    %v2322 = vld [vmem:[%s219 + $0x1e0] sm:$0xff]
    %v2323 = vld [vmem:[%s219 + $0x1e8] sm:$0xff]
    %v2324 = vld [vmem:[%s219 + $0x1f8] sm:$0xff]
    %v2325 = vld [vmem:[%s219 + $0x200] sm:$0xff]
    %v2326 = vld [vmem:[%s219 + $0x210] sm:$0xff]
    %v2327 = vld [vmem:[%s219 + $0x218] sm:$0xff]
    %v2328 = vld [vmem:[%s219 + $0x228] sm:$0xff]
    %v2329 = vld [vmem:[%s219 + $0x230] sm:$0xff]
    %v2330 = vld [vmem:[%s219 + $0x240] sm:$0xff]
    %v2331 = vld [vmem:[%s219 + $0x248] sm:$0xff]
    %v2332 = vld [vmem:[%s219 + $0x258] sm:$0xff]
    %v2333 = vld [vmem:[%s219 + $0x260] sm:$0xff]
    %v2334 = vld [vmem:[%s219 + $0x270] sm:$0xff]
    %v2335 = vld [vmem:[%s219 + $0x278] sm:$0xff]
    %v2336 = vld [vmem:[%s219 + $0x288] sm:$0xff]
    %v2337 = vld [vmem:[%s219 + $0x290] sm:$0xff]
    %v2338 = vld [vmem:[%s219 + $0x2a0] sm:$0xff]
    %v2339 = vld [vmem:[%s219 + $0x2a8] sm:$0xff]
    %v2340 = vld [vmem:[%s219 + $0x2b8] sm:$0xff]
    %v2341 = vld [vmem:[%s219 + $0x2c0] sm:$0xff]
    %v2342 = vld [vmem:[%s219 + $0x2d0] sm:$0xff]
    %v2343 = vld [vmem:[%s219 + $0x2d8] sm:$0xff]
    %v2344 = vld [vmem:[%s219 + $0x2e8] sm:$0xff]
    %v2345 = vld [vmem:[%s219 + $0x2f0] sm:$0xff]
    %v2346 = vld [vmem:[%s219 + $0x300] sm:$0xff]
    %v2347 = vld [vmem:[%s219 + $0x308] sm:$0xff]
    %v2348 = vld [vmem:[%s219 + $0x318] sm:$0xff]
    %v2349 = vld [vmem:[%s219 + $0x320] sm:$0xff]
    %s2350 = scalar_lea.vmem %s1, 12
    %v2351 = vld [vmem:[%s2350] sm:$0xf]
    %v2353 = vsel %vm109, %v2286, 0
    %v2356 = vsel %vm109, %v2287, 0
    %v2359 = vsel %vm109, %v2288, 0
    %v2362 = vsel %vm109, %v2289, 0
    %v2365 = vsel %vm109, %v2290, 0
    %v2368 = vsel %vm109, %v2291, 0
    %v2371 = vsel %vm109, %v2292, 0
    %v2374 = vsel %vm109, %v2293, 0
    %v2377 = vsel %vm109, %v2294, 0
    %v2380 = vsel %vm109, %v2295, 0
    %v2383 = vsel %vm109, %v2296, 0
    %v2386 = vsel %vm109, %v2297, 0
    %v2389 = vsel %vm109, %v2298, 0
    %v2392 = vsel %vm109, %v2299, 0
    %v2395 = vsel %vm109, %v2300, 0
    %v2398 = vsel %vm109, %v2301, 0
    %v2401 = vsel %vm109, %v2302, 0
    %v2404 = vsel %vm109, %v2303, 0
    %v2407 = vsel %vm109, %v2304, 0
    %v2410 = vsel %vm109, %v2305, 0
    %v2413 = vsel %vm109, %v2306, 0
    %v2416 = vsel %vm109, %v2307, 0
    %v2419 = vsel %vm109, %v2308, 0
    %v2422 = vsel %vm109, %v2309, 0
    %v2425 = vsel %vm109, %v2310, 0
    %v2428 = vsel %vm109, %v2311, 0
    %v2431 = vsel %vm109, %v2312, 0
    %v2434 = vsel %vm109, %v2313, 0
    %v2437 = vsel %vm109, %v2314, 0
    %v2440 = vsel %vm109, %v2315, 0
    %v2443 = vsel %vm109, %v2316, 0
    %v2446 = vsel %vm109, %v2317, 0
    %v2449 = vsel %vm109, %v2318, 0
    %v2452 = vsel %vm109, %v2319, 0
    %v2455 = vsel %vm109, %v2320, 0
    %v2458 = vsel %vm109, %v2321, 0
    %v2461 = vsel %vm109, %v2322, 0
    %v2464 = vsel %vm109, %v2323, 0
    %v2467 = vsel %vm109, %v2324, 0
    %v2470 = vsel %vm109, %v2325, 0
    %v2473 = vsel %vm109, %v2326, 0
    %v2476 = vsel %vm109, %v2327, 0
    %v2479 = vsel %vm109, %v2328, 0
    %v2482 = vsel %vm109, %v2329, 0
    %v2485 = vsel %vm109, %v2330, 0
    %v2488 = vsel %vm109, %v2331, 0
    %v2491 = vsel %vm109, %v2332, 0
    %v2494 = vsel %vm109, %v2333, 0
    %v2497 = vsel %vm109, %v2334, 0
    %v2500 = vsel %vm109, %v2335, 0
    %v2503 = vsel %vm109, %v2336, 0
    %v2506 = vsel %vm109, %v2337, 0
    %v2509 = vsel %vm109, %v2338, 0
    %v2512 = vsel %vm109, %v2339, 0
    %v2515 = vsel %vm109, %v2340, 0
    %v2518 = vsel %vm109, %v2341, 0
    %v2521 = vsel %vm109, %v2342, 0
    %v2524 = vsel %vm109, %v2343, 0
    %v2527 = vsel %vm109, %v2344, 0
    %v2530 = vsel %vm109, %v2345, 0
    %v2533 = vsel %vm109, %v2346, 0
    %v2536 = vsel %vm109, %v2347, 0
    %v2539 = vsel %vm109, %v2348, 0
    %v2542 = vsel %vm109, %v2349, 0
    %v2545 = vsel %vm607, %v2351, 0
    %2547 = vmatprep.subr.mxu0 0.0
    %2548 = vmatpush1.msra.mxu0 0.0
    %2549 = vmatprep.subr.mxu0 0.0
    %2550 = vmatpush1.msra.mxu0 0.0
    %2551 = vmatprep.subr.mxu0 0.0
    %2552 = vmatpush1.msra.mxu0 0.0
    %2553 = vmatprep.subr.mxu0 0.0
    %2554 = vmatpush1.msra.mxu0 0.0
    %2555 = vmatprep.subr.mxu0 0.0
    %2556 = vmatpush1.msra.mxu0 0.0
    %2557 = vmatprep.subr.mxu0 0.0
    %2558 = vmatpush1.msra.mxu0 0.0
    %2559 = vmatprep.subr.mxu0 0.0
    %2560 = vmatpush1.msra.mxu0 0.0
    %2561 = vmatprep.subr.mxu0 0.0
    %2562 = vmatpush1.msra.mxu0 0.0
    %2563 = vmatprep.subr.mxu0 0.0
    %2564 = vmatpush1.msra.mxu0 0.0
    %2565 = vmatprep.subr.mxu0 0.0
    %2566 = vmatpush1.msra.mxu0 0.0
    %2567 = vmatprep.subr.mxu0 0.0
    %2568 = vmatpush1.msra.mxu0 0.0
    %2569 = vmatprep.subr.mxu0 0.0
    %2570 = vmatpush1.msra.mxu0 0.0
    %2571 = vmatprep.subr.mxu0 0.0
    %2572 = vmatpush1.msra.mxu0 0.0
    %2573 = vmatprep.subr.mxu0 0.0
    %2574 = vmatpush1.msra.mxu0 0.0
    %2575 = vmatprep.subr.mxu0 0.0
    %2576 = vmatpush1.msra.mxu0 0.0
    %2577 = vmatprep.subr.mxu0 0.0
    %2578 = vmatpush1.msra.mxu0 %v2545
    %2579 = vmatprep.subr.mxu0 0.0
    %2580 = vmatpush2.msra.mxu0 0.0
    %2581 = vmatprep.subr.mxu0 0.0
    %2582 = vmatpush2.msra.mxu0 0.0
    %2583 = vmatprep.subr.mxu0 0.0
    %2584 = vmatpush2.msra.mxu0 0.0
    %2585 = vmatprep.subr.mxu0 0.0
    %2586 = vmatpush2.msra.mxu0 0.0
    %2587 = vmatprep.subr.mxu0 0.0
    %2588 = vmatpush2.msra.mxu0 0.0
    %2589 = vmatprep.subr.mxu0 0.0
    %2590 = vmatpush2.msra.mxu0 0.0
    %2591 = vmatprep.subr.mxu0 0.0
    %2592 = vmatpush2.msra.mxu0 0.0
    %2593 = vmatprep.subr.mxu0 0.0
    %2594 = vmatpush2.msra.mxu0 0.0
    %2595 = vmatprep.subr.mxu0 0.0
    %2596 = vmatpush2.msra.mxu0 0.0
    %2597 = vmatprep.subr.mxu0 0.0
    %2598 = vmatpush2.msra.mxu0 0.0
    %2599 = vmatprep.subr.mxu0 0.0
    %2600 = vmatpush2.msra.mxu0 0.0
    %2601 = vmatprep.subr.mxu0 0.0
    %2602 = vmatpush2.msra.mxu0 0.0
    %2603 = vmatprep.subr.mxu0 0.0
    %2604 = vmatpush2.msra.mxu0 0.0
    %2605 = vmatprep.subr.mxu0 0.0
    %2606 = vmatpush2.msra.mxu0 0.0
    %2607 = vmatprep.subr.mxu0 0.0
    %2608 = vmatpush2.msra.mxu0 0.0
    %2609 = vmatprep.subr.mxu0 0.0
    %2610 = vmatpush2.msra.mxu0 0.0
    %2611 = vmatprep.mubr.f32.mxu0 0.0
    %2612 = vmatmul.mubr.f32.gmra.mxu0 %v2353
    %v2613 = vpop.f32.mrf.mxu0
    %v2614 = vadd.f32 0.0, %v2613
    %v2615 = vpop.f32.mrf.mxu0
    %2616 = vmatprep.mubr.f32.mxu0 0.0
    %2617 = vmatmul.mubr.f32.gmra.mxu0 %v2356
    %v2618 = vpop.f32.mrf.mxu0
    %v2619 = vadd.f32 0.0, %v2618
    %v2620 = vpop.f32.mrf.mxu0
    %2621 = vmatprep.mubr.f32.mxu0 0.0
    %2622 = vmatmul.mubr.f32.gmra.mxu0 %v2359
    %v2623 = vpop.f32.mrf.mxu0
    %v2624 = vadd.f32 0.0, %v2623
    %v2625 = vpop.f32.mrf.mxu0
    %2626 = vmatprep.mubr.f32.mxu0 0.0
    %2627 = vmatmul.mubr.f32.gmra.mxu0 %v2362
    %v2628 = vpop.f32.mrf.mxu0
    %v2629 = vadd.f32 0.0, %v2628
    %v2630 = vpop.f32.mrf.mxu0
    %2631 = vmatprep.mubr.f32.mxu0 0.0
    %2632 = vmatmul.mubr.f32.gmra.mxu0 %v2365
    %v2633 = vpop.f32.mrf.mxu0
    %v2634 = vadd.f32 0.0, %v2633
    %v2635 = vpop.f32.mrf.mxu0
    %2636 = vmatprep.mubr.f32.mxu0 0.0
    %2637 = vmatmul.mubr.f32.gmra.mxu0 %v2368
    %v2638 = vpop.f32.mrf.mxu0
    %v2639 = vadd.f32 0.0, %v2638
    %v2640 = vpop.f32.mrf.mxu0
    %2641 = vmatprep.mubr.f32.mxu0 0.0
    %2642 = vmatmul.mubr.f32.gmra.mxu0 %v2371
    %v2643 = vpop.f32.mrf.mxu0
    %v2644 = vadd.f32 0.0, %v2643
    %v2645 = vpop.f32.mrf.mxu0
    %2646 = vmatprep.mubr.f32.mxu0 0.0
    %2647 = vmatmul.mubr.f32.gmra.mxu0 %v2374
    %v2648 = vpop.f32.mrf.mxu0
    %v2649 = vadd.f32 0.0, %v2648
    %v2650 = vpop.f32.mrf.mxu0
    %2651 = vmatprep.mubr.f32.mxu0 0.0
    %2652 = vmatmul.mubr.f32.gmra.mxu0 %v2377
    %v2653 = vpop.f32.mrf.mxu0
    %v2654 = vadd.f32 0.0, %v2653
    %v2655 = vpop.f32.mrf.mxu0
    %2656 = vmatprep.mubr.f32.mxu0 0.0
    %2657 = vmatmul.mubr.f32.gmra.mxu0 %v2380
    %v2658 = vpop.f32.mrf.mxu0
    %v2659 = vadd.f32 0.0, %v2658
    %v2660 = vpop.f32.mrf.mxu0
    %2661 = vmatprep.mubr.f32.mxu0 0.0
    %2662 = vmatmul.mubr.f32.gmra.mxu0 %v2383
    %v2663 = vpop.f32.mrf.mxu0
    %v2664 = vadd.f32 0.0, %v2663
    %v2665 = vpop.f32.mrf.mxu0
    %2666 = vmatprep.mubr.f32.mxu0 0.0
    %2667 = vmatmul.mubr.f32.gmra.mxu0 %v2386
    %v2668 = vpop.f32.mrf.mxu0
    %v2669 = vadd.f32 0.0, %v2668
    %v2670 = vpop.f32.mrf.mxu0
    %2671 = vmatprep.mubr.f32.mxu0 0.0
    %2672 = vmatmul.mubr.f32.gmra.mxu0 %v2389
    %v2673 = vpop.f32.mrf.mxu0
    %v2674 = vadd.f32 0.0, %v2673
    %v2675 = vpop.f32.mrf.mxu0
    %2676 = vmatprep.mubr.f32.mxu0 0.0
    %2677 = vmatmul.mubr.f32.gmra.mxu0 %v2392
    %v2678 = vpop.f32.mrf.mxu0
    %v2679 = vadd.f32 0.0, %v2678
    %v2680 = vpop.f32.mrf.mxu0
    %2681 = vmatprep.mubr.f32.mxu0 0.0
    %2682 = vmatmul.mubr.f32.gmra.mxu0 %v2395
    %v2683 = vpop.f32.mrf.mxu0
    %v2684 = vadd.f32 0.0, %v2683
    %v2685 = vpop.f32.mrf.mxu0
    %2686 = vmatprep.mubr.f32.mxu0 0.0
    %2687 = vmatmul.mubr.f32.gmra.mxu0 %v2398
    %v2688 = vpop.f32.mrf.mxu0
    %v2689 = vadd.f32 0.0, %v2688
    %v2690 = vpop.f32.mrf.mxu0
    %2691 = vmatprep.mubr.f32.mxu0 0.0
    %2692 = vmatmul.mubr.f32.gmra.mxu0 %v2401
    %v2693 = vpop.f32.mrf.mxu0
    %v2694 = vadd.f32 0.0, %v2693
    %v2695 = vpop.f32.mrf.mxu0
    %2696 = vmatprep.mubr.f32.mxu0 0.0
    %2697 = vmatmul.mubr.f32.gmra.mxu0 %v2404
    %v2698 = vpop.f32.mrf.mxu0
    %v2699 = vadd.f32 0.0, %v2698
    %v2700 = vpop.f32.mrf.mxu0
    %2701 = vmatprep.mubr.f32.mxu0 0.0
    %2702 = vmatmul.mubr.f32.gmra.mxu0 %v2407
    %v2703 = vpop.f32.mrf.mxu0
    %v2704 = vadd.f32 0.0, %v2703
    %v2705 = vpop.f32.mrf.mxu0
    %2706 = vmatprep.mubr.f32.mxu0 0.0
    %2707 = vmatmul.mubr.f32.gmra.mxu0 %v2410
    %v2708 = vpop.f32.mrf.mxu0
    %v2709 = vadd.f32 0.0, %v2708
    %v2710 = vpop.f32.mrf.mxu0
    %2711 = vmatprep.mubr.f32.mxu0 0.0
    %2712 = vmatmul.mubr.f32.gmra.mxu0 %v2413
    %v2713 = vpop.f32.mrf.mxu0
    %v2714 = vadd.f32 0.0, %v2713
    %v2715 = vpop.f32.mrf.mxu0
    %2716 = vmatprep.mubr.f32.mxu0 0.0
    %2717 = vmatmul.mubr.f32.gmra.mxu0 %v2416
    %v2718 = vpop.f32.mrf.mxu0
    %v2719 = vadd.f32 0.0, %v2718
    %v2720 = vpop.f32.mrf.mxu0
    %2721 = vmatprep.mubr.f32.mxu0 0.0
    %2722 = vmatmul.mubr.f32.gmra.mxu0 %v2419
    %v2723 = vpop.f32.mrf.mxu0
    %v2724 = vadd.f32 0.0, %v2723
    %v2725 = vpop.f32.mrf.mxu0
    %2726 = vmatprep.mubr.f32.mxu0 0.0
    %2727 = vmatmul.mubr.f32.gmra.mxu0 %v2422
    %v2728 = vpop.f32.mrf.mxu0
    %v2729 = vadd.f32 0.0, %v2728
    %v2730 = vpop.f32.mrf.mxu0
    %2731 = vmatprep.mubr.f32.mxu0 0.0
    %2732 = vmatmul.mubr.f32.gmra.mxu0 %v2425
    %v2733 = vpop.f32.mrf.mxu0
    %v2734 = vadd.f32 0.0, %v2733
    %v2735 = vpop.f32.mrf.mxu0
    %2736 = vmatprep.mubr.f32.mxu0 0.0
    %2737 = vmatmul.mubr.f32.gmra.mxu0 %v2428
    %v2738 = vpop.f32.mrf.mxu0
    %v2739 = vadd.f32 0.0, %v2738
    %v2740 = vpop.f32.mrf.mxu0
    %2741 = vmatprep.mubr.f32.mxu0 0.0
    %2742 = vmatmul.mubr.f32.gmra.mxu0 %v2431
    %v2743 = vpop.f32.mrf.mxu0
    %v2744 = vadd.f32 0.0, %v2743
    %v2745 = vpop.f32.mrf.mxu0
    %2746 = vmatprep.mubr.f32.mxu0 0.0
    %2747 = vmatmul.mubr.f32.gmra.mxu0 %v2434
    %v2748 = vpop.f32.mrf.mxu0
    %v2749 = vadd.f32 0.0, %v2748
    %v2750 = vpop.f32.mrf.mxu0
    %2751 = vmatprep.mubr.f32.mxu0 0.0
    %2752 = vmatmul.mubr.f32.gmra.mxu0 %v2437
    %v2753 = vpop.f32.mrf.mxu0
    %v2754 = vadd.f32 0.0, %v2753
    %v2755 = vpop.f32.mrf.mxu0
    %2756 = vmatprep.mubr.f32.mxu0 0.0
    %2757 = vmatmul.mubr.f32.gmra.mxu0 %v2440
    %v2758 = vpop.f32.mrf.mxu0
    %v2759 = vadd.f32 0.0, %v2758
    %v2760 = vpop.f32.mrf.mxu0
    %2761 = vmatprep.mubr.f32.mxu0 0.0
    %2762 = vmatmul.mubr.f32.gmra.mxu0 %v2443
    %v2763 = vpop.f32.mrf.mxu0
    %v2764 = vadd.f32 0.0, %v2763
    %v2765 = vpop.f32.mrf.mxu0
    %2766 = vmatprep.mubr.f32.mxu0 0.0
    %2767 = vmatmul.mubr.f32.gmra.mxu0 %v2446
    %v2768 = vpop.f32.mrf.mxu0
    %v2769 = vadd.f32 0.0, %v2768
    %v2770 = vpop.f32.mrf.mxu0
    %2771 = vmatprep.mubr.f32.mxu0 0.0
    %2772 = vmatmul.mubr.f32.gmra.mxu0 %v2449
    %v2773 = vpop.f32.mrf.mxu0
    %v2774 = vadd.f32 0.0, %v2773
    %v2775 = vpop.f32.mrf.mxu0
    %2776 = vmatprep.mubr.f32.mxu0 0.0
    %2777 = vmatmul.mubr.f32.gmra.mxu0 %v2452
    %v2778 = vpop.f32.mrf.mxu0
    %v2779 = vadd.f32 0.0, %v2778
    %v2780 = vpop.f32.mrf.mxu0
    %2781 = vmatprep.mubr.f32.mxu0 0.0
    %2782 = vmatmul.mubr.f32.gmra.mxu0 %v2455
    %v2783 = vpop.f32.mrf.mxu0
    %v2784 = vadd.f32 0.0, %v2783
    %v2785 = vpop.f32.mrf.mxu0
    %2786 = vmatprep.mubr.f32.mxu0 0.0
    %2787 = vmatmul.mubr.f32.gmra.mxu0 %v2458
    %v2788 = vpop.f32.mrf.mxu0
    %v2789 = vadd.f32 0.0, %v2788
    %v2790 = vpop.f32.mrf.mxu0
    %2791 = vmatprep.mubr.f32.mxu0 0.0
    %2792 = vmatmul.mubr.f32.gmra.mxu0 %v2461
    %v2793 = vpop.f32.mrf.mxu0
    %v2794 = vadd.f32 0.0, %v2793
    %v2795 = vpop.f32.mrf.mxu0
    %2796 = vmatprep.mubr.f32.mxu0 0.0
    %2797 = vmatmul.mubr.f32.gmra.mxu0 %v2464
    %v2798 = vpop.f32.mrf.mxu0
    %v2799 = vadd.f32 0.0, %v2798
    %v2800 = vpop.f32.mrf.mxu0
    %2801 = vmatprep.mubr.f32.mxu0 0.0
    %2802 = vmatmul.mubr.f32.gmra.mxu0 %v2467
    %v2803 = vpop.f32.mrf.mxu0
    %v2804 = vadd.f32 0.0, %v2803
    %v2805 = vpop.f32.mrf.mxu0
    %2806 = vmatprep.mubr.f32.mxu0 0.0
    %2807 = vmatmul.mubr.f32.gmra.mxu0 %v2470
    %v2808 = vpop.f32.mrf.mxu0
    %v2809 = vadd.f32 0.0, %v2808
    %v2810 = vpop.f32.mrf.mxu0
    %2811 = vmatprep.mubr.f32.mxu0 0.0
    %2812 = vmatmul.mubr.f32.gmra.mxu0 %v2473
    %v2813 = vpop.f32.mrf.mxu0
    %v2814 = vadd.f32 0.0, %v2813
    %v2815 = vpop.f32.mrf.mxu0
    %2816 = vmatprep.mubr.f32.mxu0 0.0
    %2817 = vmatmul.mubr.f32.gmra.mxu0 %v2476
    %v2818 = vpop.f32.mrf.mxu0
    %v2819 = vadd.f32 0.0, %v2818
    %v2820 = vpop.f32.mrf.mxu0
    %2821 = vmatprep.mubr.f32.mxu0 0.0
    %2822 = vmatmul.mubr.f32.gmra.mxu0 %v2479
    %v2823 = vpop.f32.mrf.mxu0
    %v2824 = vadd.f32 0.0, %v2823
    %v2825 = vpop.f32.mrf.mxu0
    %2826 = vmatprep.mubr.f32.mxu0 0.0
    %2827 = vmatmul.mubr.f32.gmra.mxu0 %v2482
    %v2828 = vpop.f32.mrf.mxu0
    %v2829 = vadd.f32 0.0, %v2828
    %v2830 = vpop.f32.mrf.mxu0
    %2831 = vmatprep.mubr.f32.mxu0 0.0
    %2832 = vmatmul.mubr.f32.gmra.mxu0 %v2485
    %v2833 = vpop.f32.mrf.mxu0
    %v2834 = vadd.f32 0.0, %v2833
    %v2835 = vpop.f32.mrf.mxu0
    %2836 = vmatprep.mubr.f32.mxu0 0.0
    %2837 = vmatmul.mubr.f32.gmra.mxu0 %v2488
    %v2838 = vpop.f32.mrf.mxu0
    %v2839 = vadd.f32 0.0, %v2838
    %v2840 = vpop.f32.mrf.mxu0
    %2841 = vmatprep.mubr.f32.mxu0 0.0
    %2842 = vmatmul.mubr.f32.gmra.mxu0 %v2491
    %v2843 = vpop.f32.mrf.mxu0
    %v2844 = vadd.f32 0.0, %v2843
    %v2845 = vpop.f32.mrf.mxu0
    %2846 = vmatprep.mubr.f32.mxu0 0.0
    %2847 = vmatmul.mubr.f32.gmra.mxu0 %v2494
    %v2848 = vpop.f32.mrf.mxu0
    %v2849 = vadd.f32 0.0, %v2848
    %v2850 = vpop.f32.mrf.mxu0
    %2851 = vmatprep.mubr.f32.mxu0 0.0
    %2852 = vmatmul.mubr.f32.gmra.mxu0 %v2497
    %v2853 = vpop.f32.mrf.mxu0
    %v2854 = vadd.f32 0.0, %v2853
    %v2855 = vpop.f32.mrf.mxu0
    %2856 = vmatprep.mubr.f32.mxu0 0.0
    %2857 = vmatmul.mubr.f32.gmra.mxu0 %v2500
    %v2858 = vpop.f32.mrf.mxu0
    %v2859 = vadd.f32 0.0, %v2858
    %v2860 = vpop.f32.mrf.mxu0
    %2861 = vmatprep.mubr.f32.mxu0 0.0
    %2862 = vmatmul.mubr.f32.gmra.mxu0 %v2503
    %v2863 = vpop.f32.mrf.mxu0
    %v2864 = vadd.f32 0.0, %v2863
    %v2865 = vpop.f32.mrf.mxu0
    %2866 = vmatprep.mubr.f32.mxu0 0.0
    %2867 = vmatmul.mubr.f32.gmra.mxu0 %v2506
    %v2868 = vpop.f32.mrf.mxu0
    %v2869 = vadd.f32 0.0, %v2868
    %v2870 = vpop.f32.mrf.mxu0
    %2871 = vmatprep.mubr.f32.mxu0 0.0
    %2872 = vmatmul.mubr.f32.gmra.mxu0 %v2509
    %v2873 = vpop.f32.mrf.mxu0
    %v2874 = vadd.f32 0.0, %v2873
    %v2875 = vpop.f32.mrf.mxu0
    %2876 = vmatprep.mubr.f32.mxu0 0.0
    %2877 = vmatmul.mubr.f32.gmra.mxu0 %v2512
    %v2878 = vpop.f32.mrf.mxu0
    %v2879 = vadd.f32 0.0, %v2878
    %v2880 = vpop.f32.mrf.mxu0
    %2881 = vmatprep.mubr.f32.mxu0 0.0
    %2882 = vmatmul.mubr.f32.gmra.mxu0 %v2515
    %v2883 = vpop.f32.mrf.mxu0
    %v2884 = vadd.f32 0.0, %v2883
    %v2885 = vpop.f32.mrf.mxu0
    %2886 = vmatprep.mubr.f32.mxu0 0.0
    %2887 = vmatmul.mubr.f32.gmra.mxu0 %v2518
    %v2888 = vpop.f32.mrf.mxu0
    %v2889 = vadd.f32 0.0, %v2888
    %v2890 = vpop.f32.mrf.mxu0
    %2891 = vmatprep.mubr.f32.mxu0 0.0
    %2892 = vmatmul.mubr.f32.gmra.mxu0 %v2521
    %v2893 = vpop.f32.mrf.mxu0
    %v2894 = vadd.f32 0.0, %v2893
    %v2895 = vpop.f32.mrf.mxu0
    %2896 = vmatprep.mubr.f32.mxu0 0.0
    %2897 = vmatmul.mubr.f32.gmra.mxu0 %v2524
    %v2898 = vpop.f32.mrf.mxu0
    %v2899 = vadd.f32 0.0, %v2898
    %v2900 = vpop.f32.mrf.mxu0
    %2901 = vmatprep.mubr.f32.mxu0 0.0
    %2902 = vmatmul.mubr.f32.gmra.mxu0 %v2527
    %v2903 = vpop.f32.mrf.mxu0
    %v2904 = vadd.f32 0.0, %v2903
    %v2905 = vpop.f32.mrf.mxu0
    %2906 = vmatprep.mubr.f32.mxu0 0.0
    %2907 = vmatmul.mubr.f32.gmra.mxu0 %v2530
    %v2908 = vpop.f32.mrf.mxu0
    %v2909 = vadd.f32 0.0, %v2908
    %v2910 = vpop.f32.mrf.mxu0
    %2911 = vmatprep.mubr.f32.mxu0 0.0
    %2912 = vmatmul.mubr.f32.gmra.mxu0 %v2533
    %v2913 = vpop.f32.mrf.mxu0
    %v2914 = vadd.f32 0.0, %v2913
    %v2915 = vpop.f32.mrf.mxu0
    %2916 = vmatprep.mubr.f32.mxu0 0.0
    %2917 = vmatmul.mubr.f32.gmra.mxu0 %v2536
    %v2918 = vpop.f32.mrf.mxu0
    %v2919 = vadd.f32 0.0, %v2918
    %v2920 = vpop.f32.mrf.mxu0
    %2921 = vmatprep.mubr.f32.mxu0 0.0
    %2922 = vmatmul.mubr.f32.gmra.mxu0 %v2539
    %v2923 = vpop.f32.mrf.mxu0
    %v2924 = vadd.f32 0.0, %v2923
    %v2925 = vpop.f32.mrf.mxu0
    %2926 = vmatprep.mubr.f32.mxu0 0.0
    %2927 = vmatmul.mubr.f32.gmra.mxu0 %v2542
    %v2928 = vpop.f32.mrf.mxu0
    %v2929 = vadd.f32 0.0, %v2928
    %v2930 = vpop.f32.mrf.mxu0
    %2931 = vdwg.mxu0
    %v2932 = vadd.f32 %v2222, %v2614
    %v2933 = vadd.f32 %v2223, %v2619
    %v2934 = vadd.f32 %v2224, %v2624
    %v2935 = vadd.f32 %v2225, %v2629
    %v2936 = vadd.f32 %v2226, %v2634
    %v2937 = vadd.f32 %v2227, %v2639
    %v2938 = vadd.f32 %v2228, %v2644
    %v2939 = vadd.f32 %v2229, %v2649
    %v2940 = vadd.f32 %v2230, %v2654
    %v2941 = vadd.f32 %v2231, %v2659
    %v2942 = vadd.f32 %v2232, %v2664
    %v2943 = vadd.f32 %v2233, %v2669
    %v2944 = vadd.f32 %v2234, %v2674
    %v2945 = vadd.f32 %v2235, %v2679
    %v2946 = vadd.f32 %v2236, %v2684
    %v2947 = vadd.f32 %v2237, %v2689
    %v2948 = vadd.f32 %v2238, %v2694
    %v2949 = vadd.f32 %v2239, %v2699
    %v2950 = vadd.f32 %v2240, %v2704
    %v2951 = vadd.f32 %v2241, %v2709
    %v2952 = vadd.f32 %v2242, %v2714
    %v2953 = vadd.f32 %v2243, %v2719
    %v2954 = vadd.f32 %v2244, %v2724
    %v2955 = vadd.f32 %v2245, %v2729
    %v2956 = vadd.f32 %v2246, %v2734
    %v2957 = vadd.f32 %v2247, %v2739
    %v2958 = vadd.f32 %v2248, %v2744
    %v2959 = vadd.f32 %v2249, %v2749
    %v2960 = vadd.f32 %v2250, %v2754
    %v2961 = vadd.f32 %v2251, %v2759
    %v2962 = vadd.f32 %v2252, %v2764
    %v2963 = vadd.f32 %v2253, %v2769
    %v2964 = vadd.f32 %v2254, %v2774
    %v2965 = vadd.f32 %v2255, %v2779
    %v2966 = vadd.f32 %v2256, %v2784
    %v2967 = vadd.f32 %v2257, %v2789
    %v2968 = vadd.f32 %v2258, %v2794
    %v2969 = vadd.f32 %v2259, %v2799
    %v2970 = vadd.f32 %v2260, %v2804
    %v2971 = vadd.f32 %v2261, %v2809
    %v2972 = vadd.f32 %v2262, %v2814
    %v2973 = vadd.f32 %v2263, %v2819
    %v2974 = vadd.f32 %v2264, %v2824
    %v2975 = vadd.f32 %v2265, %v2829
    %v2976 = vadd.f32 %v2266, %v2834
    %v2977 = vadd.f32 %v2267, %v2839
    %v2978 = vadd.f32 %v2268, %v2844
    %v2979 = vadd.f32 %v2269, %v2849
    %v2980 = vadd.f32 %v2270, %v2854
    %v2981 = vadd.f32 %v2271, %v2859
    %v2982 = vadd.f32 %v2272, %v2864
    %v2983 = vadd.f32 %v2273, %v2869
    %v2984 = vadd.f32 %v2274, %v2874
    %v2985 = vadd.f32 %v2275, %v2879
    %v2986 = vadd.f32 %v2276, %v2884
    %v2987 = vadd.f32 %v2277, %v2889
    %v2988 = vadd.f32 %v2278, %v2894
    %v2989 = vadd.f32 %v2279, %v2899
    %v2990 = vadd.f32 %v2280, %v2904
    %v2991 = vadd.f32 %v2281, %v2909
    %v2992 = vadd.f32 %v2282, %v2914
    %v2993 = vadd.f32 %v2283, %v2919
    %v2994 = vadd.f32 %v2284, %v2924
    %v2995 = vadd.f32 %v2285, %v2929
    %v2996 = vld [vmem:[%s219 + $0x1] sm:$0xff]
    %v2997 = vld [vmem:[%s219 + $0x9] sm:$0xff]
    %v2998 = vld [vmem:[%s219 + $0x19] sm:$0xff]
    %v2999 = vld [vmem:[%s219 + $0x21] sm:$0xff]
    %v3000 = vld [vmem:[%s219 + $0x31] sm:$0xff]
    %v3001 = vld [vmem:[%s219 + $0x39] sm:$0xff]
    %v3002 = vld [vmem:[%s219 + $0x49] sm:$0xff]
    %v3003 = vld [vmem:[%s219 + $0x51] sm:$0xff]
    %v3004 = vld [vmem:[%s219 + $0x61] sm:$0xff]
    %v3005 = vld [vmem:[%s219 + $0x69] sm:$0xff]
    %v3006 = vld [vmem:[%s219 + $0x79] sm:$0xff]
    %v3007 = vld [vmem:[%s219 + $0x81] sm:$0xff]
    %v3008 = vld [vmem:[%s219 + $0x91] sm:$0xff]
    %v3009 = vld [vmem:[%s219 + $0x99] sm:$0xff]
    %v3010 = vld [vmem:[%s219 + $0xa9] sm:$0xff]
    %v3011 = vld [vmem:[%s219 + $0xb1] sm:$0xff]
    %v3012 = vld [vmem:[%s219 + $0xc1] sm:$0xff]
    %v3013 = vld [vmem:[%s219 + $0xc9] sm:$0xff]
    %v3014 = vld [vmem:[%s219 + $0xd9] sm:$0xff]
    %v3015 = vld [vmem:[%s219 + $0xe1] sm:$0xff]
    %v3016 = vld [vmem:[%s219 + $0xf1] sm:$0xff]
    %v3017 = vld [vmem:[%s219 + $0xf9] sm:$0xff]
    %v3018 = vld [vmem:[%s219 + $0x109] sm:$0xff]
    %v3019 = vld [vmem:[%s219 + $0x111] sm:$0xff]
    %v3020 = vld [vmem:[%s219 + $0x121] sm:$0xff]
    %v3021 = vld [vmem:[%s219 + $0x129] sm:$0xff]
    %v3022 = vld [vmem:[%s219 + $0x139] sm:$0xff]
    %v3023 = vld [vmem:[%s219 + $0x141] sm:$0xff]
    %v3024 = vld [vmem:[%s219 + $0x151] sm:$0xff]
    %v3025 = vld [vmem:[%s219 + $0x159] sm:$0xff]
    %v3026 = vld [vmem:[%s219 + $0x169] sm:$0xff]
    %v3027 = vld [vmem:[%s219 + $0x171] sm:$0xff]
    %v3028 = vld [vmem:[%s219 + $0x1b1] sm:$0xff]
    %v3029 = vld [vmem:[%s219 + $0x1b9] sm:$0xff]
    %v3030 = vld [vmem:[%s219 + $0x1c9] sm:$0xff]
    %v3031 = vld [vmem:[%s219 + $0x1d1] sm:$0xff]
    %v3032 = vld [vmem:[%s219 + $0x1e1] sm:$0xff]
    %v3033 = vld [vmem:[%s219 + $0x1e9] sm:$0xff]
    %v3034 = vld [vmem:[%s219 + $0x1f9] sm:$0xff]
    %v3035 = vld [vmem:[%s219 + $0x201] sm:$0xff]
    %v3036 = vld [vmem:[%s219 + $0x211] sm:$0xff]
    %v3037 = vld [vmem:[%s219 + $0x219] sm:$0xff]
    %v3038 = vld [vmem:[%s219 + $0x229] sm:$0xff]
    %v3039 = vld [vmem:[%s219 + $0x231] sm:$0xff]
    %v3040 = vld [vmem:[%s219 + $0x241] sm:$0xff]
    %v3041 = vld [vmem:[%s219 + $0x249] sm:$0xff]
    %v3042 = vld [vmem:[%s219 + $0x259] sm:$0xff]
    %v3043 = vld [vmem:[%s219 + $0x261] sm:$0xff]
    %v3044 = vld [vmem:[%s219 + $0x271] sm:$0xff]
    %v3045 = vld [vmem:[%s219 + $0x279] sm:$0xff]
    %v3046 = vld [vmem:[%s219 + $0x289] sm:$0xff]
    %v3047 = vld [vmem:[%s219 + $0x291] sm:$0xff]
    %v3048 = vld [vmem:[%s219 + $0x2a1] sm:$0xff]
    %v3049 = vld [vmem:[%s219 + $0x2a9] sm:$0xff]
    %v3050 = vld [vmem:[%s219 + $0x2b9] sm:$0xff]
    %v3051 = vld [vmem:[%s219 + $0x2c1] sm:$0xff]
    %v3052 = vld [vmem:[%s219 + $0x2d1] sm:$0xff]
    %v3053 = vld [vmem:[%s219 + $0x2d9] sm:$0xff]
    %v3054 = vld [vmem:[%s219 + $0x2e9] sm:$0xff]
    %v3055 = vld [vmem:[%s219 + $0x2f1] sm:$0xff]
    %v3056 = vld [vmem:[%s219 + $0x301] sm:$0xff]
    %v3057 = vld [vmem:[%s219 + $0x309] sm:$0xff]
    %v3058 = vld [vmem:[%s219 + $0x319] sm:$0xff]
    %v3059 = vld [vmem:[%s219 + $0x321] sm:$0xff]
    %s3060 = scalar_lea.vmem %s1, 16
    %v3061 = vld [vmem:[%s3060] sm:$0xf]
    %v3063 = vsel %vm109, %v2996, 0
    %v3066 = vsel %vm109, %v2997, 0
    %v3069 = vsel %vm109, %v2998, 0
    %v3072 = vsel %vm109, %v2999, 0
    %v3075 = vsel %vm109, %v3000, 0
    %v3078 = vsel %vm109, %v3001, 0
    %v3081 = vsel %vm109, %v3002, 0
    %v3084 = vsel %vm109, %v3003, 0
    %v3087 = vsel %vm109, %v3004, 0
    %v3090 = vsel %vm109, %v3005, 0
    %v3093 = vsel %vm109, %v3006, 0
    %v3096 = vsel %vm109, %v3007, 0
    %v3099 = vsel %vm109, %v3008, 0
    %v3102 = vsel %vm109, %v3009, 0
    %v3105 = vsel %vm109, %v3010, 0
    %v3108 = vsel %vm109, %v3011, 0
    %v3111 = vsel %vm109, %v3012, 0
    %v3114 = vsel %vm109, %v3013, 0
    %v3117 = vsel %vm109, %v3014, 0
    %v3120 = vsel %vm109, %v3015, 0
    %v3123 = vsel %vm109, %v3016, 0
    %v3126 = vsel %vm109, %v3017, 0
    %v3129 = vsel %vm109, %v3018, 0
    %v3132 = vsel %vm109, %v3019, 0
    %v3135 = vsel %vm109, %v3020, 0
    %v3138 = vsel %vm109, %v3021, 0
    %v3141 = vsel %vm109, %v3022, 0
    %v3144 = vsel %vm109, %v3023, 0
    %v3147 = vsel %vm109, %v3024, 0
    %v3150 = vsel %vm109, %v3025, 0
    %v3153 = vsel %vm109, %v3026, 0
    %v3156 = vsel %vm109, %v3027, 0
    %v3159 = vsel %vm109, %v3028, 0
    %v3162 = vsel %vm109, %v3029, 0
    %v3165 = vsel %vm109, %v3030, 0
    %v3168 = vsel %vm109, %v3031, 0
    %v3171 = vsel %vm109, %v3032, 0
    %v3174 = vsel %vm109, %v3033, 0
    %v3177 = vsel %vm109, %v3034, 0
    %v3180 = vsel %vm109, %v3035, 0
    %v3183 = vsel %vm109, %v3036, 0
    %v3186 = vsel %vm109, %v3037, 0
    %v3189 = vsel %vm109, %v3038, 0
    %v3192 = vsel %vm109, %v3039, 0
    %v3195 = vsel %vm109, %v3040, 0
    %v3198 = vsel %vm109, %v3041, 0
    %v3201 = vsel %vm109, %v3042, 0
    %v3204 = vsel %vm109, %v3043, 0
    %v3207 = vsel %vm109, %v3044, 0
    %v3210 = vsel %vm109, %v3045, 0
    %v3213 = vsel %vm109, %v3046, 0
    %v3216 = vsel %vm109, %v3047, 0
    %v3219 = vsel %vm109, %v3048, 0
    %v3222 = vsel %vm109, %v3049, 0
    %v3225 = vsel %vm109, %v3050, 0
    %v3228 = vsel %vm109, %v3051, 0
    %v3231 = vsel %vm109, %v3052, 0
    %v3234 = vsel %vm109, %v3053, 0
    %v3237 = vsel %vm109, %v3054, 0
    %v3240 = vsel %vm109, %v3055, 0
    %v3243 = vsel %vm109, %v3056, 0
    %v3246 = vsel %vm109, %v3057, 0
    %v3249 = vsel %vm109, %v3058, 0
    %v3252 = vsel %vm109, %v3059, 0
    %v3255 = vsel %vm607, %v3061, 0
    %3257 = vmatprep.subr.mxu0 0.0
    %3258 = vmatpush1.msra.mxu0 0.0
    %3259 = vmatprep.subr.mxu0 0.0
    %3260 = vmatpush1.msra.mxu0 0.0
    %3261 = vmatprep.subr.mxu0 0.0
    %3262 = vmatpush1.msra.mxu0 0.0
    %3263 = vmatprep.subr.mxu0 0.0
    %3264 = vmatpush1.msra.mxu0 0.0
    %3265 = vmatprep.subr.mxu0 0.0
    %3266 = vmatpush1.msra.mxu0 0.0
    %3267 = vmatprep.subr.mxu0 0.0
    %3268 = vmatpush1.msra.mxu0 0.0
    %3269 = vmatprep.subr.mxu0 0.0
    %3270 = vmatpush1.msra.mxu0 0.0
    %3271 = vmatprep.subr.mxu0 0.0
    %3272 = vmatpush1.msra.mxu0 0.0
    %3273 = vmatprep.subr.mxu0 0.0
    %3274 = vmatpush1.msra.mxu0 0.0
    %3275 = vmatprep.subr.mxu0 0.0
    %3276 = vmatpush1.msra.mxu0 0.0
    %3277 = vmatprep.subr.mxu0 0.0
    %3278 = vmatpush1.msra.mxu0 0.0
    %3279 = vmatprep.subr.mxu0 0.0
    %3280 = vmatpush1.msra.mxu0 0.0
    %3281 = vmatprep.subr.mxu0 0.0
    %3282 = vmatpush1.msra.mxu0 0.0
    %3283 = vmatprep.subr.mxu0 0.0
    %3284 = vmatpush1.msra.mxu0 0.0
    %3285 = vmatprep.subr.mxu0 0.0
    %3286 = vmatpush1.msra.mxu0 0.0
    %3287 = vmatprep.subr.mxu0 0.0
    %3288 = vmatpush1.msra.mxu0 %v3255
    %3289 = vmatprep.subr.mxu0 0.0
    %3290 = vmatpush2.msra.mxu0 0.0
    %3291 = vmatprep.subr.mxu0 0.0
    %3292 = vmatpush2.msra.mxu0 0.0
    %3293 = vmatprep.subr.mxu0 0.0
    %3294 = vmatpush2.msra.mxu0 0.0
    %3295 = vmatprep.subr.mxu0 0.0
    %3296 = vmatpush2.msra.mxu0 0.0
    %3297 = vmatprep.subr.mxu0 0.0
    %3298 = vmatpush2.msra.mxu0 0.0
    %3299 = vmatprep.subr.mxu0 0.0
    %3300 = vmatpush2.msra.mxu0 0.0
    %3301 = vmatprep.subr.mxu0 0.0
    %3302 = vmatpush2.msra.mxu0 0.0
    %3303 = vmatprep.subr.mxu0 0.0
    %3304 = vmatpush2.msra.mxu0 0.0
    %3305 = vmatprep.subr.mxu0 0.0
    %3306 = vmatpush2.msra.mxu0 0.0
    %3307 = vmatprep.subr.mxu0 0.0
    %3308 = vmatpush2.msra.mxu0 0.0
    %3309 = vmatprep.subr.mxu0 0.0
    %3310 = vmatpush2.msra.mxu0 0.0
    %3311 = vmatprep.subr.mxu0 0.0
    %3312 = vmatpush2.msra.mxu0 0.0
    %3313 = vmatprep.subr.mxu0 0.0
    %3314 = vmatpush2.msra.mxu0 0.0
    %3315 = vmatprep.subr.mxu0 0.0
    %3316 = vmatpush2.msra.mxu0 0.0
    %3317 = vmatprep.subr.mxu0 0.0
    %3318 = vmatpush2.msra.mxu0 0.0
    %3319 = vmatprep.subr.mxu0 0.0
    %3320 = vmatpush2.msra.mxu0 0.0
    %3321 = vmatprep.mubr.f32.mxu0 0.0
    %3322 = vmatmul.mubr.f32.gmra.mxu0 %v3063
    %v3323 = vpop.f32.mrf.mxu0
    %v3324 = vadd.f32 0.0, %v3323
    %v3325 = vpop.f32.mrf.mxu0
    %3326 = vmatprep.mubr.f32.mxu0 0.0
    %3327 = vmatmul.mubr.f32.gmra.mxu0 %v3066
    %v3328 = vpop.f32.mrf.mxu0
    %v3329 = vadd.f32 0.0, %v3328
    %v3330 = vpop.f32.mrf.mxu0
    %3331 = vmatprep.mubr.f32.mxu0 0.0
    %3332 = vmatmul.mubr.f32.gmra.mxu0 %v3069
    %v3333 = vpop.f32.mrf.mxu0
    %v3334 = vadd.f32 0.0, %v3333
    %v3335 = vpop.f32.mrf.mxu0
    %3336 = vmatprep.mubr.f32.mxu0 0.0
    %3337 = vmatmul.mubr.f32.gmra.mxu0 %v3072
    %v3338 = vpop.f32.mrf.mxu0
    %v3339 = vadd.f32 0.0, %v3338
    %v3340 = vpop.f32.mrf.mxu0
    %3341 = vmatprep.mubr.f32.mxu0 0.0
    %3342 = vmatmul.mubr.f32.gmra.mxu0 %v3075
    %v3343 = vpop.f32.mrf.mxu0
    %v3344 = vadd.f32 0.0, %v3343
    %v3345 = vpop.f32.mrf.mxu0
    %3346 = vmatprep.mubr.f32.mxu0 0.0
    %3347 = vmatmul.mubr.f32.gmra.mxu0 %v3078
    %v3348 = vpop.f32.mrf.mxu0
    %v3349 = vadd.f32 0.0, %v3348
    %v3350 = vpop.f32.mrf.mxu0
    %3351 = vmatprep.mubr.f32.mxu0 0.0
    %3352 = vmatmul.mubr.f32.gmra.mxu0 %v3081
    %v3353 = vpop.f32.mrf.mxu0
    %v3354 = vadd.f32 0.0, %v3353
    %v3355 = vpop.f32.mrf.mxu0
    %3356 = vmatprep.mubr.f32.mxu0 0.0
    %3357 = vmatmul.mubr.f32.gmra.mxu0 %v3084
    %v3358 = vpop.f32.mrf.mxu0
    %v3359 = vadd.f32 0.0, %v3358
    %v3360 = vpop.f32.mrf.mxu0
    %3361 = vmatprep.mubr.f32.mxu0 0.0
    %3362 = vmatmul.mubr.f32.gmra.mxu0 %v3087
    %v3363 = vpop.f32.mrf.mxu0
    %v3364 = vadd.f32 0.0, %v3363
    %v3365 = vpop.f32.mrf.mxu0
    %3366 = vmatprep.mubr.f32.mxu0 0.0
    %3367 = vmatmul.mubr.f32.gmra.mxu0 %v3090
    %v3368 = vpop.f32.mrf.mxu0
    %v3369 = vadd.f32 0.0, %v3368
    %v3370 = vpop.f32.mrf.mxu0
    %3371 = vmatprep.mubr.f32.mxu0 0.0
    %3372 = vmatmul.mubr.f32.gmra.mxu0 %v3093
    %v3373 = vpop.f32.mrf.mxu0
    %v3374 = vadd.f32 0.0, %v3373
    %v3375 = vpop.f32.mrf.mxu0
    %3376 = vmatprep.mubr.f32.mxu0 0.0
    %3377 = vmatmul.mubr.f32.gmra.mxu0 %v3096
    %v3378 = vpop.f32.mrf.mxu0
    %v3379 = vadd.f32 0.0, %v3378
    %v3380 = vpop.f32.mrf.mxu0
    %3381 = vmatprep.mubr.f32.mxu0 0.0
    %3382 = vmatmul.mubr.f32.gmra.mxu0 %v3099
    %v3383 = vpop.f32.mrf.mxu0
    %v3384 = vadd.f32 0.0, %v3383
    %v3385 = vpop.f32.mrf.mxu0
    %3386 = vmatprep.mubr.f32.mxu0 0.0
    %3387 = vmatmul.mubr.f32.gmra.mxu0 %v3102
    %v3388 = vpop.f32.mrf.mxu0
    %v3389 = vadd.f32 0.0, %v3388
    %v3390 = vpop.f32.mrf.mxu0
    %3391 = vmatprep.mubr.f32.mxu0 0.0
    %3392 = vmatmul.mubr.f32.gmra.mxu0 %v3105
    %v3393 = vpop.f32.mrf.mxu0
    %v3394 = vadd.f32 0.0, %v3393
    %v3395 = vpop.f32.mrf.mxu0
    %3396 = vmatprep.mubr.f32.mxu0 0.0
    %3397 = vmatmul.mubr.f32.gmra.mxu0 %v3108
    %v3398 = vpop.f32.mrf.mxu0
    %v3399 = vadd.f32 0.0, %v3398
    %v3400 = vpop.f32.mrf.mxu0
    %3401 = vmatprep.mubr.f32.mxu0 0.0
    %3402 = vmatmul.mubr.f32.gmra.mxu0 %v3111
    %v3403 = vpop.f32.mrf.mxu0
    %v3404 = vadd.f32 0.0, %v3403
    %v3405 = vpop.f32.mrf.mxu0
    %3406 = vmatprep.mubr.f32.mxu0 0.0
    %3407 = vmatmul.mubr.f32.gmra.mxu0 %v3114
    %v3408 = vpop.f32.mrf.mxu0
    %v3409 = vadd.f32 0.0, %v3408
    %v3410 = vpop.f32.mrf.mxu0
    %3411 = vmatprep.mubr.f32.mxu0 0.0
    %3412 = vmatmul.mubr.f32.gmra.mxu0 %v3117
    %v3413 = vpop.f32.mrf.mxu0
    %v3414 = vadd.f32 0.0, %v3413
    %v3415 = vpop.f32.mrf.mxu0
    %3416 = vmatprep.mubr.f32.mxu0 0.0
    %3417 = vmatmul.mubr.f32.gmra.mxu0 %v3120
    %v3418 = vpop.f32.mrf.mxu0
    %v3419 = vadd.f32 0.0, %v3418
    %v3420 = vpop.f32.mrf.mxu0
    %3421 = vmatprep.mubr.f32.mxu0 0.0
    %3422 = vmatmul.mubr.f32.gmra.mxu0 %v3123
    %v3423 = vpop.f32.mrf.mxu0
    %v3424 = vadd.f32 0.0, %v3423
    %v3425 = vpop.f32.mrf.mxu0
    %3426 = vmatprep.mubr.f32.mxu0 0.0
    %3427 = vmatmul.mubr.f32.gmra.mxu0 %v3126
    %v3428 = vpop.f32.mrf.mxu0
    %v3429 = vadd.f32 0.0, %v3428
    %v3430 = vpop.f32.mrf.mxu0
    %3431 = vmatprep.mubr.f32.mxu0 0.0
    %3432 = vmatmul.mubr.f32.gmra.mxu0 %v3129
    %v3433 = vpop.f32.mrf.mxu0
    %v3434 = vadd.f32 0.0, %v3433
    %v3435 = vpop.f32.mrf.mxu0
    %3436 = vmatprep.mubr.f32.mxu0 0.0
    %3437 = vmatmul.mubr.f32.gmra.mxu0 %v3132
    %v3438 = vpop.f32.mrf.mxu0
    %v3439 = vadd.f32 0.0, %v3438
    %v3440 = vpop.f32.mrf.mxu0
    %3441 = vmatprep.mubr.f32.mxu0 0.0
    %3442 = vmatmul.mubr.f32.gmra.mxu0 %v3135
    %v3443 = vpop.f32.mrf.mxu0
    %v3444 = vadd.f32 0.0, %v3443
    %v3445 = vpop.f32.mrf.mxu0
    %3446 = vmatprep.mubr.f32.mxu0 0.0
    %3447 = vmatmul.mubr.f32.gmra.mxu0 %v3138
    %v3448 = vpop.f32.mrf.mxu0
    %v3449 = vadd.f32 0.0, %v3448
    %v3450 = vpop.f32.mrf.mxu0
    %3451 = vmatprep.mubr.f32.mxu0 0.0
    %3452 = vmatmul.mubr.f32.gmra.mxu0 %v3141
    %v3453 = vpop.f32.mrf.mxu0
    %v3454 = vadd.f32 0.0, %v3453
    %v3455 = vpop.f32.mrf.mxu0
    %3456 = vmatprep.mubr.f32.mxu0 0.0
    %3457 = vmatmul.mubr.f32.gmra.mxu0 %v3144
    %v3458 = vpop.f32.mrf.mxu0
    %v3459 = vadd.f32 0.0, %v3458
    %v3460 = vpop.f32.mrf.mxu0
    %3461 = vmatprep.mubr.f32.mxu0 0.0
    %3462 = vmatmul.mubr.f32.gmra.mxu0 %v3147
    %v3463 = vpop.f32.mrf.mxu0
    %v3464 = vadd.f32 0.0, %v3463
    %v3465 = vpop.f32.mrf.mxu0
    %3466 = vmatprep.mubr.f32.mxu0 0.0
    %3467 = vmatmul.mubr.f32.gmra.mxu0 %v3150
    %v3468 = vpop.f32.mrf.mxu0
    %v3469 = vadd.f32 0.0, %v3468
    %v3470 = vpop.f32.mrf.mxu0
    %3471 = vmatprep.mubr.f32.mxu0 0.0
    %3472 = vmatmul.mubr.f32.gmra.mxu0 %v3153
    %v3473 = vpop.f32.mrf.mxu0
    %v3474 = vadd.f32 0.0, %v3473
    %v3475 = vpop.f32.mrf.mxu0
    %3476 = vmatprep.mubr.f32.mxu0 0.0
    %3477 = vmatmul.mubr.f32.gmra.mxu0 %v3156
    %v3478 = vpop.f32.mrf.mxu0
    %v3479 = vadd.f32 0.0, %v3478
    %v3480 = vpop.f32.mrf.mxu0
    %3481 = vmatprep.mubr.f32.mxu0 0.0
    %3482 = vmatmul.mubr.f32.gmra.mxu0 %v3159
    %v3483 = vpop.f32.mrf.mxu0
    %v3484 = vadd.f32 0.0, %v3483
    %v3485 = vpop.f32.mrf.mxu0
    %3486 = vmatprep.mubr.f32.mxu0 0.0
    %3487 = vmatmul.mubr.f32.gmra.mxu0 %v3162
    %v3488 = vpop.f32.mrf.mxu0
    %v3489 = vadd.f32 0.0, %v3488
    %v3490 = vpop.f32.mrf.mxu0
    %3491 = vmatprep.mubr.f32.mxu0 0.0
    %3492 = vmatmul.mubr.f32.gmra.mxu0 %v3165
    %v3493 = vpop.f32.mrf.mxu0
    %v3494 = vadd.f32 0.0, %v3493
    %v3495 = vpop.f32.mrf.mxu0
    %3496 = vmatprep.mubr.f32.mxu0 0.0
    %3497 = vmatmul.mubr.f32.gmra.mxu0 %v3168
    %v3498 = vpop.f32.mrf.mxu0
    %v3499 = vadd.f32 0.0, %v3498
    %v3500 = vpop.f32.mrf.mxu0
    %3501 = vmatprep.mubr.f32.mxu0 0.0
    %3502 = vmatmul.mubr.f32.gmra.mxu0 %v3171
    %v3503 = vpop.f32.mrf.mxu0
    %v3504 = vadd.f32 0.0, %v3503
    %v3505 = vpop.f32.mrf.mxu0
    %3506 = vmatprep.mubr.f32.mxu0 0.0
    %3507 = vmatmul.mubr.f32.gmra.mxu0 %v3174
    %v3508 = vpop.f32.mrf.mxu0
    %v3509 = vadd.f32 0.0, %v3508
    %v3510 = vpop.f32.mrf.mxu0
    %3511 = vmatprep.mubr.f32.mxu0 0.0
    %3512 = vmatmul.mubr.f32.gmra.mxu0 %v3177
    %v3513 = vpop.f32.mrf.mxu0
    %v3514 = vadd.f32 0.0, %v3513
    %v3515 = vpop.f32.mrf.mxu0
    %3516 = vmatprep.mubr.f32.mxu0 0.0
    %3517 = vmatmul.mubr.f32.gmra.mxu0 %v3180
    %v3518 = vpop.f32.mrf.mxu0
    %v3519 = vadd.f32 0.0, %v3518
    %v3520 = vpop.f32.mrf.mxu0
    %3521 = vmatprep.mubr.f32.mxu0 0.0
    %3522 = vmatmul.mubr.f32.gmra.mxu0 %v3183
    %v3523 = vpop.f32.mrf.mxu0
    %v3524 = vadd.f32 0.0, %v3523
    %v3525 = vpop.f32.mrf.mxu0
    %3526 = vmatprep.mubr.f32.mxu0 0.0
    %3527 = vmatmul.mubr.f32.gmra.mxu0 %v3186
    %v3528 = vpop.f32.mrf.mxu0
    %v3529 = vadd.f32 0.0, %v3528
    %v3530 = vpop.f32.mrf.mxu0
    %3531 = vmatprep.mubr.f32.mxu0 0.0
    %3532 = vmatmul.mubr.f32.gmra.mxu0 %v3189
    %v3533 = vpop.f32.mrf.mxu0
    %v3534 = vadd.f32 0.0, %v3533
    %v3535 = vpop.f32.mrf.mxu0
    %3536 = vmatprep.mubr.f32.mxu0 0.0
    %3537 = vmatmul.mubr.f32.gmra.mxu0 %v3192
    %v3538 = vpop.f32.mrf.mxu0
    %v3539 = vadd.f32 0.0, %v3538
    %v3540 = vpop.f32.mrf.mxu0
    %3541 = vmatprep.mubr.f32.mxu0 0.0
    %3542 = vmatmul.mubr.f32.gmra.mxu0 %v3195
    %v3543 = vpop.f32.mrf.mxu0
    %v3544 = vadd.f32 0.0, %v3543
    %v3545 = vpop.f32.mrf.mxu0
    %3546 = vmatprep.mubr.f32.mxu0 0.0
    %3547 = vmatmul.mubr.f32.gmra.mxu0 %v3198
    %v3548 = vpop.f32.mrf.mxu0
    %v3549 = vadd.f32 0.0, %v3548
    %v3550 = vpop.f32.mrf.mxu0
    %3551 = vmatprep.mubr.f32.mxu0 0.0
    %3552 = vmatmul.mubr.f32.gmra.mxu0 %v3201
    %v3553 = vpop.f32.mrf.mxu0
    %v3554 = vadd.f32 0.0, %v3553
    %v3555 = vpop.f32.mrf.mxu0
    %3556 = vmatprep.mubr.f32.mxu0 0.0
    %3557 = vmatmul.mubr.f32.gmra.mxu0 %v3204
    %v3558 = vpop.f32.mrf.mxu0
    %v3559 = vadd.f32 0.0, %v3558
    %v3560 = vpop.f32.mrf.mxu0
    %3561 = vmatprep.mubr.f32.mxu0 0.0
    %3562 = vmatmul.mubr.f32.gmra.mxu0 %v3207
    %v3563 = vpop.f32.mrf.mxu0
    %v3564 = vadd.f32 0.0, %v3563
    %v3565 = vpop.f32.mrf.mxu0
    %3566 = vmatprep.mubr.f32.mxu0 0.0
    %3567 = vmatmul.mubr.f32.gmra.mxu0 %v3210
    %v3568 = vpop.f32.mrf.mxu0
    %v3569 = vadd.f32 0.0, %v3568
    %v3570 = vpop.f32.mrf.mxu0
    %3571 = vmatprep.mubr.f32.mxu0 0.0
    %3572 = vmatmul.mubr.f32.gmra.mxu0 %v3213
    %v3573 = vpop.f32.mrf.mxu0
    %v3574 = vadd.f32 0.0, %v3573
    %v3575 = vpop.f32.mrf.mxu0
    %3576 = vmatprep.mubr.f32.mxu0 0.0
    %3577 = vmatmul.mubr.f32.gmra.mxu0 %v3216
    %v3578 = vpop.f32.mrf.mxu0
    %v3579 = vadd.f32 0.0, %v3578
    %v3580 = vpop.f32.mrf.mxu0
    %3581 = vmatprep.mubr.f32.mxu0 0.0
    %3582 = vmatmul.mubr.f32.gmra.mxu0 %v3219
    %v3583 = vpop.f32.mrf.mxu0
    %v3584 = vadd.f32 0.0, %v3583
    %v3585 = vpop.f32.mrf.mxu0
    %3586 = vmatprep.mubr.f32.mxu0 0.0
    %3587 = vmatmul.mubr.f32.gmra.mxu0 %v3222
    %v3588 = vpop.f32.mrf.mxu0
    %v3589 = vadd.f32 0.0, %v3588
    %v3590 = vpop.f32.mrf.mxu0
    %3591 = vmatprep.mubr.f32.mxu0 0.0
    %3592 = vmatmul.mubr.f32.gmra.mxu0 %v3225
    %v3593 = vpop.f32.mrf.mxu0
    %v3594 = vadd.f32 0.0, %v3593
    %v3595 = vpop.f32.mrf.mxu0
    %3596 = vmatprep.mubr.f32.mxu0 0.0
    %3597 = vmatmul.mubr.f32.gmra.mxu0 %v3228
    %v3598 = vpop.f32.mrf.mxu0
    %v3599 = vadd.f32 0.0, %v3598
    %v3600 = vpop.f32.mrf.mxu0
    %3601 = vmatprep.mubr.f32.mxu0 0.0
    %3602 = vmatmul.mubr.f32.gmra.mxu0 %v3231
    %v3603 = vpop.f32.mrf.mxu0
    %v3604 = vadd.f32 0.0, %v3603
    %v3605 = vpop.f32.mrf.mxu0
    %3606 = vmatprep.mubr.f32.mxu0 0.0
    %3607 = vmatmul.mubr.f32.gmra.mxu0 %v3234
    %v3608 = vpop.f32.mrf.mxu0
    %v3609 = vadd.f32 0.0, %v3608
    %v3610 = vpop.f32.mrf.mxu0
    %3611 = vmatprep.mubr.f32.mxu0 0.0
    %3612 = vmatmul.mubr.f32.gmra.mxu0 %v3237
    %v3613 = vpop.f32.mrf.mxu0
    %v3614 = vadd.f32 0.0, %v3613
    %v3615 = vpop.f32.mrf.mxu0
    %3616 = vmatprep.mubr.f32.mxu0 0.0
    %3617 = vmatmul.mubr.f32.gmra.mxu0 %v3240
    %v3618 = vpop.f32.mrf.mxu0
    %v3619 = vadd.f32 0.0, %v3618
    %v3620 = vpop.f32.mrf.mxu0
    %3621 = vmatprep.mubr.f32.mxu0 0.0
    %3622 = vmatmul.mubr.f32.gmra.mxu0 %v3243
    %v3623 = vpop.f32.mrf.mxu0
    %v3624 = vadd.f32 0.0, %v3623
    %v3625 = vpop.f32.mrf.mxu0
    %3626 = vmatprep.mubr.f32.mxu0 0.0
    %3627 = vmatmul.mubr.f32.gmra.mxu0 %v3246
    %v3628 = vpop.f32.mrf.mxu0
    %v3629 = vadd.f32 0.0, %v3628
    %v3630 = vpop.f32.mrf.mxu0
    %3631 = vmatprep.mubr.f32.mxu0 0.0
    %3632 = vmatmul.mubr.f32.gmra.mxu0 %v3249
    %v3633 = vpop.f32.mrf.mxu0
    %v3634 = vadd.f32 0.0, %v3633
    %v3635 = vpop.f32.mrf.mxu0
    %3636 = vmatprep.mubr.f32.mxu0 0.0
    %3637 = vmatmul.mubr.f32.gmra.mxu0 %v3252
    %v3638 = vpop.f32.mrf.mxu0
    %v3639 = vadd.f32 0.0, %v3638
    %v3640 = vpop.f32.mrf.mxu0
    %3641 = vdwg.mxu0
    %v3642 = vadd.f32 %v2932, %v3324
    %v3643 = vadd.f32 %v2933, %v3329
    %v3644 = vadd.f32 %v2934, %v3334
    %v3645 = vadd.f32 %v2935, %v3339
    %v3646 = vadd.f32 %v2936, %v3344
    %v3647 = vadd.f32 %v2937, %v3349
    %v3648 = vadd.f32 %v2938, %v3354
    %v3649 = vadd.f32 %v2939, %v3359
    %v3650 = vadd.f32 %v2940, %v3364
    %v3651 = vadd.f32 %v2941, %v3369
    %v3652 = vadd.f32 %v2942, %v3374
    %v3653 = vadd.f32 %v2943, %v3379
    %v3654 = vadd.f32 %v2944, %v3384
    %v3655 = vadd.f32 %v2945, %v3389
    %v3656 = vadd.f32 %v2946, %v3394
    %v3657 = vadd.f32 %v2947, %v3399
    %v3658 = vadd.f32 %v2948, %v3404
    %v3659 = vadd.f32 %v2949, %v3409
    %v3660 = vadd.f32 %v2950, %v3414
    %v3661 = vadd.f32 %v2951, %v3419
    %v3662 = vadd.f32 %v2952, %v3424
    %v3663 = vadd.f32 %v2953, %v3429
    %v3664 = vadd.f32 %v2954, %v3434
    %v3665 = vadd.f32 %v2955, %v3439
    %v3666 = vadd.f32 %v2956, %v3444
    %v3667 = vadd.f32 %v2957, %v3449
    %v3668 = vadd.f32 %v2958, %v3454
    %v3669 = vadd.f32 %v2959, %v3459
    %v3670 = vadd.f32 %v2960, %v3464
    %v3671 = vadd.f32 %v2961, %v3469
    %v3672 = vadd.f32 %v2962, %v3474
    %v3673 = vadd.f32 %v2963, %v3479
    %v3674 = vadd.f32 %v2964, %v3484
    %v3675 = vadd.f32 %v2965, %v3489
    %v3676 = vadd.f32 %v2966, %v3494
    %v3677 = vadd.f32 %v2967, %v3499
    %v3678 = vadd.f32 %v2968, %v3504
    %v3679 = vadd.f32 %v2969, %v3509
    %v3680 = vadd.f32 %v2970, %v3514
    %v3681 = vadd.f32 %v2971, %v3519
    %v3682 = vadd.f32 %v2972, %v3524
    %v3683 = vadd.f32 %v2973, %v3529
    %v3684 = vadd.f32 %v2974, %v3534
    %v3685 = vadd.f32 %v2975, %v3539
    %v3686 = vadd.f32 %v2976, %v3544
    %v3687 = vadd.f32 %v2977, %v3549
    %v3688 = vadd.f32 %v2978, %v3554
    %v3689 = vadd.f32 %v2979, %v3559
    %v3690 = vadd.f32 %v2980, %v3564
    %v3691 = vadd.f32 %v2981, %v3569
    %v3692 = vadd.f32 %v2982, %v3574
    %v3693 = vadd.f32 %v2983, %v3579
    %v3694 = vadd.f32 %v2984, %v3584
    %v3695 = vadd.f32 %v2985, %v3589
    %v3696 = vadd.f32 %v2986, %v3594
    %v3697 = vadd.f32 %v2987, %v3599
    %v3698 = vadd.f32 %v2988, %v3604
    %v3699 = vadd.f32 %v2989, %v3609
    %v3700 = vadd.f32 %v2990, %v3614
    %v3701 = vadd.f32 %v2991, %v3619
    %v3702 = vadd.f32 %v2992, %v3624
    %v3703 = vadd.f32 %v2993, %v3629
    %v3704 = vadd.f32 %v2994, %v3634
    %v3705 = vadd.f32 %v2995, %v3639
    %v3706 = vld [vmem:[%s219 + $0x2] sm:$0xff]
    %v3707 = vld [vmem:[%s219 + $0xa] sm:$0xff]
    %v3708 = vld [vmem:[%s219 + $0x1a] sm:$0xff]
    %v3709 = vld [vmem:[%s219 + $0x22] sm:$0xff]
    %v3710 = vld [vmem:[%s219 + $0x32] sm:$0xff]
    %v3711 = vld [vmem:[%s219 + $0x3a] sm:$0xff]
    %v3712 = vld [vmem:[%s219 + $0x4a] sm:$0xff]
    %v3713 = vld [vmem:[%s219 + $0x52] sm:$0xff]
    %v3714 = vld [vmem:[%s219 + $0x62] sm:$0xff]
    %v3715 = vld [vmem:[%s219 + $0x6a] sm:$0xff]
    %v3716 = vld [vmem:[%s219 + $0x7a] sm:$0xff]
    %v3717 = vld [vmem:[%s219 + $0x82] sm:$0xff]
    %v3718 = vld [vmem:[%s219 + $0x92] sm:$0xff]
    %v3719 = vld [vmem:[%s219 + $0x9a] sm:$0xff]
    %v3720 = vld [vmem:[%s219 + $0xaa] sm:$0xff]
    %v3721 = vld [vmem:[%s219 + $0xb2] sm:$0xff]
    %v3722 = vld [vmem:[%s219 + $0xc2] sm:$0xff]
    %v3723 = vld [vmem:[%s219 + $0xca] sm:$0xff]
    %v3724 = vld [vmem:[%s219 + $0xda] sm:$0xff]
    %v3725 = vld [vmem:[%s219 + $0xe2] sm:$0xff]
    %v3726 = vld [vmem:[%s219 + $0xf2] sm:$0xff]
    %v3727 = vld [vmem:[%s219 + $0xfa] sm:$0xff]
    %v3728 = vld [vmem:[%s219 + $0x10a] sm:$0xff]
    %v3729 = vld [vmem:[%s219 + $0x112] sm:$0xff]
    %v3730 = vld [vmem:[%s219 + $0x122] sm:$0xff]
    %v3731 = vld [vmem:[%s219 + $0x12a] sm:$0xff]
    %v3732 = vld [vmem:[%s219 + $0x13a] sm:$0xff]
    %v3733 = vld [vmem:[%s219 + $0x142] sm:$0xff]
    %v3734 = vld [vmem:[%s219 + $0x152] sm:$0xff]
    %v3735 = vld [vmem:[%s219 + $0x15a] sm:$0xff]
    %v3736 = vld [vmem:[%s219 + $0x16a] sm:$0xff]
    %v3737 = vld [vmem:[%s219 + $0x172] sm:$0xff]
    %v3738 = vld [vmem:[%s219 + $0x1b2] sm:$0xff]
    %v3739 = vld [vmem:[%s219 + $0x1ba] sm:$0xff]
    %v3740 = vld [vmem:[%s219 + $0x1ca] sm:$0xff]
    %v3741 = vld [vmem:[%s219 + $0x1d2] sm:$0xff]
    %v3742 = vld [vmem:[%s219 + $0x1e2] sm:$0xff]
    %v3743 = vld [vmem:[%s219 + $0x1ea] sm:$0xff]
    %v3744 = vld [vmem:[%s219 + $0x1fa] sm:$0xff]
    %v3745 = vld [vmem:[%s219 + $0x202] sm:$0xff]
    %v3746 = vld [vmem:[%s219 + $0x212] sm:$0xff]
    %v3747 = vld [vmem:[%s219 + $0x21a] sm:$0xff]
    %v3748 = vld [vmem:[%s219 + $0x22a] sm:$0xff]
    %v3749 = vld [vmem:[%s219 + $0x232] sm:$0xff]
    %v3750 = vld [vmem:[%s219 + $0x242] sm:$0xff]
    %v3751 = vld [vmem:[%s219 + $0x24a] sm:$0xff]
    %v3752 = vld [vmem:[%s219 + $0x25a] sm:$0xff]
    %v3753 = vld [vmem:[%s219 + $0x262] sm:$0xff]
    %v3754 = vld [vmem:[%s219 + $0x272] sm:$0xff]
    %v3755 = vld [vmem:[%s219 + $0x27a] sm:$0xff]
    %v3756 = vld [vmem:[%s219 + $0x28a] sm:$0xff]
    %v3757 = vld [vmem:[%s219 + $0x292] sm:$0xff]
    %v3758 = vld [vmem:[%s219 + $0x2a2] sm:$0xff]
    %v3759 = vld [vmem:[%s219 + $0x2aa] sm:$0xff]
    %v3760 = vld [vmem:[%s219 + $0x2ba] sm:$0xff]
    %v3761 = vld [vmem:[%s219 + $0x2c2] sm:$0xff]
    %v3762 = vld [vmem:[%s219 + $0x2d2] sm:$0xff]
    %v3763 = vld [vmem:[%s219 + $0x2da] sm:$0xff]
    %v3764 = vld [vmem:[%s219 + $0x2ea] sm:$0xff]
    %v3765 = vld [vmem:[%s219 + $0x2f2] sm:$0xff]
    %v3766 = vld [vmem:[%s219 + $0x302] sm:$0xff]
    %v3767 = vld [vmem:[%s219 + $0x30a] sm:$0xff]
    %v3768 = vld [vmem:[%s219 + $0x31a] sm:$0xff]
    %v3769 = vld [vmem:[%s219 + $0x322] sm:$0xff]
    %s3770 = scalar_lea.vmem %s1, 20
    %v3771 = vld [vmem:[%s3770] sm:$0xf]
    %v3773 = vsel %vm109, %v3706, 0
    %v3776 = vsel %vm109, %v3707, 0
    %v3779 = vsel %vm109, %v3708, 0
    %v3782 = vsel %vm109, %v3709, 0
    %v3785 = vsel %vm109, %v3710, 0
    %v3788 = vsel %vm109, %v3711, 0
    %v3791 = vsel %vm109, %v3712, 0
    %v3794 = vsel %vm109, %v3713, 0
    %v3797 = vsel %vm109, %v3714, 0
    %v3800 = vsel %vm109, %v3715, 0
    %v3803 = vsel %vm109, %v3716, 0
    %v3806 = vsel %vm109, %v3717, 0
    %v3809 = vsel %vm109, %v3718, 0
    %v3812 = vsel %vm109, %v3719, 0
    %v3815 = vsel %vm109, %v3720, 0
    %v3818 = vsel %vm109, %v3721, 0
    %v3821 = vsel %vm109, %v3722, 0
    %v3824 = vsel %vm109, %v3723, 0
    %v3827 = vsel %vm109, %v3724, 0
    %v3830 = vsel %vm109, %v3725, 0
    %v3833 = vsel %vm109, %v3726, 0
    %v3836 = vsel %vm109, %v3727, 0
    %v3839 = vsel %vm109, %v3728, 0
    %v3842 = vsel %vm109, %v3729, 0
    %v3845 = vsel %vm109, %v3730, 0
    %v3848 = vsel %vm109, %v3731, 0
    %v3851 = vsel %vm109, %v3732, 0
    %v3854 = vsel %vm109, %v3733, 0
    %v3857 = vsel %vm109, %v3734, 0
    %v3860 = vsel %vm109, %v3735, 0
    %v3863 = vsel %vm109, %v3736, 0
    %v3866 = vsel %vm109, %v3737, 0
    %v3869 = vsel %vm109, %v3738, 0
    %v3872 = vsel %vm109, %v3739, 0
    %v3875 = vsel %vm109, %v3740, 0
    %v3878 = vsel %vm109, %v3741, 0
    %v3881 = vsel %vm109, %v3742, 0
    %v3884 = vsel %vm109, %v3743, 0
    %v3887 = vsel %vm109, %v3744, 0
    %v3890 = vsel %vm109, %v3745, 0
    %v3893 = vsel %vm109, %v3746, 0
    %v3896 = vsel %vm109, %v3747, 0
    %v3899 = vsel %vm109, %v3748, 0
    %v3902 = vsel %vm109, %v3749, 0
    %v3905 = vsel %vm109, %v3750, 0
    %v3908 = vsel %vm109, %v3751, 0
    %v3911 = vsel %vm109, %v3752, 0
    %v3914 = vsel %vm109, %v3753, 0
    %v3917 = vsel %vm109, %v3754, 0
    %v3920 = vsel %vm109, %v3755, 0
    %v3923 = vsel %vm109, %v3756, 0
    %v3926 = vsel %vm109, %v3757, 0
    %v3929 = vsel %vm109, %v3758, 0
    %v3932 = vsel %vm109, %v3759, 0
    %v3935 = vsel %vm109, %v3760, 0
    %v3938 = vsel %vm109, %v3761, 0
    %v3941 = vsel %vm109, %v3762, 0
    %v3944 = vsel %vm109, %v3763, 0
    %v3947 = vsel %vm109, %v3764, 0
    %v3950 = vsel %vm109, %v3765, 0
    %v3953 = vsel %vm109, %v3766, 0
    %v3956 = vsel %vm109, %v3767, 0
    %v3959 = vsel %vm109, %v3768, 0
    %v3962 = vsel %vm109, %v3769, 0
    %v3965 = vsel %vm607, %v3771, 0
    %3967 = vmatprep.subr.mxu0 0.0
    %3968 = vmatpush1.msra.mxu0 0.0
    %3969 = vmatprep.subr.mxu0 0.0
    %3970 = vmatpush1.msra.mxu0 0.0
    %3971 = vmatprep.subr.mxu0 0.0
    %3972 = vmatpush1.msra.mxu0 0.0
    %3973 = vmatprep.subr.mxu0 0.0
    %3974 = vmatpush1.msra.mxu0 0.0
    %3975 = vmatprep.subr.mxu0 0.0
    %3976 = vmatpush1.msra.mxu0 0.0
    %3977 = vmatprep.subr.mxu0 0.0
    %3978 = vmatpush1.msra.mxu0 0.0
    %3979 = vmatprep.subr.mxu0 0.0
    %3980 = vmatpush1.msra.mxu0 0.0
    %3981 = vmatprep.subr.mxu0 0.0
    %3982 = vmatpush1.msra.mxu0 0.0
    %3983 = vmatprep.subr.mxu0 0.0
    %3984 = vmatpush1.msra.mxu0 0.0
    %3985 = vmatprep.subr.mxu0 0.0
    %3986 = vmatpush1.msra.mxu0 0.0
    %3987 = vmatprep.subr.mxu0 0.0
    %3988 = vmatpush1.msra.mxu0 0.0
    %3989 = vmatprep.subr.mxu0 0.0
    %3990 = vmatpush1.msra.mxu0 0.0
    %3991 = vmatprep.subr.mxu0 0.0
    %3992 = vmatpush1.msra.mxu0 0.0
    %3993 = vmatprep.subr.mxu0 0.0
    %3994 = vmatpush1.msra.mxu0 0.0
    %3995 = vmatprep.subr.mxu0 0.0
    %3996 = vmatpush1.msra.mxu0 0.0
    %3997 = vmatprep.subr.mxu0 0.0
    %3998 = vmatpush1.msra.mxu0 %v3965
    %3999 = vmatprep.subr.mxu0 0.0
    %4000 = vmatpush2.msra.mxu0 0.0
    %4001 = vmatprep.subr.mxu0 0.0
    %4002 = vmatpush2.msra.mxu0 0.0
    %4003 = vmatprep.subr.mxu0 0.0
    %4004 = vmatpush2.msra.mxu0 0.0
    %4005 = vmatprep.subr.mxu0 0.0
    %4006 = vmatpush2.msra.mxu0 0.0
    %4007 = vmatprep.subr.mxu0 0.0
    %4008 = vmatpush2.msra.mxu0 0.0
    %4009 = vmatprep.subr.mxu0 0.0
    %4010 = vmatpush2.msra.mxu0 0.0
    %4011 = vmatprep.subr.mxu0 0.0
    %4012 = vmatpush2.msra.mxu0 0.0
    %4013 = vmatprep.subr.mxu0 0.0
    %4014 = vmatpush2.msra.mxu0 0.0
    %4015 = vmatprep.subr.mxu0 0.0
    %4016 = vmatpush2.msra.mxu0 0.0
    %4017 = vmatprep.subr.mxu0 0.0
    %4018 = vmatpush2.msra.mxu0 0.0
    %4019 = vmatprep.subr.mxu0 0.0
    %4020 = vmatpush2.msra.mxu0 0.0
    %4021 = vmatprep.subr.mxu0 0.0
    %4022 = vmatpush2.msra.mxu0 0.0
    %4023 = vmatprep.subr.mxu0 0.0
    %4024 = vmatpush2.msra.mxu0 0.0
    %4025 = vmatprep.subr.mxu0 0.0
    %4026 = vmatpush2.msra.mxu0 0.0
    %4027 = vmatprep.subr.mxu0 0.0
    %4028 = vmatpush2.msra.mxu0 0.0
    %4029 = vmatprep.subr.mxu0 0.0
    %4030 = vmatpush2.msra.mxu0 0.0
    %4031 = vmatprep.mubr.f32.mxu0 0.0
    %4032 = vmatmul.mubr.f32.gmra.mxu0 %v3773
    %v4033 = vpop.f32.mrf.mxu0
    %v4034 = vadd.f32 0.0, %v4033
    %v4035 = vpop.f32.mrf.mxu0
    %4036 = vmatprep.mubr.f32.mxu0 0.0
    %4037 = vmatmul.mubr.f32.gmra.mxu0 %v3776
    %v4038 = vpop.f32.mrf.mxu0
    %v4039 = vadd.f32 0.0, %v4038
    %v4040 = vpop.f32.mrf.mxu0
    %4041 = vmatprep.mubr.f32.mxu0 0.0
    %4042 = vmatmul.mubr.f32.gmra.mxu0 %v3779
    %v4043 = vpop.f32.mrf.mxu0
    %v4044 = vadd.f32 0.0, %v4043
    %v4045 = vpop.f32.mrf.mxu0
    %4046 = vmatprep.mubr.f32.mxu0 0.0
    %4047 = vmatmul.mubr.f32.gmra.mxu0 %v3782
    %v4048 = vpop.f32.mrf.mxu0
    %v4049 = vadd.f32 0.0, %v4048
    %v4050 = vpop.f32.mrf.mxu0
    %4051 = vmatprep.mubr.f32.mxu0 0.0
    %4052 = vmatmul.mubr.f32.gmra.mxu0 %v3785
    %v4053 = vpop.f32.mrf.mxu0
    %v4054 = vadd.f32 0.0, %v4053
    %v4055 = vpop.f32.mrf.mxu0
    %4056 = vmatprep.mubr.f32.mxu0 0.0
    %4057 = vmatmul.mubr.f32.gmra.mxu0 %v3788
    %v4058 = vpop.f32.mrf.mxu0
    %v4059 = vadd.f32 0.0, %v4058
    %v4060 = vpop.f32.mrf.mxu0
    %4061 = vmatprep.mubr.f32.mxu0 0.0
    %4062 = vmatmul.mubr.f32.gmra.mxu0 %v3791
    %v4063 = vpop.f32.mrf.mxu0
    %v4064 = vadd.f32 0.0, %v4063
    %v4065 = vpop.f32.mrf.mxu0
    %4066 = vmatprep.mubr.f32.mxu0 0.0
    %4067 = vmatmul.mubr.f32.gmra.mxu0 %v3794
    %v4068 = vpop.f32.mrf.mxu0
    %v4069 = vadd.f32 0.0, %v4068
    %v4070 = vpop.f32.mrf.mxu0
    %4071 = vmatprep.mubr.f32.mxu0 0.0
    %4072 = vmatmul.mubr.f32.gmra.mxu0 %v3797
    %v4073 = vpop.f32.mrf.mxu0
    %v4074 = vadd.f32 0.0, %v4073
    %v4075 = vpop.f32.mrf.mxu0
    %4076 = vmatprep.mubr.f32.mxu0 0.0
    %4077 = vmatmul.mubr.f32.gmra.mxu0 %v3800
    %v4078 = vpop.f32.mrf.mxu0
    %v4079 = vadd.f32 0.0, %v4078
    %v4080 = vpop.f32.mrf.mxu0
    %4081 = vmatprep.mubr.f32.mxu0 0.0
    %4082 = vmatmul.mubr.f32.gmra.mxu0 %v3803
    %v4083 = vpop.f32.mrf.mxu0
    %v4084 = vadd.f32 0.0, %v4083
    %v4085 = vpop.f32.mrf.mxu0
    %4086 = vmatprep.mubr.f32.mxu0 0.0
    %4087 = vmatmul.mubr.f32.gmra.mxu0 %v3806
    %v4088 = vpop.f32.mrf.mxu0
    %v4089 = vadd.f32 0.0, %v4088
    %v4090 = vpop.f32.mrf.mxu0
    %4091 = vmatprep.mubr.f32.mxu0 0.0
    %4092 = vmatmul.mubr.f32.gmra.mxu0 %v3809
    %v4093 = vpop.f32.mrf.mxu0
    %v4094 = vadd.f32 0.0, %v4093
    %v4095 = vpop.f32.mrf.mxu0
    %4096 = vmatprep.mubr.f32.mxu0 0.0
    %4097 = vmatmul.mubr.f32.gmra.mxu0 %v3812
    %v4098 = vpop.f32.mrf.mxu0
    %v4099 = vadd.f32 0.0, %v4098
    %v4100 = vpop.f32.mrf.mxu0
    %4101 = vmatprep.mubr.f32.mxu0 0.0
    %4102 = vmatmul.mubr.f32.gmra.mxu0 %v3815
    %v4103 = vpop.f32.mrf.mxu0
    %v4104 = vadd.f32 0.0, %v4103
    %v4105 = vpop.f32.mrf.mxu0
    %4106 = vmatprep.mubr.f32.mxu0 0.0
    %4107 = vmatmul.mubr.f32.gmra.mxu0 %v3818
    %v4108 = vpop.f32.mrf.mxu0
    %v4109 = vadd.f32 0.0, %v4108
    %v4110 = vpop.f32.mrf.mxu0
    %4111 = vmatprep.mubr.f32.mxu0 0.0
    %4112 = vmatmul.mubr.f32.gmra.mxu0 %v3821
    %v4113 = vpop.f32.mrf.mxu0
    %v4114 = vadd.f32 0.0, %v4113
    %v4115 = vpop.f32.mrf.mxu0
    %4116 = vmatprep.mubr.f32.mxu0 0.0
    %4117 = vmatmul.mubr.f32.gmra.mxu0 %v3824
    %v4118 = vpop.f32.mrf.mxu0
    %v4119 = vadd.f32 0.0, %v4118
    %v4120 = vpop.f32.mrf.mxu0
    %4121 = vmatprep.mubr.f32.mxu0 0.0
    %4122 = vmatmul.mubr.f32.gmra.mxu0 %v3827
    %v4123 = vpop.f32.mrf.mxu0
    %v4124 = vadd.f32 0.0, %v4123
    %v4125 = vpop.f32.mrf.mxu0
    %4126 = vmatprep.mubr.f32.mxu0 0.0
    %4127 = vmatmul.mubr.f32.gmra.mxu0 %v3830
    %v4128 = vpop.f32.mrf.mxu0
    %v4129 = vadd.f32 0.0, %v4128
    %v4130 = vpop.f32.mrf.mxu0
    %4131 = vmatprep.mubr.f32.mxu0 0.0
    %4132 = vmatmul.mubr.f32.gmra.mxu0 %v3833
    %v4133 = vpop.f32.mrf.mxu0
    %v4134 = vadd.f32 0.0, %v4133
    %v4135 = vpop.f32.mrf.mxu0
    %4136 = vmatprep.mubr.f32.mxu0 0.0
    %4137 = vmatmul.mubr.f32.gmra.mxu0 %v3836
    %v4138 = vpop.f32.mrf.mxu0
    %v4139 = vadd.f32 0.0, %v4138
    %v4140 = vpop.f32.mrf.mxu0
    %4141 = vmatprep.mubr.f32.mxu0 0.0
    %4142 = vmatmul.mubr.f32.gmra.mxu0 %v3839
    %v4143 = vpop.f32.mrf.mxu0
    %v4144 = vadd.f32 0.0, %v4143
    %v4145 = vpop.f32.mrf.mxu0
    %4146 = vmatprep.mubr.f32.mxu0 0.0
    %4147 = vmatmul.mubr.f32.gmra.mxu0 %v3842
    %v4148 = vpop.f32.mrf.mxu0
    %v4149 = vadd.f32 0.0, %v4148
    %v4150 = vpop.f32.mrf.mxu0
    %4151 = vmatprep.mubr.f32.mxu0 0.0
    %4152 = vmatmul.mubr.f32.gmra.mxu0 %v3845
    %v4153 = vpop.f32.mrf.mxu0
    %v4154 = vadd.f32 0.0, %v4153
    %v4155 = vpop.f32.mrf.mxu0
    %4156 = vmatprep.mubr.f32.mxu0 0.0
    %4157 = vmatmul.mubr.f32.gmra.mxu0 %v3848
    %v4158 = vpop.f32.mrf.mxu0
    %v4159 = vadd.f32 0.0, %v4158
    %v4160 = vpop.f32.mrf.mxu0
    %4161 = vmatprep.mubr.f32.mxu0 0.0
    %4162 = vmatmul.mubr.f32.gmra.mxu0 %v3851
    %v4163 = vpop.f32.mrf.mxu0
    %v4164 = vadd.f32 0.0, %v4163
    %v4165 = vpop.f32.mrf.mxu0
    %4166 = vmatprep.mubr.f32.mxu0 0.0
    %4167 = vmatmul.mubr.f32.gmra.mxu0 %v3854
    %v4168 = vpop.f32.mrf.mxu0
    %v4169 = vadd.f32 0.0, %v4168
    %v4170 = vpop.f32.mrf.mxu0
    %4171 = vmatprep.mubr.f32.mxu0 0.0
    %4172 = vmatmul.mubr.f32.gmra.mxu0 %v3857
    %v4173 = vpop.f32.mrf.mxu0
    %v4174 = vadd.f32 0.0, %v4173
    %v4175 = vpop.f32.mrf.mxu0
    %4176 = vmatprep.mubr.f32.mxu0 0.0
    %4177 = vmatmul.mubr.f32.gmra.mxu0 %v3860
    %v4178 = vpop.f32.mrf.mxu0
    %v4179 = vadd.f32 0.0, %v4178
    %v4180 = vpop.f32.mrf.mxu0
    %4181 = vmatprep.mubr.f32.mxu0 0.0
    %4182 = vmatmul.mubr.f32.gmra.mxu0 %v3863
    %v4183 = vpop.f32.mrf.mxu0
    %v4184 = vadd.f32 0.0, %v4183
    %v4185 = vpop.f32.mrf.mxu0
    %4186 = vmatprep.mubr.f32.mxu0 0.0
    %4187 = vmatmul.mubr.f32.gmra.mxu0 %v3866
    %v4188 = vpop.f32.mrf.mxu0
    %v4189 = vadd.f32 0.0, %v4188
    %v4190 = vpop.f32.mrf.mxu0
    %4191 = vmatprep.mubr.f32.mxu0 0.0
    %4192 = vmatmul.mubr.f32.gmra.mxu0 %v3869
    %v4193 = vpop.f32.mrf.mxu0
    %v4194 = vadd.f32 0.0, %v4193
    %v4195 = vpop.f32.mrf.mxu0
    %4196 = vmatprep.mubr.f32.mxu0 0.0
    %4197 = vmatmul.mubr.f32.gmra.mxu0 %v3872
    %v4198 = vpop.f32.mrf.mxu0
    %v4199 = vadd.f32 0.0, %v4198
    %v4200 = vpop.f32.mrf.mxu0
    %4201 = vmatprep.mubr.f32.mxu0 0.0
    %4202 = vmatmul.mubr.f32.gmra.mxu0 %v3875
    %v4203 = vpop.f32.mrf.mxu0
    %v4204 = vadd.f32 0.0, %v4203
    %v4205 = vpop.f32.mrf.mxu0
    %4206 = vmatprep.mubr.f32.mxu0 0.0
    %4207 = vmatmul.mubr.f32.gmra.mxu0 %v3878
    %v4208 = vpop.f32.mrf.mxu0
    %v4209 = vadd.f32 0.0, %v4208
    %v4210 = vpop.f32.mrf.mxu0
    %4211 = vmatprep.mubr.f32.mxu0 0.0
    %4212 = vmatmul.mubr.f32.gmra.mxu0 %v3881
    %v4213 = vpop.f32.mrf.mxu0
    %v4214 = vadd.f32 0.0, %v4213
    %v4215 = vpop.f32.mrf.mxu0
    %4216 = vmatprep.mubr.f32.mxu0 0.0
    %4217 = vmatmul.mubr.f32.gmra.mxu0 %v3884
    %v4218 = vpop.f32.mrf.mxu0
    %v4219 = vadd.f32 0.0, %v4218
    %v4220 = vpop.f32.mrf.mxu0
    %4221 = vmatprep.mubr.f32.mxu0 0.0
    %4222 = vmatmul.mubr.f32.gmra.mxu0 %v3887
    %v4223 = vpop.f32.mrf.mxu0
    %v4224 = vadd.f32 0.0, %v4223
    %v4225 = vpop.f32.mrf.mxu0
    %4226 = vmatprep.mubr.f32.mxu0 0.0
    %4227 = vmatmul.mubr.f32.gmra.mxu0 %v3890
    %v4228 = vpop.f32.mrf.mxu0
    %v4229 = vadd.f32 0.0, %v4228
    %v4230 = vpop.f32.mrf.mxu0
    %4231 = vmatprep.mubr.f32.mxu0 0.0
    %4232 = vmatmul.mubr.f32.gmra.mxu0 %v3893
    %v4233 = vpop.f32.mrf.mxu0
    %v4234 = vadd.f32 0.0, %v4233
    %v4235 = vpop.f32.mrf.mxu0
    %4236 = vmatprep.mubr.f32.mxu0 0.0
    %4237 = vmatmul.mubr.f32.gmra.mxu0 %v3896
    %v4238 = vpop.f32.mrf.mxu0
    %v4239 = vadd.f32 0.0, %v4238
    %v4240 = vpop.f32.mrf.mxu0
    %4241 = vmatprep.mubr.f32.mxu0 0.0
    %4242 = vmatmul.mubr.f32.gmra.mxu0 %v3899
    %v4243 = vpop.f32.mrf.mxu0
    %v4244 = vadd.f32 0.0, %v4243
    %v4245 = vpop.f32.mrf.mxu0
    %4246 = vmatprep.mubr.f32.mxu0 0.0
    %4247 = vmatmul.mubr.f32.gmra.mxu0 %v3902
    %v4248 = vpop.f32.mrf.mxu0
    %v4249 = vadd.f32 0.0, %v4248
    %v4250 = vpop.f32.mrf.mxu0
    %4251 = vmatprep.mubr.f32.mxu0 0.0
    %4252 = vmatmul.mubr.f32.gmra.mxu0 %v3905
    %v4253 = vpop.f32.mrf.mxu0
    %v4254 = vadd.f32 0.0, %v4253
    %v4255 = vpop.f32.mrf.mxu0
    %4256 = vmatprep.mubr.f32.mxu0 0.0
    %4257 = vmatmul.mubr.f32.gmra.mxu0 %v3908
    %v4258 = vpop.f32.mrf.mxu0
    %v4259 = vadd.f32 0.0, %v4258
    %v4260 = vpop.f32.mrf.mxu0
    %4261 = vmatprep.mubr.f32.mxu0 0.0
    %4262 = vmatmul.mubr.f32.gmra.mxu0 %v3911
    %v4263 = vpop.f32.mrf.mxu0
    %v4264 = vadd.f32 0.0, %v4263
    %v4265 = vpop.f32.mrf.mxu0
    %4266 = vmatprep.mubr.f32.mxu0 0.0
    %4267 = vmatmul.mubr.f32.gmra.mxu0 %v3914
    %v4268 = vpop.f32.mrf.mxu0
    %v4269 = vadd.f32 0.0, %v4268
    %v4270 = vpop.f32.mrf.mxu0
    %4271 = vmatprep.mubr.f32.mxu0 0.0
    %4272 = vmatmul.mubr.f32.gmra.mxu0 %v3917
    %v4273 = vpop.f32.mrf.mxu0
    %v4274 = vadd.f32 0.0, %v4273
    %v4275 = vpop.f32.mrf.mxu0
    %4276 = vmatprep.mubr.f32.mxu0 0.0
    %4277 = vmatmul.mubr.f32.gmra.mxu0 %v3920
    %v4278 = vpop.f32.mrf.mxu0
    %v4279 = vadd.f32 0.0, %v4278
    %v4280 = vpop.f32.mrf.mxu0
    %4281 = vmatprep.mubr.f32.mxu0 0.0
    %4282 = vmatmul.mubr.f32.gmra.mxu0 %v3923
    %v4283 = vpop.f32.mrf.mxu0
    %v4284 = vadd.f32 0.0, %v4283
    %v4285 = vpop.f32.mrf.mxu0
    %4286 = vmatprep.mubr.f32.mxu0 0.0
    %4287 = vmatmul.mubr.f32.gmra.mxu0 %v3926
    %v4288 = vpop.f32.mrf.mxu0
    %v4289 = vadd.f32 0.0, %v4288
    %v4290 = vpop.f32.mrf.mxu0
    %4291 = vmatprep.mubr.f32.mxu0 0.0
    %4292 = vmatmul.mubr.f32.gmra.mxu0 %v3929
    %v4293 = vpop.f32.mrf.mxu0
    %v4294 = vadd.f32 0.0, %v4293
    %v4295 = vpop.f32.mrf.mxu0
    %4296 = vmatprep.mubr.f32.mxu0 0.0
    %4297 = vmatmul.mubr.f32.gmra.mxu0 %v3932
    %v4298 = vpop.f32.mrf.mxu0
    %v4299 = vadd.f32 0.0, %v4298
    %v4300 = vpop.f32.mrf.mxu0
    %4301 = vmatprep.mubr.f32.mxu0 0.0
    %4302 = vmatmul.mubr.f32.gmra.mxu0 %v3935
    %v4303 = vpop.f32.mrf.mxu0
    %v4304 = vadd.f32 0.0, %v4303
    %v4305 = vpop.f32.mrf.mxu0
    %4306 = vmatprep.mubr.f32.mxu0 0.0
    %4307 = vmatmul.mubr.f32.gmra.mxu0 %v3938
    %v4308 = vpop.f32.mrf.mxu0
    %v4309 = vadd.f32 0.0, %v4308
    %v4310 = vpop.f32.mrf.mxu0
    %4311 = vmatprep.mubr.f32.mxu0 0.0
    %4312 = vmatmul.mubr.f32.gmra.mxu0 %v3941
    %v4313 = vpop.f32.mrf.mxu0
    %v4314 = vadd.f32 0.0, %v4313
    %v4315 = vpop.f32.mrf.mxu0
    %4316 = vmatprep.mubr.f32.mxu0 0.0
    %4317 = vmatmul.mubr.f32.gmra.mxu0 %v3944
    %v4318 = vpop.f32.mrf.mxu0
    %v4319 = vadd.f32 0.0, %v4318
    %v4320 = vpop.f32.mrf.mxu0
    %4321 = vmatprep.mubr.f32.mxu0 0.0
    %4322 = vmatmul.mubr.f32.gmra.mxu0 %v3947
    %v4323 = vpop.f32.mrf.mxu0
    %v4324 = vadd.f32 0.0, %v4323
    %v4325 = vpop.f32.mrf.mxu0
    %4326 = vmatprep.mubr.f32.mxu0 0.0
    %4327 = vmatmul.mubr.f32.gmra.mxu0 %v3950
    %v4328 = vpop.f32.mrf.mxu0
    %v4329 = vadd.f32 0.0, %v4328
    %v4330 = vpop.f32.mrf.mxu0
    %4331 = vmatprep.mubr.f32.mxu0 0.0
    %4332 = vmatmul.mubr.f32.gmra.mxu0 %v3953
    %v4333 = vpop.f32.mrf.mxu0
    %v4334 = vadd.f32 0.0, %v4333
    %v4335 = vpop.f32.mrf.mxu0
    %4336 = vmatprep.mubr.f32.mxu0 0.0
    %4337 = vmatmul.mubr.f32.gmra.mxu0 %v3956
    %v4338 = vpop.f32.mrf.mxu0
    %v4339 = vadd.f32 0.0, %v4338
    %v4340 = vpop.f32.mrf.mxu0
    %4341 = vmatprep.mubr.f32.mxu0 0.0
    %4342 = vmatmul.mubr.f32.gmra.mxu0 %v3959
    %v4343 = vpop.f32.mrf.mxu0
    %v4344 = vadd.f32 0.0, %v4343
    %v4345 = vpop.f32.mrf.mxu0
    %4346 = vmatprep.mubr.f32.mxu0 0.0
    %4347 = vmatmul.mubr.f32.gmra.mxu0 %v3962
    %v4348 = vpop.f32.mrf.mxu0
    %v4349 = vadd.f32 0.0, %v4348
    %v4350 = vpop.f32.mrf.mxu0
    %4351 = vdwg.mxu0
    %v4352 = vadd.f32 %v3642, %v4034
    %v4353 = vadd.f32 %v3643, %v4039
    %v4354 = vadd.f32 %v3644, %v4044
    %v4355 = vadd.f32 %v3645, %v4049
    %v4356 = vadd.f32 %v3646, %v4054
    %v4357 = vadd.f32 %v3647, %v4059
    %v4358 = vadd.f32 %v3648, %v4064
    %v4359 = vadd.f32 %v3649, %v4069
    %v4360 = vadd.f32 %v3650, %v4074
    %v4361 = vadd.f32 %v3651, %v4079
    %v4362 = vadd.f32 %v3652, %v4084
    %v4363 = vadd.f32 %v3653, %v4089
    %v4364 = vadd.f32 %v3654, %v4094
    %v4365 = vadd.f32 %v3655, %v4099
    %v4366 = vadd.f32 %v3656, %v4104
    %v4367 = vadd.f32 %v3657, %v4109
    %v4368 = vadd.f32 %v3658, %v4114
    %v4369 = vadd.f32 %v3659, %v4119
    %v4370 = vadd.f32 %v3660, %v4124
    %v4371 = vadd.f32 %v3661, %v4129
    %v4372 = vadd.f32 %v3662, %v4134
    %v4373 = vadd.f32 %v3663, %v4139
    %v4374 = vadd.f32 %v3664, %v4144
    %v4375 = vadd.f32 %v3665, %v4149
    %v4376 = vadd.f32 %v3666, %v4154
    %v4377 = vadd.f32 %v3667, %v4159
    %v4378 = vadd.f32 %v3668, %v4164
    %v4379 = vadd.f32 %v3669, %v4169
    %v4380 = vadd.f32 %v3670, %v4174
    %v4381 = vadd.f32 %v3671, %v4179
    %v4382 = vadd.f32 %v3672, %v4184
    %v4383 = vadd.f32 %v3673, %v4189
    %v4384 = vadd.f32 %v3674, %v4194
    %v4385 = vadd.f32 %v3675, %v4199
    %v4386 = vadd.f32 %v3676, %v4204
    %v4387 = vadd.f32 %v3677, %v4209
    %v4388 = vadd.f32 %v3678, %v4214
    %v4389 = vadd.f32 %v3679, %v4219
    %v4390 = vadd.f32 %v3680, %v4224
    %v4391 = vadd.f32 %v3681, %v4229
    %v4392 = vadd.f32 %v3682, %v4234
    %v4393 = vadd.f32 %v3683, %v4239
    %v4394 = vadd.f32 %v3684, %v4244
    %v4395 = vadd.f32 %v3685, %v4249
    %v4396 = vadd.f32 %v3686, %v4254
    %v4397 = vadd.f32 %v3687, %v4259
    %v4398 = vadd.f32 %v3688, %v4264
    %v4399 = vadd.f32 %v3689, %v4269
    %v4400 = vadd.f32 %v3690, %v4274
    %v4401 = vadd.f32 %v3691, %v4279
    %v4402 = vadd.f32 %v3692, %v4284
    %v4403 = vadd.f32 %v3693, %v4289
    %v4404 = vadd.f32 %v3694, %v4294
    %v4405 = vadd.f32 %v3695, %v4299
    %v4406 = vadd.f32 %v3696, %v4304
    %v4407 = vadd.f32 %v3697, %v4309
    %v4408 = vadd.f32 %v3698, %v4314
    %v4409 = vadd.f32 %v3699, %v4319
    %v4410 = vadd.f32 %v3700, %v4324
    %v4411 = vadd.f32 %v3701, %v4329
    %v4412 = vadd.f32 %v3702, %v4334
    %v4413 = vadd.f32 %v3703, %v4339
    %v4414 = vadd.f32 %v3704, %v4344
    %v4415 = vadd.f32 %v3705, %v4349
    %s4416 = scalar_lea.vmem [#allocation2], 48
    %v4417 = vld [vmem:[%s4416] sm:$0xff]
    %v4418 = vld [vmem:[%s4416 + $0x8] sm:$0xff]
    %v4419 = vld [vmem:[%s4416 + $0x18] sm:$0xff]
    %v4420 = vld [vmem:[%s4416 + $0x20] sm:$0xff]
    %v4421 = vld [vmem:[%s4416 + $0x30] sm:$0xff]
    %v4422 = vld [vmem:[%s4416 + $0x38] sm:$0xff]
    %v4423 = vld [vmem:[%s4416 + $0x48] sm:$0xff]
    %v4424 = vld [vmem:[%s4416 + $0x50] sm:$0xff]
    %v4425 = vld [vmem:[%s4416 + $0x60] sm:$0xff]
    %v4426 = vld [vmem:[%s4416 + $0x68] sm:$0xff]
    %v4427 = vld [vmem:[%s4416 + $0x78] sm:$0xff]
    %v4428 = vld [vmem:[%s4416 + $0x80] sm:$0xff]
    %v4429 = vld [vmem:[%s4416 + $0x90] sm:$0xff]
    %v4430 = vld [vmem:[%s4416 + $0x98] sm:$0xff]
    %v4431 = vld [vmem:[%s4416 + $0xa8] sm:$0xff]
    %v4432 = vld [vmem:[%s4416 + $0xb0] sm:$0xff]
    %v4433 = vld [vmem:[%s4416 + $0xc0] sm:$0xff]
    %v4434 = vld [vmem:[%s4416 + $0xc8] sm:$0xff]
    %v4435 = vld [vmem:[%s4416 + $0xd8] sm:$0xff]
    %v4436 = vld [vmem:[%s4416 + $0xe0] sm:$0xff]
    %v4437 = vld [vmem:[%s4416 + $0xf0] sm:$0xff]
    %v4438 = vld [vmem:[%s4416 + $0xf8] sm:$0xff]
    %v4439 = vld [vmem:[%s4416 + $0x108] sm:$0xff]
    %v4440 = vld [vmem:[%s4416 + $0x110] sm:$0xff]
    %v4441 = vld [vmem:[%s4416 + $0x120] sm:$0xff]
    %v4442 = vld [vmem:[%s4416 + $0x128] sm:$0xff]
    %v4443 = vld [vmem:[%s4416 + $0x138] sm:$0xff]
    %v4444 = vld [vmem:[%s4416 + $0x140] sm:$0xff]
    %v4445 = vld [vmem:[%s4416 + $0x150] sm:$0xff]
    %v4446 = vld [vmem:[%s4416 + $0x158] sm:$0xff]
    %v4447 = vld [vmem:[%s4416 + $0x168] sm:$0xff]
    %v4448 = vld [vmem:[%s4416 + $0x170] sm:$0xff]
    %v4449 = vld [vmem:[%s4416 + $0x1b0] sm:$0xff]
    %v4450 = vld [vmem:[%s4416 + $0x1b8] sm:$0xff]
    %v4451 = vld [vmem:[%s4416 + $0x1c8] sm:$0xff]
    %v4452 = vld [vmem:[%s4416 + $0x1d0] sm:$0xff]
    %v4453 = vld [vmem:[%s4416 + $0x1e0] sm:$0xff]
    %v4454 = vld [vmem:[%s4416 + $0x1e8] sm:$0xff]
    %v4455 = vld [vmem:[%s4416 + $0x1f8] sm:$0xff]
    %v4456 = vld [vmem:[%s4416 + $0x200] sm:$0xff]
    %v4457 = vld [vmem:[%s4416 + $0x210] sm:$0xff]
    %v4458 = vld [vmem:[%s4416 + $0x218] sm:$0xff]
    %v4459 = vld [vmem:[%s4416 + $0x228] sm:$0xff]
    %v4460 = vld [vmem:[%s4416 + $0x230] sm:$0xff]
    %v4461 = vld [vmem:[%s4416 + $0x240] sm:$0xff]
    %v4462 = vld [vmem:[%s4416 + $0x248] sm:$0xff]
    %v4463 = vld [vmem:[%s4416 + $0x258] sm:$0xff]
    %v4464 = vld [vmem:[%s4416 + $0x260] sm:$0xff]
    %v4465 = vld [vmem:[%s4416 + $0x270] sm:$0xff]
    %v4466 = vld [vmem:[%s4416 + $0x278] sm:$0xff]
    %v4467 = vld [vmem:[%s4416 + $0x288] sm:$0xff]
    %v4468 = vld [vmem:[%s4416 + $0x290] sm:$0xff]
    %v4469 = vld [vmem:[%s4416 + $0x2a0] sm:$0xff]
    %v4470 = vld [vmem:[%s4416 + $0x2a8] sm:$0xff]
    %v4471 = vld [vmem:[%s4416 + $0x2b8] sm:$0xff]
    %v4472 = vld [vmem:[%s4416 + $0x2c0] sm:$0xff]
    %v4473 = vld [vmem:[%s4416 + $0x2d0] sm:$0xff]
    %v4474 = vld [vmem:[%s4416 + $0x2d8] sm:$0xff]
    %v4475 = vld [vmem:[%s4416 + $0x2e8] sm:$0xff]
    %v4476 = vld [vmem:[%s4416 + $0x2f0] sm:$0xff]
    %v4477 = vld [vmem:[%s4416 + $0x300] sm:$0xff]
    %v4478 = vld [vmem:[%s4416 + $0x308] sm:$0xff]
    %v4479 = vld [vmem:[%s4416 + $0x318] sm:$0xff]
    %v4480 = vld [vmem:[%s4416 + $0x320] sm:$0xff]
    %s4481 = scalar_lea.vmem %s1, 24
    %v4482 = vld [vmem:[%s4481] sm:$0xf]
    %v4484 = vsel %vm109, %v4417, 0
    %v4487 = vsel %vm109, %v4418, 0
    %v4490 = vsel %vm109, %v4419, 0
    %v4493 = vsel %vm109, %v4420, 0
    %v4496 = vsel %vm109, %v4421, 0
    %v4499 = vsel %vm109, %v4422, 0
    %v4502 = vsel %vm109, %v4423, 0
    %v4505 = vsel %vm109, %v4424, 0
    %v4508 = vsel %vm109, %v4425, 0
    %v4511 = vsel %vm109, %v4426, 0
    %v4514 = vsel %vm109, %v4427, 0
    %v4517 = vsel %vm109, %v4428, 0
    %v4520 = vsel %vm109, %v4429, 0
    %v4523 = vsel %vm109, %v4430, 0
    %v4526 = vsel %vm109, %v4431, 0
    %v4529 = vsel %vm109, %v4432, 0
    %v4532 = vsel %vm109, %v4433, 0
    %v4535 = vsel %vm109, %v4434, 0
    %v4538 = vsel %vm109, %v4435, 0
    %v4541 = vsel %vm109, %v4436, 0
    %v4544 = vsel %vm109, %v4437, 0
    %v4547 = vsel %vm109, %v4438, 0
    %v4550 = vsel %vm109, %v4439, 0
    %v4553 = vsel %vm109, %v4440, 0
    %v4556 = vsel %vm109, %v4441, 0
    %v4559 = vsel %vm109, %v4442, 0
    %v4562 = vsel %vm109, %v4443, 0
    %v4565 = vsel %vm109, %v4444, 0
    %v4568 = vsel %vm109, %v4445, 0
    %v4571 = vsel %vm109, %v4446, 0
    %v4574 = vsel %vm109, %v4447, 0
    %v4577 = vsel %vm109, %v4448, 0
    %v4580 = vsel %vm109, %v4449, 0
    %v4583 = vsel %vm109, %v4450, 0
    %v4586 = vsel %vm109, %v4451, 0
    %v4589 = vsel %vm109, %v4452, 0
    %v4592 = vsel %vm109, %v4453, 0
    %v4595 = vsel %vm109, %v4454, 0
    %v4598 = vsel %vm109, %v4455, 0
    %v4601 = vsel %vm109, %v4456, 0
    %v4604 = vsel %vm109, %v4457, 0
    %v4607 = vsel %vm109, %v4458, 0
    %v4610 = vsel %vm109, %v4459, 0
    %v4613 = vsel %vm109, %v4460, 0
    %v4616 = vsel %vm109, %v4461, 0
    %v4619 = vsel %vm109, %v4462, 0
    %v4622 = vsel %vm109, %v4463, 0
    %v4625 = vsel %vm109, %v4464, 0
    %v4628 = vsel %vm109, %v4465, 0
    %v4631 = vsel %vm109, %v4466, 0
    %v4634 = vsel %vm109, %v4467, 0
    %v4637 = vsel %vm109, %v4468, 0
    %v4640 = vsel %vm109, %v4469, 0
    %v4643 = vsel %vm109, %v4470, 0
    %v4646 = vsel %vm109, %v4471, 0
    %v4649 = vsel %vm109, %v4472, 0
    %v4652 = vsel %vm109, %v4473, 0
    %v4655 = vsel %vm109, %v4474, 0
    %v4658 = vsel %vm109, %v4475, 0
    %v4661 = vsel %vm109, %v4476, 0
    %v4664 = vsel %vm109, %v4477, 0
    %v4667 = vsel %vm109, %v4478, 0
    %v4670 = vsel %vm109, %v4479, 0
    %v4673 = vsel %vm109, %v4480, 0
    %v4676 = vsel %vm607, %v4482, 0
    %4678 = vmatprep.subr.mxu0 0.0
    %4679 = vmatpush1.msra.mxu0 0.0
    %4680 = vmatprep.subr.mxu0 0.0
    %4681 = vmatpush1.msra.mxu0 0.0
    %4682 = vmatprep.subr.mxu0 0.0
    %4683 = vmatpush1.msra.mxu0 0.0
    %4684 = vmatprep.subr.mxu0 0.0
    %4685 = vmatpush1.msra.mxu0 0.0
    %4686 = vmatprep.subr.mxu0 0.0
    %4687 = vmatpush1.msra.mxu0 0.0
    %4688 = vmatprep.subr.mxu0 0.0
    %4689 = vmatpush1.msra.mxu0 0.0
    %4690 = vmatprep.subr.mxu0 0.0
    %4691 = vmatpush1.msra.mxu0 0.0
    %4692 = vmatprep.subr.mxu0 0.0
    %4693 = vmatpush1.msra.mxu0 0.0
    %4694 = vmatprep.subr.mxu0 0.0
    %4695 = vmatpush1.msra.mxu0 0.0
    %4696 = vmatprep.subr.mxu0 0.0
    %4697 = vmatpush1.msra.mxu0 0.0
    %4698 = vmatprep.subr.mxu0 0.0
    %4699 = vmatpush1.msra.mxu0 0.0
    %4700 = vmatprep.subr.mxu0 0.0
    %4701 = vmatpush1.msra.mxu0 0.0
    %4702 = vmatprep.subr.mxu0 0.0
    %4703 = vmatpush1.msra.mxu0 0.0
    %4704 = vmatprep.subr.mxu0 0.0
    %4705 = vmatpush1.msra.mxu0 0.0
    %4706 = vmatprep.subr.mxu0 0.0
    %4707 = vmatpush1.msra.mxu0 0.0
    %4708 = vmatprep.subr.mxu0 0.0
    %4709 = vmatpush1.msra.mxu0 %v4676
    %4710 = vmatprep.subr.mxu0 0.0
    %4711 = vmatpush2.msra.mxu0 0.0
    %4712 = vmatprep.subr.mxu0 0.0
    %4713 = vmatpush2.msra.mxu0 0.0
    %4714 = vmatprep.subr.mxu0 0.0
    %4715 = vmatpush2.msra.mxu0 0.0
    %4716 = vmatprep.subr.mxu0 0.0
    %4717 = vmatpush2.msra.mxu0 0.0
    %4718 = vmatprep.subr.mxu0 0.0
    %4719 = vmatpush2.msra.mxu0 0.0
    %4720 = vmatprep.subr.mxu0 0.0
    %4721 = vmatpush2.msra.mxu0 0.0
    %4722 = vmatprep.subr.mxu0 0.0
    %4723 = vmatpush2.msra.mxu0 0.0
    %4724 = vmatprep.subr.mxu0 0.0
    %4725 = vmatpush2.msra.mxu0 0.0
    %4726 = vmatprep.subr.mxu0 0.0
    %4727 = vmatpush2.msra.mxu0 0.0
    %4728 = vmatprep.subr.mxu0 0.0
    %4729 = vmatpush2.msra.mxu0 0.0
    %4730 = vmatprep.subr.mxu0 0.0
    %4731 = vmatpush2.msra.mxu0 0.0
    %4732 = vmatprep.subr.mxu0 0.0
    %4733 = vmatpush2.msra.mxu0 0.0
    %4734 = vmatprep.subr.mxu0 0.0
    %4735 = vmatpush2.msra.mxu0 0.0
    %4736 = vmatprep.subr.mxu0 0.0
    %4737 = vmatpush2.msra.mxu0 0.0
    %4738 = vmatprep.subr.mxu0 0.0
    %4739 = vmatpush2.msra.mxu0 0.0
    %4740 = vmatprep.subr.mxu0 0.0
    %4741 = vmatpush2.msra.mxu0 0.0
    %4742 = vmatprep.mubr.f32.mxu0 0.0
    %4743 = vmatmul.mubr.f32.gmra.mxu0 %v4484
    %v4744 = vpop.f32.mrf.mxu0
    %v4745 = vadd.f32 0.0, %v4744
    %v4746 = vpop.f32.mrf.mxu0
    %4747 = vmatprep.mubr.f32.mxu0 0.0
    %4748 = vmatmul.mubr.f32.gmra.mxu0 %v4487
    %v4749 = vpop.f32.mrf.mxu0
    %v4750 = vadd.f32 0.0, %v4749
    %v4751 = vpop.f32.mrf.mxu0
    %4752 = vmatprep.mubr.f32.mxu0 0.0
    %4753 = vmatmul.mubr.f32.gmra.mxu0 %v4490
    %v4754 = vpop.f32.mrf.mxu0
    %v4755 = vadd.f32 0.0, %v4754
    %v4756 = vpop.f32.mrf.mxu0
    %4757 = vmatprep.mubr.f32.mxu0 0.0
    %4758 = vmatmul.mubr.f32.gmra.mxu0 %v4493
    %v4759 = vpop.f32.mrf.mxu0
    %v4760 = vadd.f32 0.0, %v4759
    %v4761 = vpop.f32.mrf.mxu0
    %4762 = vmatprep.mubr.f32.mxu0 0.0
    %4763 = vmatmul.mubr.f32.gmra.mxu0 %v4496
    %v4764 = vpop.f32.mrf.mxu0
    %v4765 = vadd.f32 0.0, %v4764
    %v4766 = vpop.f32.mrf.mxu0
    %4767 = vmatprep.mubr.f32.mxu0 0.0
    %4768 = vmatmul.mubr.f32.gmra.mxu0 %v4499
    %v4769 = vpop.f32.mrf.mxu0
    %v4770 = vadd.f32 0.0, %v4769
    %v4771 = vpop.f32.mrf.mxu0
    %4772 = vmatprep.mubr.f32.mxu0 0.0
    %4773 = vmatmul.mubr.f32.gmra.mxu0 %v4502
    %v4774 = vpop.f32.mrf.mxu0
    %v4775 = vadd.f32 0.0, %v4774
    %v4776 = vpop.f32.mrf.mxu0
    %4777 = vmatprep.mubr.f32.mxu0 0.0
    %4778 = vmatmul.mubr.f32.gmra.mxu0 %v4505
    %v4779 = vpop.f32.mrf.mxu0
    %v4780 = vadd.f32 0.0, %v4779
    %v4781 = vpop.f32.mrf.mxu0
    %4782 = vmatprep.mubr.f32.mxu0 0.0
    %4783 = vmatmul.mubr.f32.gmra.mxu0 %v4508
    %v4784 = vpop.f32.mrf.mxu0
    %v4785 = vadd.f32 0.0, %v4784
    %v4786 = vpop.f32.mrf.mxu0
    %4787 = vmatprep.mubr.f32.mxu0 0.0
    %4788 = vmatmul.mubr.f32.gmra.mxu0 %v4511
    %v4789 = vpop.f32.mrf.mxu0
    %v4790 = vadd.f32 0.0, %v4789
    %v4791 = vpop.f32.mrf.mxu0
    %4792 = vmatprep.mubr.f32.mxu0 0.0
    %4793 = vmatmul.mubr.f32.gmra.mxu0 %v4514
    %v4794 = vpop.f32.mrf.mxu0
    %v4795 = vadd.f32 0.0, %v4794
    %v4796 = vpop.f32.mrf.mxu0
    %4797 = vmatprep.mubr.f32.mxu0 0.0
    %4798 = vmatmul.mubr.f32.gmra.mxu0 %v4517
    %v4799 = vpop.f32.mrf.mxu0
    %v4800 = vadd.f32 0.0, %v4799
    %v4801 = vpop.f32.mrf.mxu0
    %4802 = vmatprep.mubr.f32.mxu0 0.0
    %4803 = vmatmul.mubr.f32.gmra.mxu0 %v4520
    %v4804 = vpop.f32.mrf.mxu0
    %v4805 = vadd.f32 0.0, %v4804
    %v4806 = vpop.f32.mrf.mxu0
    %4807 = vmatprep.mubr.f32.mxu0 0.0
    %4808 = vmatmul.mubr.f32.gmra.mxu0 %v4523
    %v4809 = vpop.f32.mrf.mxu0
    %v4810 = vadd.f32 0.0, %v4809
    %v4811 = vpop.f32.mrf.mxu0
    %4812 = vmatprep.mubr.f32.mxu0 0.0
    %4813 = vmatmul.mubr.f32.gmra.mxu0 %v4526
    %v4814 = vpop.f32.mrf.mxu0
    %v4815 = vadd.f32 0.0, %v4814
    %v4816 = vpop.f32.mrf.mxu0
    %4817 = vmatprep.mubr.f32.mxu0 0.0
    %4818 = vmatmul.mubr.f32.gmra.mxu0 %v4529
    %v4819 = vpop.f32.mrf.mxu0
    %v4820 = vadd.f32 0.0, %v4819
    %v4821 = vpop.f32.mrf.mxu0
    %4822 = vmatprep.mubr.f32.mxu0 0.0
    %4823 = vmatmul.mubr.f32.gmra.mxu0 %v4532
    %v4824 = vpop.f32.mrf.mxu0
    %v4825 = vadd.f32 0.0, %v4824
    %v4826 = vpop.f32.mrf.mxu0
    %4827 = vmatprep.mubr.f32.mxu0 0.0
    %4828 = vmatmul.mubr.f32.gmra.mxu0 %v4535
    %v4829 = vpop.f32.mrf.mxu0
    %v4830 = vadd.f32 0.0, %v4829
    %v4831 = vpop.f32.mrf.mxu0
    %4832 = vmatprep.mubr.f32.mxu0 0.0
    %4833 = vmatmul.mubr.f32.gmra.mxu0 %v4538
    %v4834 = vpop.f32.mrf.mxu0
    %v4835 = vadd.f32 0.0, %v4834
    %v4836 = vpop.f32.mrf.mxu0
    %4837 = vmatprep.mubr.f32.mxu0 0.0
    %4838 = vmatmul.mubr.f32.gmra.mxu0 %v4541
    %v4839 = vpop.f32.mrf.mxu0
    %v4840 = vadd.f32 0.0, %v4839
    %v4841 = vpop.f32.mrf.mxu0
    %4842 = vmatprep.mubr.f32.mxu0 0.0
    %4843 = vmatmul.mubr.f32.gmra.mxu0 %v4544
    %v4844 = vpop.f32.mrf.mxu0
    %v4845 = vadd.f32 0.0, %v4844
    %v4846 = vpop.f32.mrf.mxu0
    %4847 = vmatprep.mubr.f32.mxu0 0.0
    %4848 = vmatmul.mubr.f32.gmra.mxu0 %v4547
    %v4849 = vpop.f32.mrf.mxu0
    %v4850 = vadd.f32 0.0, %v4849
    %v4851 = vpop.f32.mrf.mxu0
    %4852 = vmatprep.mubr.f32.mxu0 0.0
    %4853 = vmatmul.mubr.f32.gmra.mxu0 %v4550
    %v4854 = vpop.f32.mrf.mxu0
    %v4855 = vadd.f32 0.0, %v4854
    %v4856 = vpop.f32.mrf.mxu0
    %4857 = vmatprep.mubr.f32.mxu0 0.0
    %4858 = vmatmul.mubr.f32.gmra.mxu0 %v4553
    %v4859 = vpop.f32.mrf.mxu0
    %v4860 = vadd.f32 0.0, %v4859
    %v4861 = vpop.f32.mrf.mxu0
    %4862 = vmatprep.mubr.f32.mxu0 0.0
    %4863 = vmatmul.mubr.f32.gmra.mxu0 %v4556
    %v4864 = vpop.f32.mrf.mxu0
    %v4865 = vadd.f32 0.0, %v4864
    %v4866 = vpop.f32.mrf.mxu0
    %4867 = vmatprep.mubr.f32.mxu0 0.0
    %4868 = vmatmul.mubr.f32.gmra.mxu0 %v4559
    %v4869 = vpop.f32.mrf.mxu0
    %v4870 = vadd.f32 0.0, %v4869
    %v4871 = vpop.f32.mrf.mxu0
    %4872 = vmatprep.mubr.f32.mxu0 0.0
    %4873 = vmatmul.mubr.f32.gmra.mxu0 %v4562
    %v4874 = vpop.f32.mrf.mxu0
    %v4875 = vadd.f32 0.0, %v4874
    %v4876 = vpop.f32.mrf.mxu0
    %4877 = vmatprep.mubr.f32.mxu0 0.0
    %4878 = vmatmul.mubr.f32.gmra.mxu0 %v4565
    %v4879 = vpop.f32.mrf.mxu0
    %v4880 = vadd.f32 0.0, %v4879
    %v4881 = vpop.f32.mrf.mxu0
    %4882 = vmatprep.mubr.f32.mxu0 0.0
    %4883 = vmatmul.mubr.f32.gmra.mxu0 %v4568
    %v4884 = vpop.f32.mrf.mxu0
    %v4885 = vadd.f32 0.0, %v4884
    %v4886 = vpop.f32.mrf.mxu0
    %4887 = vmatprep.mubr.f32.mxu0 0.0
    %4888 = vmatmul.mubr.f32.gmra.mxu0 %v4571
    %v4889 = vpop.f32.mrf.mxu0
    %v4890 = vadd.f32 0.0, %v4889
    %v4891 = vpop.f32.mrf.mxu0
    %4892 = vmatprep.mubr.f32.mxu0 0.0
    %4893 = vmatmul.mubr.f32.gmra.mxu0 %v4574
    %v4894 = vpop.f32.mrf.mxu0
    %v4895 = vadd.f32 0.0, %v4894
    %v4896 = vpop.f32.mrf.mxu0
    %4897 = vmatprep.mubr.f32.mxu0 0.0
    %4898 = vmatmul.mubr.f32.gmra.mxu0 %v4577
    %v4899 = vpop.f32.mrf.mxu0
    %v4900 = vadd.f32 0.0, %v4899
    %v4901 = vpop.f32.mrf.mxu0
    %4902 = vmatprep.mubr.f32.mxu0 0.0
    %4903 = vmatmul.mubr.f32.gmra.mxu0 %v4580
    %v4904 = vpop.f32.mrf.mxu0
    %v4905 = vadd.f32 0.0, %v4904
    %v4906 = vpop.f32.mrf.mxu0
    %4907 = vmatprep.mubr.f32.mxu0 0.0
    %4908 = vmatmul.mubr.f32.gmra.mxu0 %v4583
    %v4909 = vpop.f32.mrf.mxu0
    %v4910 = vadd.f32 0.0, %v4909
    %v4911 = vpop.f32.mrf.mxu0
    %4912 = vmatprep.mubr.f32.mxu0 0.0
    %4913 = vmatmul.mubr.f32.gmra.mxu0 %v4586
    %v4914 = vpop.f32.mrf.mxu0
    %v4915 = vadd.f32 0.0, %v4914
    %v4916 = vpop.f32.mrf.mxu0
    %4917 = vmatprep.mubr.f32.mxu0 0.0
    %4918 = vmatmul.mubr.f32.gmra.mxu0 %v4589
    %v4919 = vpop.f32.mrf.mxu0
    %v4920 = vadd.f32 0.0, %v4919
    %v4921 = vpop.f32.mrf.mxu0
    %4922 = vmatprep.mubr.f32.mxu0 0.0
    %4923 = vmatmul.mubr.f32.gmra.mxu0 %v4592
    %v4924 = vpop.f32.mrf.mxu0
    %v4925 = vadd.f32 0.0, %v4924
    %v4926 = vpop.f32.mrf.mxu0
    %4927 = vmatprep.mubr.f32.mxu0 0.0
    %4928 = vmatmul.mubr.f32.gmra.mxu0 %v4595
    %v4929 = vpop.f32.mrf.mxu0
    %v4930 = vadd.f32 0.0, %v4929
    %v4931 = vpop.f32.mrf.mxu0
    %4932 = vmatprep.mubr.f32.mxu0 0.0
    %4933 = vmatmul.mubr.f32.gmra.mxu0 %v4598
    %v4934 = vpop.f32.mrf.mxu0
    %v4935 = vadd.f32 0.0, %v4934
    %v4936 = vpop.f32.mrf.mxu0
    %4937 = vmatprep.mubr.f32.mxu0 0.0
    %4938 = vmatmul.mubr.f32.gmra.mxu0 %v4601
    %v4939 = vpop.f32.mrf.mxu0
    %v4940 = vadd.f32 0.0, %v4939
    %v4941 = vpop.f32.mrf.mxu0
    %4942 = vmatprep.mubr.f32.mxu0 0.0
    %4943 = vmatmul.mubr.f32.gmra.mxu0 %v4604
    %v4944 = vpop.f32.mrf.mxu0
    %v4945 = vadd.f32 0.0, %v4944
    %v4946 = vpop.f32.mrf.mxu0
    %4947 = vmatprep.mubr.f32.mxu0 0.0
    %4948 = vmatmul.mubr.f32.gmra.mxu0 %v4607
    %v4949 = vpop.f32.mrf.mxu0
    %v4950 = vadd.f32 0.0, %v4949
    %v4951 = vpop.f32.mrf.mxu0
    %4952 = vmatprep.mubr.f32.mxu0 0.0
    %4953 = vmatmul.mubr.f32.gmra.mxu0 %v4610
    %v4954 = vpop.f32.mrf.mxu0
    %v4955 = vadd.f32 0.0, %v4954
    %v4956 = vpop.f32.mrf.mxu0
    %4957 = vmatprep.mubr.f32.mxu0 0.0
    %4958 = vmatmul.mubr.f32.gmra.mxu0 %v4613
    %v4959 = vpop.f32.mrf.mxu0
    %v4960 = vadd.f32 0.0, %v4959
    %v4961 = vpop.f32.mrf.mxu0
    %4962 = vmatprep.mubr.f32.mxu0 0.0
    %4963 = vmatmul.mubr.f32.gmra.mxu0 %v4616
    %v4964 = vpop.f32.mrf.mxu0
    %v4965 = vadd.f32 0.0, %v4964
    %v4966 = vpop.f32.mrf.mxu0
    %4967 = vmatprep.mubr.f32.mxu0 0.0
    %4968 = vmatmul.mubr.f32.gmra.mxu0 %v4619
    %v4969 = vpop.f32.mrf.mxu0
    %v4970 = vadd.f32 0.0, %v4969
    %v4971 = vpop.f32.mrf.mxu0
    %4972 = vmatprep.mubr.f32.mxu0 0.0
    %4973 = vmatmul.mubr.f32.gmra.mxu0 %v4622
    %v4974 = vpop.f32.mrf.mxu0
    %v4975 = vadd.f32 0.0, %v4974
    %v4976 = vpop.f32.mrf.mxu0
    %4977 = vmatprep.mubr.f32.mxu0 0.0
    %4978 = vmatmul.mubr.f32.gmra.mxu0 %v4625
    %v4979 = vpop.f32.mrf.mxu0
    %v4980 = vadd.f32 0.0, %v4979
    %v4981 = vpop.f32.mrf.mxu0
    %4982 = vmatprep.mubr.f32.mxu0 0.0
    %4983 = vmatmul.mubr.f32.gmra.mxu0 %v4628
    %v4984 = vpop.f32.mrf.mxu0
    %v4985 = vadd.f32 0.0, %v4984
    %v4986 = vpop.f32.mrf.mxu0
    %4987 = vmatprep.mubr.f32.mxu0 0.0
    %4988 = vmatmul.mubr.f32.gmra.mxu0 %v4631
    %v4989 = vpop.f32.mrf.mxu0
    %v4990 = vadd.f32 0.0, %v4989
    %v4991 = vpop.f32.mrf.mxu0
    %4992 = vmatprep.mubr.f32.mxu0 0.0
    %4993 = vmatmul.mubr.f32.gmra.mxu0 %v4634
    %v4994 = vpop.f32.mrf.mxu0
    %v4995 = vadd.f32 0.0, %v4994
    %v4996 = vpop.f32.mrf.mxu0
    %4997 = vmatprep.mubr.f32.mxu0 0.0
    %4998 = vmatmul.mubr.f32.gmra.mxu0 %v4637
    %v4999 = vpop.f32.mrf.mxu0
    %v5000 = vadd.f32 0.0, %v4999
    %v5001 = vpop.f32.mrf.mxu0
    %5002 = vmatprep.mubr.f32.mxu0 0.0
    %5003 = vmatmul.mubr.f32.gmra.mxu0 %v4640
    %v5004 = vpop.f32.mrf.mxu0
    %v5005 = vadd.f32 0.0, %v5004
    %v5006 = vpop.f32.mrf.mxu0
    %5007 = vmatprep.mubr.f32.mxu0 0.0
    %5008 = vmatmul.mubr.f32.gmra.mxu0 %v4643
    %v5009 = vpop.f32.mrf.mxu0
    %v5010 = vadd.f32 0.0, %v5009
    %v5011 = vpop.f32.mrf.mxu0
    %5012 = vmatprep.mubr.f32.mxu0 0.0
    %5013 = vmatmul.mubr.f32.gmra.mxu0 %v4646
    %v5014 = vpop.f32.mrf.mxu0
    %v5015 = vadd.f32 0.0, %v5014
    %v5016 = vpop.f32.mrf.mxu0
    %5017 = vmatprep.mubr.f32.mxu0 0.0
    %5018 = vmatmul.mubr.f32.gmra.mxu0 %v4649
    %v5019 = vpop.f32.mrf.mxu0
    %v5020 = vadd.f32 0.0, %v5019
    %v5021 = vpop.f32.mrf.mxu0
    %5022 = vmatprep.mubr.f32.mxu0 0.0
    %5023 = vmatmul.mubr.f32.gmra.mxu0 %v4652
    %v5024 = vpop.f32.mrf.mxu0
    %v5025 = vadd.f32 0.0, %v5024
    %v5026 = vpop.f32.mrf.mxu0
    %5027 = vmatprep.mubr.f32.mxu0 0.0
    %5028 = vmatmul.mubr.f32.gmra.mxu0 %v4655
    %v5029 = vpop.f32.mrf.mxu0
    %v5030 = vadd.f32 0.0, %v5029
    %v5031 = vpop.f32.mrf.mxu0
    %5032 = vmatprep.mubr.f32.mxu0 0.0
    %5033 = vmatmul.mubr.f32.gmra.mxu0 %v4658
    %v5034 = vpop.f32.mrf.mxu0
    %v5035 = vadd.f32 0.0, %v5034
    %v5036 = vpop.f32.mrf.mxu0
    %5037 = vmatprep.mubr.f32.mxu0 0.0
    %5038 = vmatmul.mubr.f32.gmra.mxu0 %v4661
    %v5039 = vpop.f32.mrf.mxu0
    %v5040 = vadd.f32 0.0, %v5039
    %v5041 = vpop.f32.mrf.mxu0
    %5042 = vmatprep.mubr.f32.mxu0 0.0
    %5043 = vmatmul.mubr.f32.gmra.mxu0 %v4664
    %v5044 = vpop.f32.mrf.mxu0
    %v5045 = vadd.f32 0.0, %v5044
    %v5046 = vpop.f32.mrf.mxu0
    %5047 = vmatprep.mubr.f32.mxu0 0.0
    %5048 = vmatmul.mubr.f32.gmra.mxu0 %v4667
    %v5049 = vpop.f32.mrf.mxu0
    %v5050 = vadd.f32 0.0, %v5049
    %v5051 = vpop.f32.mrf.mxu0
    %5052 = vmatprep.mubr.f32.mxu0 0.0
    %5053 = vmatmul.mubr.f32.gmra.mxu0 %v4670
    %v5054 = vpop.f32.mrf.mxu0
    %v5055 = vadd.f32 0.0, %v5054
    %v5056 = vpop.f32.mrf.mxu0
    %5057 = vmatprep.mubr.f32.mxu0 0.0
    %5058 = vmatmul.mubr.f32.gmra.mxu0 %v4673
    %v5059 = vpop.f32.mrf.mxu0
    %v5060 = vadd.f32 0.0, %v5059
    %v5061 = vpop.f32.mrf.mxu0
    %5062 = vdwg.mxu0
    %v5063 = vadd.f32 %v4352, %v4745
    %v5064 = vadd.f32 %v4353, %v4750
    %v5065 = vadd.f32 %v4354, %v4755
    %v5066 = vadd.f32 %v4355, %v4760
    %v5067 = vadd.f32 %v4356, %v4765
    %v5068 = vadd.f32 %v4357, %v4770
    %v5069 = vadd.f32 %v4358, %v4775
    %v5070 = vadd.f32 %v4359, %v4780
    %v5071 = vadd.f32 %v4360, %v4785
    %v5072 = vadd.f32 %v4361, %v4790
    %v5073 = vadd.f32 %v4362, %v4795
    %v5074 = vadd.f32 %v4363, %v4800
    %v5075 = vadd.f32 %v4364, %v4805
    %v5076 = vadd.f32 %v4365, %v4810
    %v5077 = vadd.f32 %v4366, %v4815
    %v5078 = vadd.f32 %v4367, %v4820
    %v5079 = vadd.f32 %v4368, %v4825
    %v5080 = vadd.f32 %v4369, %v4830
    %v5081 = vadd.f32 %v4370, %v4835
    %v5082 = vadd.f32 %v4371, %v4840
    %v5083 = vadd.f32 %v4372, %v4845
    %v5084 = vadd.f32 %v4373, %v4850
    %v5085 = vadd.f32 %v4374, %v4855
    %v5086 = vadd.f32 %v4375, %v4860
    %v5087 = vadd.f32 %v4376, %v4865
    %v5088 = vadd.f32 %v4377, %v4870
    %v5089 = vadd.f32 %v4378, %v4875
    %v5090 = vadd.f32 %v4379, %v4880
    %v5091 = vadd.f32 %v4380, %v4885
    %v5092 = vadd.f32 %v4381, %v4890
    %v5093 = vadd.f32 %v4382, %v4895
    %v5094 = vadd.f32 %v4383, %v4900
    %v5095 = vadd.f32 %v4384, %v4905
    %v5096 = vadd.f32 %v4385, %v4910
    %v5097 = vadd.f32 %v4386, %v4915
    %v5098 = vadd.f32 %v4387, %v4920
    %v5099 = vadd.f32 %v4388, %v4925
    %v5100 = vadd.f32 %v4389, %v4930
    %v5101 = vadd.f32 %v4390, %v4935
    %v5102 = vadd.f32 %v4391, %v4940
    %v5103 = vadd.f32 %v4392, %v4945
    %v5104 = vadd.f32 %v4393, %v4950
    %v5105 = vadd.f32 %v4394, %v4955
    %v5106 = vadd.f32 %v4395, %v4960
    %v5107 = vadd.f32 %v4396, %v4965
    %v5108 = vadd.f32 %v4397, %v4970
    %v5109 = vadd.f32 %v4398, %v4975
    %v5110 = vadd.f32 %v4399, %v4980
    %v5111 = vadd.f32 %v4400, %v4985
    %v5112 = vadd.f32 %v4401, %v4990
    %v5113 = vadd.f32 %v4402, %v4995
    %v5114 = vadd.f32 %v4403, %v5000
    %v5115 = vadd.f32 %v4404, %v5005
    %v5116 = vadd.f32 %v4405, %v5010
    %v5117 = vadd.f32 %v4406, %v5015
    %v5118 = vadd.f32 %v4407, %v5020
    %v5119 = vadd.f32 %v4408, %v5025
    %v5120 = vadd.f32 %v4409, %v5030
    %v5121 = vadd.f32 %v4410, %v5035
    %v5122 = vadd.f32 %v4411, %v5040
    %v5123 = vadd.f32 %v4412, %v5045
    %v5124 = vadd.f32 %v4413, %v5050
    %v5125 = vadd.f32 %v4414, %v5055
    %v5126 = vadd.f32 %v4415, %v5060
    %v5127 = vld [vmem:[%s4416 + $0x1] sm:$0xff]
    %v5128 = vld [vmem:[%s4416 + $0x9] sm:$0xff]
    %v5129 = vld [vmem:[%s4416 + $0x19] sm:$0xff]
    %v5130 = vld [vmem:[%s4416 + $0x21] sm:$0xff]
    %v5131 = vld [vmem:[%s4416 + $0x31] sm:$0xff]
    %v5132 = vld [vmem:[%s4416 + $0x39] sm:$0xff]
    %v5133 = vld [vmem:[%s4416 + $0x49] sm:$0xff]
    %v5134 = vld [vmem:[%s4416 + $0x51] sm:$0xff]
    %v5135 = vld [vmem:[%s4416 + $0x61] sm:$0xff]
    %v5136 = vld [vmem:[%s4416 + $0x69] sm:$0xff]
    %v5137 = vld [vmem:[%s4416 + $0x79] sm:$0xff]
    %v5138 = vld [vmem:[%s4416 + $0x81] sm:$0xff]
    %v5139 = vld [vmem:[%s4416 + $0x91] sm:$0xff]
    %v5140 = vld [vmem:[%s4416 + $0x99] sm:$0xff]
    %v5141 = vld [vmem:[%s4416 + $0xa9] sm:$0xff]
    %v5142 = vld [vmem:[%s4416 + $0xb1] sm:$0xff]
    %v5143 = vld [vmem:[%s4416 + $0xc1] sm:$0xff]
    %v5144 = vld [vmem:[%s4416 + $0xc9] sm:$0xff]
    %v5145 = vld [vmem:[%s4416 + $0xd9] sm:$0xff]
    %v5146 = vld [vmem:[%s4416 + $0xe1] sm:$0xff]
    %v5147 = vld [vmem:[%s4416 + $0xf1] sm:$0xff]
    %v5148 = vld [vmem:[%s4416 + $0xf9] sm:$0xff]
    %v5149 = vld [vmem:[%s4416 + $0x109] sm:$0xff]
    %v5150 = vld [vmem:[%s4416 + $0x111] sm:$0xff]
    %v5151 = vld [vmem:[%s4416 + $0x121] sm:$0xff]
    %v5152 = vld [vmem:[%s4416 + $0x129] sm:$0xff]
    %v5153 = vld [vmem:[%s4416 + $0x139] sm:$0xff]
    %v5154 = vld [vmem:[%s4416 + $0x141] sm:$0xff]
    %v5155 = vld [vmem:[%s4416 + $0x151] sm:$0xff]
    %v5156 = vld [vmem:[%s4416 + $0x159] sm:$0xff]
    %v5157 = vld [vmem:[%s4416 + $0x169] sm:$0xff]
    %v5158 = vld [vmem:[%s4416 + $0x171] sm:$0xff]
    %v5159 = vld [vmem:[%s4416 + $0x1b1] sm:$0xff]
    %v5160 = vld [vmem:[%s4416 + $0x1b9] sm:$0xff]
    %v5161 = vld [vmem:[%s4416 + $0x1c9] sm:$0xff]
    %v5162 = vld [vmem:[%s4416 + $0x1d1] sm:$0xff]
    %v5163 = vld [vmem:[%s4416 + $0x1e1] sm:$0xff]
    %v5164 = vld [vmem:[%s4416 + $0x1e9] sm:$0xff]
    %v5165 = vld [vmem:[%s4416 + $0x1f9] sm:$0xff]
    %v5166 = vld [vmem:[%s4416 + $0x201] sm:$0xff]
    %v5167 = vld [vmem:[%s4416 + $0x211] sm:$0xff]
    %v5168 = vld [vmem:[%s4416 + $0x219] sm:$0xff]
    %v5169 = vld [vmem:[%s4416 + $0x229] sm:$0xff]
    %v5170 = vld [vmem:[%s4416 + $0x231] sm:$0xff]
    %v5171 = vld [vmem:[%s4416 + $0x241] sm:$0xff]
    %v5172 = vld [vmem:[%s4416 + $0x249] sm:$0xff]
    %v5173 = vld [vmem:[%s4416 + $0x259] sm:$0xff]
    %v5174 = vld [vmem:[%s4416 + $0x261] sm:$0xff]
    %v5175 = vld [vmem:[%s4416 + $0x271] sm:$0xff]
    %v5176 = vld [vmem:[%s4416 + $0x279] sm:$0xff]
    %v5177 = vld [vmem:[%s4416 + $0x289] sm:$0xff]
    %v5178 = vld [vmem:[%s4416 + $0x291] sm:$0xff]
    %v5179 = vld [vmem:[%s4416 + $0x2a1] sm:$0xff]
    %v5180 = vld [vmem:[%s4416 + $0x2a9] sm:$0xff]
    %v5181 = vld [vmem:[%s4416 + $0x2b9] sm:$0xff]
    %v5182 = vld [vmem:[%s4416 + $0x2c1] sm:$0xff]
    %v5183 = vld [vmem:[%s4416 + $0x2d1] sm:$0xff]
    %v5184 = vld [vmem:[%s4416 + $0x2d9] sm:$0xff]
    %v5185 = vld [vmem:[%s4416 + $0x2e9] sm:$0xff]
    %v5186 = vld [vmem:[%s4416 + $0x2f1] sm:$0xff]
    %v5187 = vld [vmem:[%s4416 + $0x301] sm:$0xff]
    %v5188 = vld [vmem:[%s4416 + $0x309] sm:$0xff]
    %v5189 = vld [vmem:[%s4416 + $0x319] sm:$0xff]
    %v5190 = vld [vmem:[%s4416 + $0x321] sm:$0xff]
    %s5191 = scalar_lea.vmem %s1, 28
    %v5192 = vld [vmem:[%s5191] sm:$0xf]
    %v5194 = vsel %vm109, %v5127, 0
    %v5197 = vsel %vm109, %v5128, 0
    %v5200 = vsel %vm109, %v5129, 0
    %v5203 = vsel %vm109, %v5130, 0
    %v5206 = vsel %vm109, %v5131, 0
    %v5209 = vsel %vm109, %v5132, 0
    %v5212 = vsel %vm109, %v5133, 0
    %v5215 = vsel %vm109, %v5134, 0
    %v5218 = vsel %vm109, %v5135, 0
    %v5221 = vsel %vm109, %v5136, 0
    %v5224 = vsel %vm109, %v5137, 0
    %v5227 = vsel %vm109, %v5138, 0
    %v5230 = vsel %vm109, %v5139, 0
    %v5233 = vsel %vm109, %v5140, 0
    %v5236 = vsel %vm109, %v5141, 0
    %v5239 = vsel %vm109, %v5142, 0
    %v5242 = vsel %vm109, %v5143, 0
    %v5245 = vsel %vm109, %v5144, 0
    %v5248 = vsel %vm109, %v5145, 0
    %v5251 = vsel %vm109, %v5146, 0
    %v5254 = vsel %vm109, %v5147, 0
    %v5257 = vsel %vm109, %v5148, 0
    %v5260 = vsel %vm109, %v5149, 0
    %v5263 = vsel %vm109, %v5150, 0
    %v5266 = vsel %vm109, %v5151, 0
    %v5269 = vsel %vm109, %v5152, 0
    %v5272 = vsel %vm109, %v5153, 0
    %v5275 = vsel %vm109, %v5154, 0
    %v5278 = vsel %vm109, %v5155, 0
    %v5281 = vsel %vm109, %v5156, 0
    %v5284 = vsel %vm109, %v5157, 0
    %v5287 = vsel %vm109, %v5158, 0
    %v5290 = vsel %vm109, %v5159, 0
    %v5293 = vsel %vm109, %v5160, 0
    %v5296 = vsel %vm109, %v5161, 0
    %v5299 = vsel %vm109, %v5162, 0
    %v5302 = vsel %vm109, %v5163, 0
    %v5305 = vsel %vm109, %v5164, 0
    %v5308 = vsel %vm109, %v5165, 0
    %v5311 = vsel %vm109, %v5166, 0
    %v5314 = vsel %vm109, %v5167, 0
    %v5317 = vsel %vm109, %v5168, 0
    %v5320 = vsel %vm109, %v5169, 0
    %v5323 = vsel %vm109, %v5170, 0
    %v5326 = vsel %vm109, %v5171, 0
    %v5329 = vsel %vm109, %v5172, 0
    %v5332 = vsel %vm109, %v5173, 0
    %v5335 = vsel %vm109, %v5174, 0
    %v5338 = vsel %vm109, %v5175, 0
    %v5341 = vsel %vm109, %v5176, 0
    %v5344 = vsel %vm109, %v5177, 0
    %v5347 = vsel %vm109, %v5178, 0
    %v5350 = vsel %vm109, %v5179, 0
    %v5353 = vsel %vm109, %v5180, 0
    %v5356 = vsel %vm109, %v5181, 0
    %v5359 = vsel %vm109, %v5182, 0
    %v5362 = vsel %vm109, %v5183, 0
    %v5365 = vsel %vm109, %v5184, 0
    %v5368 = vsel %vm109, %v5185, 0
    %v5371 = vsel %vm109, %v5186, 0
    %v5374 = vsel %vm109, %v5187, 0
    %v5377 = vsel %vm109, %v5188, 0
    %v5380 = vsel %vm109, %v5189, 0
    %v5383 = vsel %vm109, %v5190, 0
    %v5386 = vsel %vm607, %v5192, 0
    %5388 = vmatprep.subr.mxu0 0.0
    %5389 = vmatpush1.msra.mxu0 0.0
    %5390 = vmatprep.subr.mxu0 0.0
    %5391 = vmatpush1.msra.mxu0 0.0
    %5392 = vmatprep.subr.mxu0 0.0
    %5393 = vmatpush1.msra.mxu0 0.0
    %5394 = vmatprep.subr.mxu0 0.0
    %5395 = vmatpush1.msra.mxu0 0.0
    %5396 = vmatprep.subr.mxu0 0.0
    %5397 = vmatpush1.msra.mxu0 0.0
    %5398 = vmatprep.subr.mxu0 0.0
    %5399 = vmatpush1.msra.mxu0 0.0
    %5400 = vmatprep.subr.mxu0 0.0
    %5401 = vmatpush1.msra.mxu0 0.0
    %5402 = vmatprep.subr.mxu0 0.0
    %5403 = vmatpush1.msra.mxu0 0.0
    %5404 = vmatprep.subr.mxu0 0.0
    %5405 = vmatpush1.msra.mxu0 0.0
    %5406 = vmatprep.subr.mxu0 0.0
    %5407 = vmatpush1.msra.mxu0 0.0
    %5408 = vmatprep.subr.mxu0 0.0
    %5409 = vmatpush1.msra.mxu0 0.0
    %5410 = vmatprep.subr.mxu0 0.0
    %5411 = vmatpush1.msra.mxu0 0.0
    %5412 = vmatprep.subr.mxu0 0.0
    %5413 = vmatpush1.msra.mxu0 0.0
    %5414 = vmatprep.subr.mxu0 0.0
    %5415 = vmatpush1.msra.mxu0 0.0
    %5416 = vmatprep.subr.mxu0 0.0
    %5417 = vmatpush1.msra.mxu0 0.0
    %5418 = vmatprep.subr.mxu0 0.0
    %5419 = vmatpush1.msra.mxu0 %v5386
    %5420 = vmatprep.subr.mxu0 0.0
    %5421 = vmatpush2.msra.mxu0 0.0
    %5422 = vmatprep.subr.mxu0 0.0
    %5423 = vmatpush2.msra.mxu0 0.0
    %5424 = vmatprep.subr.mxu0 0.0
    %5425 = vmatpush2.msra.mxu0 0.0
    %5426 = vmatprep.subr.mxu0 0.0
    %5427 = vmatpush2.msra.mxu0 0.0
    %5428 = vmatprep.subr.mxu0 0.0
    %5429 = vmatpush2.msra.mxu0 0.0
    %5430 = vmatprep.subr.mxu0 0.0
    %5431 = vmatpush2.msra.mxu0 0.0
    %5432 = vmatprep.subr.mxu0 0.0
    %5433 = vmatpush2.msra.mxu0 0.0
    %5434 = vmatprep.subr.mxu0 0.0
    %5435 = vmatpush2.msra.mxu0 0.0
    %5436 = vmatprep.subr.mxu0 0.0
    %5437 = vmatpush2.msra.mxu0 0.0
    %5438 = vmatprep.subr.mxu0 0.0
    %5439 = vmatpush2.msra.mxu0 0.0
    %5440 = vmatprep.subr.mxu0 0.0
    %5441 = vmatpush2.msra.mxu0 0.0
    %5442 = vmatprep.subr.mxu0 0.0
    %5443 = vmatpush2.msra.mxu0 0.0
    %5444 = vmatprep.subr.mxu0 0.0
    %5445 = vmatpush2.msra.mxu0 0.0
    %5446 = vmatprep.subr.mxu0 0.0
    %5447 = vmatpush2.msra.mxu0 0.0
    %5448 = vmatprep.subr.mxu0 0.0
    %5449 = vmatpush2.msra.mxu0 0.0
    %5450 = vmatprep.subr.mxu0 0.0
    %5451 = vmatpush2.msra.mxu0 0.0
    %5452 = vmatprep.mubr.f32.mxu0 0.0
    %5453 = vmatmul.mubr.f32.gmra.mxu0 %v5194
    %v5454 = vpop.f32.mrf.mxu0
    %v5455 = vadd.f32 0.0, %v5454
    %v5456 = vpop.f32.mrf.mxu0
    %5457 = vmatprep.mubr.f32.mxu0 0.0
    %5458 = vmatmul.mubr.f32.gmra.mxu0 %v5197
    %v5459 = vpop.f32.mrf.mxu0
    %v5460 = vadd.f32 0.0, %v5459
    %v5461 = vpop.f32.mrf.mxu0
    %5462 = vmatprep.mubr.f32.mxu0 0.0
    %5463 = vmatmul.mubr.f32.gmra.mxu0 %v5200
    %v5464 = vpop.f32.mrf.mxu0
    %v5465 = vadd.f32 0.0, %v5464
    %v5466 = vpop.f32.mrf.mxu0
    %5467 = vmatprep.mubr.f32.mxu0 0.0
    %5468 = vmatmul.mubr.f32.gmra.mxu0 %v5203
    %v5469 = vpop.f32.mrf.mxu0
    %v5470 = vadd.f32 0.0, %v5469
    %v5471 = vpop.f32.mrf.mxu0
    %5472 = vmatprep.mubr.f32.mxu0 0.0
    %5473 = vmatmul.mubr.f32.gmra.mxu0 %v5206
    %v5474 = vpop.f32.mrf.mxu0
    %v5475 = vadd.f32 0.0, %v5474
    %v5476 = vpop.f32.mrf.mxu0
    %5477 = vmatprep.mubr.f32.mxu0 0.0
    %5478 = vmatmul.mubr.f32.gmra.mxu0 %v5209
    %v5479 = vpop.f32.mrf.mxu0
    %v5480 = vadd.f32 0.0, %v5479
    %v5481 = vpop.f32.mrf.mxu0
    %5482 = vmatprep.mubr.f32.mxu0 0.0
    %5483 = vmatmul.mubr.f32.gmra.mxu0 %v5212
    %v5484 = vpop.f32.mrf.mxu0
    %v5485 = vadd.f32 0.0, %v5484
    %v5486 = vpop.f32.mrf.mxu0
    %5487 = vmatprep.mubr.f32.mxu0 0.0
    %5488 = vmatmul.mubr.f32.gmra.mxu0 %v5215
    %v5489 = vpop.f32.mrf.mxu0
    %v5490 = vadd.f32 0.0, %v5489
    %v5491 = vpop.f32.mrf.mxu0
    %5492 = vmatprep.mubr.f32.mxu0 0.0
    %5493 = vmatmul.mubr.f32.gmra.mxu0 %v5218
    %v5494 = vpop.f32.mrf.mxu0
    %v5495 = vadd.f32 0.0, %v5494
    %v5496 = vpop.f32.mrf.mxu0
    %5497 = vmatprep.mubr.f32.mxu0 0.0
    %5498 = vmatmul.mubr.f32.gmra.mxu0 %v5221
    %v5499 = vpop.f32.mrf.mxu0
    %v5500 = vadd.f32 0.0, %v5499
    %v5501 = vpop.f32.mrf.mxu0
    %5502 = vmatprep.mubr.f32.mxu0 0.0
    %5503 = vmatmul.mubr.f32.gmra.mxu0 %v5224
    %v5504 = vpop.f32.mrf.mxu0
    %v5505 = vadd.f32 0.0, %v5504
    %v5506 = vpop.f32.mrf.mxu0
    %5507 = vmatprep.mubr.f32.mxu0 0.0
    %5508 = vmatmul.mubr.f32.gmra.mxu0 %v5227
    %v5509 = vpop.f32.mrf.mxu0
    %v5510 = vadd.f32 0.0, %v5509
    %v5511 = vpop.f32.mrf.mxu0
    %5512 = vmatprep.mubr.f32.mxu0 0.0
    %5513 = vmatmul.mubr.f32.gmra.mxu0 %v5230
    %v5514 = vpop.f32.mrf.mxu0
    %v5515 = vadd.f32 0.0, %v5514
    %v5516 = vpop.f32.mrf.mxu0
    %5517 = vmatprep.mubr.f32.mxu0 0.0
    %5518 = vmatmul.mubr.f32.gmra.mxu0 %v5233
    %v5519 = vpop.f32.mrf.mxu0
    %v5520 = vadd.f32 0.0, %v5519
    %v5521 = vpop.f32.mrf.mxu0
    %5522 = vmatprep.mubr.f32.mxu0 0.0
    %5523 = vmatmul.mubr.f32.gmra.mxu0 %v5236
    %v5524 = vpop.f32.mrf.mxu0
    %v5525 = vadd.f32 0.0, %v5524
    %v5526 = vpop.f32.mrf.mxu0
    %5527 = vmatprep.mubr.f32.mxu0 0.0
    %5528 = vmatmul.mubr.f32.gmra.mxu0 %v5239
    %v5529 = vpop.f32.mrf.mxu0
    %v5530 = vadd.f32 0.0, %v5529
    %v5531 = vpop.f32.mrf.mxu0
    %5532 = vmatprep.mubr.f32.mxu0 0.0
    %5533 = vmatmul.mubr.f32.gmra.mxu0 %v5242
    %v5534 = vpop.f32.mrf.mxu0
    %v5535 = vadd.f32 0.0, %v5534
    %v5536 = vpop.f32.mrf.mxu0
    %5537 = vmatprep.mubr.f32.mxu0 0.0
    %5538 = vmatmul.mubr.f32.gmra.mxu0 %v5245
    %v5539 = vpop.f32.mrf.mxu0
    %v5540 = vadd.f32 0.0, %v5539
    %v5541 = vpop.f32.mrf.mxu0
    %5542 = vmatprep.mubr.f32.mxu0 0.0
    %5543 = vmatmul.mubr.f32.gmra.mxu0 %v5248
    %v5544 = vpop.f32.mrf.mxu0
    %v5545 = vadd.f32 0.0, %v5544
    %v5546 = vpop.f32.mrf.mxu0
    %5547 = vmatprep.mubr.f32.mxu0 0.0
    %5548 = vmatmul.mubr.f32.gmra.mxu0 %v5251
    %v5549 = vpop.f32.mrf.mxu0
    %v5550 = vadd.f32 0.0, %v5549
    %v5551 = vpop.f32.mrf.mxu0
    %5552 = vmatprep.mubr.f32.mxu0 0.0
    %5553 = vmatmul.mubr.f32.gmra.mxu0 %v5254
    %v5554 = vpop.f32.mrf.mxu0
    %v5555 = vadd.f32 0.0, %v5554
    %v5556 = vpop.f32.mrf.mxu0
    %5557 = vmatprep.mubr.f32.mxu0 0.0
    %5558 = vmatmul.mubr.f32.gmra.mxu0 %v5257
    %v5559 = vpop.f32.mrf.mxu0
    %v5560 = vadd.f32 0.0, %v5559
    %v5561 = vpop.f32.mrf.mxu0
    %5562 = vmatprep.mubr.f32.mxu0 0.0
    %5563 = vmatmul.mubr.f32.gmra.mxu0 %v5260
    %v5564 = vpop.f32.mrf.mxu0
    %v5565 = vadd.f32 0.0, %v5564
    %v5566 = vpop.f32.mrf.mxu0
    %5567 = vmatprep.mubr.f32.mxu0 0.0
    %5568 = vmatmul.mubr.f32.gmra.mxu0 %v5263
    %v5569 = vpop.f32.mrf.mxu0
    %v5570 = vadd.f32 0.0, %v5569
    %v5571 = vpop.f32.mrf.mxu0
    %5572 = vmatprep.mubr.f32.mxu0 0.0
    %5573 = vmatmul.mubr.f32.gmra.mxu0 %v5266
    %v5574 = vpop.f32.mrf.mxu0
    %v5575 = vadd.f32 0.0, %v5574
    %v5576 = vpop.f32.mrf.mxu0
    %5577 = vmatprep.mubr.f32.mxu0 0.0
    %5578 = vmatmul.mubr.f32.gmra.mxu0 %v5269
    %v5579 = vpop.f32.mrf.mxu0
    %v5580 = vadd.f32 0.0, %v5579
    %v5581 = vpop.f32.mrf.mxu0
    %5582 = vmatprep.mubr.f32.mxu0 0.0
    %5583 = vmatmul.mubr.f32.gmra.mxu0 %v5272
    %v5584 = vpop.f32.mrf.mxu0
    %v5585 = vadd.f32 0.0, %v5584
    %v5586 = vpop.f32.mrf.mxu0
    %5587 = vmatprep.mubr.f32.mxu0 0.0
    %5588 = vmatmul.mubr.f32.gmra.mxu0 %v5275
    %v5589 = vpop.f32.mrf.mxu0
    %v5590 = vadd.f32 0.0, %v5589
    %v5591 = vpop.f32.mrf.mxu0
    %5592 = vmatprep.mubr.f32.mxu0 0.0
    %5593 = vmatmul.mubr.f32.gmra.mxu0 %v5278
    %v5594 = vpop.f32.mrf.mxu0
    %v5595 = vadd.f32 0.0, %v5594
    %v5596 = vpop.f32.mrf.mxu0
    %5597 = vmatprep.mubr.f32.mxu0 0.0
    %5598 = vmatmul.mubr.f32.gmra.mxu0 %v5281
    %v5599 = vpop.f32.mrf.mxu0
    %v5600 = vadd.f32 0.0, %v5599
    %v5601 = vpop.f32.mrf.mxu0
    %5602 = vmatprep.mubr.f32.mxu0 0.0
    %5603 = vmatmul.mubr.f32.gmra.mxu0 %v5284
    %v5604 = vpop.f32.mrf.mxu0
    %v5605 = vadd.f32 0.0, %v5604
    %v5606 = vpop.f32.mrf.mxu0
    %5607 = vmatprep.mubr.f32.mxu0 0.0
    %5608 = vmatmul.mubr.f32.gmra.mxu0 %v5287
    %v5609 = vpop.f32.mrf.mxu0
    %v5610 = vadd.f32 0.0, %v5609
    %v5611 = vpop.f32.mrf.mxu0
    %5612 = vmatprep.mubr.f32.mxu0 0.0
    %5613 = vmatmul.mubr.f32.gmra.mxu0 %v5290
    %v5614 = vpop.f32.mrf.mxu0
    %v5615 = vadd.f32 0.0, %v5614
    %v5616 = vpop.f32.mrf.mxu0
    %5617 = vmatprep.mubr.f32.mxu0 0.0
    %5618 = vmatmul.mubr.f32.gmra.mxu0 %v5293
    %v5619 = vpop.f32.mrf.mxu0
    %v5620 = vadd.f32 0.0, %v5619
    %v5621 = vpop.f32.mrf.mxu0
    %5622 = vmatprep.mubr.f32.mxu0 0.0
    %5623 = vmatmul.mubr.f32.gmra.mxu0 %v5296
    %v5624 = vpop.f32.mrf.mxu0
    %v5625 = vadd.f32 0.0, %v5624
    %v5626 = vpop.f32.mrf.mxu0
    %5627 = vmatprep.mubr.f32.mxu0 0.0
    %5628 = vmatmul.mubr.f32.gmra.mxu0 %v5299
    %v5629 = vpop.f32.mrf.mxu0
    %v5630 = vadd.f32 0.0, %v5629
    %v5631 = vpop.f32.mrf.mxu0
    %5632 = vmatprep.mubr.f32.mxu0 0.0
    %5633 = vmatmul.mubr.f32.gmra.mxu0 %v5302
    %v5634 = vpop.f32.mrf.mxu0
    %v5635 = vadd.f32 0.0, %v5634
    %v5636 = vpop.f32.mrf.mxu0
    %5637 = vmatprep.mubr.f32.mxu0 0.0
    %5638 = vmatmul.mubr.f32.gmra.mxu0 %v5305
    %v5639 = vpop.f32.mrf.mxu0
    %v5640 = vadd.f32 0.0, %v5639
    %v5641 = vpop.f32.mrf.mxu0
    %5642 = vmatprep.mubr.f32.mxu0 0.0
    %5643 = vmatmul.mubr.f32.gmra.mxu0 %v5308
    %v5644 = vpop.f32.mrf.mxu0
    %v5645 = vadd.f32 0.0, %v5644
    %v5646 = vpop.f32.mrf.mxu0
    %5647 = vmatprep.mubr.f32.mxu0 0.0
    %5648 = vmatmul.mubr.f32.gmra.mxu0 %v5311
    %v5649 = vpop.f32.mrf.mxu0
    %v5650 = vadd.f32 0.0, %v5649
    %v5651 = vpop.f32.mrf.mxu0
    %5652 = vmatprep.mubr.f32.mxu0 0.0
    %5653 = vmatmul.mubr.f32.gmra.mxu0 %v5314
    %v5654 = vpop.f32.mrf.mxu0
    %v5655 = vadd.f32 0.0, %v5654
    %v5656 = vpop.f32.mrf.mxu0
    %5657 = vmatprep.mubr.f32.mxu0 0.0
    %5658 = vmatmul.mubr.f32.gmra.mxu0 %v5317
    %v5659 = vpop.f32.mrf.mxu0
    %v5660 = vadd.f32 0.0, %v5659
    %v5661 = vpop.f32.mrf.mxu0
    %5662 = vmatprep.mubr.f32.mxu0 0.0
    %5663 = vmatmul.mubr.f32.gmra.mxu0 %v5320
    %v5664 = vpop.f32.mrf.mxu0
    %v5665 = vadd.f32 0.0, %v5664
    %v5666 = vpop.f32.mrf.mxu0
    %5667 = vmatprep.mubr.f32.mxu0 0.0
    %5668 = vmatmul.mubr.f32.gmra.mxu0 %v5323
    %v5669 = vpop.f32.mrf.mxu0
    %v5670 = vadd.f32 0.0, %v5669
    %v5671 = vpop.f32.mrf.mxu0
    %5672 = vmatprep.mubr.f32.mxu0 0.0
    %5673 = vmatmul.mubr.f32.gmra.mxu0 %v5326
    %v5674 = vpop.f32.mrf.mxu0
    %v5675 = vadd.f32 0.0, %v5674
    %v5676 = vpop.f32.mrf.mxu0
    %5677 = vmatprep.mubr.f32.mxu0 0.0
    %5678 = vmatmul.mubr.f32.gmra.mxu0 %v5329
    %v5679 = vpop.f32.mrf.mxu0
    %v5680 = vadd.f32 0.0, %v5679
    %v5681 = vpop.f32.mrf.mxu0
    %5682 = vmatprep.mubr.f32.mxu0 0.0
    %5683 = vmatmul.mubr.f32.gmra.mxu0 %v5332
    %v5684 = vpop.f32.mrf.mxu0
    %v5685 = vadd.f32 0.0, %v5684
    %v5686 = vpop.f32.mrf.mxu0
    %5687 = vmatprep.mubr.f32.mxu0 0.0
    %5688 = vmatmul.mubr.f32.gmra.mxu0 %v5335
    %v5689 = vpop.f32.mrf.mxu0
    %v5690 = vadd.f32 0.0, %v5689
    %v5691 = vpop.f32.mrf.mxu0
    %5692 = vmatprep.mubr.f32.mxu0 0.0
    %5693 = vmatmul.mubr.f32.gmra.mxu0 %v5338
    %v5694 = vpop.f32.mrf.mxu0
    %v5695 = vadd.f32 0.0, %v5694
    %v5696 = vpop.f32.mrf.mxu0
    %5697 = vmatprep.mubr.f32.mxu0 0.0
    %5698 = vmatmul.mubr.f32.gmra.mxu0 %v5341
    %v5699 = vpop.f32.mrf.mxu0
    %v5700 = vadd.f32 0.0, %v5699
    %v5701 = vpop.f32.mrf.mxu0
    %5702 = vmatprep.mubr.f32.mxu0 0.0
    %5703 = vmatmul.mubr.f32.gmra.mxu0 %v5344
    %v5704 = vpop.f32.mrf.mxu0
    %v5705 = vadd.f32 0.0, %v5704
    %v5706 = vpop.f32.mrf.mxu0
    %5707 = vmatprep.mubr.f32.mxu0 0.0
    %5708 = vmatmul.mubr.f32.gmra.mxu0 %v5347
    %v5709 = vpop.f32.mrf.mxu0
    %v5710 = vadd.f32 0.0, %v5709
    %v5711 = vpop.f32.mrf.mxu0
    %5712 = vmatprep.mubr.f32.mxu0 0.0
    %5713 = vmatmul.mubr.f32.gmra.mxu0 %v5350
    %v5714 = vpop.f32.mrf.mxu0
    %v5715 = vadd.f32 0.0, %v5714
    %v5716 = vpop.f32.mrf.mxu0
    %5717 = vmatprep.mubr.f32.mxu0 0.0
    %5718 = vmatmul.mubr.f32.gmra.mxu0 %v5353
    %v5719 = vpop.f32.mrf.mxu0
    %v5720 = vadd.f32 0.0, %v5719
    %v5721 = vpop.f32.mrf.mxu0
    %5722 = vmatprep.mubr.f32.mxu0 0.0
    %5723 = vmatmul.mubr.f32.gmra.mxu0 %v5356
    %v5724 = vpop.f32.mrf.mxu0
    %v5725 = vadd.f32 0.0, %v5724
    %v5726 = vpop.f32.mrf.mxu0
    %5727 = vmatprep.mubr.f32.mxu0 0.0
    %5728 = vmatmul.mubr.f32.gmra.mxu0 %v5359
    %v5729 = vpop.f32.mrf.mxu0
    %v5730 = vadd.f32 0.0, %v5729
    %v5731 = vpop.f32.mrf.mxu0
    %5732 = vmatprep.mubr.f32.mxu0 0.0
    %5733 = vmatmul.mubr.f32.gmra.mxu0 %v5362
    %v5734 = vpop.f32.mrf.mxu0
    %v5735 = vadd.f32 0.0, %v5734
    %v5736 = vpop.f32.mrf.mxu0
    %5737 = vmatprep.mubr.f32.mxu0 0.0
    %5738 = vmatmul.mubr.f32.gmra.mxu0 %v5365
    %v5739 = vpop.f32.mrf.mxu0
    %v5740 = vadd.f32 0.0, %v5739
    %v5741 = vpop.f32.mrf.mxu0
    %5742 = vmatprep.mubr.f32.mxu0 0.0
    %5743 = vmatmul.mubr.f32.gmra.mxu0 %v5368
    %v5744 = vpop.f32.mrf.mxu0
    %v5745 = vadd.f32 0.0, %v5744
    %v5746 = vpop.f32.mrf.mxu0
    %5747 = vmatprep.mubr.f32.mxu0 0.0
    %5748 = vmatmul.mubr.f32.gmra.mxu0 %v5371
    %v5749 = vpop.f32.mrf.mxu0
    %v5750 = vadd.f32 0.0, %v5749
    %v5751 = vpop.f32.mrf.mxu0
    %5752 = vmatprep.mubr.f32.mxu0 0.0
    %5753 = vmatmul.mubr.f32.gmra.mxu0 %v5374
    %v5754 = vpop.f32.mrf.mxu0
    %v5755 = vadd.f32 0.0, %v5754
    %v5756 = vpop.f32.mrf.mxu0
    %5757 = vmatprep.mubr.f32.mxu0 0.0
    %5758 = vmatmul.mubr.f32.gmra.mxu0 %v5377
    %v5759 = vpop.f32.mrf.mxu0
    %v5760 = vadd.f32 0.0, %v5759
    %v5761 = vpop.f32.mrf.mxu0
    %5762 = vmatprep.mubr.f32.mxu0 0.0
    %5763 = vmatmul.mubr.f32.gmra.mxu0 %v5380
    %v5764 = vpop.f32.mrf.mxu0
    %v5765 = vadd.f32 0.0, %v5764
    %v5766 = vpop.f32.mrf.mxu0
    %5767 = vmatprep.mubr.f32.mxu0 0.0
    %5768 = vmatmul.mubr.f32.gmra.mxu0 %v5383
    %v5769 = vpop.f32.mrf.mxu0
    %v5770 = vadd.f32 0.0, %v5769
    %v5771 = vpop.f32.mrf.mxu0
    %5772 = vdwg.mxu0
    %v5773 = vadd.f32 %v5063, %v5455
    %v5774 = vadd.f32 %v5064, %v5460
    %v5775 = vadd.f32 %v5065, %v5465
    %v5776 = vadd.f32 %v5066, %v5470
    %v5777 = vadd.f32 %v5067, %v5475
    %v5778 = vadd.f32 %v5068, %v5480
    %v5779 = vadd.f32 %v5069, %v5485
    %v5780 = vadd.f32 %v5070, %v5490
    %v5781 = vadd.f32 %v5071, %v5495
    %v5782 = vadd.f32 %v5072, %v5500
    %v5783 = vadd.f32 %v5073, %v5505
    %v5784 = vadd.f32 %v5074, %v5510
    %v5785 = vadd.f32 %v5075, %v5515
    %v5786 = vadd.f32 %v5076, %v5520
    %v5787 = vadd.f32 %v5077, %v5525
    %v5788 = vadd.f32 %v5078, %v5530
    %v5789 = vadd.f32 %v5079, %v5535
    %v5790 = vadd.f32 %v5080, %v5540
    %v5791 = vadd.f32 %v5081, %v5545
    %v5792 = vadd.f32 %v5082, %v5550
    %v5793 = vadd.f32 %v5083, %v5555
    %v5794 = vadd.f32 %v5084, %v5560
    %v5795 = vadd.f32 %v5085, %v5565
    %v5796 = vadd.f32 %v5086, %v5570
    %v5797 = vadd.f32 %v5087, %v5575
    %v5798 = vadd.f32 %v5088, %v5580
    %v5799 = vadd.f32 %v5089, %v5585
    %v5800 = vadd.f32 %v5090, %v5590
    %v5801 = vadd.f32 %v5091, %v5595
    %v5802 = vadd.f32 %v5092, %v5600
    %v5803 = vadd.f32 %v5093, %v5605
    %v5804 = vadd.f32 %v5094, %v5610
    %v5805 = vadd.f32 %v5095, %v5615
    %v5806 = vadd.f32 %v5096, %v5620
    %v5807 = vadd.f32 %v5097, %v5625
    %v5808 = vadd.f32 %v5098, %v5630
    %v5809 = vadd.f32 %v5099, %v5635
    %v5810 = vadd.f32 %v5100, %v5640
    %v5811 = vadd.f32 %v5101, %v5645
    %v5812 = vadd.f32 %v5102, %v5650
    %v5813 = vadd.f32 %v5103, %v5655
    %v5814 = vadd.f32 %v5104, %v5660
    %v5815 = vadd.f32 %v5105, %v5665
    %v5816 = vadd.f32 %v5106, %v5670
    %v5817 = vadd.f32 %v5107, %v5675
    %v5818 = vadd.f32 %v5108, %v5680
    %v5819 = vadd.f32 %v5109, %v5685
    %v5820 = vadd.f32 %v5110, %v5690
    %v5821 = vadd.f32 %v5111, %v5695
    %v5822 = vadd.f32 %v5112, %v5700
    %v5823 = vadd.f32 %v5113, %v5705
    %v5824 = vadd.f32 %v5114, %v5710
    %v5825 = vadd.f32 %v5115, %v5715
    %v5826 = vadd.f32 %v5116, %v5720
    %v5827 = vadd.f32 %v5117, %v5725
    %v5828 = vadd.f32 %v5118, %v5730
    %v5829 = vadd.f32 %v5119, %v5735
    %v5830 = vadd.f32 %v5120, %v5740
    %v5831 = vadd.f32 %v5121, %v5745
    %v5832 = vadd.f32 %v5122, %v5750
    %v5833 = vadd.f32 %v5123, %v5755
    %v5834 = vadd.f32 %v5124, %v5760
    %v5835 = vadd.f32 %v5125, %v5765
    %v5836 = vadd.f32 %v5126, %v5770
    %v5837 = vld [vmem:[%s4416 + $0x2] sm:$0xff]
    %v5838 = vld [vmem:[%s4416 + $0xa] sm:$0xff]
    %v5839 = vld [vmem:[%s4416 + $0x1a] sm:$0xff]
    %v5840 = vld [vmem:[%s4416 + $0x22] sm:$0xff]
    %v5841 = vld [vmem:[%s4416 + $0x32] sm:$0xff]
    %v5842 = vld [vmem:[%s4416 + $0x3a] sm:$0xff]
    %v5843 = vld [vmem:[%s4416 + $0x4a] sm:$0xff]
    %v5844 = vld [vmem:[%s4416 + $0x52] sm:$0xff]
    %v5845 = vld [vmem:[%s4416 + $0x62] sm:$0xff]
    %v5846 = vld [vmem:[%s4416 + $0x6a] sm:$0xff]
    %v5847 = vld [vmem:[%s4416 + $0x7a] sm:$0xff]
    %v5848 = vld [vmem:[%s4416 + $0x82] sm:$0xff]
    %v5849 = vld [vmem:[%s4416 + $0x92] sm:$0xff]
    %v5850 = vld [vmem:[%s4416 + $0x9a] sm:$0xff]
    %v5851 = vld [vmem:[%s4416 + $0xaa] sm:$0xff]
    %v5852 = vld [vmem:[%s4416 + $0xb2] sm:$0xff]
    %v5853 = vld [vmem:[%s4416 + $0xc2] sm:$0xff]
    %v5854 = vld [vmem:[%s4416 + $0xca] sm:$0xff]
    %v5855 = vld [vmem:[%s4416 + $0xda] sm:$0xff]
    %v5856 = vld [vmem:[%s4416 + $0xe2] sm:$0xff]
    %v5857 = vld [vmem:[%s4416 + $0xf2] sm:$0xff]
    %v5858 = vld [vmem:[%s4416 + $0xfa] sm:$0xff]
    %v5859 = vld [vmem:[%s4416 + $0x10a] sm:$0xff]
    %v5860 = vld [vmem:[%s4416 + $0x112] sm:$0xff]
    %v5861 = vld [vmem:[%s4416 + $0x122] sm:$0xff]
    %v5862 = vld [vmem:[%s4416 + $0x12a] sm:$0xff]
    %v5863 = vld [vmem:[%s4416 + $0x13a] sm:$0xff]
    %v5864 = vld [vmem:[%s4416 + $0x142] sm:$0xff]
    %v5865 = vld [vmem:[%s4416 + $0x152] sm:$0xff]
    %v5866 = vld [vmem:[%s4416 + $0x15a] sm:$0xff]
    %v5867 = vld [vmem:[%s4416 + $0x16a] sm:$0xff]
    %v5868 = vld [vmem:[%s4416 + $0x172] sm:$0xff]
    %v5869 = vld [vmem:[%s4416 + $0x1b2] sm:$0xff]
    %v5870 = vld [vmem:[%s4416 + $0x1ba] sm:$0xff]
    %v5871 = vld [vmem:[%s4416 + $0x1ca] sm:$0xff]
    %v5872 = vld [vmem:[%s4416 + $0x1d2] sm:$0xff]
    %v5873 = vld [vmem:[%s4416 + $0x1e2] sm:$0xff]
    %v5874 = vld [vmem:[%s4416 + $0x1ea] sm:$0xff]
    %v5875 = vld [vmem:[%s4416 + $0x1fa] sm:$0xff]
    %v5876 = vld [vmem:[%s4416 + $0x202] sm:$0xff]
    %v5877 = vld [vmem:[%s4416 + $0x212] sm:$0xff]
    %v5878 = vld [vmem:[%s4416 + $0x21a] sm:$0xff]
    %v5879 = vld [vmem:[%s4416 + $0x22a] sm:$0xff]
    %v5880 = vld [vmem:[%s4416 + $0x232] sm:$0xff]
    %v5881 = vld [vmem:[%s4416 + $0x242] sm:$0xff]
    %v5882 = vld [vmem:[%s4416 + $0x24a] sm:$0xff]
    %v5883 = vld [vmem:[%s4416 + $0x25a] sm:$0xff]
    %v5884 = vld [vmem:[%s4416 + $0x262] sm:$0xff]
    %v5885 = vld [vmem:[%s4416 + $0x272] sm:$0xff]
    %v5886 = vld [vmem:[%s4416 + $0x27a] sm:$0xff]
    %v5887 = vld [vmem:[%s4416 + $0x28a] sm:$0xff]
    %v5888 = vld [vmem:[%s4416 + $0x292] sm:$0xff]
    %v5889 = vld [vmem:[%s4416 + $0x2a2] sm:$0xff]
    %v5890 = vld [vmem:[%s4416 + $0x2aa] sm:$0xff]
    %v5891 = vld [vmem:[%s4416 + $0x2ba] sm:$0xff]
    %v5892 = vld [vmem:[%s4416 + $0x2c2] sm:$0xff]
    %v5893 = vld [vmem:[%s4416 + $0x2d2] sm:$0xff]
    %v5894 = vld [vmem:[%s4416 + $0x2da] sm:$0xff]
    %v5895 = vld [vmem:[%s4416 + $0x2ea] sm:$0xff]
    %v5896 = vld [vmem:[%s4416 + $0x2f2] sm:$0xff]
    %v5897 = vld [vmem:[%s4416 + $0x302] sm:$0xff]
    %v5898 = vld [vmem:[%s4416 + $0x30a] sm:$0xff]
    %v5899 = vld [vmem:[%s4416 + $0x31a] sm:$0xff]
    %v5900 = vld [vmem:[%s4416 + $0x322] sm:$0xff]
    %s5901 = scalar_lea.vmem %s1, 32
    %v5902 = vld [vmem:[%s5901] sm:$0xf]
    %v5904 = vsel %vm109, %v5837, 0
    %v5907 = vsel %vm109, %v5838, 0
    %v5910 = vsel %vm109, %v5839, 0
    %v5913 = vsel %vm109, %v5840, 0
    %v5916 = vsel %vm109, %v5841, 0
    %v5919 = vsel %vm109, %v5842, 0
    %v5922 = vsel %vm109, %v5843, 0
    %v5925 = vsel %vm109, %v5844, 0
    %v5928 = vsel %vm109, %v5845, 0
    %v5931 = vsel %vm109, %v5846, 0
    %v5934 = vsel %vm109, %v5847, 0
    %v5937 = vsel %vm109, %v5848, 0
    %v5940 = vsel %vm109, %v5849, 0
    %v5943 = vsel %vm109, %v5850, 0
    %v5946 = vsel %vm109, %v5851, 0
    %v5949 = vsel %vm109, %v5852, 0
    %v5952 = vsel %vm109, %v5853, 0
    %v5955 = vsel %vm109, %v5854, 0
    %v5958 = vsel %vm109, %v5855, 0
    %v5961 = vsel %vm109, %v5856, 0
    %v5964 = vsel %vm109, %v5857, 0
    %v5967 = vsel %vm109, %v5858, 0
    %v5970 = vsel %vm109, %v5859, 0
    %v5973 = vsel %vm109, %v5860, 0
    %v5976 = vsel %vm109, %v5861, 0
    %v5979 = vsel %vm109, %v5862, 0
    %v5982 = vsel %vm109, %v5863, 0
    %v5985 = vsel %vm109, %v5864, 0
    %v5988 = vsel %vm109, %v5865, 0
    %v5991 = vsel %vm109, %v5866, 0
    %v5994 = vsel %vm109, %v5867, 0
    %v5997 = vsel %vm109, %v5868, 0
    %v6000 = vsel %vm109, %v5869, 0
    %v6003 = vsel %vm109, %v5870, 0
    %v6006 = vsel %vm109, %v5871, 0
    %v6009 = vsel %vm109, %v5872, 0
    %v6012 = vsel %vm109, %v5873, 0
    %v6015 = vsel %vm109, %v5874, 0
    %v6018 = vsel %vm109, %v5875, 0
    %v6021 = vsel %vm109, %v5876, 0
    %v6024 = vsel %vm109, %v5877, 0
    %v6027 = vsel %vm109, %v5878, 0
    %v6030 = vsel %vm109, %v5879, 0
    %v6033 = vsel %vm109, %v5880, 0
    %v6036 = vsel %vm109, %v5881, 0
    %v6039 = vsel %vm109, %v5882, 0
    %v6042 = vsel %vm109, %v5883, 0
    %v6045 = vsel %vm109, %v5884, 0
    %v6048 = vsel %vm109, %v5885, 0
    %v6051 = vsel %vm109, %v5886, 0
    %v6054 = vsel %vm109, %v5887, 0
    %v6057 = vsel %vm109, %v5888, 0
    %v6060 = vsel %vm109, %v5889, 0
    %v6063 = vsel %vm109, %v5890, 0
    %v6066 = vsel %vm109, %v5891, 0
    %v6069 = vsel %vm109, %v5892, 0
    %v6072 = vsel %vm109, %v5893, 0
    %v6075 = vsel %vm109, %v5894, 0
    %v6078 = vsel %vm109, %v5895, 0
    %v6081 = vsel %vm109, %v5896, 0
    %v6084 = vsel %vm109, %v5897, 0
    %v6087 = vsel %vm109, %v5898, 0
    %v6090 = vsel %vm109, %v5899, 0
    %v6093 = vsel %vm109, %v5900, 0
    %v6096 = vsel %vm607, %v5902, 0
    %6098 = vmatprep.subr.mxu0 0.0
    %6099 = vmatpush1.msra.mxu0 0.0
    %6100 = vmatprep.subr.mxu0 0.0
    %6101 = vmatpush1.msra.mxu0 0.0
    %6102 = vmatprep.subr.mxu0 0.0
    %6103 = vmatpush1.msra.mxu0 0.0
    %6104 = vmatprep.subr.mxu0 0.0
    %6105 = vmatpush1.msra.mxu0 0.0
    %6106 = vmatprep.subr.mxu0 0.0
    %6107 = vmatpush1.msra.mxu0 0.0
    %6108 = vmatprep.subr.mxu0 0.0
    %6109 = vmatpush1.msra.mxu0 0.0
    %6110 = vmatprep.subr.mxu0 0.0
    %6111 = vmatpush1.msra.mxu0 0.0
    %6112 = vmatprep.subr.mxu0 0.0
    %6113 = vmatpush1.msra.mxu0 0.0
    %6114 = vmatprep.subr.mxu0 0.0
    %6115 = vmatpush1.msra.mxu0 0.0
    %6116 = vmatprep.subr.mxu0 0.0
    %6117 = vmatpush1.msra.mxu0 0.0
    %6118 = vmatprep.subr.mxu0 0.0
    %6119 = vmatpush1.msra.mxu0 0.0
    %6120 = vmatprep.subr.mxu0 0.0
    %6121 = vmatpush1.msra.mxu0 0.0
    %6122 = vmatprep.subr.mxu0 0.0
    %6123 = vmatpush1.msra.mxu0 0.0
    %6124 = vmatprep.subr.mxu0 0.0
    %6125 = vmatpush1.msra.mxu0 0.0
    %6126 = vmatprep.subr.mxu0 0.0
    %6127 = vmatpush1.msra.mxu0 0.0
    %6128 = vmatprep.subr.mxu0 0.0
    %6129 = vmatpush1.msra.mxu0 %v6096
    %6130 = vmatprep.subr.mxu0 0.0
    %6131 = vmatpush2.msra.mxu0 0.0
    %6132 = vmatprep.subr.mxu0 0.0
    %6133 = vmatpush2.msra.mxu0 0.0
    %6134 = vmatprep.subr.mxu0 0.0
    %6135 = vmatpush2.msra.mxu0 0.0
    %6136 = vmatprep.subr.mxu0 0.0
    %6137 = vmatpush2.msra.mxu0 0.0
    %6138 = vmatprep.subr.mxu0 0.0
    %6139 = vmatpush2.msra.mxu0 0.0
    %6140 = vmatprep.subr.mxu0 0.0
    %6141 = vmatpush2.msra.mxu0 0.0
    %6142 = vmatprep.subr.mxu0 0.0
    %6143 = vmatpush2.msra.mxu0 0.0
    %6144 = vmatprep.subr.mxu0 0.0
    %6145 = vmatpush2.msra.mxu0 0.0
    %6146 = vmatprep.subr.mxu0 0.0
    %6147 = vmatpush2.msra.mxu0 0.0
    %6148 = vmatprep.subr.mxu0 0.0
    %6149 = vmatpush2.msra.mxu0 0.0
    %6150 = vmatprep.subr.mxu0 0.0
    %6151 = vmatpush2.msra.mxu0 0.0
    %6152 = vmatprep.subr.mxu0 0.0
    %6153 = vmatpush2.msra.mxu0 0.0
    %6154 = vmatprep.subr.mxu0 0.0
    %6155 = vmatpush2.msra.mxu0 0.0
    %6156 = vmatprep.subr.mxu0 0.0
    %6157 = vmatpush2.msra.mxu0 0.0
    %6158 = vmatprep.subr.mxu0 0.0
    %6159 = vmatpush2.msra.mxu0 0.0
    %6160 = vmatprep.subr.mxu0 0.0
    %6161 = vmatpush2.msra.mxu0 0.0
    %6162 = vmatprep.mubr.f32.mxu0 0.0
    %6163 = vmatmul.mubr.f32.gmra.mxu0 %v5904
    %v6164 = vpop.f32.mrf.mxu0
    %v6165 = vadd.f32 0.0, %v6164
    %v6166 = vpop.f32.mrf.mxu0
    %6167 = vmatprep.mubr.f32.mxu0 0.0
    %6168 = vmatmul.mubr.f32.gmra.mxu0 %v5907
    %v6169 = vpop.f32.mrf.mxu0
    %v6170 = vadd.f32 0.0, %v6169
    %v6171 = vpop.f32.mrf.mxu0
    %6172 = vmatprep.mubr.f32.mxu0 0.0
    %6173 = vmatmul.mubr.f32.gmra.mxu0 %v5910
    %v6174 = vpop.f32.mrf.mxu0
    %v6175 = vadd.f32 0.0, %v6174
    %v6176 = vpop.f32.mrf.mxu0
    %6177 = vmatprep.mubr.f32.mxu0 0.0
    %6178 = vmatmul.mubr.f32.gmra.mxu0 %v5913
    %v6179 = vpop.f32.mrf.mxu0
    %v6180 = vadd.f32 0.0, %v6179
    %v6181 = vpop.f32.mrf.mxu0
    %6182 = vmatprep.mubr.f32.mxu0 0.0
    %6183 = vmatmul.mubr.f32.gmra.mxu0 %v5916
    %v6184 = vpop.f32.mrf.mxu0
    %v6185 = vadd.f32 0.0, %v6184
    %v6186 = vpop.f32.mrf.mxu0
    %6187 = vmatprep.mubr.f32.mxu0 0.0
    %6188 = vmatmul.mubr.f32.gmra.mxu0 %v5919
    %v6189 = vpop.f32.mrf.mxu0
    %v6190 = vadd.f32 0.0, %v6189
    %v6191 = vpop.f32.mrf.mxu0
    %6192 = vmatprep.mubr.f32.mxu0 0.0
    %6193 = vmatmul.mubr.f32.gmra.mxu0 %v5922
    %v6194 = vpop.f32.mrf.mxu0
    %v6195 = vadd.f32 0.0, %v6194
    %v6196 = vpop.f32.mrf.mxu0
    %6197 = vmatprep.mubr.f32.mxu0 0.0
    %6198 = vmatmul.mubr.f32.gmra.mxu0 %v5925
    %v6199 = vpop.f32.mrf.mxu0
    %v6200 = vadd.f32 0.0, %v6199
    %v6201 = vpop.f32.mrf.mxu0
    %6202 = vmatprep.mubr.f32.mxu0 0.0
    %6203 = vmatmul.mubr.f32.gmra.mxu0 %v5928
    %v6204 = vpop.f32.mrf.mxu0
    %v6205 = vadd.f32 0.0, %v6204
    %v6206 = vpop.f32.mrf.mxu0
    %6207 = vmatprep.mubr.f32.mxu0 0.0
    %6208 = vmatmul.mubr.f32.gmra.mxu0 %v5931
    %v6209 = vpop.f32.mrf.mxu0
    %v6210 = vadd.f32 0.0, %v6209
    %v6211 = vpop.f32.mrf.mxu0
    %6212 = vmatprep.mubr.f32.mxu0 0.0
    %6213 = vmatmul.mubr.f32.gmra.mxu0 %v5934
    %v6214 = vpop.f32.mrf.mxu0
    %v6215 = vadd.f32 0.0, %v6214
    %v6216 = vpop.f32.mrf.mxu0
    %6217 = vmatprep.mubr.f32.mxu0 0.0
    %6218 = vmatmul.mubr.f32.gmra.mxu0 %v5937
    %v6219 = vpop.f32.mrf.mxu0
    %v6220 = vadd.f32 0.0, %v6219
    %v6221 = vpop.f32.mrf.mxu0
    %6222 = vmatprep.mubr.f32.mxu0 0.0
    %6223 = vmatmul.mubr.f32.gmra.mxu0 %v5940
    %v6224 = vpop.f32.mrf.mxu0
    %v6225 = vadd.f32 0.0, %v6224
    %v6226 = vpop.f32.mrf.mxu0
    %6227 = vmatprep.mubr.f32.mxu0 0.0
    %6228 = vmatmul.mubr.f32.gmra.mxu0 %v5943
    %v6229 = vpop.f32.mrf.mxu0
    %v6230 = vadd.f32 0.0, %v6229
    %v6231 = vpop.f32.mrf.mxu0
    %6232 = vmatprep.mubr.f32.mxu0 0.0
    %6233 = vmatmul.mubr.f32.gmra.mxu0 %v5946
    %v6234 = vpop.f32.mrf.mxu0
    %v6235 = vadd.f32 0.0, %v6234
    %v6236 = vpop.f32.mrf.mxu0
    %6237 = vmatprep.mubr.f32.mxu0 0.0
    %6238 = vmatmul.mubr.f32.gmra.mxu0 %v5949
    %v6239 = vpop.f32.mrf.mxu0
    %v6240 = vadd.f32 0.0, %v6239
    %v6241 = vpop.f32.mrf.mxu0
    %6242 = vmatprep.mubr.f32.mxu0 0.0
    %6243 = vmatmul.mubr.f32.gmra.mxu0 %v5952
    %v6244 = vpop.f32.mrf.mxu0
    %v6245 = vadd.f32 0.0, %v6244
    %v6246 = vpop.f32.mrf.mxu0
    %6247 = vmatprep.mubr.f32.mxu0 0.0
    %6248 = vmatmul.mubr.f32.gmra.mxu0 %v5955
    %v6249 = vpop.f32.mrf.mxu0
    %v6250 = vadd.f32 0.0, %v6249
    %v6251 = vpop.f32.mrf.mxu0
    %6252 = vmatprep.mubr.f32.mxu0 0.0
    %6253 = vmatmul.mubr.f32.gmra.mxu0 %v5958
    %v6254 = vpop.f32.mrf.mxu0
    %v6255 = vadd.f32 0.0, %v6254
    %v6256 = vpop.f32.mrf.mxu0
    %6257 = vmatprep.mubr.f32.mxu0 0.0
    %6258 = vmatmul.mubr.f32.gmra.mxu0 %v5961
    %v6259 = vpop.f32.mrf.mxu0
    %v6260 = vadd.f32 0.0, %v6259
    %v6261 = vpop.f32.mrf.mxu0
    %6262 = vmatprep.mubr.f32.mxu0 0.0
    %6263 = vmatmul.mubr.f32.gmra.mxu0 %v5964
    %v6264 = vpop.f32.mrf.mxu0
    %v6265 = vadd.f32 0.0, %v6264
    %v6266 = vpop.f32.mrf.mxu0
    %6267 = vmatprep.mubr.f32.mxu0 0.0
    %6268 = vmatmul.mubr.f32.gmra.mxu0 %v5967
    %v6269 = vpop.f32.mrf.mxu0
    %v6270 = vadd.f32 0.0, %v6269
    %v6271 = vpop.f32.mrf.mxu0
    %6272 = vmatprep.mubr.f32.mxu0 0.0
    %6273 = vmatmul.mubr.f32.gmra.mxu0 %v5970
    %v6274 = vpop.f32.mrf.mxu0
    %v6275 = vadd.f32 0.0, %v6274
    %v6276 = vpop.f32.mrf.mxu0
    %6277 = vmatprep.mubr.f32.mxu0 0.0
    %6278 = vmatmul.mubr.f32.gmra.mxu0 %v5973
    %v6279 = vpop.f32.mrf.mxu0
    %v6280 = vadd.f32 0.0, %v6279
    %v6281 = vpop.f32.mrf.mxu0
    %6282 = vmatprep.mubr.f32.mxu0 0.0
    %6283 = vmatmul.mubr.f32.gmra.mxu0 %v5976
    %v6284 = vpop.f32.mrf.mxu0
    %v6285 = vadd.f32 0.0, %v6284
    %v6286 = vpop.f32.mrf.mxu0
    %6287 = vmatprep.mubr.f32.mxu0 0.0
    %6288 = vmatmul.mubr.f32.gmra.mxu0 %v5979
    %v6289 = vpop.f32.mrf.mxu0
    %v6290 = vadd.f32 0.0, %v6289
    %v6291 = vpop.f32.mrf.mxu0
    %6292 = vmatprep.mubr.f32.mxu0 0.0
    %6293 = vmatmul.mubr.f32.gmra.mxu0 %v5982
    %v6294 = vpop.f32.mrf.mxu0
    %v6295 = vadd.f32 0.0, %v6294
    %v6296 = vpop.f32.mrf.mxu0
    %6297 = vmatprep.mubr.f32.mxu0 0.0
    %6298 = vmatmul.mubr.f32.gmra.mxu0 %v5985
    %v6299 = vpop.f32.mrf.mxu0
    %v6300 = vadd.f32 0.0, %v6299
    %v6301 = vpop.f32.mrf.mxu0
    %6302 = vmatprep.mubr.f32.mxu0 0.0
    %6303 = vmatmul.mubr.f32.gmra.mxu0 %v5988
    %v6304 = vpop.f32.mrf.mxu0
    %v6305 = vadd.f32 0.0, %v6304
    %v6306 = vpop.f32.mrf.mxu0
    %6307 = vmatprep.mubr.f32.mxu0 0.0
    %6308 = vmatmul.mubr.f32.gmra.mxu0 %v5991
    %v6309 = vpop.f32.mrf.mxu0
    %v6310 = vadd.f32 0.0, %v6309
    %v6311 = vpop.f32.mrf.mxu0
    %6312 = vmatprep.mubr.f32.mxu0 0.0
    %6313 = vmatmul.mubr.f32.gmra.mxu0 %v5994
    %v6314 = vpop.f32.mrf.mxu0
    %v6315 = vadd.f32 0.0, %v6314
    %v6316 = vpop.f32.mrf.mxu0
    %6317 = vmatprep.mubr.f32.mxu0 0.0
    %6318 = vmatmul.mubr.f32.gmra.mxu0 %v5997
    %v6319 = vpop.f32.mrf.mxu0
    %v6320 = vadd.f32 0.0, %v6319
    %v6321 = vpop.f32.mrf.mxu0
    %6322 = vmatprep.mubr.f32.mxu0 0.0
    %6323 = vmatmul.mubr.f32.gmra.mxu0 %v6000
    %v6324 = vpop.f32.mrf.mxu0
    %v6325 = vadd.f32 0.0, %v6324
    %v6326 = vpop.f32.mrf.mxu0
    %6327 = vmatprep.mubr.f32.mxu0 0.0
    %6328 = vmatmul.mubr.f32.gmra.mxu0 %v6003
    %v6329 = vpop.f32.mrf.mxu0
    %v6330 = vadd.f32 0.0, %v6329
    %v6331 = vpop.f32.mrf.mxu0
    %6332 = vmatprep.mubr.f32.mxu0 0.0
    %6333 = vmatmul.mubr.f32.gmra.mxu0 %v6006
    %v6334 = vpop.f32.mrf.mxu0
    %v6335 = vadd.f32 0.0, %v6334
    %v6336 = vpop.f32.mrf.mxu0
    %6337 = vmatprep.mubr.f32.mxu0 0.0
    %6338 = vmatmul.mubr.f32.gmra.mxu0 %v6009
    %v6339 = vpop.f32.mrf.mxu0
    %v6340 = vadd.f32 0.0, %v6339
    %v6341 = vpop.f32.mrf.mxu0
    %6342 = vmatprep.mubr.f32.mxu0 0.0
    %6343 = vmatmul.mubr.f32.gmra.mxu0 %v6012
    %v6344 = vpop.f32.mrf.mxu0
    %v6345 = vadd.f32 0.0, %v6344
    %v6346 = vpop.f32.mrf.mxu0
    %6347 = vmatprep.mubr.f32.mxu0 0.0
    %6348 = vmatmul.mubr.f32.gmra.mxu0 %v6015
    %v6349 = vpop.f32.mrf.mxu0
    %v6350 = vadd.f32 0.0, %v6349
    %v6351 = vpop.f32.mrf.mxu0
    %6352 = vmatprep.mubr.f32.mxu0 0.0
    %6353 = vmatmul.mubr.f32.gmra.mxu0 %v6018
    %v6354 = vpop.f32.mrf.mxu0
    %v6355 = vadd.f32 0.0, %v6354
    %v6356 = vpop.f32.mrf.mxu0
    %6357 = vmatprep.mubr.f32.mxu0 0.0
    %6358 = vmatmul.mubr.f32.gmra.mxu0 %v6021
    %v6359 = vpop.f32.mrf.mxu0
    %v6360 = vadd.f32 0.0, %v6359
    %v6361 = vpop.f32.mrf.mxu0
    %6362 = vmatprep.mubr.f32.mxu0 0.0
    %6363 = vmatmul.mubr.f32.gmra.mxu0 %v6024
    %v6364 = vpop.f32.mrf.mxu0
    %v6365 = vadd.f32 0.0, %v6364
    %v6366 = vpop.f32.mrf.mxu0
    %6367 = vmatprep.mubr.f32.mxu0 0.0
    %6368 = vmatmul.mubr.f32.gmra.mxu0 %v6027
    %v6369 = vpop.f32.mrf.mxu0
    %v6370 = vadd.f32 0.0, %v6369
    %v6371 = vpop.f32.mrf.mxu0
    %6372 = vmatprep.mubr.f32.mxu0 0.0
    %6373 = vmatmul.mubr.f32.gmra.mxu0 %v6030
    %v6374 = vpop.f32.mrf.mxu0
    %v6375 = vadd.f32 0.0, %v6374
    %v6376 = vpop.f32.mrf.mxu0
    %6377 = vmatprep.mubr.f32.mxu0 0.0
    %6378 = vmatmul.mubr.f32.gmra.mxu0 %v6033
    %v6379 = vpop.f32.mrf.mxu0
    %v6380 = vadd.f32 0.0, %v6379
    %v6381 = vpop.f32.mrf.mxu0
    %6382 = vmatprep.mubr.f32.mxu0 0.0
    %6383 = vmatmul.mubr.f32.gmra.mxu0 %v6036
    %v6384 = vpop.f32.mrf.mxu0
    %v6385 = vadd.f32 0.0, %v6384
    %v6386 = vpop.f32.mrf.mxu0
    %6387 = vmatprep.mubr.f32.mxu0 0.0
    %6388 = vmatmul.mubr.f32.gmra.mxu0 %v6039
    %v6389 = vpop.f32.mrf.mxu0
    %v6390 = vadd.f32 0.0, %v6389
    %v6391 = vpop.f32.mrf.mxu0
    %6392 = vmatprep.mubr.f32.mxu0 0.0
    %6393 = vmatmul.mubr.f32.gmra.mxu0 %v6042
    %v6394 = vpop.f32.mrf.mxu0
    %v6395 = vadd.f32 0.0, %v6394
    %v6396 = vpop.f32.mrf.mxu0
    %6397 = vmatprep.mubr.f32.mxu0 0.0
    %6398 = vmatmul.mubr.f32.gmra.mxu0 %v6045
    %v6399 = vpop.f32.mrf.mxu0
    %v6400 = vadd.f32 0.0, %v6399
    %v6401 = vpop.f32.mrf.mxu0
    %6402 = vmatprep.mubr.f32.mxu0 0.0
    %6403 = vmatmul.mubr.f32.gmra.mxu0 %v6048
    %v6404 = vpop.f32.mrf.mxu0
    %v6405 = vadd.f32 0.0, %v6404
    %v6406 = vpop.f32.mrf.mxu0
    %6407 = vmatprep.mubr.f32.mxu0 0.0
    %6408 = vmatmul.mubr.f32.gmra.mxu0 %v6051
    %v6409 = vpop.f32.mrf.mxu0
    %v6410 = vadd.f32 0.0, %v6409
    %v6411 = vpop.f32.mrf.mxu0
    %6412 = vmatprep.mubr.f32.mxu0 0.0
    %6413 = vmatmul.mubr.f32.gmra.mxu0 %v6054
    %v6414 = vpop.f32.mrf.mxu0
    %v6415 = vadd.f32 0.0, %v6414
    %v6416 = vpop.f32.mrf.mxu0
    %6417 = vmatprep.mubr.f32.mxu0 0.0
    %6418 = vmatmul.mubr.f32.gmra.mxu0 %v6057
    %v6419 = vpop.f32.mrf.mxu0
    %v6420 = vadd.f32 0.0, %v6419
    %v6421 = vpop.f32.mrf.mxu0
    %6422 = vmatprep.mubr.f32.mxu0 0.0
    %6423 = vmatmul.mubr.f32.gmra.mxu0 %v6060
    %v6424 = vpop.f32.mrf.mxu0
    %v6425 = vadd.f32 0.0, %v6424
    %v6426 = vpop.f32.mrf.mxu0
    %6427 = vmatprep.mubr.f32.mxu0 0.0
    %6428 = vmatmul.mubr.f32.gmra.mxu0 %v6063
    %v6429 = vpop.f32.mrf.mxu0
    %v6430 = vadd.f32 0.0, %v6429
    %v6431 = vpop.f32.mrf.mxu0
    %6432 = vmatprep.mubr.f32.mxu0 0.0
    %6433 = vmatmul.mubr.f32.gmra.mxu0 %v6066
    %v6434 = vpop.f32.mrf.mxu0
    %v6435 = vadd.f32 0.0, %v6434
    %v6436 = vpop.f32.mrf.mxu0
    %6437 = vmatprep.mubr.f32.mxu0 0.0
    %6438 = vmatmul.mubr.f32.gmra.mxu0 %v6069
    %v6439 = vpop.f32.mrf.mxu0
    %v6440 = vadd.f32 0.0, %v6439
    %v6441 = vpop.f32.mrf.mxu0
    %6442 = vmatprep.mubr.f32.mxu0 0.0
    %6443 = vmatmul.mubr.f32.gmra.mxu0 %v6072
    %v6444 = vpop.f32.mrf.mxu0
    %v6445 = vadd.f32 0.0, %v6444
    %v6446 = vpop.f32.mrf.mxu0
    %6447 = vmatprep.mubr.f32.mxu0 0.0
    %6448 = vmatmul.mubr.f32.gmra.mxu0 %v6075
    %v6449 = vpop.f32.mrf.mxu0
    %v6450 = vadd.f32 0.0, %v6449
    %v6451 = vpop.f32.mrf.mxu0
    %6452 = vmatprep.mubr.f32.mxu0 0.0
    %6453 = vmatmul.mubr.f32.gmra.mxu0 %v6078
    %v6454 = vpop.f32.mrf.mxu0
    %v6455 = vadd.f32 0.0, %v6454
    %v6456 = vpop.f32.mrf.mxu0
    %6457 = vmatprep.mubr.f32.mxu0 0.0
    %6458 = vmatmul.mubr.f32.gmra.mxu0 %v6081
    %v6459 = vpop.f32.mrf.mxu0
    %v6460 = vadd.f32 0.0, %v6459
    %v6461 = vpop.f32.mrf.mxu0
    %6462 = vmatprep.mubr.f32.mxu0 0.0
    %6463 = vmatmul.mubr.f32.gmra.mxu0 %v6084
    %v6464 = vpop.f32.mrf.mxu0
    %v6465 = vadd.f32 0.0, %v6464
    %v6466 = vpop.f32.mrf.mxu0
    %6467 = vmatprep.mubr.f32.mxu0 0.0
    %6468 = vmatmul.mubr.f32.gmra.mxu0 %v6087
    %v6469 = vpop.f32.mrf.mxu0
    %v6470 = vadd.f32 0.0, %v6469
    %v6471 = vpop.f32.mrf.mxu0
    %6472 = vmatprep.mubr.f32.mxu0 0.0
    %6473 = vmatmul.mubr.f32.gmra.mxu0 %v6090
    %v6474 = vpop.f32.mrf.mxu0
    %v6475 = vadd.f32 0.0, %v6474
    %v6476 = vpop.f32.mrf.mxu0
    %6477 = vmatprep.mubr.f32.mxu0 0.0
    %6478 = vmatmul.mubr.f32.gmra.mxu0 %v6093
    %v6479 = vpop.f32.mrf.mxu0
    %v6480 = vadd.f32 0.0, %v6479
    %v6481 = vpop.f32.mrf.mxu0
    %6482 = vdwg.mxu0
    %v6483 = vadd.f32 %v5773, %v6165
    %v6484 = vadd.f32 %v5774, %v6170
    %v6485 = vadd.f32 %v5775, %v6175
    %v6486 = vadd.f32 %v5776, %v6180
    %v6487 = vadd.f32 %v5777, %v6185
    %v6488 = vadd.f32 %v5778, %v6190
    %v6489 = vadd.f32 %v5779, %v6195
    %v6490 = vadd.f32 %v5780, %v6200
    %v6491 = vadd.f32 %v5781, %v6205
    %v6492 = vadd.f32 %v5782, %v6210
    %v6493 = vadd.f32 %v5783, %v6215
    %v6494 = vadd.f32 %v5784, %v6220
    %v6495 = vadd.f32 %v5785, %v6225
    %v6496 = vadd.f32 %v5786, %v6230
    %v6497 = vadd.f32 %v5787, %v6235
    %v6498 = vadd.f32 %v5788, %v6240
    %v6499 = vadd.f32 %v5789, %v6245
    %v6500 = vadd.f32 %v5790, %v6250
    %v6501 = vadd.f32 %v5791, %v6255
    %v6502 = vadd.f32 %v5792, %v6260
    %v6503 = vadd.f32 %v5793, %v6265
    %v6504 = vadd.f32 %v5794, %v6270
    %v6505 = vadd.f32 %v5795, %v6275
    %v6506 = vadd.f32 %v5796, %v6280
    %v6507 = vadd.f32 %v5797, %v6285
    %v6508 = vadd.f32 %v5798, %v6290
    %v6509 = vadd.f32 %v5799, %v6295
    %v6510 = vadd.f32 %v5800, %v6300
    %v6511 = vadd.f32 %v5801, %v6305
    %v6512 = vadd.f32 %v5802, %v6310
    %v6513 = vadd.f32 %v5803, %v6315
    %v6514 = vadd.f32 %v5804, %v6320
    %v6515 = vadd.f32 %v5805, %v6325
    %v6516 = vadd.f32 %v5806, %v6330
    %v6517 = vadd.f32 %v5807, %v6335
    %v6518 = vadd.f32 %v5808, %v6340
    %v6519 = vadd.f32 %v5809, %v6345
    %v6520 = vadd.f32 %v5810, %v6350
    %v6521 = vadd.f32 %v5811, %v6355
    %v6522 = vadd.f32 %v5812, %v6360
    %v6523 = vadd.f32 %v5813, %v6365
    %v6524 = vadd.f32 %v5814, %v6370
    %v6525 = vadd.f32 %v5815, %v6375
    %v6526 = vadd.f32 %v5816, %v6380
    %v6527 = vadd.f32 %v5817, %v6385
    %v6528 = vadd.f32 %v5818, %v6390
    %v6529 = vadd.f32 %v5819, %v6395
    %v6530 = vadd.f32 %v5820, %v6400
    %v6531 = vadd.f32 %v5821, %v6405
    %v6532 = vadd.f32 %v5822, %v6410
    %v6533 = vadd.f32 %v5823, %v6415
    %v6534 = vadd.f32 %v5824, %v6420
    %v6535 = vadd.f32 %v5825, %v6425
    %v6536 = vadd.f32 %v5826, %v6430
    %v6537 = vadd.f32 %v5827, %v6435
    %v6538 = vadd.f32 %v5828, %v6440
    %v6539 = vadd.f32 %v5829, %v6445
    %v6540 = vadd.f32 %v5830, %v6450
    %v6541 = vadd.f32 %v5831, %v6455
    %v6542 = vadd.f32 %v5832, %v6460
    %v6543 = vadd.f32 %v5833, %v6465
    %v6544 = vadd.f32 %v5834, %v6470
    %v6545 = vadd.f32 %v5835, %v6475
    %v6546 = vadd.f32 %v5836, %v6480
    %v6547 = vld [vmem:[%s2] sm:$0x1]
    %v6549 = vlaneseq
    %v6550 = vshrl.u32 %v6549, 7
    %v6551 = vsub.s32 0, %v6550
    %v6552 = vrot.slane %v6547, %v6551
    %v6554 = vadd.f32 %v6483, %v6552
    %v6555 = vadd.f32 %v6484, %v6552
    %v6556 = vadd.f32 %v6485, %v6552
    %v6557 = vadd.f32 %v6486, %v6552
    %v6558 = vadd.f32 %v6487, %v6552
    %v6559 = vadd.f32 %v6488, %v6552
    %v6560 = vadd.f32 %v6489, %v6552
    %v6561 = vadd.f32 %v6490, %v6552
    %v6562 = vadd.f32 %v6491, %v6552
    %v6563 = vadd.f32 %v6492, %v6552
    %v6564 = vadd.f32 %v6493, %v6552
    %v6565 = vadd.f32 %v6494, %v6552
    %v6566 = vadd.f32 %v6495, %v6552
    %v6567 = vadd.f32 %v6496, %v6552
    %v6568 = vadd.f32 %v6497, %v6552
    %v6569 = vadd.f32 %v6498, %v6552
    %v6570 = vadd.f32 %v6499, %v6552
    %v6571 = vadd.f32 %v6500, %v6552
    %v6572 = vadd.f32 %v6501, %v6552
    %v6573 = vadd.f32 %v6502, %v6552
    %v6574 = vadd.f32 %v6503, %v6552
    %v6575 = vadd.f32 %v6504, %v6552
    %v6576 = vadd.f32 %v6505, %v6552
    %v6577 = vadd.f32 %v6506, %v6552
    %v6578 = vadd.f32 %v6507, %v6552
    %v6579 = vadd.f32 %v6508, %v6552
    %v6580 = vadd.f32 %v6509, %v6552
    %v6581 = vadd.f32 %v6510, %v6552
    %v6582 = vadd.f32 %v6511, %v6552
    %v6583 = vadd.f32 %v6512, %v6552
    %v6584 = vadd.f32 %v6513, %v6552
    %v6585 = vadd.f32 %v6514, %v6552
    %v6586 = vadd.f32 %v6515, %v6552
    %v6587 = vadd.f32 %v6516, %v6552
    %v6588 = vadd.f32 %v6517, %v6552
    %v6589 = vadd.f32 %v6518, %v6552
    %v6590 = vadd.f32 %v6519, %v6552
    %v6591 = vadd.f32 %v6520, %v6552
    %v6592 = vadd.f32 %v6521, %v6552
    %v6593 = vadd.f32 %v6522, %v6552
    %v6594 = vadd.f32 %v6523, %v6552
    %v6595 = vadd.f32 %v6524, %v6552
    %v6596 = vadd.f32 %v6525, %v6552
    %v6597 = vadd.f32 %v6526, %v6552
    %v6598 = vadd.f32 %v6527, %v6552
    %v6599 = vadd.f32 %v6528, %v6552
    %v6600 = vadd.f32 %v6529, %v6552
    %v6601 = vadd.f32 %v6530, %v6552
    %v6602 = vadd.f32 %v6531, %v6552
    %v6603 = vadd.f32 %v6532, %v6552
    %v6604 = vadd.f32 %v6533, %v6552
    %v6605 = vadd.f32 %v6534, %v6552
    %v6606 = vadd.f32 %v6535, %v6552
    %v6607 = vadd.f32 %v6536, %v6552
    %v6608 = vadd.f32 %v6537, %v6552
    %v6609 = vadd.f32 %v6538, %v6552
    %v6610 = vadd.f32 %v6539, %v6552
    %v6611 = vadd.f32 %v6540, %v6552
    %v6612 = vadd.f32 %v6541, %v6552
    %v6613 = vadd.f32 %v6542, %v6552
    %v6614 = vadd.f32 %v6543, %v6552
    %v6615 = vadd.f32 %v6544, %v6552
    %v6616 = vadd.f32 %v6545, %v6552
    %v6617 = vadd.f32 %v6546, %v6552
    %vm6618 = vcmask 64512
    %v6619 = vsel %vm6618, %v6554, 0.0
    %v6620 = vsel %vm6618, %v6555, 0.0
    %v6621 = vadd.f32 %v6619, %v6620
    %v6622 = vsel %vm6618, %v6556, 0.0
    %v6623 = vadd.f32 %v6621, %v6622
    %v6624 = vsel %vm6618, %v6557, 0.0
    %v6625 = vadd.f32 %v6623, %v6624
    %v6626 = vsel %vm6618, %v6558, 0.0
    %v6627 = vadd.f32 %v6625, %v6626
    %v6628 = vsel %vm6618, %v6559, 0.0
    %v6629 = vadd.f32 %v6627, %v6628
    %v6630 = vsel %vm6618, %v6560, 0.0
    %v6631 = vadd.f32 %v6629, %v6630
    %v6632 = vsel %vm6618, %v6561, 0.0
    %v6633 = vadd.f32 %v6631, %v6632
    %v6634 = vsel %vm6618, %v6562, 0.0
    %v6635 = vadd.f32 %v6633, %v6634
    %v6636 = vsel %vm6618, %v6563, 0.0
    %v6637 = vadd.f32 %v6635, %v6636
    %v6638 = vsel %vm6618, %v6564, 0.0
    %v6639 = vadd.f32 %v6637, %v6638
    %v6640 = vsel %vm6618, %v6565, 0.0
    %v6641 = vadd.f32 %v6639, %v6640
    %v6642 = vsel %vm6618, %v6566, 0.0
    %v6643 = vadd.f32 %v6641, %v6642
    %v6644 = vsel %vm6618, %v6567, 0.0
    %v6645 = vadd.f32 %v6643, %v6644
    %v6646 = vsel %vm6618, %v6568, 0.0
    %v6647 = vadd.f32 %v6645, %v6646
    %v6648 = vsel %vm6618, %v6569, 0.0
    %v6649 = vadd.f32 %v6647, %v6648
    %v6650 = vsel %vm6618, %v6570, 0.0
    %v6651 = vadd.f32 %v6649, %v6650
    %v6652 = vsel %vm6618, %v6571, 0.0
    %v6653 = vadd.f32 %v6651, %v6652
    %v6654 = vsel %vm6618, %v6572, 0.0
    %v6655 = vadd.f32 %v6653, %v6654
    %v6656 = vsel %vm6618, %v6573, 0.0
    %v6657 = vadd.f32 %v6655, %v6656
    %v6658 = vsel %vm6618, %v6574, 0.0
    %v6659 = vadd.f32 %v6657, %v6658
    %v6660 = vsel %vm6618, %v6575, 0.0
    %v6661 = vadd.f32 %v6659, %v6660
    %v6662 = vsel %vm6618, %v6576, 0.0
    %v6663 = vadd.f32 %v6661, %v6662
    %v6664 = vsel %vm6618, %v6577, 0.0
    %v6665 = vadd.f32 %v6663, %v6664
    %v6666 = vsel %vm6618, %v6578, 0.0
    %v6667 = vadd.f32 %v6665, %v6666
    %v6668 = vsel %vm6618, %v6579, 0.0
    %v6669 = vadd.f32 %v6667, %v6668
    %v6670 = vsel %vm6618, %v6580, 0.0
    %v6671 = vadd.f32 %v6669, %v6670
    %v6672 = vsel %vm6618, %v6581, 0.0
    %v6673 = vadd.f32 %v6671, %v6672
    %v6674 = vsel %vm6618, %v6582, 0.0
    %v6675 = vadd.f32 %v6673, %v6674
    %v6676 = vsel %vm6618, %v6583, 0.0
    %v6677 = vadd.f32 %v6675, %v6676
    %v6678 = vsel %vm6618, %v6584, 0.0
    %v6679 = vadd.f32 %v6677, %v6678
    %v6680 = vsel %vm6618, %v6585, 0.0
    %v6681 = vadd.f32 %v6679, %v6680
    %v6682 = vsel %vm6618, %v6586, 0.0
    %v6683 = vadd.f32 %v6681, %v6682
    %v6684 = vsel %vm6618, %v6587, 0.0
    %v6685 = vadd.f32 %v6683, %v6684
    %v6686 = vsel %vm6618, %v6588, 0.0
    %v6687 = vadd.f32 %v6685, %v6686
    %v6688 = vsel %vm6618, %v6589, 0.0
    %v6689 = vadd.f32 %v6687, %v6688
    %v6690 = vsel %vm6618, %v6590, 0.0
    %v6691 = vadd.f32 %v6689, %v6690
    %v6692 = vsel %vm6618, %v6591, 0.0
    %v6693 = vadd.f32 %v6691, %v6692
    %v6694 = vsel %vm6618, %v6592, 0.0
    %v6695 = vadd.f32 %v6693, %v6694
    %v6696 = vsel %vm6618, %v6593, 0.0
    %v6697 = vadd.f32 %v6695, %v6696
    %v6698 = vsel %vm6618, %v6594, 0.0
    %v6699 = vadd.f32 %v6697, %v6698
    %v6700 = vsel %vm6618, %v6595, 0.0
    %v6701 = vadd.f32 %v6699, %v6700
    %v6702 = vsel %vm6618, %v6596, 0.0
    %v6703 = vadd.f32 %v6701, %v6702
    %v6704 = vsel %vm6618, %v6597, 0.0
    %v6705 = vadd.f32 %v6703, %v6704
    %v6706 = vsel %vm6618, %v6598, 0.0
    %v6707 = vadd.f32 %v6705, %v6706
    %v6708 = vsel %vm6618, %v6599, 0.0
    %v6709 = vadd.f32 %v6707, %v6708
    %v6710 = vsel %vm6618, %v6600, 0.0
    %v6711 = vadd.f32 %v6709, %v6710
    %v6712 = vsel %vm6618, %v6601, 0.0
    %v6713 = vadd.f32 %v6711, %v6712
    %v6714 = vsel %vm6618, %v6602, 0.0
    %v6715 = vadd.f32 %v6713, %v6714
    %v6716 = vsel %vm6618, %v6603, 0.0
    %v6717 = vadd.f32 %v6715, %v6716
    %v6718 = vsel %vm6618, %v6604, 0.0
    %v6719 = vadd.f32 %v6717, %v6718
    %v6720 = vsel %vm6618, %v6605, 0.0
    %v6721 = vadd.f32 %v6719, %v6720
    %v6722 = vsel %vm6618, %v6606, 0.0
    %v6723 = vadd.f32 %v6721, %v6722
    %v6724 = vsel %vm6618, %v6607, 0.0
    %v6725 = vadd.f32 %v6723, %v6724
    %v6726 = vsel %vm6618, %v6608, 0.0
    %v6727 = vadd.f32 %v6725, %v6726
    %v6728 = vsel %vm6618, %v6609, 0.0
    %v6729 = vadd.f32 %v6727, %v6728
    %v6730 = vsel %vm6618, %v6610, 0.0
    %v6731 = vadd.f32 %v6729, %v6730
    %v6732 = vsel %vm6618, %v6611, 0.0
    %v6733 = vadd.f32 %v6731, %v6732
    %v6734 = vsel %vm6618, %v6612, 0.0
    %v6735 = vadd.f32 %v6733, %v6734
    %v6736 = vsel %vm6618, %v6613, 0.0
    %v6737 = vadd.f32 %v6735, %v6736
    %v6738 = vsel %vm6618, %v6614, 0.0
    %v6739 = vadd.f32 %v6737, %v6738
    %v6740 = vsel %vm6618, %v6615, 0.0
    %v6741 = vadd.f32 %v6739, %v6740
    %v6742 = vsel %vm6618, %v6616, 0.0
    %v6743 = vadd.f32 %v6741, %v6742
    %v6744 = vsel %vm6618, %v6617, 0.0
    %v6745 = vadd.f32 %v6743, %v6744
    %v6746 = vrot.slane %v6745, 4
    %v6747 = vadd.f32 %v6745, %v6746
    %v6748 = vrot.slane %v6747, 2
    %v6749 = vadd.f32 %v6747, %v6748
    %v6750 = vrot.slane %v6749, 1
    %v6751 = vadd.f32 %v6749, %v6750
    %v6752 = vmul.f32 %v6751, 0.001953125
    %v6753 = vmul.f32 %v6554, %v6554
    %v6754 = vmul.f32 %v6555, %v6555
    %v6755 = vmul.f32 %v6556, %v6556
    %v6756 = vmul.f32 %v6557, %v6557
    %v6757 = vmul.f32 %v6558, %v6558
    %v6758 = vmul.f32 %v6559, %v6559
    %v6759 = vmul.f32 %v6560, %v6560
    %v6760 = vmul.f32 %v6561, %v6561
    %v6761 = vmul.f32 %v6562, %v6562
    %v6762 = vmul.f32 %v6563, %v6563
    %v6763 = vmul.f32 %v6564, %v6564
    %v6764 = vmul.f32 %v6565, %v6565
    %v6765 = vmul.f32 %v6566, %v6566
    %v6766 = vmul.f32 %v6567, %v6567
    %v6767 = vmul.f32 %v6568, %v6568
    %v6768 = vmul.f32 %v6569, %v6569
    %v6769 = vmul.f32 %v6570, %v6570
    %v6770 = vmul.f32 %v6571, %v6571
    %v6771 = vmul.f32 %v6572, %v6572
    %v6772 = vmul.f32 %v6573, %v6573
    %v6773 = vmul.f32 %v6574, %v6574
    %v6774 = vmul.f32 %v6575, %v6575
    %v6775 = vmul.f32 %v6576, %v6576
    %v6776 = vmul.f32 %v6577, %v6577
    %v6777 = vmul.f32 %v6578, %v6578
    %v6778 = vmul.f32 %v6579, %v6579
    %v6779 = vmul.f32 %v6580, %v6580
    %v6780 = vmul.f32 %v6581, %v6581
    %v6781 = vmul.f32 %v6582, %v6582
    %v6782 = vmul.f32 %v6583, %v6583
    %v6783 = vmul.f32 %v6584, %v6584
    %v6784 = vmul.f32 %v6585, %v6585
    %v6785 = vmul.f32 %v6586, %v6586
    %v6786 = vmul.f32 %v6587, %v6587
    %v6787 = vmul.f32 %v6588, %v6588
    %v6788 = vmul.f32 %v6589, %v6589
    %v6789 = vmul.f32 %v6590, %v6590
    %v6790 = vmul.f32 %v6591, %v6591
    %v6791 = vmul.f32 %v6592, %v6592
    %v6792 = vmul.f32 %v6593, %v6593
    %v6793 = vmul.f32 %v6594, %v6594
    %v6794 = vmul.f32 %v6595, %v6595
    %v6795 = vmul.f32 %v6596, %v6596
    %v6796 = vmul.f32 %v6597, %v6597
    %v6797 = vmul.f32 %v6598, %v6598
    %v6798 = vmul.f32 %v6599, %v6599
    %v6799 = vmul.f32 %v6600, %v6600
    %v6800 = vmul.f32 %v6601, %v6601
    %v6801 = vmul.f32 %v6602, %v6602
    %v6802 = vmul.f32 %v6603, %v6603
    %v6803 = vmul.f32 %v6604, %v6604
    %v6804 = vmul.f32 %v6605, %v6605
    %v6805 = vmul.f32 %v6606, %v6606
    %v6806 = vmul.f32 %v6607, %v6607
    %v6807 = vmul.f32 %v6608, %v6608
    %v6808 = vmul.f32 %v6609, %v6609
    %v6809 = vmul.f32 %v6610, %v6610
    %v6810 = vmul.f32 %v6611, %v6611
    %v6811 = vmul.f32 %v6612, %v6612
    %v6812 = vmul.f32 %v6613, %v6613
    %v6813 = vmul.f32 %v6614, %v6614
    %v6814 = vmul.f32 %v6615, %v6615
    %v6815 = vmul.f32 %v6616, %v6616
    %v6816 = vmul.f32 %v6617, %v6617
    %v6817 = vsel %vm6618, %v6753, 0.0
    %v6818 = vsel %vm6618, %v6754, 0.0
    %v6819 = vadd.f32 %v6817, %v6818
    %v6820 = vsel %vm6618, %v6755, 0.0
    %v6821 = vadd.f32 %v6819, %v6820
    %v6822 = vsel %vm6618, %v6756, 0.0
    %v6823 = vadd.f32 %v6821, %v6822
    %v6824 = vsel %vm6618, %v6757, 0.0
    %v6825 = vadd.f32 %v6823, %v6824
    %v6826 = vsel %vm6618, %v6758, 0.0
    %v6827 = vadd.f32 %v6825, %v6826
    %v6828 = vsel %vm6618, %v6759, 0.0
    %v6829 = vadd.f32 %v6827, %v6828
    %v6830 = vsel %vm6618, %v6760, 0.0
    %v6831 = vadd.f32 %v6829, %v6830
    %v6832 = vsel %vm6618, %v6761, 0.0
    %v6833 = vadd.f32 %v6831, %v6832
    %v6834 = vsel %vm6618, %v6762, 0.0
    %v6835 = vadd.f32 %v6833, %v6834
    %v6836 = vsel %vm6618, %v6763, 0.0
    %v6837 = vadd.f32 %v6835, %v6836
    %v6838 = vsel %vm6618, %v6764, 0.0
    %v6839 = vadd.f32 %v6837, %v6838
    %v6840 = vsel %vm6618, %v6765, 0.0
    %v6841 = vadd.f32 %v6839, %v6840
    %v6842 = vsel %vm6618, %v6766, 0.0
    %v6843 = vadd.f32 %v6841, %v6842
    %v6844 = vsel %vm6618, %v6767, 0.0
    %v6845 = vadd.f32 %v6843, %v6844
    %v6846 = vsel %vm6618, %v6768, 0.0
    %v6847 = vadd.f32 %v6845, %v6846
    %v6848 = vsel %vm6618, %v6769, 0.0
    %v6849 = vadd.f32 %v6847, %v6848
    %v6850 = vsel %vm6618, %v6770, 0.0
    %v6851 = vadd.f32 %v6849, %v6850
    %v6852 = vsel %vm6618, %v6771, 0.0
    %v6853 = vadd.f32 %v6851, %v6852
    %v6854 = vsel %vm6618, %v6772, 0.0
    %v6855 = vadd.f32 %v6853, %v6854
    %v6856 = vsel %vm6618, %v6773, 0.0
    %v6857 = vadd.f32 %v6855, %v6856
    %v6858 = vsel %vm6618, %v6774, 0.0
    %v6859 = vadd.f32 %v6857, %v6858
    %v6860 = vsel %vm6618, %v6775, 0.0
    %v6861 = vadd.f32 %v6859, %v6860
    %v6862 = vsel %vm6618, %v6776, 0.0
    %v6863 = vadd.f32 %v6861, %v6862
    %v6864 = vsel %vm6618, %v6777, 0.0
    %v6865 = vadd.f32 %v6863, %v6864
    %v6866 = vsel %vm6618, %v6778, 0.0
    %v6867 = vadd.f32 %v6865, %v6866
    %v6868 = vsel %vm6618, %v6779, 0.0
    %v6869 = vadd.f32 %v6867, %v6868
    %v6870 = vsel %vm6618, %v6780, 0.0
    %v6871 = vadd.f32 %v6869, %v6870
    %v6872 = vsel %vm6618, %v6781, 0.0
    %v6873 = vadd.f32 %v6871, %v6872
    %v6874 = vsel %vm6618, %v6782, 0.0
    %v6875 = vadd.f32 %v6873, %v6874
    %v6876 = vsel %vm6618, %v6783, 0.0
    %v6877 = vadd.f32 %v6875, %v6876
    %v6878 = vsel %vm6618, %v6784, 0.0
    %v6879 = vadd.f32 %v6877, %v6878
    %v6880 = vsel %vm6618, %v6785, 0.0
    %v6881 = vadd.f32 %v6879, %v6880
    %v6882 = vsel %vm6618, %v6786, 0.0
    %v6883 = vadd.f32 %v6881, %v6882
    %v6884 = vsel %vm6618, %v6787, 0.0
    %v6885 = vadd.f32 %v6883, %v6884
    %v6886 = vsel %vm6618, %v6788, 0.0
    %v6887 = vadd.f32 %v6885, %v6886
    %v6888 = vsel %vm6618, %v6789, 0.0
    %v6889 = vadd.f32 %v6887, %v6888
    %v6890 = vsel %vm6618, %v6790, 0.0
    %v6891 = vadd.f32 %v6889, %v6890
    %v6892 = vsel %vm6618, %v6791, 0.0
    %v6893 = vadd.f32 %v6891, %v6892
    %v6894 = vsel %vm6618, %v6792, 0.0
    %v6895 = vadd.f32 %v6893, %v6894
    %v6896 = vsel %vm6618, %v6793, 0.0
    %v6897 = vadd.f32 %v6895, %v6896
    %v6898 = vsel %vm6618, %v6794, 0.0
    %v6899 = vadd.f32 %v6897, %v6898
    %v6900 = vsel %vm6618, %v6795, 0.0
    %v6901 = vadd.f32 %v6899, %v6900
    %v6902 = vsel %vm6618, %v6796, 0.0
    %v6903 = vadd.f32 %v6901, %v6902
    %v6904 = vsel %vm6618, %v6797, 0.0
    %v6905 = vadd.f32 %v6903, %v6904
    %v6906 = vsel %vm6618, %v6798, 0.0
    %v6907 = vadd.f32 %v6905, %v6906
    %v6908 = vsel %vm6618, %v6799, 0.0
    %v6909 = vadd.f32 %v6907, %v6908
    %v6910 = vsel %vm6618, %v6800, 0.0
    %v6911 = vadd.f32 %v6909, %v6910
    %v6912 = vsel %vm6618, %v6801, 0.0
    %v6913 = vadd.f32 %v6911, %v6912
    %v6914 = vsel %vm6618, %v6802, 0.0
    %v6915 = vadd.f32 %v6913, %v6914
    %v6916 = vsel %vm6618, %v6803, 0.0
    %v6917 = vadd.f32 %v6915, %v6916
    %v6918 = vsel %vm6618, %v6804, 0.0
    %v6919 = vadd.f32 %v6917, %v6918
    %v6920 = vsel %vm6618, %v6805, 0.0
    %v6921 = vadd.f32 %v6919, %v6920
    %v6922 = vsel %vm6618, %v6806, 0.0
    %v6923 = vadd.f32 %v6921, %v6922
    %v6924 = vsel %vm6618, %v6807, 0.0
    %v6925 = vadd.f32 %v6923, %v6924
    %v6926 = vsel %vm6618, %v6808, 0.0
    %v6927 = vadd.f32 %v6925, %v6926
    %v6928 = vsel %vm6618, %v6809, 0.0
    %v6929 = vadd.f32 %v6927, %v6928
    %v6930 = vsel %vm6618, %v6810, 0.0
    %v6931 = vadd.f32 %v6929, %v6930
    %v6932 = vsel %vm6618, %v6811, 0.0
    %v6933 = vadd.f32 %v6931, %v6932
    %v6934 = vsel %vm6618, %v6812, 0.0
    %v6935 = vadd.f32 %v6933, %v6934
    %v6936 = vsel %vm6618, %v6813, 0.0
    %v6937 = vadd.f32 %v6935, %v6936
    %v6938 = vsel %vm6618, %v6814, 0.0
    %v6939 = vadd.f32 %v6937, %v6938
    %v6940 = vsel %vm6618, %v6815, 0.0
    %v6941 = vadd.f32 %v6939, %v6940
    %v6942 = vsel %vm6618, %v6816, 0.0
    %v6943 = vadd.f32 %v6941, %v6942
    %v6944 = vrot.slane %v6943, 4
    %v6945 = vadd.f32 %v6943, %v6944
    %v6946 = vrot.slane %v6945, 2
    %v6947 = vadd.f32 %v6945, %v6946
    %v6948 = vrot.slane %v6947, 1
    %v6949 = vadd.f32 %v6947, %v6948
    %v6950 = vmul.f32 %v6949, 0.001953125
    %v6951 = vmul.f32 %v6752, %v6752
    %v6952 = vsub.f32 %v6950, %v6951
    %v6953 = vsub.f32 %v6554, %v6752
    %v6954 = vsub.f32 %v6555, %v6752
    %v6955 = vsub.f32 %v6556, %v6752
    %v6956 = vsub.f32 %v6557, %v6752
    %v6957 = vsub.f32 %v6558, %v6752
    %v6958 = vsub.f32 %v6559, %v6752
    %v6959 = vsub.f32 %v6560, %v6752
    %v6960 = vsub.f32 %v6561, %v6752
    %v6961 = vsub.f32 %v6562, %v6752
    %v6962 = vsub.f32 %v6563, %v6752
    %v6963 = vsub.f32 %v6564, %v6752
    %v6964 = vsub.f32 %v6565, %v6752
    %v6965 = vsub.f32 %v6566, %v6752
    %v6966 = vsub.f32 %v6567, %v6752
    %v6967 = vsub.f32 %v6568, %v6752
    %v6968 = vsub.f32 %v6569, %v6752
    %v6969 = vsub.f32 %v6570, %v6752
    %v6970 = vsub.f32 %v6571, %v6752
    %v6971 = vsub.f32 %v6572, %v6752
    %v6972 = vsub.f32 %v6573, %v6752
    %v6973 = vsub.f32 %v6574, %v6752
    %v6974 = vsub.f32 %v6575, %v6752
    %v6975 = vsub.f32 %v6576, %v6752
    %v6976 = vsub.f32 %v6577, %v6752
    %v6977 = vsub.f32 %v6578, %v6752
    %v6978 = vsub.f32 %v6579, %v6752
    %v6979 = vsub.f32 %v6580, %v6752
    %v6980 = vsub.f32 %v6581, %v6752
    %v6981 = vsub.f32 %v6582, %v6752
    %v6982 = vsub.f32 %v6583, %v6752
    %v6983 = vsub.f32 %v6584, %v6752
    %v6984 = vsub.f32 %v6585, %v6752
    %v6985 = vsub.f32 %v6586, %v6752
    %v6986 = vsub.f32 %v6587, %v6752
    %v6987 = vsub.f32 %v6588, %v6752
    %v6988 = vsub.f32 %v6589, %v6752
    %v6989 = vsub.f32 %v6590, %v6752
    %v6990 = vsub.f32 %v6591, %v6752
    %v6991 = vsub.f32 %v6592, %v6752
    %v6992 = vsub.f32 %v6593, %v6752
    %v6993 = vsub.f32 %v6594, %v6752
    %v6994 = vsub.f32 %v6595, %v6752
    %v6995 = vsub.f32 %v6596, %v6752
    %v6996 = vsub.f32 %v6597, %v6752
    %v6997 = vsub.f32 %v6598, %v6752
    %v6998 = vsub.f32 %v6599, %v6752
    %v6999 = vsub.f32 %v6600, %v6752
    %v7000 = vsub.f32 %v6601, %v6752
    %v7001 = vsub.f32 %v6602, %v6752
    %v7002 = vsub.f32 %v6603, %v6752
    %v7003 = vsub.f32 %v6604, %v6752
    %v7004 = vsub.f32 %v6605, %v6752
    %v7005 = vsub.f32 %v6606, %v6752
    %v7006 = vsub.f32 %v6607, %v6752
    %v7007 = vsub.f32 %v6608, %v6752
    %v7008 = vsub.f32 %v6609, %v6752
    %v7009 = vsub.f32 %v6610, %v6752
    %v7010 = vsub.f32 %v6611, %v6752
    %v7011 = vsub.f32 %v6612, %v6752
    %v7012 = vsub.f32 %v6613, %v6752
    %v7013 = vsub.f32 %v6614, %v6752
    %v7014 = vsub.f32 %v6615, %v6752
    %v7015 = vsub.f32 %v6616, %v6752
    %v7016 = vsub.f32 %v6617, %v6752
    %v7017 = vadd.f32 %v6952, 1e-05
    %v7018 = vrsqrt.pop %v7017
    %v7019 = vmul.f32 %v6953, %v7018
    %v7020 = vmul.f32 %v6954, %v7018
    %v7021 = vmul.f32 %v6955, %v7018
    %v7022 = vmul.f32 %v6956, %v7018
    %v7023 = vmul.f32 %v6957, %v7018
    %v7024 = vmul.f32 %v6958, %v7018
    %v7025 = vmul.f32 %v6959, %v7018
    %v7026 = vmul.f32 %v6960, %v7018
    %v7027 = vmul.f32 %v6961, %v7018
    %v7028 = vmul.f32 %v6962, %v7018
    %v7029 = vmul.f32 %v6963, %v7018
    %v7030 = vmul.f32 %v6964, %v7018
    %v7031 = vmul.f32 %v6965, %v7018
    %v7032 = vmul.f32 %v6966, %v7018
    %v7033 = vmul.f32 %v6967, %v7018
    %v7034 = vmul.f32 %v6968, %v7018
    %v7035 = vmul.f32 %v6969, %v7018
    %v7036 = vmul.f32 %v6970, %v7018
    %v7037 = vmul.f32 %v6971, %v7018
    %v7038 = vmul.f32 %v6972, %v7018
    %v7039 = vmul.f32 %v6973, %v7018
    %v7040 = vmul.f32 %v6974, %v7018
    %v7041 = vmul.f32 %v6975, %v7018
    %v7042 = vmul.f32 %v6976, %v7018
    %v7043 = vmul.f32 %v6977, %v7018
    %v7044 = vmul.f32 %v6978, %v7018
    %v7045 = vmul.f32 %v6979, %v7018
    %v7046 = vmul.f32 %v6980, %v7018
    %v7047 = vmul.f32 %v6981, %v7018
    %v7048 = vmul.f32 %v6982, %v7018
    %v7049 = vmul.f32 %v6983, %v7018
    %v7050 = vmul.f32 %v6984, %v7018
    %v7051 = vmul.f32 %v6985, %v7018
    %v7052 = vmul.f32 %v6986, %v7018
    %v7053 = vmul.f32 %v6987, %v7018
    %v7054 = vmul.f32 %v6988, %v7018
    %v7055 = vmul.f32 %v6989, %v7018
    %v7056 = vmul.f32 %v6990, %v7018
    %v7057 = vmul.f32 %v6991, %v7018
    %v7058 = vmul.f32 %v6992, %v7018
    %v7059 = vmul.f32 %v6993, %v7018
    %v7060 = vmul.f32 %v6994, %v7018
    %v7061 = vmul.f32 %v6995, %v7018
    %v7062 = vmul.f32 %v6996, %v7018
    %v7063 = vmul.f32 %v6997, %v7018
    %v7064 = vmul.f32 %v6998, %v7018
    %v7065 = vmul.f32 %v6999, %v7018
    %v7066 = vmul.f32 %v7000, %v7018
    %v7067 = vmul.f32 %v7001, %v7018
    %v7068 = vmul.f32 %v7002, %v7018
    %v7069 = vmul.f32 %v7003, %v7018
    %v7070 = vmul.f32 %v7004, %v7018
    %v7071 = vmul.f32 %v7005, %v7018
    %v7072 = vmul.f32 %v7006, %v7018
    %v7073 = vmul.f32 %v7007, %v7018
    %v7074 = vmul.f32 %v7008, %v7018
    %v7075 = vmul.f32 %v7009, %v7018
    %v7076 = vmul.f32 %v7010, %v7018
    %v7077 = vmul.f32 %v7011, %v7018
    %v7078 = vmul.f32 %v7012, %v7018
    %v7079 = vmul.f32 %v7013, %v7018
    %v7080 = vmul.f32 %v7014, %v7018
    %v7081 = vmul.f32 %v7015, %v7018
    %v7082 = vmul.f32 %v7016, %v7018
    %v7083 = vld [vmem:[%s3] sm:$0x1]
    %v7085 = vlaneseq
    %v7086 = vshrl.u32 %v7085, 7
    %v7087 = vsub.s32 0, %v7086
    %v7088 = vrot.slane %v7083, %v7087
    %v7090 = vmul.f32 %v7019, %v7088
    %v7091 = vmul.f32 %v7020, %v7088
    %v7092 = vmul.f32 %v7021, %v7088
    %v7093 = vmul.f32 %v7022, %v7088
    %v7094 = vmul.f32 %v7023, %v7088
    %v7095 = vmul.f32 %v7024, %v7088
    %v7096 = vmul.f32 %v7025, %v7088
    %v7097 = vmul.f32 %v7026, %v7088
    %v7098 = vmul.f32 %v7027, %v7088
    %v7099 = vmul.f32 %v7028, %v7088
    %v7100 = vmul.f32 %v7029, %v7088
    %v7101 = vmul.f32 %v7030, %v7088
    %v7102 = vmul.f32 %v7031, %v7088
    %v7103 = vmul.f32 %v7032, %v7088
    %v7104 = vmul.f32 %v7033, %v7088
    %v7105 = vmul.f32 %v7034, %v7088
    %v7106 = vmul.f32 %v7035, %v7088
    %v7107 = vmul.f32 %v7036, %v7088
    %v7108 = vmul.f32 %v7037, %v7088
    %v7109 = vmul.f32 %v7038, %v7088
    %v7110 = vmul.f32 %v7039, %v7088
    %v7111 = vmul.f32 %v7040, %v7088
    %v7112 = vmul.f32 %v7041, %v7088
    %v7113 = vmul.f32 %v7042, %v7088
    %v7114 = vmul.f32 %v7043, %v7088
    %v7115 = vmul.f32 %v7044, %v7088
    %v7116 = vmul.f32 %v7045, %v7088
    %v7117 = vmul.f32 %v7046, %v7088
    %v7118 = vmul.f32 %v7047, %v7088
    %v7119 = vmul.f32 %v7048, %v7088
    %v7120 = vmul.f32 %v7049, %v7088
    %v7121 = vmul.f32 %v7050, %v7088
    %v7122 = vmul.f32 %v7051, %v7088
    %v7123 = vmul.f32 %v7052, %v7088
    %v7124 = vmul.f32 %v7053, %v7088
    %v7125 = vmul.f32 %v7054, %v7088
    %v7126 = vmul.f32 %v7055, %v7088
    %v7127 = vmul.f32 %v7056, %v7088
    %v7128 = vmul.f32 %v7057, %v7088
    %v7129 = vmul.f32 %v7058, %v7088
    %v7130 = vmul.f32 %v7059, %v7088
    %v7131 = vmul.f32 %v7060, %v7088
    %v7132 = vmul.f32 %v7061, %v7088
    %v7133 = vmul.f32 %v7062, %v7088
    %v7134 = vmul.f32 %v7063, %v7088
    %v7135 = vmul.f32 %v7064, %v7088
    %v7136 = vmul.f32 %v7065, %v7088
    %v7137 = vmul.f32 %v7066, %v7088
    %v7138 = vmul.f32 %v7067, %v7088
    %v7139 = vmul.f32 %v7068, %v7088
    %v7140 = vmul.f32 %v7069, %v7088
    %v7141 = vmul.f32 %v7070, %v7088
    %v7142 = vmul.f32 %v7071, %v7088
    %v7143 = vmul.f32 %v7072, %v7088
    %v7144 = vmul.f32 %v7073, %v7088
    %v7145 = vmul.f32 %v7074, %v7088
    %v7146 = vmul.f32 %v7075, %v7088
    %v7147 = vmul.f32 %v7076, %v7088
    %v7148 = vmul.f32 %v7077, %v7088
    %v7149 = vmul.f32 %v7078, %v7088
    %v7150 = vmul.f32 %v7079, %v7088
    %v7151 = vmul.f32 %v7080, %v7088
    %v7152 = vmul.f32 %v7081, %v7088
    %v7153 = vmul.f32 %v7082, %v7088
    %v7154 = vld [vmem:[%s4] sm:$0x1]
    %v7156 = vlaneseq
    %v7157 = vshrl.u32 %v7156, 7
    %v7158 = vsub.s32 0, %v7157
    %v7159 = vrot.slane %v7154, %v7158
    %v7161 = vadd.f32 %v7090, %v7159
    %v7162 = vadd.f32 %v7091, %v7159
    %v7163 = vadd.f32 %v7092, %v7159
    %v7164 = vadd.f32 %v7093, %v7159
    %v7165 = vadd.f32 %v7094, %v7159
    %v7166 = vadd.f32 %v7095, %v7159
    %v7167 = vadd.f32 %v7096, %v7159
    %v7168 = vadd.f32 %v7097, %v7159
    %v7169 = vadd.f32 %v7098, %v7159
    %v7170 = vadd.f32 %v7099, %v7159
    %v7171 = vadd.f32 %v7100, %v7159
    %v7172 = vadd.f32 %v7101, %v7159
    %v7173 = vadd.f32 %v7102, %v7159
    %v7174 = vadd.f32 %v7103, %v7159
    %v7175 = vadd.f32 %v7104, %v7159
    %v7176 = vadd.f32 %v7105, %v7159
    %v7177 = vadd.f32 %v7106, %v7159
    %v7178 = vadd.f32 %v7107, %v7159
    %v7179 = vadd.f32 %v7108, %v7159
    %v7180 = vadd.f32 %v7109, %v7159
    %v7181 = vadd.f32 %v7110, %v7159
    %v7182 = vadd.f32 %v7111, %v7159
    %v7183 = vadd.f32 %v7112, %v7159
    %v7184 = vadd.f32 %v7113, %v7159
    %v7185 = vadd.f32 %v7114, %v7159
    %v7186 = vadd.f32 %v7115, %v7159
    %v7187 = vadd.f32 %v7116, %v7159
    %v7188 = vadd.f32 %v7117, %v7159
    %v7189 = vadd.f32 %v7118, %v7159
    %v7190 = vadd.f32 %v7119, %v7159
    %v7191 = vadd.f32 %v7120, %v7159
    %v7192 = vadd.f32 %v7121, %v7159
    %v7193 = vadd.f32 %v7122, %v7159
    %v7194 = vadd.f32 %v7123, %v7159
    %v7195 = vadd.f32 %v7124, %v7159
    %v7196 = vadd.f32 %v7125, %v7159
    %v7197 = vadd.f32 %v7126, %v7159
    %v7198 = vadd.f32 %v7127, %v7159
    %v7199 = vadd.f32 %v7128, %v7159
    %v7200 = vadd.f32 %v7129, %v7159
    %v7201 = vadd.f32 %v7130, %v7159
    %v7202 = vadd.f32 %v7131, %v7159
    %v7203 = vadd.f32 %v7132, %v7159
    %v7204 = vadd.f32 %v7133, %v7159
    %v7205 = vadd.f32 %v7134, %v7159
    %v7206 = vadd.f32 %v7135, %v7159
    %v7207 = vadd.f32 %v7136, %v7159
    %v7208 = vadd.f32 %v7137, %v7159
    %v7209 = vadd.f32 %v7138, %v7159
    %v7210 = vadd.f32 %v7139, %v7159
    %v7211 = vadd.f32 %v7140, %v7159
    %v7212 = vadd.f32 %v7141, %v7159
    %v7213 = vadd.f32 %v7142, %v7159
    %v7214 = vadd.f32 %v7143, %v7159
    %v7215 = vadd.f32 %v7144, %v7159
    %v7216 = vadd.f32 %v7145, %v7159
    %v7217 = vadd.f32 %v7146, %v7159
    %v7218 = vadd.f32 %v7147, %v7159
    %v7219 = vadd.f32 %v7148, %v7159
    %v7220 = vadd.f32 %v7149, %v7159
    %v7221 = vadd.f32 %v7150, %v7159
    %v7222 = vadd.f32 %v7151, %v7159
    %v7223 = vadd.f32 %v7152, %v7159
    %v7224 = vadd.f32 %v7153, %v7159
    %v7225 = vmax.f32 %v7161, 0.0
    %v7226 = vmax.f32 %v7162, 0.0
    %v7227 = vmax.f32 %v7163, 0.0
    %v7228 = vmax.f32 %v7164, 0.0
    %v7229 = vmax.f32 %v7165, 0.0
    %v7230 = vmax.f32 %v7166, 0.0
    %v7231 = vmax.f32 %v7167, 0.0
    %v7232 = vmax.f32 %v7168, 0.0
    %v7233 = vmax.f32 %v7169, 0.0
    %v7234 = vmax.f32 %v7170, 0.0
    %v7235 = vmax.f32 %v7171, 0.0
    %v7236 = vmax.f32 %v7172, 0.0
    %v7237 = vmax.f32 %v7173, 0.0
    %v7238 = vmax.f32 %v7174, 0.0
    %v7239 = vmax.f32 %v7175, 0.0
    %v7240 = vmax.f32 %v7176, 0.0
    %v7241 = vmax.f32 %v7177, 0.0
    %v7242 = vmax.f32 %v7178, 0.0
    %v7243 = vmax.f32 %v7179, 0.0
    %v7244 = vmax.f32 %v7180, 0.0
    %v7245 = vmax.f32 %v7181, 0.0
    %v7246 = vmax.f32 %v7182, 0.0
    %v7247 = vmax.f32 %v7183, 0.0
    %v7248 = vmax.f32 %v7184, 0.0
    %v7249 = vmax.f32 %v7185, 0.0
    %v7250 = vmax.f32 %v7186, 0.0
    %v7251 = vmax.f32 %v7187, 0.0
    %v7252 = vmax.f32 %v7188, 0.0
    %v7253 = vmax.f32 %v7189, 0.0
    %v7254 = vmax.f32 %v7190, 0.0
    %v7255 = vmax.f32 %v7191, 0.0
    %v7256 = vmax.f32 %v7192, 0.0
    %v7257 = vmax.f32 %v7193, 0.0
    %v7258 = vmax.f32 %v7194, 0.0
    %v7259 = vmax.f32 %v7195, 0.0
    %v7260 = vmax.f32 %v7196, 0.0
    %v7261 = vmax.f32 %v7197, 0.0
    %v7262 = vmax.f32 %v7198, 0.0
    %v7263 = vmax.f32 %v7199, 0.0
    %v7264 = vmax.f32 %v7200, 0.0
    %v7265 = vmax.f32 %v7201, 0.0
    %v7266 = vmax.f32 %v7202, 0.0
    %v7267 = vmax.f32 %v7203, 0.0
    %v7268 = vmax.f32 %v7204, 0.0
    %v7269 = vmax.f32 %v7205, 0.0
    %v7270 = vmax.f32 %v7206, 0.0
    %v7271 = vmax.f32 %v7207, 0.0
    %v7272 = vmax.f32 %v7208, 0.0
    %v7273 = vmax.f32 %v7209, 0.0
    %v7274 = vmax.f32 %v7210, 0.0
    %v7275 = vmax.f32 %v7211, 0.0
    %v7276 = vmax.f32 %v7212, 0.0
    %v7277 = vmax.f32 %v7213, 0.0
    %v7278 = vmax.f32 %v7214, 0.0
    %v7279 = vmax.f32 %v7215, 0.0
    %v7280 = vmax.f32 %v7216, 0.0
    %v7281 = vmax.f32 %v7217, 0.0
    %v7282 = vmax.f32 %v7218, 0.0
    %v7283 = vmax.f32 %v7219, 0.0
    %v7284 = vmax.f32 %v7220, 0.0
    %v7285 = vmax.f32 %v7221, 0.0
    %v7286 = vmax.f32 %v7222, 0.0
    %v7287 = vmax.f32 %v7223, 0.0
    %v7288 = vmax.f32 %v7224, 0.0
    %7289 = vst.msk [vmem:[#allocation3] sm:$0xff] %vm6618, %v7225
    %7290 = vst.msk [vmem:[#allocation3 + $0x8] sm:$0xff] %vm6618, %v7226
    %7291 = vst.msk [vmem:[#allocation3 + $0x10] sm:$0xff] %vm6618, %v7227
    %7292 = vst.msk [vmem:[#allocation3 + $0x18] sm:$0xff] %vm6618, %v7228
    %7293 = vst.msk [vmem:[#allocation3 + $0x20] sm:$0xff] %vm6618, %v7229
    %7294 = vst.msk [vmem:[#allocation3 + $0x28] sm:$0xff] %vm6618, %v7230
    %7295 = vst.msk [vmem:[#allocation3 + $0x30] sm:$0xff] %vm6618, %v7231
    %7296 = vst.msk [vmem:[#allocation3 + $0x38] sm:$0xff] %vm6618, %v7232
    %7297 = vst.msk [vmem:[#allocation3 + $0x40] sm:$0xff] %vm6618, %v7233
    %7298 = vst.msk [vmem:[#allocation3 + $0x48] sm:$0xff] %vm6618, %v7234
    %7299 = vst.msk [vmem:[#allocation3 + $0x50] sm:$0xff] %vm6618, %v7235
    %7300 = vst.msk [vmem:[#allocation3 + $0x58] sm:$0xff] %vm6618, %v7236
    %7301 = vst.msk [vmem:[#allocation3 + $0x60] sm:$0xff] %vm6618, %v7237
    %7302 = vst.msk [vmem:[#allocation3 + $0x68] sm:$0xff] %vm6618, %v7238
    %7303 = vst.msk [vmem:[#allocation3 + $0x70] sm:$0xff] %vm6618, %v7239
    %7304 = vst.msk [vmem:[#allocation3 + $0x78] sm:$0xff] %vm6618, %v7240
    %7305 = vst.msk [vmem:[#allocation3 + $0x80] sm:$0xff] %vm6618, %v7241
    %7306 = vst.msk [vmem:[#allocation3 + $0x88] sm:$0xff] %vm6618, %v7242
    %7307 = vst.msk [vmem:[#allocation3 + $0x90] sm:$0xff] %vm6618, %v7243
    %7308 = vst.msk [vmem:[#allocation3 + $0x98] sm:$0xff] %vm6618, %v7244
    %7309 = vst.msk [vmem:[#allocation3 + $0xa0] sm:$0xff] %vm6618, %v7245
    %7310 = vst.msk [vmem:[#allocation3 + $0xa8] sm:$0xff] %vm6618, %v7246
    %7311 = vst.msk [vmem:[#allocation3 + $0xb0] sm:$0xff] %vm6618, %v7247
    %7312 = vst.msk [vmem:[#allocation3 + $0xb8] sm:$0xff] %vm6618, %v7248
    %7313 = vst.msk [vmem:[#allocation3 + $0xc0] sm:$0xff] %vm6618, %v7249
    %7314 = vst.msk [vmem:[#allocation3 + $0xc8] sm:$0xff] %vm6618, %v7250
    %7315 = vst.msk [vmem:[#allocation3 + $0xd0] sm:$0xff] %vm6618, %v7251
    %7316 = vst.msk [vmem:[#allocation3 + $0xd8] sm:$0xff] %vm6618, %v7252
    %7317 = vst.msk [vmem:[#allocation3 + $0xe0] sm:$0xff] %vm6618, %v7253
    %7318 = vst.msk [vmem:[#allocation3 + $0xe8] sm:$0xff] %vm6618, %v7254
    %7319 = vst.msk [vmem:[#allocation3 + $0xf0] sm:$0xff] %vm6618, %v7255
    %7320 = vst.msk [vmem:[#allocation3 + $0xf8] sm:$0xff] %vm6618, %v7256
    %7321 = vst.msk [vmem:[#allocation3 + $0x100] sm:$0xff] %vm6618, %v7257
    %7322 = vst.msk [vmem:[#allocation3 + $0x108] sm:$0xff] %vm6618, %v7258
    %7323 = vst.msk [vmem:[#allocation3 + $0x110] sm:$0xff] %vm6618, %v7259
    %7324 = vst.msk [vmem:[#allocation3 + $0x118] sm:$0xff] %vm6618, %v7260
    %7325 = vst.msk [vmem:[#allocation3 + $0x120] sm:$0xff] %vm6618, %v7261
    %7326 = vst.msk [vmem:[#allocation3 + $0x128] sm:$0xff] %vm6618, %v7262
    %7327 = vst.msk [vmem:[#allocation3 + $0x130] sm:$0xff] %vm6618, %v7263
    %7328 = vst.msk [vmem:[#allocation3 + $0x138] sm:$0xff] %vm6618, %v7264
    %7329 = vst.msk [vmem:[#allocation3 + $0x140] sm:$0xff] %vm6618, %v7265
    %7330 = vst.msk [vmem:[#allocation3 + $0x148] sm:$0xff] %vm6618, %v7266
    %7331 = vst.msk [vmem:[#allocation3 + $0x150] sm:$0xff] %vm6618, %v7267
    %7332 = vst.msk [vmem:[#allocation3 + $0x158] sm:$0xff] %vm6618, %v7268
    %7333 = vst.msk [vmem:[#allocation3 + $0x160] sm:$0xff] %vm6618, %v7269
    %7334 = vst.msk [vmem:[#allocation3 + $0x168] sm:$0xff] %vm6618, %v7270
    %7335 = vst.msk [vmem:[#allocation3 + $0x170] sm:$0xff] %vm6618, %v7271
    %7336 = vst.msk [vmem:[#allocation3 + $0x178] sm:$0xff] %vm6618, %v7272
    %7337 = vst.msk [vmem:[#allocation3 + $0x180] sm:$0xff] %vm6618, %v7273
    %7338 = vst.msk [vmem:[#allocation3 + $0x188] sm:$0xff] %vm6618, %v7274
    %7339 = vst.msk [vmem:[#allocation3 + $0x190] sm:$0xff] %vm6618, %v7275
    %7340 = vst.msk [vmem:[#allocation3 + $0x198] sm:$0xff] %vm6618, %v7276
    %7341 = vst.msk [vmem:[#allocation3 + $0x1a0] sm:$0xff] %vm6618, %v7277
    %7342 = vst.msk [vmem:[#allocation3 + $0x1a8] sm:$0xff] %vm6618, %v7278
    %7343 = vst.msk [vmem:[#allocation3 + $0x1b0] sm:$0xff] %vm6618, %v7279
    %7344 = vst.msk [vmem:[#allocation3 + $0x1b8] sm:$0xff] %vm6618, %v7280
    %7345 = vst.msk [vmem:[#allocation3 + $0x1c0] sm:$0xff] %vm6618, %v7281
    %7346 = vst.msk [vmem:[#allocation3 + $0x1c8] sm:$0xff] %vm6618, %v7282
    %7347 = vst.msk [vmem:[#allocation3 + $0x1d0] sm:$0xff] %vm6618, %v7283
    %7348 = vst.msk [vmem:[#allocation3 + $0x1d8] sm:$0xff] %vm6618, %v7284
    %7349 = vst.msk [vmem:[#allocation3 + $0x1e0] sm:$0xff] %vm6618, %v7285
    %7350 = vst.msk [vmem:[#allocation3 + $0x1e8] sm:$0xff] %vm6618, %v7286
    %7351 = vst.msk [vmem:[#allocation3 + $0x1f0] sm:$0xff] %vm6618, %v7287
    %7352 = vst.msk [vmem:[#allocation3 + $0x1f8] sm:$0xff] %vm6618, %v7288
    %v7353 = vld [vmem:[#allocation3] ss:$2 sm:$0xff]
    %s7354 = scalar_lea.vmem [#allocation3], 16
    %v7355 = vld [vmem:[%s7354] ss:$2 sm:$0xff]
    %s7356 = scalar_lea.vmem [#allocation3], 32
    %v7357 = vld [vmem:[%s7356] ss:$2 sm:$0xff]
    %s7358 = scalar_lea.vmem [#allocation3], 48
    %v7359 = vld [vmem:[%s7358] ss:$2 sm:$0xff]
    %s7360 = scalar_lea.vmem [#allocation3], 64
    %v7361 = vld [vmem:[%s7360] ss:$2 sm:$0xff]
    %s7362 = scalar_lea.vmem [#allocation3], 80
    %v7363 = vld [vmem:[%s7362] ss:$2 sm:$0xff]
    %s7364 = scalar_lea.vmem [#allocation3], 96
    %v7365 = vld [vmem:[%s7364] ss:$2 sm:$0xff]
    %s7366 = scalar_lea.vmem [#allocation3], 112
    %v7367 = vld [vmem:[%s7366] ss:$2 sm:$0xff]
    %s7368 = scalar_lea.vmem [#allocation3], 128
    %v7369 = vld [vmem:[%s7368] ss:$2 sm:$0xff]
    %s7370 = scalar_lea.vmem [#allocation3], 144
    %v7371 = vld [vmem:[%s7370] ss:$2 sm:$0xff]
    %s7372 = scalar_lea.vmem [#allocation3], 160
    %v7373 = vld [vmem:[%s7372] ss:$2 sm:$0xff]
    %s7374 = scalar_lea.vmem [#allocation3], 176
    %v7375 = vld [vmem:[%s7374] ss:$2 sm:$0xff]
    %s7376 = scalar_lea.vmem [#allocation3], 192
    %v7377 = vld [vmem:[%s7376] ss:$2 sm:$0xff]
    %s7378 = scalar_lea.vmem [#allocation3], 208
    %v7379 = vld [vmem:[%s7378] ss:$2 sm:$0xff]
    %s7380 = scalar_lea.vmem [#allocation3], 224
    %v7381 = vld [vmem:[%s7380] ss:$2 sm:$0xff]
    %s7382 = scalar_lea.vmem [#allocation3], 240
    %v7383 = vld [vmem:[%s7382] ss:$2 sm:$0xff]
    %s7384 = scalar_lea.vmem [#allocation3], 256
    %v7385 = vld [vmem:[%s7384] ss:$2 sm:$0xff]
    %s7386 = scalar_lea.vmem [#allocation3], 272
    %v7387 = vld [vmem:[%s7386] ss:$2 sm:$0xff]
    %s7388 = scalar_lea.vmem [#allocation3], 288
    %v7389 = vld [vmem:[%s7388] ss:$2 sm:$0xff]
    %s7390 = scalar_lea.vmem [#allocation3], 304
    %v7391 = vld [vmem:[%s7390] ss:$2 sm:$0xff]
    %s7392 = scalar_lea.vmem [#allocation3], 320
    %v7393 = vld [vmem:[%s7392] ss:$2 sm:$0xff]
    %s7394 = scalar_lea.vmem [#allocation3], 336
    %v7395 = vld [vmem:[%s7394] ss:$2 sm:$0xff]
    %s7396 = scalar_lea.vmem [#allocation3], 352
    %v7397 = vld [vmem:[%s7396] ss:$2 sm:$0xff]
    %s7398 = scalar_lea.vmem [#allocation3], 368
    %v7399 = vld [vmem:[%s7398] ss:$2 sm:$0xff]
    %s7400 = scalar_lea.vmem [#allocation3], 384
    %v7401 = vld [vmem:[%s7400] ss:$2 sm:$0xff]
    %s7402 = scalar_lea.vmem [#allocation3], 400
    %v7403 = vld [vmem:[%s7402] ss:$2 sm:$0xff]
    %s7404 = scalar_lea.vmem [#allocation3], 416
    %v7405 = vld [vmem:[%s7404] ss:$2 sm:$0xff]
    %s7406 = scalar_lea.vmem [#allocation3], 432
    %v7407 = vld [vmem:[%s7406] ss:$2 sm:$0xff]
    %s7408 = scalar_lea.vmem [#allocation3], 448
    %v7409 = vld [vmem:[%s7408] ss:$2 sm:$0xff]
    %s7410 = scalar_lea.vmem [#allocation3], 464
    %v7411 = vld [vmem:[%s7410] ss:$2 sm:$0xff]
    %s7412 = scalar_lea.vmem [#allocation3], 480
    %v7413 = vld [vmem:[%s7412] ss:$2 sm:$0xff]
    %s7414 = scalar_lea.vmem [#allocation3], 496
    %v7415 = vld [vmem:[%s7414] ss:$2 sm:$0xff]
    %s7416 = scalar_lea.vmem [#allocation3], 1
    %v7417 = vld [vmem:[%s7416] ss:$2 sm:$0xff]
    %s7418 = scalar_lea.vmem [#allocation3], 17
    %v7419 = vld [vmem:[%s7418] ss:$2 sm:$0xff]
    %s7420 = scalar_lea.vmem [#allocation3], 33
    %v7421 = vld [vmem:[%s7420] ss:$2 sm:$0xff]
    %s7422 = scalar_lea.vmem [#allocation3], 49
    %v7423 = vld [vmem:[%s7422] ss:$2 sm:$0xff]
    %s7424 = scalar_lea.vmem [#allocation3], 65
    %v7425 = vld [vmem:[%s7424] ss:$2 sm:$0xff]
    %s7426 = scalar_lea.vmem [#allocation3], 81
    %v7427 = vld [vmem:[%s7426] ss:$2 sm:$0xff]
    %s7428 = scalar_lea.vmem [#allocation3], 97
    %v7429 = vld [vmem:[%s7428] ss:$2 sm:$0xff]
    %s7430 = scalar_lea.vmem [#allocation3], 113
    %v7431 = vld [vmem:[%s7430] ss:$2 sm:$0xff]
    %s7432 = scalar_lea.vmem [#allocation3], 129
    %v7433 = vld [vmem:[%s7432] ss:$2 sm:$0xff]
    %s7434 = scalar_lea.vmem [#allocation3], 145
    %v7435 = vld [vmem:[%s7434] ss:$2 sm:$0xff]
    %s7436 = scalar_lea.vmem [#allocation3], 161
    %v7437 = vld [vmem:[%s7436] ss:$2 sm:$0xff]
    %s7438 = scalar_lea.vmem [#allocation3], 177
    %v7439 = vld [vmem:[%s7438] ss:$2 sm:$0xff]
    %s7440 = scalar_lea.vmem [#allocation3], 193
    %v7441 = vld [vmem:[%s7440] ss:$2 sm:$0xff]
    %s7442 = scalar_lea.vmem [#allocation3], 209
    %v7443 = vld [vmem:[%s7442] ss:$2 sm:$0xff]
    %s7444 = scalar_lea.vmem [#allocation3], 225
    %v7445 = vld [vmem:[%s7444] ss:$2 sm:$0xff]
    %s7446 = scalar_lea.vmem [#allocation3], 241
    %v7447 = vld [vmem:[%s7446] ss:$2 sm:$0xff]
    %s7448 = scalar_lea.vmem [#allocation3], 257
    %v7449 = vld [vmem:[%s7448] ss:$2 sm:$0xff]
    %s7450 = scalar_lea.vmem [#allocation3], 273
    %v7451 = vld [vmem:[%s7450] ss:$2 sm:$0xff]
    %s7452 = scalar_lea.vmem [#allocation3], 289
    %v7453 = vld [vmem:[%s7452] ss:$2 sm:$0xff]
    %s7454 = scalar_lea.vmem [#allocation3], 305
    %v7455 = vld [vmem:[%s7454] ss:$2 sm:$0xff]
    %s7456 = scalar_lea.vmem [#allocation3], 321
    %v7457 = vld [vmem:[%s7456] ss:$2 sm:$0xff]
    %s7458 = scalar_lea.vmem [#allocation3], 337
    %v7459 = vld [vmem:[%s7458] ss:$2 sm:$0xff]
    %s7460 = scalar_lea.vmem [#allocation3], 353
    %v7461 = vld [vmem:[%s7460] ss:$2 sm:$0xff]
    %s7462 = scalar_lea.vmem [#allocation3], 369
    %v7463 = vld [vmem:[%s7462] ss:$2 sm:$0xff]
    %s7464 = scalar_lea.vmem [#allocation3], 385
    %v7465 = vld [vmem:[%s7464] ss:$2 sm:$0xff]
    %s7466 = scalar_lea.vmem [#allocation3], 401
    %v7467 = vld [vmem:[%s7466] ss:$2 sm:$0xff]
    %s7468 = scalar_lea.vmem [#allocation3], 417
    %v7469 = vld [vmem:[%s7468] ss:$2 sm:$0xff]
    %s7470 = scalar_lea.vmem [#allocation3], 433
    %v7471 = vld [vmem:[%s7470] ss:$2 sm:$0xff]
    %s7472 = scalar_lea.vmem [#allocation3], 449
    %v7473 = vld [vmem:[%s7472] ss:$2 sm:$0xff]
    %s7474 = scalar_lea.vmem [#allocation3], 465
    %v7475 = vld [vmem:[%s7474] ss:$2 sm:$0xff]
    %s7476 = scalar_lea.vmem [#allocation3], 481
    %v7477 = vld [vmem:[%s7476] ss:$2 sm:$0xff]
    %s7478 = scalar_lea.vmem [#allocation3], 497
    %v7479 = vld [vmem:[%s7478] ss:$2 sm:$0xff]
    %v7480 = vmax.f32 %v7353, %v7417
    %v7481 = vmax.f32 %v7355, %v7419
    %v7482 = vmax.f32 %v7357, %v7421
    %v7483 = vmax.f32 %v7359, %v7423
    %v7484 = vmax.f32 %v7361, %v7425
    %v7485 = vmax.f32 %v7363, %v7427
    %v7486 = vmax.f32 %v7365, %v7429
    %v7487 = vmax.f32 %v7367, %v7431
    %v7488 = vmax.f32 %v7369, %v7433
    %v7489 = vmax.f32 %v7371, %v7435
    %v7490 = vmax.f32 %v7373, %v7437
    %v7491 = vmax.f32 %v7375, %v7439
    %v7492 = vmax.f32 %v7377, %v7441
    %v7493 = vmax.f32 %v7379, %v7443
    %v7494 = vmax.f32 %v7381, %v7445
    %v7495 = vmax.f32 %v7383, %v7447
    %v7496 = vmax.f32 %v7385, %v7449
    %v7497 = vmax.f32 %v7387, %v7451
    %v7498 = vmax.f32 %v7389, %v7453
    %v7499 = vmax.f32 %v7391, %v7455
    %v7500 = vmax.f32 %v7393, %v7457
    %v7501 = vmax.f32 %v7395, %v7459
    %v7502 = vmax.f32 %v7397, %v7461
    %v7503 = vmax.f32 %v7399, %v7463
    %v7504 = vmax.f32 %v7401, %v7465
    %v7505 = vmax.f32 %v7403, %v7467
    %v7506 = vmax.f32 %v7405, %v7469
    %v7507 = vmax.f32 %v7407, %v7471
    %v7508 = vmax.f32 %v7409, %v7473
    %v7509 = vmax.f32 %v7411, %v7475
    %v7510 = vmax.f32 %v7413, %v7477
    %v7511 = vmax.f32 %v7415, %v7479
    %v7512 = vsel %vm6618, %v7480, -inf
    %v7513 = vsel %vm6618, %v7481, -inf
    %v7514 = vmax.f32 %v7512, %v7513
    %v7515 = vsel %vm6618, %v7482, -inf
    %v7516 = vsel %vm6618, %v7483, -inf
    %v7517 = vmax.f32 %v7515, %v7516
    %v7518 = vsel %vm6618, %v7484, -inf
    %v7519 = vsel %vm6618, %v7485, -inf
    %v7520 = vmax.f32 %v7518, %v7519
    %v7521 = vsel %vm6618, %v7486, -inf
    %v7522 = vsel %vm6618, %v7487, -inf
    %v7523 = vmax.f32 %v7521, %v7522
    %v7524 = vsel %vm6618, %v7488, -inf
    %v7525 = vsel %vm6618, %v7489, -inf
    %v7526 = vmax.f32 %v7524, %v7525
    %v7527 = vsel %vm6618, %v7490, -inf
    %v7528 = vsel %vm6618, %v7491, -inf
    %v7529 = vmax.f32 %v7527, %v7528
    %v7530 = vsel %vm6618, %v7492, -inf
    %v7531 = vsel %vm6618, %v7493, -inf
    %v7532 = vmax.f32 %v7530, %v7531
    %v7533 = vsel %vm6618, %v7494, -inf
    %v7534 = vsel %vm6618, %v7495, -inf
    %v7535 = vmax.f32 %v7533, %v7534
    %v7536 = vsel %vm6618, %v7496, -inf
    %v7537 = vsel %vm6618, %v7497, -inf
    %v7538 = vmax.f32 %v7536, %v7537
    %v7539 = vsel %vm6618, %v7498, -inf
    %v7540 = vsel %vm6618, %v7499, -inf
    %v7541 = vmax.f32 %v7539, %v7540
    %v7542 = vsel %vm6618, %v7500, -inf
    %v7543 = vsel %vm6618, %v7501, -inf
    %v7544 = vmax.f32 %v7542, %v7543
    %v7545 = vsel %vm6618, %v7502, -inf
    %v7546 = vsel %vm6618, %v7503, -inf
    %v7547 = vmax.f32 %v7545, %v7546
    %v7548 = vsel %vm6618, %v7504, -inf
    %v7549 = vsel %vm6618, %v7505, -inf
    %v7550 = vmax.f32 %v7548, %v7549
    %v7551 = vsel %vm6618, %v7506, -inf
    %v7552 = vsel %vm6618, %v7507, -inf
    %v7553 = vmax.f32 %v7551, %v7552
    %v7554 = vsel %vm6618, %v7508, -inf
    %v7555 = vsel %vm6618, %v7509, -inf
    %v7556 = vmax.f32 %v7554, %v7555
    %v7557 = vsel %vm6618, %v7510, -inf
    %v7558 = vsel %vm6618, %v7511, -inf
    %v7559 = vmax.f32 %v7557, %v7558
    %7560 = vst.msk [vmem:[#allocation4] sm:$0xff] %vm6618, 0.0
    %vm7561 = vcmask 58368
    %7562 = vst.msk [vmem:[#allocation4 + $0x8] sm:$0x3] %vm7561, 0.0
    %7563 = vst.msk [vmem:[#allocation4 + $0x10] sm:$0xff] %vm6618, 0.0
    %7564 = vst.msk [vmem:[#allocation4 + $0x18] sm:$0x3] %vm7561, 0.0
    %7565 = vst.msk [vmem:[#allocation4 + $0x20] sm:$0xff] %vm6618, 0.0
    %7566 = vst.msk [vmem:[#allocation4 + $0x28] sm:$0x3] %vm7561, 0.0
    %7567 = vst.msk [vmem:[#allocation4 + $0x30] sm:$0xff] %vm6618, 0.0
    %7568 = vst.msk [vmem:[#allocation4 + $0x38] sm:$0x3] %vm7561, 0.0
    %7569 = vst.msk [vmem:[#allocation4 + $0x40] sm:$0xff] %vm6618, 0.0
    %7570 = vst.msk [vmem:[#allocation4 + $0x48] sm:$0x3] %vm7561, 0.0
    %7571 = vst.msk [vmem:[#allocation4 + $0x50] sm:$0xff] %vm6618, 0.0
    %7572 = vst.msk [vmem:[#allocation4 + $0x58] sm:$0x3] %vm7561, 0.0
    %7573 = vst.msk [vmem:[#allocation4 + $0x60] sm:$0xff] %vm6618, 0.0
    %7574 = vst.msk [vmem:[#allocation4 + $0x68] sm:$0x3] %vm7561, 0.0
    %7575 = vst.msk [vmem:[#allocation4 + $0x70] sm:$0xff] %vm6618, 0.0
    %7576 = vst.msk [vmem:[#allocation4 + $0x78] sm:$0x3] %vm7561, 0.0
    %7577 = vst.msk [vmem:[#allocation4 + $0x80] sm:$0xff] %vm6618, 0.0
    %7578 = vst.msk [vmem:[#allocation4 + $0x88] sm:$0x3] %vm7561, 0.0
    %7579 = vst.msk [vmem:[#allocation4 + $0x90] sm:$0xff] %vm6618, 0.0
    %7580 = vst.msk [vmem:[#allocation4 + $0x98] sm:$0x3] %vm7561, 0.0
    %7581 = vst.msk [vmem:[#allocation4 + $0xa0] sm:$0xff] %vm6618, 0.0
    %7582 = vst.msk [vmem:[#allocation4 + $0xa8] sm:$0x3] %vm7561, 0.0
    %7583 = vst.msk [vmem:[#allocation4 + $0xb0] sm:$0xff] %vm6618, 0.0
    %7584 = vst.msk [vmem:[#allocation4 + $0xb8] sm:$0x3] %vm7561, 0.0
    %7585 = vst.msk [vmem:[#allocation4 + $0xc0] sm:$0xff] %vm6618, 0.0
    %7586 = vst.msk [vmem:[#allocation4 + $0xc8] sm:$0x3] %vm7561, 0.0
    %7587 = vst.msk [vmem:[#allocation4 + $0xd0] sm:$0xff] %vm6618, 0.0
    %7588 = vst.msk [vmem:[#allocation4 + $0xd8] sm:$0x3] %vm7561, 0.0
    %7589 = vst.msk [vmem:[#allocation4 + $0xe0] sm:$0xff] %vm6618, 0.0
    %7590 = vst.msk [vmem:[#allocation4 + $0xe8] sm:$0x3] %vm7561, 0.0
    %7591 = vst.msk [vmem:[#allocation4 + $0xf0] sm:$0xff] %vm6618, 0.0
    %7592 = vst.msk [vmem:[#allocation4 + $0xf8] sm:$0x3] %vm7561, 0.0
    %7593 = vst.msk [vmem:[#allocation4 + $0x100] sm:$0xff] %vm6618, 0.0
    %7594 = vst.msk [vmem:[#allocation4 + $0x108] sm:$0x3] %vm7561, 0.0
    %7595 = vst.msk [vmem:[#allocation4 + $0x110] sm:$0xff] %vm6618, 0.0
    %7596 = vst.msk [vmem:[#allocation4 + $0x118] sm:$0x3] %vm7561, 0.0
    %7597 = vst.msk [vmem:[#allocation4 + $0x120] sm:$0xff] %vm6618, 0.0
    %7598 = vst.msk [vmem:[#allocation4 + $0x128] sm:$0x3] %vm7561, 0.0
    %7599 = vst.msk [vmem:[#allocation4 + $0x130] sm:$0xff] %vm6618, 0.0
    %7600 = vst.msk [vmem:[#allocation4 + $0x138] sm:$0x3] %vm7561, 0.0
    %s7601 = scalar_lea.vmem [#allocation4], 16
    %7602 = vst.msk [vmem:[%s7601 + $0x1] sm:$0xff] %vm6618, %v7514
    %7603 = vst.msk [vmem:[%s7601 + $0x11] sm:$0xff] %vm6618, %v7517
    %7604 = vst.msk [vmem:[%s7601 + $0x21] sm:$0xff] %vm6618, %v7520
    %7605 = vst.msk [vmem:[%s7601 + $0x31] sm:$0xff] %vm6618, %v7523
    %7606 = vst.msk [vmem:[%s7601 + $0x41] sm:$0xff] %vm6618, %v7526
    %7607 = vst.msk [vmem:[%s7601 + $0x51] sm:$0xff] %vm6618, %v7529
    %7608 = vst.msk [vmem:[%s7601 + $0x61] sm:$0xff] %vm6618, %v7532
    %7609 = vst.msk [vmem:[%s7601 + $0x71] sm:$0xff] %vm6618, %v7535
    %7610 = vst.msk [vmem:[%s7601 + $0xa1] sm:$0xff] %vm6618, %v7538
    %7611 = vst.msk [vmem:[%s7601 + $0xb1] sm:$0xff] %vm6618, %v7541
    %7612 = vst.msk [vmem:[%s7601 + $0xc1] sm:$0xff] %vm6618, %v7544
    %7613 = vst.msk [vmem:[%s7601 + $0xd1] sm:$0xff] %vm6618, %v7547
    %7614 = vst.msk [vmem:[%s7601 + $0xe1] sm:$0xff] %vm6618, %v7550
    %7615 = vst.msk [vmem:[%s7601 + $0xf1] sm:$0xff] %vm6618, %v7553
    %7616 = vst.msk [vmem:[%s7601 + $0x101] sm:$0xff] %vm6618, %v7556
    %7617 = vst.msk [vmem:[%s7601 + $0x111] sm:$0xff] %vm6618, %v7559
    %v7618 = vld [vmem:[#allocation4] sm:$0xff]
    %v7619 = vld [vmem:[#allocation4 + $0x10] sm:$0xff]
    %v7620 = vld [vmem:[#allocation4 + $0x20] sm:$0xff]
    %v7621 = vld [vmem:[#allocation4 + $0x30] sm:$0xff]
    %v7622 = vld [vmem:[#allocation4 + $0x40] sm:$0xff]
    %v7623 = vld [vmem:[#allocation4 + $0x50] sm:$0xff]
    %v7624 = vld [vmem:[#allocation4 + $0x60] sm:$0xff]
    %v7625 = vld [vmem:[#allocation4 + $0x70] sm:$0xff]
    %v7626 = vld [vmem:[#allocation4 + $0xa0] sm:$0xff]
    %v7627 = vld [vmem:[#allocation4 + $0xb0] sm:$0xff]
    %v7628 = vld [vmem:[#allocation4 + $0xc0] sm:$0xff]
    %v7629 = vld [vmem:[#allocation4 + $0xd0] sm:$0xff]
    %v7630 = vld [vmem:[#allocation4 + $0xe0] sm:$0xff]
    %v7631 = vld [vmem:[#allocation4 + $0xf0] sm:$0xff]
    %v7632 = vld [vmem:[#allocation4 + $0x100] sm:$0xff]
    %v7633 = vld [vmem:[#allocation4 + $0x110] sm:$0xff]
    %v7634 = vld [vmem:[%s5] sm:$0xff]
    %v7635 = vld [vmem:[#allocation4 + $0x1] sm:$0xff]
    %v7636 = vld [vmem:[#allocation4 + $0x11] sm:$0xff]
    %v7637 = vld [vmem:[#allocation4 + $0x21] sm:$0xff]
    %v7638 = vld [vmem:[#allocation4 + $0x31] sm:$0xff]
    %v7639 = vld [vmem:[#allocation4 + $0x41] sm:$0xff]
    %v7640 = vld [vmem:[#allocation4 + $0x51] sm:$0xff]
    %v7641 = vld [vmem:[#allocation4 + $0x61] sm:$0xff]
    %v7642 = vld [vmem:[#allocation4 + $0x71] sm:$0xff]
    %v7643 = vld [vmem:[#allocation4 + $0xa1] sm:$0xff]
    %v7644 = vld [vmem:[#allocation4 + $0xb1] sm:$0xff]
    %v7645 = vld [vmem:[#allocation4 + $0xc1] sm:$0xff]
    %v7646 = vld [vmem:[#allocation4 + $0xd1] sm:$0xff]
    %v7647 = vld [vmem:[#allocation4 + $0xe1] sm:$0xff]
    %v7648 = vld [vmem:[#allocation4 + $0xf1] sm:$0xff]
    %v7649 = vld [vmem:[#allocation4 + $0x101] sm:$0xff]
    %v7650 = vld [vmem:[#allocation4 + $0x111] sm:$0xff]
    %s7651 = scalar_lea.vmem %s5, 8
    %v7652 = vld [vmem:[%s7651] sm:$0xff]
    %v7654 = vsel %vm6618, %v7635, 0
    %v7657 = vsel %vm6618, %v7636, 0
    %v7660 = vsel %vm6618, %v7637, 0
    %v7663 = vsel %vm6618, %v7638, 0
    %v7666 = vsel %vm6618, %v7639, 0
    %v7669 = vsel %vm6618, %v7640, 0
    %v7672 = vsel %vm6618, %v7641, 0
    %v7675 = vsel %vm6618, %v7642, 0
    %v7678 = vsel %vm6618, %v7643, 0
    %v7681 = vsel %vm6618, %v7644, 0
    %v7684 = vsel %vm6618, %v7645, 0
    %v7687 = vsel %vm6618, %v7646, 0
    %v7690 = vsel %vm6618, %v7647, 0
    %v7693 = vsel %vm6618, %v7648, 0
    %v7696 = vsel %vm6618, %v7649, 0
    %v7699 = vsel %vm6618, %v7650, 0
    %7701 = vmatprep.subr.mxu0 0.0
    %7702 = vmatpush1.msra.mxu0 0.0
    %7703 = vmatprep.subr.mxu0 0.0
    %7704 = vmatpush1.msra.mxu0 0.0
    %7705 = vmatprep.subr.mxu0 0.0
    %7706 = vmatpush1.msra.mxu0 0.0
    %7707 = vmatprep.subr.mxu0 0.0
    %7708 = vmatpush1.msra.mxu0 0.0
    %7709 = vmatprep.subr.mxu0 0.0
    %7710 = vmatpush1.msra.mxu0 0.0
    %7711 = vmatprep.subr.mxu0 0.0
    %7712 = vmatpush1.msra.mxu0 0.0
    %7713 = vmatprep.subr.mxu0 0.0
    %7714 = vmatpush1.msra.mxu0 0.0
    %7715 = vmatprep.subr.mxu0 0.0
    %7716 = vmatpush1.msra.mxu0 0.0
    %7717 = vmatprep.subr.mxu0 0.0
    %7718 = vmatpush1.msra.mxu0 0.0
    %7719 = vmatprep.subr.mxu0 0.0
    %7720 = vmatpush1.msra.mxu0 0.0
    %7721 = vmatprep.subr.mxu0 0.0
    %7722 = vmatpush1.msra.mxu0 0.0
    %7723 = vmatprep.subr.mxu0 0.0
    %7724 = vmatpush1.msra.mxu0 0.0
    %7725 = vmatprep.subr.mxu0 0.0
    %7726 = vmatpush1.msra.mxu0 0.0
    %7727 = vmatprep.subr.mxu0 0.0
    %7728 = vmatpush1.msra.mxu0 0.0
    %7729 = vmatprep.subr.mxu0 0.0
    %7730 = vmatpush1.msra.mxu0 0.0
    %7731 = vmatprep.subr.mxu0 0.0
    %7732 = vmatpush1.msra.mxu0 %v7652
    %7733 = vmatprep.subr.mxu0 0.0
    %7734 = vmatpush2.msra.mxu0 0.0
    %7735 = vmatprep.subr.mxu0 0.0
    %7736 = vmatpush2.msra.mxu0 0.0
    %7737 = vmatprep.subr.mxu0 0.0
    %7738 = vmatpush2.msra.mxu0 0.0
    %7739 = vmatprep.subr.mxu0 0.0
    %7740 = vmatpush2.msra.mxu0 0.0
    %7741 = vmatprep.subr.mxu0 0.0
    %7742 = vmatpush2.msra.mxu0 0.0
    %7743 = vmatprep.subr.mxu0 0.0
    %7744 = vmatpush2.msra.mxu0 0.0
    %7745 = vmatprep.subr.mxu0 0.0
    %7746 = vmatpush2.msra.mxu0 0.0
    %7747 = vmatprep.subr.mxu0 0.0
    %7748 = vmatpush2.msra.mxu0 0.0
    %7749 = vmatprep.subr.mxu0 0.0
    %7750 = vmatpush2.msra.mxu0 0.0
    %7751 = vmatprep.subr.mxu0 0.0
    %7752 = vmatpush2.msra.mxu0 0.0
    %7753 = vmatprep.subr.mxu0 0.0
    %7754 = vmatpush2.msra.mxu0 0.0
    %7755 = vmatprep.subr.mxu0 0.0
    %7756 = vmatpush2.msra.mxu0 0.0
    %7757 = vmatprep.subr.mxu0 0.0
    %7758 = vmatpush2.msra.mxu0 0.0
    %7759 = vmatprep.subr.mxu0 0.0
    %7760 = vmatpush2.msra.mxu0 0.0
    %7761 = vmatprep.subr.mxu0 0.0
    %7762 = vmatpush2.msra.mxu0 0.0
    %7763 = vmatprep.subr.mxu0 0.0
    %7764 = vmatpush2.msra.mxu0 0.0
    %7765 = vmatprep.mubr.f32.mxu0 0.0
    %7766 = vmatmul.mubr.f32.gmra.mxu0 %v7654
    %v7767 = vpop.f32.mrf.mxu0
    %v7768 = vadd.f32 0.0, %v7767
    %v7769 = vpop.f32.mrf.mxu0
    %7770 = vmatprep.mubr.f32.mxu0 0.0
    %7771 = vmatmul.mubr.f32.gmra.mxu0 %v7657
    %v7772 = vpop.f32.mrf.mxu0
    %v7773 = vadd.f32 0.0, %v7772
    %v7774 = vpop.f32.mrf.mxu0
    %7775 = vmatprep.mubr.f32.mxu0 0.0
    %7776 = vmatmul.mubr.f32.gmra.mxu0 %v7660
    %v7777 = vpop.f32.mrf.mxu0
    %v7778 = vadd.f32 0.0, %v7777
    %v7779 = vpop.f32.mrf.mxu0
    %7780 = vmatprep.mubr.f32.mxu0 0.0
    %7781 = vmatmul.mubr.f32.gmra.mxu0 %v7663
    %v7782 = vpop.f32.mrf.mxu0
    %v7783 = vadd.f32 0.0, %v7782
    %v7784 = vpop.f32.mrf.mxu0
    %7785 = vmatprep.mubr.f32.mxu0 0.0
    %7786 = vmatmul.mubr.f32.gmra.mxu0 %v7666
    %v7787 = vpop.f32.mrf.mxu0
    %v7788 = vadd.f32 0.0, %v7787
    %v7789 = vpop.f32.mrf.mxu0
    %7790 = vmatprep.mubr.f32.mxu0 0.0
    %7791 = vmatmul.mubr.f32.gmra.mxu0 %v7669
    %v7792 = vpop.f32.mrf.mxu0
    %v7793 = vadd.f32 0.0, %v7792
    %v7794 = vpop.f32.mrf.mxu0
    %7795 = vmatprep.mubr.f32.mxu0 0.0
    %7796 = vmatmul.mubr.f32.gmra.mxu0 %v7672
    %v7797 = vpop.f32.mrf.mxu0
    %v7798 = vadd.f32 0.0, %v7797
    %v7799 = vpop.f32.mrf.mxu0
    %7800 = vmatprep.mubr.f32.mxu0 0.0
    %7801 = vmatmul.mubr.f32.gmra.mxu0 %v7675
    %v7802 = vpop.f32.mrf.mxu0
    %v7803 = vadd.f32 0.0, %v7802
    %v7804 = vpop.f32.mrf.mxu0
    %7805 = vmatprep.mubr.f32.mxu0 0.0
    %7806 = vmatmul.mubr.f32.gmra.mxu0 %v7678
    %v7807 = vpop.f32.mrf.mxu0
    %v7808 = vadd.f32 0.0, %v7807
    %v7809 = vpop.f32.mrf.mxu0
    %7810 = vmatprep.mubr.f32.mxu0 0.0
    %7811 = vmatmul.mubr.f32.gmra.mxu0 %v7681
    %v7812 = vpop.f32.mrf.mxu0
    %v7813 = vadd.f32 0.0, %v7812
    %v7814 = vpop.f32.mrf.mxu0
    %7815 = vmatprep.mubr.f32.mxu0 0.0
    %7816 = vmatmul.mubr.f32.gmra.mxu0 %v7684
    %v7817 = vpop.f32.mrf.mxu0
    %v7818 = vadd.f32 0.0, %v7817
    %v7819 = vpop.f32.mrf.mxu0
    %7820 = vmatprep.mubr.f32.mxu0 0.0
    %7821 = vmatmul.mubr.f32.gmra.mxu0 %v7687
    %v7822 = vpop.f32.mrf.mxu0
    %v7823 = vadd.f32 0.0, %v7822
    %v7824 = vpop.f32.mrf.mxu0
    %7825 = vmatprep.mubr.f32.mxu0 0.0
    %7826 = vmatmul.mubr.f32.gmra.mxu0 %v7690
    %v7827 = vpop.f32.mrf.mxu0
    %v7828 = vadd.f32 0.0, %v7827
    %v7829 = vpop.f32.mrf.mxu0
    %7830 = vmatprep.mubr.f32.mxu0 0.0
    %7831 = vmatmul.mubr.f32.gmra.mxu0 %v7693
    %v7832 = vpop.f32.mrf.mxu0
    %v7833 = vadd.f32 0.0, %v7832
    %v7834 = vpop.f32.mrf.mxu0
    %7835 = vmatprep.mubr.f32.mxu0 0.0
    %7836 = vmatmul.mubr.f32.gmra.mxu0 %v7696
    %v7837 = vpop.f32.mrf.mxu0
    %v7838 = vadd.f32 0.0, %v7837
    %v7839 = vpop.f32.mrf.mxu0
    %7840 = vmatprep.mubr.f32.mxu0 0.0
    %7841 = vmatmul.mubr.f32.gmra.mxu0 %v7699
    %v7842 = vpop.f32.mrf.mxu0
    %v7843 = vadd.f32 0.0, %v7842
    %v7844 = vpop.f32.mrf.mxu0
    %7845 = vdwg.mxu0
    %v7847 = vsel %vm6618, %v7618, 0
    %v7850 = vsel %vm6618, %v7619, 0
    %v7853 = vsel %vm6618, %v7620, 0
    %v7856 = vsel %vm6618, %v7621, 0
    %v7859 = vsel %vm6618, %v7622, 0
    %v7862 = vsel %vm6618, %v7623, 0
    %v7865 = vsel %vm6618, %v7624, 0
    %v7868 = vsel %vm6618, %v7625, 0
    %v7871 = vsel %vm6618, %v7626, 0
    %v7874 = vsel %vm6618, %v7627, 0
    %v7877 = vsel %vm6618, %v7628, 0
    %v7880 = vsel %vm6618, %v7629, 0
    %v7883 = vsel %vm6618, %v7630, 0
    %v7886 = vsel %vm6618, %v7631, 0
    %v7889 = vsel %vm6618, %v7632, 0
    %v7892 = vsel %vm6618, %v7633, 0
    %7894 = vmatprep.subr.mxu0 0.0
    %7895 = vmatpush1.msra.mxu0 0.0
    %7896 = vmatprep.subr.mxu0 0.0
    %7897 = vmatpush1.msra.mxu0 0.0
    %7898 = vmatprep.subr.mxu0 0.0
    %7899 = vmatpush1.msra.mxu0 0.0
    %7900 = vmatprep.subr.mxu0 0.0
    %7901 = vmatpush1.msra.mxu0 0.0
    %7902 = vmatprep.subr.mxu0 0.0
    %7903 = vmatpush1.msra.mxu0 0.0
    %7904 = vmatprep.subr.mxu0 0.0
    %7905 = vmatpush1.msra.mxu0 0.0
    %7906 = vmatprep.subr.mxu0 0.0
    %7907 = vmatpush1.msra.mxu0 0.0
    %7908 = vmatprep.subr.mxu0 0.0
    %7909 = vmatpush1.msra.mxu0 0.0
    %7910 = vmatprep.subr.mxu0 0.0
    %7911 = vmatpush1.msra.mxu0 0.0
    %7912 = vmatprep.subr.mxu0 0.0
    %7913 = vmatpush1.msra.mxu0 0.0
    %7914 = vmatprep.subr.mxu0 0.0
    %7915 = vmatpush1.msra.mxu0 0.0
    %7916 = vmatprep.subr.mxu0 0.0
    %7917 = vmatpush1.msra.mxu0 0.0
    %7918 = vmatprep.subr.mxu0 0.0
    %7919 = vmatpush1.msra.mxu0 0.0
    %7920 = vmatprep.subr.mxu0 0.0
    %7921 = vmatpush1.msra.mxu0 0.0
    %7922 = vmatprep.subr.mxu0 0.0
    %7923 = vmatpush1.msra.mxu0 0.0
    %7924 = vmatprep.subr.mxu0 0.0
    %7925 = vmatpush1.msra.mxu0 %v7634
    %7926 = vmatprep.subr.mxu0 0.0
    %7927 = vmatpush2.msra.mxu0 0.0
    %7928 = vmatprep.subr.mxu0 0.0
    %7929 = vmatpush2.msra.mxu0 0.0
    %7930 = vmatprep.subr.mxu0 0.0
    %7931 = vmatpush2.msra.mxu0 0.0
    %7932 = vmatprep.subr.mxu0 0.0
    %7933 = vmatpush2.msra.mxu0 0.0
    %7934 = vmatprep.subr.mxu0 0.0
    %7935 = vmatpush2.msra.mxu0 0.0
    %7936 = vmatprep.subr.mxu0 0.0
    %7937 = vmatpush2.msra.mxu0 0.0
    %7938 = vmatprep.subr.mxu0 0.0
    %7939 = vmatpush2.msra.mxu0 0.0
    %7940 = vmatprep.subr.mxu0 0.0
    %7941 = vmatpush2.msra.mxu0 0.0
    %7942 = vmatprep.subr.mxu0 0.0
    %7943 = vmatpush2.msra.mxu0 0.0
    %7944 = vmatprep.subr.mxu0 0.0
    %7945 = vmatpush2.msra.mxu0 0.0
    %7946 = vmatprep.subr.mxu0 0.0
    %7947 = vmatpush2.msra.mxu0 0.0
    %7948 = vmatprep.subr.mxu0 0.0
    %7949 = vmatpush2.msra.mxu0 0.0
    %7950 = vmatprep.subr.mxu0 0.0
    %7951 = vmatpush2.msra.mxu0 0.0
    %7952 = vmatprep.subr.mxu0 0.0
    %7953 = vmatpush2.msra.mxu0 0.0
    %7954 = vmatprep.subr.mxu0 0.0
    %7955 = vmatpush2.msra.mxu0 0.0
    %7956 = vmatprep.subr.mxu0 0.0
    %7957 = vmatpush2.msra.mxu0 0.0
    %7958 = vmatprep.mubr.f32.mxu0 0.0
    %7959 = vmatmul.mubr.f32.gmra.mxu0 %v7847
    %v7960 = vpop.f32.mrf.mxu0
    %v7961 = vadd.f32 %v7768, %v7960
    %v7962 = vpop.f32.mrf.mxu0
    %7963 = vmatprep.mubr.f32.mxu0 0.0
    %7964 = vmatmul.mubr.f32.gmra.mxu0 %v7850
    %v7965 = vpop.f32.mrf.mxu0
    %v7966 = vadd.f32 %v7773, %v7965
    %v7967 = vpop.f32.mrf.mxu0
    %7968 = vmatprep.mubr.f32.mxu0 0.0
    %7969 = vmatmul.mubr.f32.gmra.mxu0 %v7853
    %v7970 = vpop.f32.mrf.mxu0
    %v7971 = vadd.f32 %v7778, %v7970
    %v7972 = vpop.f32.mrf.mxu0
    %7973 = vmatprep.mubr.f32.mxu0 0.0
    %7974 = vmatmul.mubr.f32.gmra.mxu0 %v7856
    %v7975 = vpop.f32.mrf.mxu0
    %v7976 = vadd.f32 %v7783, %v7975
    %v7977 = vpop.f32.mrf.mxu0
    %7978 = vmatprep.mubr.f32.mxu0 0.0
    %7979 = vmatmul.mubr.f32.gmra.mxu0 %v7859
    %v7980 = vpop.f32.mrf.mxu0
    %v7981 = vadd.f32 %v7788, %v7980
    %v7982 = vpop.f32.mrf.mxu0
    %7983 = vmatprep.mubr.f32.mxu0 0.0
    %7984 = vmatmul.mubr.f32.gmra.mxu0 %v7862
    %v7985 = vpop.f32.mrf.mxu0
    %v7986 = vadd.f32 %v7793, %v7985
    %v7987 = vpop.f32.mrf.mxu0
    %7988 = vmatprep.mubr.f32.mxu0 0.0
    %7989 = vmatmul.mubr.f32.gmra.mxu0 %v7865
    %v7990 = vpop.f32.mrf.mxu0
    %v7991 = vadd.f32 %v7798, %v7990
    %v7992 = vpop.f32.mrf.mxu0
    %7993 = vmatprep.mubr.f32.mxu0 0.0
    %7994 = vmatmul.mubr.f32.gmra.mxu0 %v7868
    %v7995 = vpop.f32.mrf.mxu0
    %v7996 = vadd.f32 %v7803, %v7995
    %v7997 = vpop.f32.mrf.mxu0
    %7998 = vmatprep.mubr.f32.mxu0 0.0
    %7999 = vmatmul.mubr.f32.gmra.mxu0 %v7871
    %v8000 = vpop.f32.mrf.mxu0
    %v8001 = vadd.f32 %v7808, %v8000
    %v8002 = vpop.f32.mrf.mxu0
    %8003 = vmatprep.mubr.f32.mxu0 0.0
    %8004 = vmatmul.mubr.f32.gmra.mxu0 %v7874
    %v8005 = vpop.f32.mrf.mxu0
    %v8006 = vadd.f32 %v7813, %v8005
    %v8007 = vpop.f32.mrf.mxu0
    %8008 = vmatprep.mubr.f32.mxu0 0.0
    %8009 = vmatmul.mubr.f32.gmra.mxu0 %v7877
    %v8010 = vpop.f32.mrf.mxu0
    %v8011 = vadd.f32 %v7818, %v8010
    %v8012 = vpop.f32.mrf.mxu0
    %8013 = vmatprep.mubr.f32.mxu0 0.0
    %8014 = vmatmul.mubr.f32.gmra.mxu0 %v7880
    %v8015 = vpop.f32.mrf.mxu0
    %v8016 = vadd.f32 %v7823, %v8015
    %v8017 = vpop.f32.mrf.mxu0
    %8018 = vmatprep.mubr.f32.mxu0 0.0
    %8019 = vmatmul.mubr.f32.gmra.mxu0 %v7883
    %v8020 = vpop.f32.mrf.mxu0
    %v8021 = vadd.f32 %v7828, %v8020
    %v8022 = vpop.f32.mrf.mxu0
    %8023 = vmatprep.mubr.f32.mxu0 0.0
    %8024 = vmatmul.mubr.f32.gmra.mxu0 %v7886
    %v8025 = vpop.f32.mrf.mxu0
    %v8026 = vadd.f32 %v7833, %v8025
    %v8027 = vpop.f32.mrf.mxu0
    %8028 = vmatprep.mubr.f32.mxu0 0.0
    %8029 = vmatmul.mubr.f32.gmra.mxu0 %v7889
    %v8030 = vpop.f32.mrf.mxu0
    %v8031 = vadd.f32 %v7838, %v8030
    %v8032 = vpop.f32.mrf.mxu0
    %8033 = vmatprep.mubr.f32.mxu0 0.0
    %8034 = vmatmul.mubr.f32.gmra.mxu0 %v7892
    %v8035 = vpop.f32.mrf.mxu0
    %v8036 = vadd.f32 %v7843, %v8035
    %v8037 = vpop.f32.mrf.mxu0
    %8038 = vdwg.mxu0
    %v8039 = vld [vmem:[#allocation4 + $0x2] sm:$0xff]
    %v8040 = vld [vmem:[#allocation4 + $0x12] sm:$0xff]
    %v8041 = vld [vmem:[#allocation4 + $0x22] sm:$0xff]
    %v8042 = vld [vmem:[#allocation4 + $0x32] sm:$0xff]
    %v8043 = vld [vmem:[#allocation4 + $0x42] sm:$0xff]
    %v8044 = vld [vmem:[#allocation4 + $0x52] sm:$0xff]
    %v8045 = vld [vmem:[#allocation4 + $0x62] sm:$0xff]
    %v8046 = vld [vmem:[#allocation4 + $0x72] sm:$0xff]
    %v8047 = vld [vmem:[#allocation4 + $0xa2] sm:$0xff]
    %v8048 = vld [vmem:[#allocation4 + $0xb2] sm:$0xff]
    %v8049 = vld [vmem:[#allocation4 + $0xc2] sm:$0xff]
    %v8050 = vld [vmem:[#allocation4 + $0xd2] sm:$0xff]
    %v8051 = vld [vmem:[#allocation4 + $0xe2] sm:$0xff]
    %v8052 = vld [vmem:[#allocation4 + $0xf2] sm:$0xff]
    %v8053 = vld [vmem:[#allocation4 + $0x102] sm:$0xff]
    %v8054 = vld [vmem:[#allocation4 + $0x112] sm:$0xff]
    %s8055 = scalar_lea.vmem %s5, 16
    %v8056 = vld [vmem:[%s8055] sm:$0xff]
    %v8058 = vsel %vm6618, %v8039, 0
    %v8061 = vsel %vm6618, %v8040, 0
    %v8064 = vsel %vm6618, %v8041, 0
    %v8067 = vsel %vm6618, %v8042, 0
    %v8070 = vsel %vm6618, %v8043, 0
    %v8073 = vsel %vm6618, %v8044, 0
    %v8076 = vsel %vm6618, %v8045, 0
    %v8079 = vsel %vm6618, %v8046, 0
    %v8082 = vsel %vm6618, %v8047, 0
    %v8085 = vsel %vm6618, %v8048, 0
    %v8088 = vsel %vm6618, %v8049, 0
    %v8091 = vsel %vm6618, %v8050, 0
    %v8094 = vsel %vm6618, %v8051, 0
    %v8097 = vsel %vm6618, %v8052, 0
    %v8100 = vsel %vm6618, %v8053, 0
    %v8103 = vsel %vm6618, %v8054, 0
    %8105 = vmatprep.subr.mxu0 0.0
    %8106 = vmatpush1.msra.mxu0 0.0
    %8107 = vmatprep.subr.mxu0 0.0
    %8108 = vmatpush1.msra.mxu0 0.0
    %8109 = vmatprep.subr.mxu0 0.0
    %8110 = vmatpush1.msra.mxu0 0.0
    %8111 = vmatprep.subr.mxu0 0.0
    %8112 = vmatpush1.msra.mxu0 0.0
    %8113 = vmatprep.subr.mxu0 0.0
    %8114 = vmatpush1.msra.mxu0 0.0
    %8115 = vmatprep.subr.mxu0 0.0
    %8116 = vmatpush1.msra.mxu0 0.0
    %8117 = vmatprep.subr.mxu0 0.0
    %8118 = vmatpush1.msra.mxu0 0.0
    %8119 = vmatprep.subr.mxu0 0.0
    %8120 = vmatpush1.msra.mxu0 0.0
    %8121 = vmatprep.subr.mxu0 0.0
    %8122 = vmatpush1.msra.mxu0 0.0
    %8123 = vmatprep.subr.mxu0 0.0
    %8124 = vmatpush1.msra.mxu0 0.0
    %8125 = vmatprep.subr.mxu0 0.0
    %8126 = vmatpush1.msra.mxu0 0.0
    %8127 = vmatprep.subr.mxu0 0.0
    %8128 = vmatpush1.msra.mxu0 0.0
    %8129 = vmatprep.subr.mxu0 0.0
    %8130 = vmatpush1.msra.mxu0 0.0
    %8131 = vmatprep.subr.mxu0 0.0
    %8132 = vmatpush1.msra.mxu0 0.0
    %8133 = vmatprep.subr.mxu0 0.0
    %8134 = vmatpush1.msra.mxu0 0.0
    %8135 = vmatprep.subr.mxu0 0.0
    %8136 = vmatpush1.msra.mxu0 %v8056
    %8137 = vmatprep.subr.mxu0 0.0
    %8138 = vmatpush2.msra.mxu0 0.0
    %8139 = vmatprep.subr.mxu0 0.0
    %8140 = vmatpush2.msra.mxu0 0.0
    %8141 = vmatprep.subr.mxu0 0.0
    %8142 = vmatpush2.msra.mxu0 0.0
    %8143 = vmatprep.subr.mxu0 0.0
    %8144 = vmatpush2.msra.mxu0 0.0
    %8145 = vmatprep.subr.mxu0 0.0
    %8146 = vmatpush2.msra.mxu0 0.0
    %8147 = vmatprep.subr.mxu0 0.0
    %8148 = vmatpush2.msra.mxu0 0.0
    %8149 = vmatprep.subr.mxu0 0.0
    %8150 = vmatpush2.msra.mxu0 0.0
    %8151 = vmatprep.subr.mxu0 0.0
    %8152 = vmatpush2.msra.mxu0 0.0
    %8153 = vmatprep.subr.mxu0 0.0
    %8154 = vmatpush2.msra.mxu0 0.0
    %8155 = vmatprep.subr.mxu0 0.0
    %8156 = vmatpush2.msra.mxu0 0.0
    %8157 = vmatprep.subr.mxu0 0.0
    %8158 = vmatpush2.msra.mxu0 0.0
    %8159 = vmatprep.subr.mxu0 0.0
    %8160 = vmatpush2.msra.mxu0 0.0
    %8161 = vmatprep.subr.mxu0 0.0
    %8162 = vmatpush2.msra.mxu0 0.0
    %8163 = vmatprep.subr.mxu0 0.0
    %8164 = vmatpush2.msra.mxu0 0.0
    %8165 = vmatprep.subr.mxu0 0.0
    %8166 = vmatpush2.msra.mxu0 0.0
    %8167 = vmatprep.subr.mxu0 0.0
    %8168 = vmatpush2.msra.mxu0 0.0
    %8169 = vmatprep.mubr.f32.mxu0 0.0
    %8170 = vmatmul.mubr.f32.gmra.mxu0 %v8058
    %v8171 = vpop.f32.mrf.mxu0
    %v8172 = vadd.f32 0.0, %v8171
    %v8173 = vpop.f32.mrf.mxu0
    %8174 = vmatprep.mubr.f32.mxu0 0.0
    %8175 = vmatmul.mubr.f32.gmra.mxu0 %v8061
    %v8176 = vpop.f32.mrf.mxu0
    %v8177 = vadd.f32 0.0, %v8176
    %v8178 = vpop.f32.mrf.mxu0
    %8179 = vmatprep.mubr.f32.mxu0 0.0
    %8180 = vmatmul.mubr.f32.gmra.mxu0 %v8064
    %v8181 = vpop.f32.mrf.mxu0
    %v8182 = vadd.f32 0.0, %v8181
    %v8183 = vpop.f32.mrf.mxu0
    %8184 = vmatprep.mubr.f32.mxu0 0.0
    %8185 = vmatmul.mubr.f32.gmra.mxu0 %v8067
    %v8186 = vpop.f32.mrf.mxu0
    %v8187 = vadd.f32 0.0, %v8186
    %v8188 = vpop.f32.mrf.mxu0
    %8189 = vmatprep.mubr.f32.mxu0 0.0
    %8190 = vmatmul.mubr.f32.gmra.mxu0 %v8070
    %v8191 = vpop.f32.mrf.mxu0
    %v8192 = vadd.f32 0.0, %v8191
    %v8193 = vpop.f32.mrf.mxu0
    %8194 = vmatprep.mubr.f32.mxu0 0.0
    %8195 = vmatmul.mubr.f32.gmra.mxu0 %v8073
    %v8196 = vpop.f32.mrf.mxu0
    %v8197 = vadd.f32 0.0, %v8196
    %v8198 = vpop.f32.mrf.mxu0
    %8199 = vmatprep.mubr.f32.mxu0 0.0
    %8200 = vmatmul.mubr.f32.gmra.mxu0 %v8076
    %v8201 = vpop.f32.mrf.mxu0
    %v8202 = vadd.f32 0.0, %v8201
    %v8203 = vpop.f32.mrf.mxu0
    %8204 = vmatprep.mubr.f32.mxu0 0.0
    %8205 = vmatmul.mubr.f32.gmra.mxu0 %v8079
    %v8206 = vpop.f32.mrf.mxu0
    %v8207 = vadd.f32 0.0, %v8206
    %v8208 = vpop.f32.mrf.mxu0
    %8209 = vmatprep.mubr.f32.mxu0 0.0
    %8210 = vmatmul.mubr.f32.gmra.mxu0 %v8082
    %v8211 = vpop.f32.mrf.mxu0
    %v8212 = vadd.f32 0.0, %v8211
    %v8213 = vpop.f32.mrf.mxu0
    %8214 = vmatprep.mubr.f32.mxu0 0.0
    %8215 = vmatmul.mubr.f32.gmra.mxu0 %v8085
    %v8216 = vpop.f32.mrf.mxu0
    %v8217 = vadd.f32 0.0, %v8216
    %v8218 = vpop.f32.mrf.mxu0
    %8219 = vmatprep.mubr.f32.mxu0 0.0
    %8220 = vmatmul.mubr.f32.gmra.mxu0 %v8088
    %v8221 = vpop.f32.mrf.mxu0
    %v8222 = vadd.f32 0.0, %v8221
    %v8223 = vpop.f32.mrf.mxu0
    %8224 = vmatprep.mubr.f32.mxu0 0.0
    %8225 = vmatmul.mubr.f32.gmra.mxu0 %v8091
    %v8226 = vpop.f32.mrf.mxu0
    %v8227 = vadd.f32 0.0, %v8226
    %v8228 = vpop.f32.mrf.mxu0
    %8229 = vmatprep.mubr.f32.mxu0 0.0
    %8230 = vmatmul.mubr.f32.gmra.mxu0 %v8094
    %v8231 = vpop.f32.mrf.mxu0
    %v8232 = vadd.f32 0.0, %v8231
    %v8233 = vpop.f32.mrf.mxu0
    %8234 = vmatprep.mubr.f32.mxu0 0.0
    %8235 = vmatmul.mubr.f32.gmra.mxu0 %v8097
    %v8236 = vpop.f32.mrf.mxu0
    %v8237 = vadd.f32 0.0, %v8236
    %v8238 = vpop.f32.mrf.mxu0
    %8239 = vmatprep.mubr.f32.mxu0 0.0
    %8240 = vmatmul.mubr.f32.gmra.mxu0 %v8100
    %v8241 = vpop.f32.mrf.mxu0
    %v8242 = vadd.f32 0.0, %v8241
    %v8243 = vpop.f32.mrf.mxu0
    %8244 = vmatprep.mubr.f32.mxu0 0.0
    %8245 = vmatmul.mubr.f32.gmra.mxu0 %v8103
    %v8246 = vpop.f32.mrf.mxu0
    %v8247 = vadd.f32 0.0, %v8246
    %v8248 = vpop.f32.mrf.mxu0
    %8249 = vdwg.mxu0
    %v8250 = vadd.f32 %v7961, %v8172
    %v8251 = vadd.f32 %v7966, %v8177
    %v8252 = vadd.f32 %v7971, %v8182
    %v8253 = vadd.f32 %v7976, %v8187
    %v8254 = vadd.f32 %v7981, %v8192
    %v8255 = vadd.f32 %v7986, %v8197
    %v8256 = vadd.f32 %v7991, %v8202
    %v8257 = vadd.f32 %v7996, %v8207
    %v8258 = vadd.f32 %v8001, %v8212
    %v8259 = vadd.f32 %v8006, %v8217
    %v8260 = vadd.f32 %v8011, %v8222
    %v8261 = vadd.f32 %v8016, %v8227
    %v8262 = vadd.f32 %v8021, %v8232
    %v8263 = vadd.f32 %v8026, %v8237
    %v8264 = vadd.f32 %v8031, %v8242
    %v8265 = vadd.f32 %v8036, %v8247
    %v8266 = vld [vmem:[%s7601] sm:$0xff]
    %v8267 = vld [vmem:[%s7601 + $0x10] sm:$0xff]
    %v8268 = vld [vmem:[%s7601 + $0x20] sm:$0xff]
    %v8269 = vld [vmem:[%s7601 + $0x30] sm:$0xff]
    %v8270 = vld [vmem:[%s7601 + $0x40] sm:$0xff]
    %v8271 = vld [vmem:[%s7601 + $0x50] sm:$0xff]
    %v8272 = vld [vmem:[%s7601 + $0x60] sm:$0xff]
    %v8273 = vld [vmem:[%s7601 + $0x70] sm:$0xff]
    %v8274 = vld [vmem:[%s7601 + $0xa0] sm:$0xff]
    %v8275 = vld [vmem:[%s7601 + $0xb0] sm:$0xff]
    %v8276 = vld [vmem:[%s7601 + $0xc0] sm:$0xff]
    %v8277 = vld [vmem:[%s7601 + $0xd0] sm:$0xff]
    %v8278 = vld [vmem:[%s7601 + $0xe0] sm:$0xff]
    %v8279 = vld [vmem:[%s7601 + $0xf0] sm:$0xff]
    %v8280 = vld [vmem:[%s7601 + $0x100] sm:$0xff]
    %v8281 = vld [vmem:[%s7601 + $0x110] sm:$0xff]
    %s8282 = scalar_lea.vmem %s5, 24
    %v8283 = vld [vmem:[%s8282] sm:$0xff]
    %v8285 = vsel %vm6618, %v8266, 0
    %v8288 = vsel %vm6618, %v8267, 0
    %v8291 = vsel %vm6618, %v8268, 0
    %v8294 = vsel %vm6618, %v8269, 0
    %v8297 = vsel %vm6618, %v8270, 0
    %v8300 = vsel %vm6618, %v8271, 0
    %v8303 = vsel %vm6618, %v8272, 0
    %v8306 = vsel %vm6618, %v8273, 0
    %v8309 = vsel %vm6618, %v8274, 0
    %v8312 = vsel %vm6618, %v8275, 0
    %v8315 = vsel %vm6618, %v8276, 0
    %v8318 = vsel %vm6618, %v8277, 0
    %v8321 = vsel %vm6618, %v8278, 0
    %v8324 = vsel %vm6618, %v8279, 0
    %v8327 = vsel %vm6618, %v8280, 0
    %v8330 = vsel %vm6618, %v8281, 0
    %8332 = vmatprep.subr.mxu0 0.0
    %8333 = vmatpush1.msra.mxu0 0.0
    %8334 = vmatprep.subr.mxu0 0.0
    %8335 = vmatpush1.msra.mxu0 0.0
    %8336 = vmatprep.subr.mxu0 0.0
    %8337 = vmatpush1.msra.mxu0 0.0
    %8338 = vmatprep.subr.mxu0 0.0
    %8339 = vmatpush1.msra.mxu0 0.0
    %8340 = vmatprep.subr.mxu0 0.0
    %8341 = vmatpush1.msra.mxu0 0.0
    %8342 = vmatprep.subr.mxu0 0.0
    %8343 = vmatpush1.msra.mxu0 0.0
    %8344 = vmatprep.subr.mxu0 0.0
    %8345 = vmatpush1.msra.mxu0 0.0
    %8346 = vmatprep.subr.mxu0 0.0
    %8347 = vmatpush1.msra.mxu0 0.0
    %8348 = vmatprep.subr.mxu0 0.0
    %8349 = vmatpush1.msra.mxu0 0.0
    %8350 = vmatprep.subr.mxu0 0.0
    %8351 = vmatpush1.msra.mxu0 0.0
    %8352 = vmatprep.subr.mxu0 0.0
    %8353 = vmatpush1.msra.mxu0 0.0
    %8354 = vmatprep.subr.mxu0 0.0
    %8355 = vmatpush1.msra.mxu0 0.0
    %8356 = vmatprep.subr.mxu0 0.0
    %8357 = vmatpush1.msra.mxu0 0.0
    %8358 = vmatprep.subr.mxu0 0.0
    %8359 = vmatpush1.msra.mxu0 0.0
    %8360 = vmatprep.subr.mxu0 0.0
    %8361 = vmatpush1.msra.mxu0 0.0
    %8362 = vmatprep.subr.mxu0 0.0
    %8363 = vmatpush1.msra.mxu0 %v8283
    %8364 = vmatprep.subr.mxu0 0.0
    %8365 = vmatpush2.msra.mxu0 0.0
    %8366 = vmatprep.subr.mxu0 0.0
    %8367 = vmatpush2.msra.mxu0 0.0
    %8368 = vmatprep.subr.mxu0 0.0
    %8369 = vmatpush2.msra.mxu0 0.0
    %8370 = vmatprep.subr.mxu0 0.0
    %8371 = vmatpush2.msra.mxu0 0.0
    %8372 = vmatprep.subr.mxu0 0.0
    %8373 = vmatpush2.msra.mxu0 0.0
    %8374 = vmatprep.subr.mxu0 0.0
    %8375 = vmatpush2.msra.mxu0 0.0
    %8376 = vmatprep.subr.mxu0 0.0
    %8377 = vmatpush2.msra.mxu0 0.0
    %8378 = vmatprep.subr.mxu0 0.0
    %8379 = vmatpush2.msra.mxu0 0.0
    %8380 = vmatprep.subr.mxu0 0.0
    %8381 = vmatpush2.msra.mxu0 0.0
    %8382 = vmatprep.subr.mxu0 0.0
    %8383 = vmatpush2.msra.mxu0 0.0
    %8384 = vmatprep.subr.mxu0 0.0
    %8385 = vmatpush2.msra.mxu0 0.0
    %8386 = vmatprep.subr.mxu0 0.0
    %8387 = vmatpush2.msra.mxu0 0.0
    %8388 = vmatprep.subr.mxu0 0.0
    %8389 = vmatpush2.msra.mxu0 0.0
    %8390 = vmatprep.subr.mxu0 0.0
    %8391 = vmatpush2.msra.mxu0 0.0
    %8392 = vmatprep.subr.mxu0 0.0
    %8393 = vmatpush2.msra.mxu0 0.0
    %8394 = vmatprep.subr.mxu0 0.0
    %8395 = vmatpush2.msra.mxu0 0.0
    %8396 = vmatprep.mubr.f32.mxu0 0.0
    %8397 = vmatmul.mubr.f32.gmra.mxu0 %v8285
    %v8398 = vpop.f32.mrf.mxu0
    %v8399 = vadd.f32 0.0, %v8398
    %v8400 = vpop.f32.mrf.mxu0
    %8401 = vmatprep.mubr.f32.mxu0 0.0
    %8402 = vmatmul.mubr.f32.gmra.mxu0 %v8288
    %v8403 = vpop.f32.mrf.mxu0
    %v8404 = vadd.f32 0.0, %v8403
    %v8405 = vpop.f32.mrf.mxu0
    %8406 = vmatprep.mubr.f32.mxu0 0.0
    %8407 = vmatmul.mubr.f32.gmra.mxu0 %v8291
    %v8408 = vpop.f32.mrf.mxu0
    %v8409 = vadd.f32 0.0, %v8408
    %v8410 = vpop.f32.mrf.mxu0
    %8411 = vmatprep.mubr.f32.mxu0 0.0
    %8412 = vmatmul.mubr.f32.gmra.mxu0 %v8294
    %v8413 = vpop.f32.mrf.mxu0
    %v8414 = vadd.f32 0.0, %v8413
    %v8415 = vpop.f32.mrf.mxu0
    %8416 = vmatprep.mubr.f32.mxu0 0.0
    %8417 = vmatmul.mubr.f32.gmra.mxu0 %v8297
    %v8418 = vpop.f32.mrf.mxu0
    %v8419 = vadd.f32 0.0, %v8418
    %v8420 = vpop.f32.mrf.mxu0
    %8421 = vmatprep.mubr.f32.mxu0 0.0
    %8422 = vmatmul.mubr.f32.gmra.mxu0 %v8300
    %v8423 = vpop.f32.mrf.mxu0
    %v8424 = vadd.f32 0.0, %v8423
    %v8425 = vpop.f32.mrf.mxu0
    %8426 = vmatprep.mubr.f32.mxu0 0.0
    %8427 = vmatmul.mubr.f32.gmra.mxu0 %v8303
    %v8428 = vpop.f32.mrf.mxu0
    %v8429 = vadd.f32 0.0, %v8428
    %v8430 = vpop.f32.mrf.mxu0
    %8431 = vmatprep.mubr.f32.mxu0 0.0
    %8432 = vmatmul.mubr.f32.gmra.mxu0 %v8306
    %v8433 = vpop.f32.mrf.mxu0
    %v8434 = vadd.f32 0.0, %v8433
    %v8435 = vpop.f32.mrf.mxu0
    %8436 = vmatprep.mubr.f32.mxu0 0.0
    %8437 = vmatmul.mubr.f32.gmra.mxu0 %v8309
    %v8438 = vpop.f32.mrf.mxu0
    %v8439 = vadd.f32 0.0, %v8438
    %v8440 = vpop.f32.mrf.mxu0
    %8441 = vmatprep.mubr.f32.mxu0 0.0
    %8442 = vmatmul.mubr.f32.gmra.mxu0 %v8312
    %v8443 = vpop.f32.mrf.mxu0
    %v8444 = vadd.f32 0.0, %v8443
    %v8445 = vpop.f32.mrf.mxu0
    %8446 = vmatprep.mubr.f32.mxu0 0.0
    %8447 = vmatmul.mubr.f32.gmra.mxu0 %v8315
    %v8448 = vpop.f32.mrf.mxu0
    %v8449 = vadd.f32 0.0, %v8448
    %v8450 = vpop.f32.mrf.mxu0
    %8451 = vmatprep.mubr.f32.mxu0 0.0
    %8452 = vmatmul.mubr.f32.gmra.mxu0 %v8318
    %v8453 = vpop.f32.mrf.mxu0
    %v8454 = vadd.f32 0.0, %v8453
    %v8455 = vpop.f32.mrf.mxu0
    %8456 = vmatprep.mubr.f32.mxu0 0.0
    %8457 = vmatmul.mubr.f32.gmra.mxu0 %v8321
    %v8458 = vpop.f32.mrf.mxu0
    %v8459 = vadd.f32 0.0, %v8458
    %v8460 = vpop.f32.mrf.mxu0
    %8461 = vmatprep.mubr.f32.mxu0 0.0
    %8462 = vmatmul.mubr.f32.gmra.mxu0 %v8324
    %v8463 = vpop.f32.mrf.mxu0
    %v8464 = vadd.f32 0.0, %v8463
    %v8465 = vpop.f32.mrf.mxu0
    %8466 = vmatprep.mubr.f32.mxu0 0.0
    %8467 = vmatmul.mubr.f32.gmra.mxu0 %v8327
    %v8468 = vpop.f32.mrf.mxu0
    %v8469 = vadd.f32 0.0, %v8468
    %v8470 = vpop.f32.mrf.mxu0
    %8471 = vmatprep.mubr.f32.mxu0 0.0
    %8472 = vmatmul.mubr.f32.gmra.mxu0 %v8330
    %v8473 = vpop.f32.mrf.mxu0
    %v8474 = vadd.f32 0.0, %v8473
    %v8475 = vpop.f32.mrf.mxu0
    %8476 = vdwg.mxu0
    %v8477 = vadd.f32 %v8250, %v8399
    %v8478 = vadd.f32 %v8251, %v8404
    %v8479 = vadd.f32 %v8252, %v8409
    %v8480 = vadd.f32 %v8253, %v8414
    %v8481 = vadd.f32 %v8254, %v8419
    %v8482 = vadd.f32 %v8255, %v8424
    %v8483 = vadd.f32 %v8256, %v8429
    %v8484 = vadd.f32 %v8257, %v8434
    %v8485 = vadd.f32 %v8258, %v8439
    %v8486 = vadd.f32 %v8259, %v8444
    %v8487 = vadd.f32 %v8260, %v8449
    %v8488 = vadd.f32 %v8261, %v8454
    %v8489 = vadd.f32 %v8262, %v8459
    %v8490 = vadd.f32 %v8263, %v8464
    %v8491 = vadd.f32 %v8264, %v8469
    %v8492 = vadd.f32 %v8265, %v8474
    %v8493 = vld [vmem:[%s7601 + $0x1] sm:$0xff]
    %v8494 = vld [vmem:[%s7601 + $0x11] sm:$0xff]
    %v8495 = vld [vmem:[%s7601 + $0x21] sm:$0xff]
    %v8496 = vld [vmem:[%s7601 + $0x31] sm:$0xff]
    %v8497 = vld [vmem:[%s7601 + $0x41] sm:$0xff]
    %v8498 = vld [vmem:[%s7601 + $0x51] sm:$0xff]
    %v8499 = vld [vmem:[%s7601 + $0x61] sm:$0xff]
    %v8500 = vld [vmem:[%s7601 + $0x71] sm:$0xff]
    %v8501 = vld [vmem:[%s7601 + $0xa1] sm:$0xff]
    %v8502 = vld [vmem:[%s7601 + $0xb1] sm:$0xff]
    %v8503 = vld [vmem:[%s7601 + $0xc1] sm:$0xff]
    %v8504 = vld [vmem:[%s7601 + $0xd1] sm:$0xff]
    %v8505 = vld [vmem:[%s7601 + $0xe1] sm:$0xff]
    %v8506 = vld [vmem:[%s7601 + $0xf1] sm:$0xff]
    %v8507 = vld [vmem:[%s7601 + $0x101] sm:$0xff]
    %v8508 = vld [vmem:[%s7601 + $0x111] sm:$0xff]
    %s8509 = scalar_lea.vmem %s5, 32
    %v8510 = vld [vmem:[%s8509] sm:$0xff]
    %v8512 = vsel %vm6618, %v8493, 0
    %v8515 = vsel %vm6618, %v8494, 0
    %v8518 = vsel %vm6618, %v8495, 0
    %v8521 = vsel %vm6618, %v8496, 0
    %v8524 = vsel %vm6618, %v8497, 0
    %v8527 = vsel %vm6618, %v8498, 0
    %v8530 = vsel %vm6618, %v8499, 0
    %v8533 = vsel %vm6618, %v8500, 0
    %v8536 = vsel %vm6618, %v8501, 0
    %v8539 = vsel %vm6618, %v8502, 0
    %v8542 = vsel %vm6618, %v8503, 0
    %v8545 = vsel %vm6618, %v8504, 0
    %v8548 = vsel %vm6618, %v8505, 0
    %v8551 = vsel %vm6618, %v8506, 0
    %v8554 = vsel %vm6618, %v8507, 0
    %v8557 = vsel %vm6618, %v8508, 0
    %8559 = vmatprep.subr.mxu0 0.0
    %8560 = vmatpush1.msra.mxu0 0.0
    %8561 = vmatprep.subr.mxu0 0.0
    %8562 = vmatpush1.msra.mxu0 0.0
    %8563 = vmatprep.subr.mxu0 0.0
    %8564 = vmatpush1.msra.mxu0 0.0
    %8565 = vmatprep.subr.mxu0 0.0
    %8566 = vmatpush1.msra.mxu0 0.0
    %8567 = vmatprep.subr.mxu0 0.0
    %8568 = vmatpush1.msra.mxu0 0.0
    %8569 = vmatprep.subr.mxu0 0.0
    %8570 = vmatpush1.msra.mxu0 0.0
    %8571 = vmatprep.subr.mxu0 0.0
    %8572 = vmatpush1.msra.mxu0 0.0
    %8573 = vmatprep.subr.mxu0 0.0
    %8574 = vmatpush1.msra.mxu0 0.0
    %8575 = vmatprep.subr.mxu0 0.0
    %8576 = vmatpush1.msra.mxu0 0.0
    %8577 = vmatprep.subr.mxu0 0.0
    %8578 = vmatpush1.msra.mxu0 0.0
    %8579 = vmatprep.subr.mxu0 0.0
    %8580 = vmatpush1.msra.mxu0 0.0
    %8581 = vmatprep.subr.mxu0 0.0
    %8582 = vmatpush1.msra.mxu0 0.0
    %8583 = vmatprep.subr.mxu0 0.0
    %8584 = vmatpush1.msra.mxu0 0.0
    %8585 = vmatprep.subr.mxu0 0.0
    %8586 = vmatpush1.msra.mxu0 0.0
    %8587 = vmatprep.subr.mxu0 0.0
    %8588 = vmatpush1.msra.mxu0 0.0
    %8589 = vmatprep.subr.mxu0 0.0
    %8590 = vmatpush1.msra.mxu0 %v8510
    %8591 = vmatprep.subr.mxu0 0.0
    %8592 = vmatpush2.msra.mxu0 0.0
    %8593 = vmatprep.subr.mxu0 0.0
    %8594 = vmatpush2.msra.mxu0 0.0
    %8595 = vmatprep.subr.mxu0 0.0
    %8596 = vmatpush2.msra.mxu0 0.0
    %8597 = vmatprep.subr.mxu0 0.0
    %8598 = vmatpush2.msra.mxu0 0.0
    %8599 = vmatprep.subr.mxu0 0.0
    %8600 = vmatpush2.msra.mxu0 0.0
    %8601 = vmatprep.subr.mxu0 0.0
    %8602 = vmatpush2.msra.mxu0 0.0
    %8603 = vmatprep.subr.mxu0 0.0
    %8604 = vmatpush2.msra.mxu0 0.0
    %8605 = vmatprep.subr.mxu0 0.0
    %8606 = vmatpush2.msra.mxu0 0.0
    %8607 = vmatprep.subr.mxu0 0.0
    %8608 = vmatpush2.msra.mxu0 0.0
    %8609 = vmatprep.subr.mxu0 0.0
    %8610 = vmatpush2.msra.mxu0 0.0
    %8611 = vmatprep.subr.mxu0 0.0
    %8612 = vmatpush2.msra.mxu0 0.0
    %8613 = vmatprep.subr.mxu0 0.0
    %8614 = vmatpush2.msra.mxu0 0.0
    %8615 = vmatprep.subr.mxu0 0.0
    %8616 = vmatpush2.msra.mxu0 0.0
    %8617 = vmatprep.subr.mxu0 0.0
    %8618 = vmatpush2.msra.mxu0 0.0
    %8619 = vmatprep.subr.mxu0 0.0
    %8620 = vmatpush2.msra.mxu0 0.0
    %8621 = vmatprep.subr.mxu0 0.0
    %8622 = vmatpush2.msra.mxu0 0.0
    %8623 = vmatprep.mubr.f32.mxu0 0.0
    %8624 = vmatmul.mubr.f32.gmra.mxu0 %v8512
    %v8625 = vpop.f32.mrf.mxu0
    %v8626 = vadd.f32 0.0, %v8625
    %v8627 = vpop.f32.mrf.mxu0
    %8628 = vmatprep.mubr.f32.mxu0 0.0
    %8629 = vmatmul.mubr.f32.gmra.mxu0 %v8515
    %v8630 = vpop.f32.mrf.mxu0
    %v8631 = vadd.f32 0.0, %v8630
    %v8632 = vpop.f32.mrf.mxu0
    %8633 = vmatprep.mubr.f32.mxu0 0.0
    %8634 = vmatmul.mubr.f32.gmra.mxu0 %v8518
    %v8635 = vpop.f32.mrf.mxu0
    %v8636 = vadd.f32 0.0, %v8635
    %v8637 = vpop.f32.mrf.mxu0
    %8638 = vmatprep.mubr.f32.mxu0 0.0
    %8639 = vmatmul.mubr.f32.gmra.mxu0 %v8521
    %v8640 = vpop.f32.mrf.mxu0
    %v8641 = vadd.f32 0.0, %v8640
    %v8642 = vpop.f32.mrf.mxu0
    %8643 = vmatprep.mubr.f32.mxu0 0.0
    %8644 = vmatmul.mubr.f32.gmra.mxu0 %v8524
    %v8645 = vpop.f32.mrf.mxu0
    %v8646 = vadd.f32 0.0, %v8645
    %v8647 = vpop.f32.mrf.mxu0
    %8648 = vmatprep.mubr.f32.mxu0 0.0
    %8649 = vmatmul.mubr.f32.gmra.mxu0 %v8527
    %v8650 = vpop.f32.mrf.mxu0
    %v8651 = vadd.f32 0.0, %v8650
    %v8652 = vpop.f32.mrf.mxu0
    %8653 = vmatprep.mubr.f32.mxu0 0.0
    %8654 = vmatmul.mubr.f32.gmra.mxu0 %v8530
    %v8655 = vpop.f32.mrf.mxu0
    %v8656 = vadd.f32 0.0, %v8655
    %v8657 = vpop.f32.mrf.mxu0
    %8658 = vmatprep.mubr.f32.mxu0 0.0
    %8659 = vmatmul.mubr.f32.gmra.mxu0 %v8533
    %v8660 = vpop.f32.mrf.mxu0
    %v8661 = vadd.f32 0.0, %v8660
    %v8662 = vpop.f32.mrf.mxu0
    %8663 = vmatprep.mubr.f32.mxu0 0.0
    %8664 = vmatmul.mubr.f32.gmra.mxu0 %v8536
    %v8665 = vpop.f32.mrf.mxu0
    %v8666 = vadd.f32 0.0, %v8665
    %v8667 = vpop.f32.mrf.mxu0
    %8668 = vmatprep.mubr.f32.mxu0 0.0
    %8669 = vmatmul.mubr.f32.gmra.mxu0 %v8539
    %v8670 = vpop.f32.mrf.mxu0
    %v8671 = vadd.f32 0.0, %v8670
    %v8672 = vpop.f32.mrf.mxu0
    %8673 = vmatprep.mubr.f32.mxu0 0.0
    %8674 = vmatmul.mubr.f32.gmra.mxu0 %v8542
    %v8675 = vpop.f32.mrf.mxu0
    %v8676 = vadd.f32 0.0, %v8675
    %v8677 = vpop.f32.mrf.mxu0
    %8678 = vmatprep.mubr.f32.mxu0 0.0
    %8679 = vmatmul.mubr.f32.gmra.mxu0 %v8545
    %v8680 = vpop.f32.mrf.mxu0
    %v8681 = vadd.f32 0.0, %v8680
    %v8682 = vpop.f32.mrf.mxu0
    %8683 = vmatprep.mubr.f32.mxu0 0.0
    %8684 = vmatmul.mubr.f32.gmra.mxu0 %v8548
    %v8685 = vpop.f32.mrf.mxu0
    %v8686 = vadd.f32 0.0, %v8685
    %v8687 = vpop.f32.mrf.mxu0
    %8688 = vmatprep.mubr.f32.mxu0 0.0
    %8689 = vmatmul.mubr.f32.gmra.mxu0 %v8551
    %v8690 = vpop.f32.mrf.mxu0
    %v8691 = vadd.f32 0.0, %v8690
    %v8692 = vpop.f32.mrf.mxu0
    %8693 = vmatprep.mubr.f32.mxu0 0.0
    %8694 = vmatmul.mubr.f32.gmra.mxu0 %v8554
    %v8695 = vpop.f32.mrf.mxu0
    %v8696 = vadd.f32 0.0, %v8695
    %v8697 = vpop.f32.mrf.mxu0
    %8698 = vmatprep.mubr.f32.mxu0 0.0
    %8699 = vmatmul.mubr.f32.gmra.mxu0 %v8557
    %v8700 = vpop.f32.mrf.mxu0
    %v8701 = vadd.f32 0.0, %v8700
    %v8702 = vpop.f32.mrf.mxu0
    %8703 = vdwg.mxu0
    %v8704 = vadd.f32 %v8477, %v8626
    %v8705 = vadd.f32 %v8478, %v8631
    %v8706 = vadd.f32 %v8479, %v8636
    %v8707 = vadd.f32 %v8480, %v8641
    %v8708 = vadd.f32 %v8481, %v8646
    %v8709 = vadd.f32 %v8482, %v8651
    %v8710 = vadd.f32 %v8483, %v8656
    %v8711 = vadd.f32 %v8484, %v8661
    %v8712 = vadd.f32 %v8485, %v8666
    %v8713 = vadd.f32 %v8486, %v8671
    %v8714 = vadd.f32 %v8487, %v8676
    %v8715 = vadd.f32 %v8488, %v8681
    %v8716 = vadd.f32 %v8489, %v8686
    %v8717 = vadd.f32 %v8490, %v8691
    %v8718 = vadd.f32 %v8491, %v8696
    %v8719 = vadd.f32 %v8492, %v8701
    %v8720 = vld [vmem:[%s7601 + $0x2] sm:$0xff]
    %v8721 = vld [vmem:[%s7601 + $0x12] sm:$0xff]
    %v8722 = vld [vmem:[%s7601 + $0x22] sm:$0xff]
    %v8723 = vld [vmem:[%s7601 + $0x32] sm:$0xff]
    %v8724 = vld [vmem:[%s7601 + $0x42] sm:$0xff]
    %v8725 = vld [vmem:[%s7601 + $0x52] sm:$0xff]
    %v8726 = vld [vmem:[%s7601 + $0x62] sm:$0xff]
    %v8727 = vld [vmem:[%s7601 + $0x72] sm:$0xff]
    %v8728 = vld [vmem:[%s7601 + $0xa2] sm:$0xff]
    %v8729 = vld [vmem:[%s7601 + $0xb2] sm:$0xff]
    %v8730 = vld [vmem:[%s7601 + $0xc2] sm:$0xff]
    %v8731 = vld [vmem:[%s7601 + $0xd2] sm:$0xff]
    %v8732 = vld [vmem:[%s7601 + $0xe2] sm:$0xff]
    %v8733 = vld [vmem:[%s7601 + $0xf2] sm:$0xff]
    %v8734 = vld [vmem:[%s7601 + $0x102] sm:$0xff]
    %v8735 = vld [vmem:[%s7601 + $0x112] sm:$0xff]
    %s8736 = scalar_lea.vmem %s5, 40
    %v8737 = vld [vmem:[%s8736] sm:$0xff]
    %v8739 = vsel %vm6618, %v8720, 0
    %v8742 = vsel %vm6618, %v8721, 0
    %v8745 = vsel %vm6618, %v8722, 0
    %v8748 = vsel %vm6618, %v8723, 0
    %v8751 = vsel %vm6618, %v8724, 0
    %v8754 = vsel %vm6618, %v8725, 0
    %v8757 = vsel %vm6618, %v8726, 0
    %v8760 = vsel %vm6618, %v8727, 0
    %v8763 = vsel %vm6618, %v8728, 0
    %v8766 = vsel %vm6618, %v8729, 0
    %v8769 = vsel %vm6618, %v8730, 0
    %v8772 = vsel %vm6618, %v8731, 0
    %v8775 = vsel %vm6618, %v8732, 0
    %v8778 = vsel %vm6618, %v8733, 0
    %v8781 = vsel %vm6618, %v8734, 0
    %v8784 = vsel %vm6618, %v8735, 0
    %8786 = vmatprep.subr.mxu0 0.0
    %8787 = vmatpush1.msra.mxu0 0.0
    %8788 = vmatprep.subr.mxu0 0.0
    %8789 = vmatpush1.msra.mxu0 0.0
    %8790 = vmatprep.subr.mxu0 0.0
    %8791 = vmatpush1.msra.mxu0 0.0
    %8792 = vmatprep.subr.mxu0 0.0
    %8793 = vmatpush1.msra.mxu0 0.0
    %8794 = vmatprep.subr.mxu0 0.0
    %8795 = vmatpush1.msra.mxu0 0.0
    %8796 = vmatprep.subr.mxu0 0.0
    %8797 = vmatpush1.msra.mxu0 0.0
    %8798 = vmatprep.subr.mxu0 0.0
    %8799 = vmatpush1.msra.mxu0 0.0
    %8800 = vmatprep.subr.mxu0 0.0
    %8801 = vmatpush1.msra.mxu0 0.0
    %8802 = vmatprep.subr.mxu0 0.0
    %8803 = vmatpush1.msra.mxu0 0.0
    %8804 = vmatprep.subr.mxu0 0.0
    %8805 = vmatpush1.msra.mxu0 0.0
    %8806 = vmatprep.subr.mxu0 0.0
    %8807 = vmatpush1.msra.mxu0 0.0
    %8808 = vmatprep.subr.mxu0 0.0
    %8809 = vmatpush1.msra.mxu0 0.0
    %8810 = vmatprep.subr.mxu0 0.0
    %8811 = vmatpush1.msra.mxu0 0.0
    %8812 = vmatprep.subr.mxu0 0.0
    %8813 = vmatpush1.msra.mxu0 0.0
    %8814 = vmatprep.subr.mxu0 0.0
    %8815 = vmatpush1.msra.mxu0 0.0
    %8816 = vmatprep.subr.mxu0 0.0
    %8817 = vmatpush1.msra.mxu0 %v8737
    %8818 = vmatprep.subr.mxu0 0.0
    %8819 = vmatpush2.msra.mxu0 0.0
    %8820 = vmatprep.subr.mxu0 0.0
    %8821 = vmatpush2.msra.mxu0 0.0
    %8822 = vmatprep.subr.mxu0 0.0
    %8823 = vmatpush2.msra.mxu0 0.0
    %8824 = vmatprep.subr.mxu0 0.0
    %8825 = vmatpush2.msra.mxu0 0.0
    %8826 = vmatprep.subr.mxu0 0.0
    %8827 = vmatpush2.msra.mxu0 0.0
    %8828 = vmatprep.subr.mxu0 0.0
    %8829 = vmatpush2.msra.mxu0 0.0
    %8830 = vmatprep.subr.mxu0 0.0
    %8831 = vmatpush2.msra.mxu0 0.0
    %8832 = vmatprep.subr.mxu0 0.0
    %8833 = vmatpush2.msra.mxu0 0.0
    %8834 = vmatprep.subr.mxu0 0.0
    %8835 = vmatpush2.msra.mxu0 0.0
    %8836 = vmatprep.subr.mxu0 0.0
    %8837 = vmatpush2.msra.mxu0 0.0
    %8838 = vmatprep.subr.mxu0 0.0
    %8839 = vmatpush2.msra.mxu0 0.0
    %8840 = vmatprep.subr.mxu0 0.0
    %8841 = vmatpush2.msra.mxu0 0.0
    %8842 = vmatprep.subr.mxu0 0.0
    %8843 = vmatpush2.msra.mxu0 0.0
    %8844 = vmatprep.subr.mxu0 0.0
    %8845 = vmatpush2.msra.mxu0 0.0
    %8846 = vmatprep.subr.mxu0 0.0
    %8847 = vmatpush2.msra.mxu0 0.0
    %8848 = vmatprep.subr.mxu0 0.0
    %8849 = vmatpush2.msra.mxu0 0.0
    %8850 = vmatprep.mubr.f32.mxu0 0.0
    %8851 = vmatmul.mubr.f32.gmra.mxu0 %v8739
    %v8852 = vpop.f32.mrf.mxu0
    %v8853 = vadd.f32 0.0, %v8852
    %v8854 = vpop.f32.mrf.mxu0
    %8855 = vmatprep.mubr.f32.mxu0 0.0
    %8856 = vmatmul.mubr.f32.gmra.mxu0 %v8742
    %v8857 = vpop.f32.mrf.mxu0
    %v8858 = vadd.f32 0.0, %v8857
    %v8859 = vpop.f32.mrf.mxu0
    %8860 = vmatprep.mubr.f32.mxu0 0.0
    %8861 = vmatmul.mubr.f32.gmra.mxu0 %v8745
    %v8862 = vpop.f32.mrf.mxu0
    %v8863 = vadd.f32 0.0, %v8862
    %v8864 = vpop.f32.mrf.mxu0
    %8865 = vmatprep.mubr.f32.mxu0 0.0
    %8866 = vmatmul.mubr.f32.gmra.mxu0 %v8748
    %v8867 = vpop.f32.mrf.mxu0
    %v8868 = vadd.f32 0.0, %v8867
    %v8869 = vpop.f32.mrf.mxu0
    %8870 = vmatprep.mubr.f32.mxu0 0.0
    %8871 = vmatmul.mubr.f32.gmra.mxu0 %v8751
    %v8872 = vpop.f32.mrf.mxu0
    %v8873 = vadd.f32 0.0, %v8872
    %v8874 = vpop.f32.mrf.mxu0
    %8875 = vmatprep.mubr.f32.mxu0 0.0
    %8876 = vmatmul.mubr.f32.gmra.mxu0 %v8754
    %v8877 = vpop.f32.mrf.mxu0
    %v8878 = vadd.f32 0.0, %v8877
    %v8879 = vpop.f32.mrf.mxu0
    %8880 = vmatprep.mubr.f32.mxu0 0.0
    %8881 = vmatmul.mubr.f32.gmra.mxu0 %v8757
    %v8882 = vpop.f32.mrf.mxu0
    %v8883 = vadd.f32 0.0, %v8882
    %v8884 = vpop.f32.mrf.mxu0
    %8885 = vmatprep.mubr.f32.mxu0 0.0
    %8886 = vmatmul.mubr.f32.gmra.mxu0 %v8760
    %v8887 = vpop.f32.mrf.mxu0
    %v8888 = vadd.f32 0.0, %v8887
    %v8889 = vpop.f32.mrf.mxu0
    %8890 = vmatprep.mubr.f32.mxu0 0.0
    %8891 = vmatmul.mubr.f32.gmra.mxu0 %v8763
    %v8892 = vpop.f32.mrf.mxu0
    %v8893 = vadd.f32 0.0, %v8892
    %v8894 = vpop.f32.mrf.mxu0
    %8895 = vmatprep.mubr.f32.mxu0 0.0
    %8896 = vmatmul.mubr.f32.gmra.mxu0 %v8766
    %v8897 = vpop.f32.mrf.mxu0
    %v8898 = vadd.f32 0.0, %v8897
    %v8899 = vpop.f32.mrf.mxu0
    %8900 = vmatprep.mubr.f32.mxu0 0.0
    %8901 = vmatmul.mubr.f32.gmra.mxu0 %v8769
    %v8902 = vpop.f32.mrf.mxu0
    %v8903 = vadd.f32 0.0, %v8902
    %v8904 = vpop.f32.mrf.mxu0
    %8905 = vmatprep.mubr.f32.mxu0 0.0
    %8906 = vmatmul.mubr.f32.gmra.mxu0 %v8772
    %v8907 = vpop.f32.mrf.mxu0
    %v8908 = vadd.f32 0.0, %v8907
    %v8909 = vpop.f32.mrf.mxu0
    %8910 = vmatprep.mubr.f32.mxu0 0.0
    %8911 = vmatmul.mubr.f32.gmra.mxu0 %v8775
    %v8912 = vpop.f32.mrf.mxu0
    %v8913 = vadd.f32 0.0, %v8912
    %v8914 = vpop.f32.mrf.mxu0
    %8915 = vmatprep.mubr.f32.mxu0 0.0
    %8916 = vmatmul.mubr.f32.gmra.mxu0 %v8778
    %v8917 = vpop.f32.mrf.mxu0
    %v8918 = vadd.f32 0.0, %v8917
    %v8919 = vpop.f32.mrf.mxu0
    %8920 = vmatprep.mubr.f32.mxu0 0.0
    %8921 = vmatmul.mubr.f32.gmra.mxu0 %v8781
    %v8922 = vpop.f32.mrf.mxu0
    %v8923 = vadd.f32 0.0, %v8922
    %v8924 = vpop.f32.mrf.mxu0
    %8925 = vmatprep.mubr.f32.mxu0 0.0
    %8926 = vmatmul.mubr.f32.gmra.mxu0 %v8784
    %v8927 = vpop.f32.mrf.mxu0
    %v8928 = vadd.f32 0.0, %v8927
    %v8929 = vpop.f32.mrf.mxu0
    %8930 = vdwg.mxu0
    %v8931 = vadd.f32 %v8704, %v8853
    %v8932 = vadd.f32 %v8705, %v8858
    %v8933 = vadd.f32 %v8706, %v8863
    %v8934 = vadd.f32 %v8707, %v8868
    %v8935 = vadd.f32 %v8708, %v8873
    %v8936 = vadd.f32 %v8709, %v8878
    %v8937 = vadd.f32 %v8710, %v8883
    %v8938 = vadd.f32 %v8711, %v8888
    %v8939 = vadd.f32 %v8712, %v8893
    %v8940 = vadd.f32 %v8713, %v8898
    %v8941 = vadd.f32 %v8714, %v8903
    %v8942 = vadd.f32 %v8715, %v8908
    %v8943 = vadd.f32 %v8716, %v8913
    %v8944 = vadd.f32 %v8717, %v8918
    %v8945 = vadd.f32 %v8718, %v8923
    %v8946 = vadd.f32 %v8719, %v8928
    %s8947 = scalar_lea.vmem [#allocation4], 32
    %v8948 = vld [vmem:[%s8947] sm:$0xff]
    %v8949 = vld [vmem:[%s8947 + $0x10] sm:$0xff]
    %v8950 = vld [vmem:[%s8947 + $0x20] sm:$0xff]
    %v8951 = vld [vmem:[%s8947 + $0x30] sm:$0xff]
    %v8952 = vld [vmem:[%s8947 + $0x40] sm:$0xff]
    %v8953 = vld [vmem:[%s8947 + $0x50] sm:$0xff]
    %v8954 = vld [vmem:[%s8947 + $0x60] sm:$0xff]
    %v8955 = vld [vmem:[%s8947 + $0x70] sm:$0xff]
    %v8956 = vld [vmem:[%s8947 + $0xa0] sm:$0xff]
    %v8957 = vld [vmem:[%s8947 + $0xb0] sm:$0xff]
    %v8958 = vld [vmem:[%s8947 + $0xc0] sm:$0xff]
    %v8959 = vld [vmem:[%s8947 + $0xd0] sm:$0xff]
    %v8960 = vld [vmem:[%s8947 + $0xe0] sm:$0xff]
    %v8961 = vld [vmem:[%s8947 + $0xf0] sm:$0xff]
    %v8962 = vld [vmem:[%s8947 + $0x100] sm:$0xff]
    %v8963 = vld [vmem:[%s8947 + $0x110] sm:$0xff]
    %s8964 = scalar_lea.vmem %s5, 48
    %v8965 = vld [vmem:[%s8964] sm:$0xff]
    %v8967 = vsel %vm6618, %v8948, 0
    %v8970 = vsel %vm6618, %v8949, 0
    %v8973 = vsel %vm6618, %v8950, 0
    %v8976 = vsel %vm6618, %v8951, 0
    %v8979 = vsel %vm6618, %v8952, 0
    %v8982 = vsel %vm6618, %v8953, 0
    %v8985 = vsel %vm6618, %v8954, 0
    %v8988 = vsel %vm6618, %v8955, 0
    %v8991 = vsel %vm6618, %v8956, 0
    %v8994 = vsel %vm6618, %v8957, 0
    %v8997 = vsel %vm6618, %v8958, 0
    %v9000 = vsel %vm6618, %v8959, 0
    %v9003 = vsel %vm6618, %v8960, 0
    %v9006 = vsel %vm6618, %v8961, 0
    %v9009 = vsel %vm6618, %v8962, 0
    %v9012 = vsel %vm6618, %v8963, 0
    %9014 = vmatprep.subr.mxu0 0.0
    %9015 = vmatpush1.msra.mxu0 0.0
    %9016 = vmatprep.subr.mxu0 0.0
    %9017 = vmatpush1.msra.mxu0 0.0
    %9018 = vmatprep.subr.mxu0 0.0
    %9019 = vmatpush1.msra.mxu0 0.0
    %9020 = vmatprep.subr.mxu0 0.0
    %9021 = vmatpush1.msra.mxu0 0.0
    %9022 = vmatprep.subr.mxu0 0.0
    %9023 = vmatpush1.msra.mxu0 0.0
    %9024 = vmatprep.subr.mxu0 0.0
    %9025 = vmatpush1.msra.mxu0 0.0
    %9026 = vmatprep.subr.mxu0 0.0
    %9027 = vmatpush1.msra.mxu0 0.0
    %9028 = vmatprep.subr.mxu0 0.0
    %9029 = vmatpush1.msra.mxu0 0.0
    %9030 = vmatprep.subr.mxu0 0.0
    %9031 = vmatpush1.msra.mxu0 0.0
    %9032 = vmatprep.subr.mxu0 0.0
    %9033 = vmatpush1.msra.mxu0 0.0
    %9034 = vmatprep.subr.mxu0 0.0
    %9035 = vmatpush1.msra.mxu0 0.0
    %9036 = vmatprep.subr.mxu0 0.0
    %9037 = vmatpush1.msra.mxu0 0.0
    %9038 = vmatprep.subr.mxu0 0.0
    %9039 = vmatpush1.msra.mxu0 0.0
    %9040 = vmatprep.subr.mxu0 0.0
    %9041 = vmatpush1.msra.mxu0 0.0
    %9042 = vmatprep.subr.mxu0 0.0
    %9043 = vmatpush1.msra.mxu0 0.0
    %9044 = vmatprep.subr.mxu0 0.0
    %9045 = vmatpush1.msra.mxu0 %v8965
    %9046 = vmatprep.subr.mxu0 0.0
    %9047 = vmatpush2.msra.mxu0 0.0
    %9048 = vmatprep.subr.mxu0 0.0
    %9049 = vmatpush2.msra.mxu0 0.0
    %9050 = vmatprep.subr.mxu0 0.0
    %9051 = vmatpush2.msra.mxu0 0.0
    %9052 = vmatprep.subr.mxu0 0.0
    %9053 = vmatpush2.msra.mxu0 0.0
    %9054 = vmatprep.subr.mxu0 0.0
    %9055 = vmatpush2.msra.mxu0 0.0
    %9056 = vmatprep.subr.mxu0 0.0
    %9057 = vmatpush2.msra.mxu0 0.0
    %9058 = vmatprep.subr.mxu0 0.0
    %9059 = vmatpush2.msra.mxu0 0.0
    %9060 = vmatprep.subr.mxu0 0.0
    %9061 = vmatpush2.msra.mxu0 0.0
    %9062 = vmatprep.subr.mxu0 0.0
    %9063 = vmatpush2.msra.mxu0 0.0
    %9064 = vmatprep.subr.mxu0 0.0
    %9065 = vmatpush2.msra.mxu0 0.0
    %9066 = vmatprep.subr.mxu0 0.0
    %9067 = vmatpush2.msra.mxu0 0.0
    %9068 = vmatprep.subr.mxu0 0.0
    %9069 = vmatpush2.msra.mxu0 0.0
    %9070 = vmatprep.subr.mxu0 0.0
    %9071 = vmatpush2.msra.mxu0 0.0
    %9072 = vmatprep.subr.mxu0 0.0
    %9073 = vmatpush2.msra.mxu0 0.0
    %9074 = vmatprep.subr.mxu0 0.0
    %9075 = vmatpush2.msra.mxu0 0.0
    %9076 = vmatprep.subr.mxu0 0.0
    %9077 = vmatpush2.msra.mxu0 0.0
    %9078 = vmatprep.mubr.f32.mxu0 0.0
    %9079 = vmatmul.mubr.f32.gmra.mxu0 %v8967
    %v9080 = vpop.f32.mrf.mxu0
    %v9081 = vadd.f32 0.0, %v9080
    %v9082 = vpop.f32.mrf.mxu0
    %9083 = vmatprep.mubr.f32.mxu0 0.0
    %9084 = vmatmul.mubr.f32.gmra.mxu0 %v8970
    %v9085 = vpop.f32.mrf.mxu0
    %v9086 = vadd.f32 0.0, %v9085
    %v9087 = vpop.f32.mrf.mxu0
    %9088 = vmatprep.mubr.f32.mxu0 0.0
    %9089 = vmatmul.mubr.f32.gmra.mxu0 %v8973
    %v9090 = vpop.f32.mrf.mxu0
    %v9091 = vadd.f32 0.0, %v9090
    %v9092 = vpop.f32.mrf.mxu0
    %9093 = vmatprep.mubr.f32.mxu0 0.0
    %9094 = vmatmul.mubr.f32.gmra.mxu0 %v8976
    %v9095 = vpop.f32.mrf.mxu0
    %v9096 = vadd.f32 0.0, %v9095
    %v9097 = vpop.f32.mrf.mxu0
    %9098 = vmatprep.mubr.f32.mxu0 0.0
    %9099 = vmatmul.mubr.f32.gmra.mxu0 %v8979
    %v9100 = vpop.f32.mrf.mxu0
    %v9101 = vadd.f32 0.0, %v9100
    %v9102 = vpop.f32.mrf.mxu0
    %9103 = vmatprep.mubr.f32.mxu0 0.0
    %9104 = vmatmul.mubr.f32.gmra.mxu0 %v8982
    %v9105 = vpop.f32.mrf.mxu0
    %v9106 = vadd.f32 0.0, %v9105
    %v9107 = vpop.f32.mrf.mxu0
    %9108 = vmatprep.mubr.f32.mxu0 0.0
    %9109 = vmatmul.mubr.f32.gmra.mxu0 %v8985
    %v9110 = vpop.f32.mrf.mxu0
    %v9111 = vadd.f32 0.0, %v9110
    %v9112 = vpop.f32.mrf.mxu0
    %9113 = vmatprep.mubr.f32.mxu0 0.0
    %9114 = vmatmul.mubr.f32.gmra.mxu0 %v8988
    %v9115 = vpop.f32.mrf.mxu0
    %v9116 = vadd.f32 0.0, %v9115
    %v9117 = vpop.f32.mrf.mxu0
    %9118 = vmatprep.mubr.f32.mxu0 0.0
    %9119 = vmatmul.mubr.f32.gmra.mxu0 %v8991
    %v9120 = vpop.f32.mrf.mxu0
    %v9121 = vadd.f32 0.0, %v9120
    %v9122 = vpop.f32.mrf.mxu0
    %9123 = vmatprep.mubr.f32.mxu0 0.0
    %9124 = vmatmul.mubr.f32.gmra.mxu0 %v8994
    %v9125 = vpop.f32.mrf.mxu0
    %v9126 = vadd.f32 0.0, %v9125
    %v9127 = vpop.f32.mrf.mxu0
    %9128 = vmatprep.mubr.f32.mxu0 0.0
    %9129 = vmatmul.mubr.f32.gmra.mxu0 %v8997
    %v9130 = vpop.f32.mrf.mxu0
    %v9131 = vadd.f32 0.0, %v9130
    %v9132 = vpop.f32.mrf.mxu0
    %9133 = vmatprep.mubr.f32.mxu0 0.0
    %9134 = vmatmul.mubr.f32.gmra.mxu0 %v9000
    %v9135 = vpop.f32.mrf.mxu0
    %v9136 = vadd.f32 0.0, %v9135
    %v9137 = vpop.f32.mrf.mxu0
    %9138 = vmatprep.mubr.f32.mxu0 0.0
    %9139 = vmatmul.mubr.f32.gmra.mxu0 %v9003
    %v9140 = vpop.f32.mrf.mxu0
    %v9141 = vadd.f32 0.0, %v9140
    %v9142 = vpop.f32.mrf.mxu0
    %9143 = vmatprep.mubr.f32.mxu0 0.0
    %9144 = vmatmul.mubr.f32.gmra.mxu0 %v9006
    %v9145 = vpop.f32.mrf.mxu0
    %v9146 = vadd.f32 0.0, %v9145
    %v9147 = vpop.f32.mrf.mxu0
    %9148 = vmatprep.mubr.f32.mxu0 0.0
    %9149 = vmatmul.mubr.f32.gmra.mxu0 %v9009
    %v9150 = vpop.f32.mrf.mxu0
    %v9151 = vadd.f32 0.0, %v9150
    %v9152 = vpop.f32.mrf.mxu0
    %9153 = vmatprep.mubr.f32.mxu0 0.0
    %9154 = vmatmul.mubr.f32.gmra.mxu0 %v9012
    %v9155 = vpop.f32.mrf.mxu0
    %v9156 = vadd.f32 0.0, %v9155
    %v9157 = vpop.f32.mrf.mxu0
    %9158 = vdwg.mxu0
    %v9159 = vadd.f32 %v8931, %v9081
    %v9160 = vadd.f32 %v8932, %v9086
    %v9161 = vadd.f32 %v8933, %v9091
    %v9162 = vadd.f32 %v8934, %v9096
    %v9163 = vadd.f32 %v8935, %v9101
    %v9164 = vadd.f32 %v8936, %v9106
    %v9165 = vadd.f32 %v8937, %v9111
    %v9166 = vadd.f32 %v8938, %v9116
    %v9167 = vadd.f32 %v8939, %v9121
    %v9168 = vadd.f32 %v8940, %v9126
    %v9169 = vadd.f32 %v8941, %v9131
    %v9170 = vadd.f32 %v8942, %v9136
    %v9171 = vadd.f32 %v8943, %v9141
    %v9172 = vadd.f32 %v8944, %v9146
    %v9173 = vadd.f32 %v8945, %v9151
    %v9174 = vadd.f32 %v8946, %v9156
    %v9175 = vld [vmem:[%s8947 + $0x1] sm:$0xff]
    %v9176 = vld [vmem:[%s8947 + $0x11] sm:$0xff]
    %v9177 = vld [vmem:[%s8947 + $0x21] sm:$0xff]
    %v9178 = vld [vmem:[%s8947 + $0x31] sm:$0xff]
    %v9179 = vld [vmem:[%s8947 + $0x41] sm:$0xff]
    %v9180 = vld [vmem:[%s8947 + $0x51] sm:$0xff]
    %v9181 = vld [vmem:[%s8947 + $0x61] sm:$0xff]
    %v9182 = vld [vmem:[%s8947 + $0x71] sm:$0xff]
    %v9183 = vld [vmem:[%s8947 + $0xa1] sm:$0xff]
    %v9184 = vld [vmem:[%s8947 + $0xb1] sm:$0xff]
    %v9185 = vld [vmem:[%s8947 + $0xc1] sm:$0xff]
    %v9186 = vld [vmem:[%s8947 + $0xd1] sm:$0xff]
    %v9187 = vld [vmem:[%s8947 + $0xe1] sm:$0xff]
    %v9188 = vld [vmem:[%s8947 + $0xf1] sm:$0xff]
    %v9189 = vld [vmem:[%s8947 + $0x101] sm:$0xff]
    %v9190 = vld [vmem:[%s8947 + $0x111] sm:$0xff]
    %s9191 = scalar_lea.vmem %s5, 56
    %v9192 = vld [vmem:[%s9191] sm:$0xff]
    %v9194 = vsel %vm6618, %v9175, 0
    %v9197 = vsel %vm6618, %v9176, 0
    %v9200 = vsel %vm6618, %v9177, 0
    %v9203 = vsel %vm6618, %v9178, 0
    %v9206 = vsel %vm6618, %v9179, 0
    %v9209 = vsel %vm6618, %v9180, 0
    %v9212 = vsel %vm6618, %v9181, 0
    %v9215 = vsel %vm6618, %v9182, 0
    %v9218 = vsel %vm6618, %v9183, 0
    %v9221 = vsel %vm6618, %v9184, 0
    %v9224 = vsel %vm6618, %v9185, 0
    %v9227 = vsel %vm6618, %v9186, 0
    %v9230 = vsel %vm6618, %v9187, 0
    %v9233 = vsel %vm6618, %v9188, 0
    %v9236 = vsel %vm6618, %v9189, 0
    %v9239 = vsel %vm6618, %v9190, 0
    %9241 = vmatprep.subr.mxu0 0.0
    %9242 = vmatpush1.msra.mxu0 0.0
    %9243 = vmatprep.subr.mxu0 0.0
    %9244 = vmatpush1.msra.mxu0 0.0
    %9245 = vmatprep.subr.mxu0 0.0
    %9246 = vmatpush1.msra.mxu0 0.0
    %9247 = vmatprep.subr.mxu0 0.0
    %9248 = vmatpush1.msra.mxu0 0.0
    %9249 = vmatprep.subr.mxu0 0.0
    %9250 = vmatpush1.msra.mxu0 0.0
    %9251 = vmatprep.subr.mxu0 0.0
    %9252 = vmatpush1.msra.mxu0 0.0
    %9253 = vmatprep.subr.mxu0 0.0
    %9254 = vmatpush1.msra.mxu0 0.0
    %9255 = vmatprep.subr.mxu0 0.0
    %9256 = vmatpush1.msra.mxu0 0.0
    %9257 = vmatprep.subr.mxu0 0.0
    %9258 = vmatpush1.msra.mxu0 0.0
    %9259 = vmatprep.subr.mxu0 0.0
    %9260 = vmatpush1.msra.mxu0 0.0
    %9261 = vmatprep.subr.mxu0 0.0
    %9262 = vmatpush1.msra.mxu0 0.0
    %9263 = vmatprep.subr.mxu0 0.0
    %9264 = vmatpush1.msra.mxu0 0.0
    %9265 = vmatprep.subr.mxu0 0.0
    %9266 = vmatpush1.msra.mxu0 0.0
    %9267 = vmatprep.subr.mxu0 0.0
    %9268 = vmatpush1.msra.mxu0 0.0
    %9269 = vmatprep.subr.mxu0 0.0
    %9270 = vmatpush1.msra.mxu0 0.0
    %9271 = vmatprep.subr.mxu0 0.0
    %9272 = vmatpush1.msra.mxu0 %v9192
    %9273 = vmatprep.subr.mxu0 0.0
    %9274 = vmatpush2.msra.mxu0 0.0
    %9275 = vmatprep.subr.mxu0 0.0
    %9276 = vmatpush2.msra.mxu0 0.0
    %9277 = vmatprep.subr.mxu0 0.0
    %9278 = vmatpush2.msra.mxu0 0.0
    %9279 = vmatprep.subr.mxu0 0.0
    %9280 = vmatpush2.msra.mxu0 0.0
    %9281 = vmatprep.subr.mxu0 0.0
    %9282 = vmatpush2.msra.mxu0 0.0
    %9283 = vmatprep.subr.mxu0 0.0
    %9284 = vmatpush2.msra.mxu0 0.0
    %9285 = vmatprep.subr.mxu0 0.0
    %9286 = vmatpush2.msra.mxu0 0.0
    %9287 = vmatprep.subr.mxu0 0.0
    %9288 = vmatpush2.msra.mxu0 0.0
    %9289 = vmatprep.subr.mxu0 0.0
    %9290 = vmatpush2.msra.mxu0 0.0
    %9291 = vmatprep.subr.mxu0 0.0
    %9292 = vmatpush2.msra.mxu0 0.0
    %9293 = vmatprep.subr.mxu0 0.0
    %9294 = vmatpush2.msra.mxu0 0.0
    %9295 = vmatprep.subr.mxu0 0.0
    %9296 = vmatpush2.msra.mxu0 0.0
    %9297 = vmatprep.subr.mxu0 0.0
    %9298 = vmatpush2.msra.mxu0 0.0
    %9299 = vmatprep.subr.mxu0 0.0
    %9300 = vmatpush2.msra.mxu0 0.0
    %9301 = vmatprep.subr.mxu0 0.0
    %9302 = vmatpush2.msra.mxu0 0.0
    %9303 = vmatprep.subr.mxu0 0.0
    %9304 = vmatpush2.msra.mxu0 0.0
    %9305 = vmatprep.mubr.f32.mxu0 0.0
    %9306 = vmatmul.mubr.f32.gmra.mxu0 %v9194
    %v9307 = vpop.f32.mrf.mxu0
    %v9308 = vadd.f32 0.0, %v9307
    %v9309 = vpop.f32.mrf.mxu0
    %9310 = vmatprep.mubr.f32.mxu0 0.0
    %9311 = vmatmul.mubr.f32.gmra.mxu0 %v9197
    %v9312 = vpop.f32.mrf.mxu0
    %v9313 = vadd.f32 0.0, %v9312
    %v9314 = vpop.f32.mrf.mxu0
    %9315 = vmatprep.mubr.f32.mxu0 0.0
    %9316 = vmatmul.mubr.f32.gmra.mxu0 %v9200
    %v9317 = vpop.f32.mrf.mxu0
    %v9318 = vadd.f32 0.0, %v9317
    %v9319 = vpop.f32.mrf.mxu0
    %9320 = vmatprep.mubr.f32.mxu0 0.0
    %9321 = vmatmul.mubr.f32.gmra.mxu0 %v9203
    %v9322 = vpop.f32.mrf.mxu0
    %v9323 = vadd.f32 0.0, %v9322
    %v9324 = vpop.f32.mrf.mxu0
    %9325 = vmatprep.mubr.f32.mxu0 0.0
    %9326 = vmatmul.mubr.f32.gmra.mxu0 %v9206
    %v9327 = vpop.f32.mrf.mxu0
    %v9328 = vadd.f32 0.0, %v9327
    %v9329 = vpop.f32.mrf.mxu0
    %9330 = vmatprep.mubr.f32.mxu0 0.0
    %9331 = vmatmul.mubr.f32.gmra.mxu0 %v9209
    %v9332 = vpop.f32.mrf.mxu0
    %v9333 = vadd.f32 0.0, %v9332
    %v9334 = vpop.f32.mrf.mxu0
    %9335 = vmatprep.mubr.f32.mxu0 0.0
    %9336 = vmatmul.mubr.f32.gmra.mxu0 %v9212
    %v9337 = vpop.f32.mrf.mxu0
    %v9338 = vadd.f32 0.0, %v9337
    %v9339 = vpop.f32.mrf.mxu0
    %9340 = vmatprep.mubr.f32.mxu0 0.0
    %9341 = vmatmul.mubr.f32.gmra.mxu0 %v9215
    %v9342 = vpop.f32.mrf.mxu0
    %v9343 = vadd.f32 0.0, %v9342
    %v9344 = vpop.f32.mrf.mxu0
    %9345 = vmatprep.mubr.f32.mxu0 0.0
    %9346 = vmatmul.mubr.f32.gmra.mxu0 %v9218
    %v9347 = vpop.f32.mrf.mxu0
    %v9348 = vadd.f32 0.0, %v9347
    %v9349 = vpop.f32.mrf.mxu0
    %9350 = vmatprep.mubr.f32.mxu0 0.0
    %9351 = vmatmul.mubr.f32.gmra.mxu0 %v9221
    %v9352 = vpop.f32.mrf.mxu0
    %v9353 = vadd.f32 0.0, %v9352
    %v9354 = vpop.f32.mrf.mxu0
    %9355 = vmatprep.mubr.f32.mxu0 0.0
    %9356 = vmatmul.mubr.f32.gmra.mxu0 %v9224
    %v9357 = vpop.f32.mrf.mxu0
    %v9358 = vadd.f32 0.0, %v9357
    %v9359 = vpop.f32.mrf.mxu0
    %9360 = vmatprep.mubr.f32.mxu0 0.0
    %9361 = vmatmul.mubr.f32.gmra.mxu0 %v9227
    %v9362 = vpop.f32.mrf.mxu0
    %v9363 = vadd.f32 0.0, %v9362
    %v9364 = vpop.f32.mrf.mxu0
    %9365 = vmatprep.mubr.f32.mxu0 0.0
    %9366 = vmatmul.mubr.f32.gmra.mxu0 %v9230
    %v9367 = vpop.f32.mrf.mxu0
    %v9368 = vadd.f32 0.0, %v9367
    %v9369 = vpop.f32.mrf.mxu0
    %9370 = vmatprep.mubr.f32.mxu0 0.0
    %9371 = vmatmul.mubr.f32.gmra.mxu0 %v9233
    %v9372 = vpop.f32.mrf.mxu0
    %v9373 = vadd.f32 0.0, %v9372
    %v9374 = vpop.f32.mrf.mxu0
    %9375 = vmatprep.mubr.f32.mxu0 0.0
    %9376 = vmatmul.mubr.f32.gmra.mxu0 %v9236
    %v9377 = vpop.f32.mrf.mxu0
    %v9378 = vadd.f32 0.0, %v9377
    %v9379 = vpop.f32.mrf.mxu0
    %9380 = vmatprep.mubr.f32.mxu0 0.0
    %9381 = vmatmul.mubr.f32.gmra.mxu0 %v9239
    %v9382 = vpop.f32.mrf.mxu0
    %v9383 = vadd.f32 0.0, %v9382
    %v9384 = vpop.f32.mrf.mxu0
    %9385 = vdwg.mxu0
    %v9386 = vadd.f32 %v9159, %v9308
    %v9387 = vadd.f32 %v9160, %v9313
    %v9388 = vadd.f32 %v9161, %v9318
    %v9389 = vadd.f32 %v9162, %v9323
    %v9390 = vadd.f32 %v9163, %v9328
    %v9391 = vadd.f32 %v9164, %v9333
    %v9392 = vadd.f32 %v9165, %v9338
    %v9393 = vadd.f32 %v9166, %v9343
    %v9394 = vadd.f32 %v9167, %v9348
    %v9395 = vadd.f32 %v9168, %v9353
    %v9396 = vadd.f32 %v9169, %v9358
    %v9397 = vadd.f32 %v9170, %v9363
    %v9398 = vadd.f32 %v9171, %v9368
    %v9399 = vadd.f32 %v9172, %v9373
    %v9400 = vadd.f32 %v9173, %v9378
    %v9401 = vadd.f32 %v9174, %v9383
    %v9402 = vld [vmem:[%s8947 + $0x2] sm:$0xff]
    %v9403 = vld [vmem:[%s8947 + $0x12] sm:$0xff]
    %v9404 = vld [vmem:[%s8947 + $0x22] sm:$0xff]
    %v9405 = vld [vmem:[%s8947 + $0x32] sm:$0xff]
    %v9406 = vld [vmem:[%s8947 + $0x42] sm:$0xff]
    %v9407 = vld [vmem:[%s8947 + $0x52] sm:$0xff]
    %v9408 = vld [vmem:[%s8947 + $0x62] sm:$0xff]
    %v9409 = vld [vmem:[%s8947 + $0x72] sm:$0xff]
    %v9410 = vld [vmem:[%s8947 + $0xa2] sm:$0xff]
    %v9411 = vld [vmem:[%s8947 + $0xb2] sm:$0xff]
    %v9412 = vld [vmem:[%s8947 + $0xc2] sm:$0xff]
    %v9413 = vld [vmem:[%s8947 + $0xd2] sm:$0xff]
    %v9414 = vld [vmem:[%s8947 + $0xe2] sm:$0xff]
    %v9415 = vld [vmem:[%s8947 + $0xf2] sm:$0xff]
    %v9416 = vld [vmem:[%s8947 + $0x102] sm:$0xff]
    %v9417 = vld [vmem:[%s8947 + $0x112] sm:$0xff]
    %s9418 = scalar_lea.vmem %s5, 64
    %v9419 = vld [vmem:[%s9418] sm:$0xff]
    %v9421 = vsel %vm6618, %v9402, 0
    %v9424 = vsel %vm6618, %v9403, 0
    %v9427 = vsel %vm6618, %v9404, 0
    %v9430 = vsel %vm6618, %v9405, 0
    %v9433 = vsel %vm6618, %v9406, 0
    %v9436 = vsel %vm6618, %v9407, 0
    %v9439 = vsel %vm6618, %v9408, 0
    %v9442 = vsel %vm6618, %v9409, 0
    %v9445 = vsel %vm6618, %v9410, 0
    %v9448 = vsel %vm6618, %v9411, 0
    %v9451 = vsel %vm6618, %v9412, 0
    %v9454 = vsel %vm6618, %v9413, 0
    %v9457 = vsel %vm6618, %v9414, 0
    %v9460 = vsel %vm6618, %v9415, 0
    %v9463 = vsel %vm6618, %v9416, 0
    %v9466 = vsel %vm6618, %v9417, 0
    %9468 = vmatprep.subr.mxu0 0.0
    %9469 = vmatpush1.msra.mxu0 0.0
    %9470 = vmatprep.subr.mxu0 0.0
    %9471 = vmatpush1.msra.mxu0 0.0
    %9472 = vmatprep.subr.mxu0 0.0
    %9473 = vmatpush1.msra.mxu0 0.0
    %9474 = vmatprep.subr.mxu0 0.0
    %9475 = vmatpush1.msra.mxu0 0.0
    %9476 = vmatprep.subr.mxu0 0.0
    %9477 = vmatpush1.msra.mxu0 0.0
    %9478 = vmatprep.subr.mxu0 0.0
    %9479 = vmatpush1.msra.mxu0 0.0
    %9480 = vmatprep.subr.mxu0 0.0
    %9481 = vmatpush1.msra.mxu0 0.0
    %9482 = vmatprep.subr.mxu0 0.0
    %9483 = vmatpush1.msra.mxu0 0.0
    %9484 = vmatprep.subr.mxu0 0.0
    %9485 = vmatpush1.msra.mxu0 0.0
    %9486 = vmatprep.subr.mxu0 0.0
    %9487 = vmatpush1.msra.mxu0 0.0
    %9488 = vmatprep.subr.mxu0 0.0
    %9489 = vmatpush1.msra.mxu0 0.0
    %9490 = vmatprep.subr.mxu0 0.0
    %9491 = vmatpush1.msra.mxu0 0.0
    %9492 = vmatprep.subr.mxu0 0.0
    %9493 = vmatpush1.msra.mxu0 0.0
    %9494 = vmatprep.subr.mxu0 0.0
    %9495 = vmatpush1.msra.mxu0 0.0
    %9496 = vmatprep.subr.mxu0 0.0
    %9497 = vmatpush1.msra.mxu0 0.0
    %9498 = vmatprep.subr.mxu0 0.0
    %9499 = vmatpush1.msra.mxu0 %v9419
    %9500 = vmatprep.subr.mxu0 0.0
    %9501 = vmatpush2.msra.mxu0 0.0
    %9502 = vmatprep.subr.mxu0 0.0
    %9503 = vmatpush2.msra.mxu0 0.0
    %9504 = vmatprep.subr.mxu0 0.0
    %9505 = vmatpush2.msra.mxu0 0.0
    %9506 = vmatprep.subr.mxu0 0.0
    %9507 = vmatpush2.msra.mxu0 0.0
    %9508 = vmatprep.subr.mxu0 0.0
    %9509 = vmatpush2.msra.mxu0 0.0
    %9510 = vmatprep.subr.mxu0 0.0
    %9511 = vmatpush2.msra.mxu0 0.0
    %9512 = vmatprep.subr.mxu0 0.0
    %9513 = vmatpush2.msra.mxu0 0.0
    %9514 = vmatprep.subr.mxu0 0.0
    %9515 = vmatpush2.msra.mxu0 0.0
    %9516 = vmatprep.subr.mxu0 0.0
    %9517 = vmatpush2.msra.mxu0 0.0
    %9518 = vmatprep.subr.mxu0 0.0
    %9519 = vmatpush2.msra.mxu0 0.0
    %9520 = vmatprep.subr.mxu0 0.0
    %9521 = vmatpush2.msra.mxu0 0.0
    %9522 = vmatprep.subr.mxu0 0.0
    %9523 = vmatpush2.msra.mxu0 0.0
    %9524 = vmatprep.subr.mxu0 0.0
    %9525 = vmatpush2.msra.mxu0 0.0
    %9526 = vmatprep.subr.mxu0 0.0
    %9527 = vmatpush2.msra.mxu0 0.0
    %9528 = vmatprep.subr.mxu0 0.0
    %9529 = vmatpush2.msra.mxu0 0.0
    %9530 = vmatprep.subr.mxu0 0.0
    %9531 = vmatpush2.msra.mxu0 0.0
    %9532 = vmatprep.mubr.f32.mxu0 0.0
    %9533 = vmatmul.mubr.f32.gmra.mxu0 %v9421
    %v9534 = vpop.f32.mrf.mxu0
    %v9535 = vadd.f32 0.0, %v9534
    %v9536 = vpop.f32.mrf.mxu0
    %9537 = vmatprep.mubr.f32.mxu0 0.0
    %9538 = vmatmul.mubr.f32.gmra.mxu0 %v9424
    %v9539 = vpop.f32.mrf.mxu0
    %v9540 = vadd.f32 0.0, %v9539
    %v9541 = vpop.f32.mrf.mxu0
    %9542 = vmatprep.mubr.f32.mxu0 0.0
    %9543 = vmatmul.mubr.f32.gmra.mxu0 %v9427
    %v9544 = vpop.f32.mrf.mxu0
    %v9545 = vadd.f32 0.0, %v9544
    %v9546 = vpop.f32.mrf.mxu0
    %9547 = vmatprep.mubr.f32.mxu0 0.0
    %9548 = vmatmul.mubr.f32.gmra.mxu0 %v9430
    %v9549 = vpop.f32.mrf.mxu0
    %v9550 = vadd.f32 0.0, %v9549
    %v9551 = vpop.f32.mrf.mxu0
    %9552 = vmatprep.mubr.f32.mxu0 0.0
    %9553 = vmatmul.mubr.f32.gmra.mxu0 %v9433
    %v9554 = vpop.f32.mrf.mxu0
    %v9555 = vadd.f32 0.0, %v9554
    %v9556 = vpop.f32.mrf.mxu0
    %9557 = vmatprep.mubr.f32.mxu0 0.0
    %9558 = vmatmul.mubr.f32.gmra.mxu0 %v9436
    %v9559 = vpop.f32.mrf.mxu0
    %v9560 = vadd.f32 0.0, %v9559
    %v9561 = vpop.f32.mrf.mxu0
    %9562 = vmatprep.mubr.f32.mxu0 0.0
    %9563 = vmatmul.mubr.f32.gmra.mxu0 %v9439
    %v9564 = vpop.f32.mrf.mxu0
    %v9565 = vadd.f32 0.0, %v9564
    %v9566 = vpop.f32.mrf.mxu0
    %9567 = vmatprep.mubr.f32.mxu0 0.0
    %9568 = vmatmul.mubr.f32.gmra.mxu0 %v9442
    %v9569 = vpop.f32.mrf.mxu0
    %v9570 = vadd.f32 0.0, %v9569
    %v9571 = vpop.f32.mrf.mxu0
    %9572 = vmatprep.mubr.f32.mxu0 0.0
    %9573 = vmatmul.mubr.f32.gmra.mxu0 %v9445
    %v9574 = vpop.f32.mrf.mxu0
    %v9575 = vadd.f32 0.0, %v9574
    %v9576 = vpop.f32.mrf.mxu0
    %9577 = vmatprep.mubr.f32.mxu0 0.0
    %9578 = vmatmul.mubr.f32.gmra.mxu0 %v9448
    %v9579 = vpop.f32.mrf.mxu0
    %v9580 = vadd.f32 0.0, %v9579
    %v9581 = vpop.f32.mrf.mxu0
    %9582 = vmatprep.mubr.f32.mxu0 0.0
    %9583 = vmatmul.mubr.f32.gmra.mxu0 %v9451
    %v9584 = vpop.f32.mrf.mxu0
    %v9585 = vadd.f32 0.0, %v9584
    %v9586 = vpop.f32.mrf.mxu0
    %9587 = vmatprep.mubr.f32.mxu0 0.0
    %9588 = vmatmul.mubr.f32.gmra.mxu0 %v9454
    %v9589 = vpop.f32.mrf.mxu0
    %v9590 = vadd.f32 0.0, %v9589
    %v9591 = vpop.f32.mrf.mxu0
    %9592 = vmatprep.mubr.f32.mxu0 0.0
    %9593 = vmatmul.mubr.f32.gmra.mxu0 %v9457
    %v9594 = vpop.f32.mrf.mxu0
    %v9595 = vadd.f32 0.0, %v9594
    %v9596 = vpop.f32.mrf.mxu0
    %9597 = vmatprep.mubr.f32.mxu0 0.0
    %9598 = vmatmul.mubr.f32.gmra.mxu0 %v9460
    %v9599 = vpop.f32.mrf.mxu0
    %v9600 = vadd.f32 0.0, %v9599
    %v9601 = vpop.f32.mrf.mxu0
    %9602 = vmatprep.mubr.f32.mxu0 0.0
    %9603 = vmatmul.mubr.f32.gmra.mxu0 %v9463
    %v9604 = vpop.f32.mrf.mxu0
    %v9605 = vadd.f32 0.0, %v9604
    %v9606 = vpop.f32.mrf.mxu0
    %9607 = vmatprep.mubr.f32.mxu0 0.0
    %9608 = vmatmul.mubr.f32.gmra.mxu0 %v9466
    %v9609 = vpop.f32.mrf.mxu0
    %v9610 = vadd.f32 0.0, %v9609
    %v9611 = vpop.f32.mrf.mxu0
    %9612 = vdwg.mxu0
    %v9613 = vadd.f32 %v9386, %v9535
    %v9614 = vadd.f32 %v9387, %v9540
    %v9615 = vadd.f32 %v9388, %v9545
    %v9616 = vadd.f32 %v9389, %v9550
    %v9617 = vadd.f32 %v9390, %v9555
    %v9618 = vadd.f32 %v9391, %v9560
    %v9619 = vadd.f32 %v9392, %v9565
    %v9620 = vadd.f32 %v9393, %v9570
    %v9621 = vadd.f32 %v9394, %v9575
    %v9622 = vadd.f32 %v9395, %v9580
    %v9623 = vadd.f32 %v9396, %v9585
    %v9624 = vadd.f32 %v9397, %v9590
    %v9625 = vadd.f32 %v9398, %v9595
    %v9626 = vadd.f32 %v9399, %v9600
    %v9627 = vadd.f32 %v9400, %v9605
    %v9628 = vadd.f32 %v9401, %v9610
    %v9629 = vld [vmem:[%s6] sm:$0x1]
    %v9631 = vlaneseq
    %v9632 = vshrl.u32 %v9631, 7
    %v9633 = vsub.s32 0, %v9632
    %v9634 = vrot.slane %v9629, %v9633
    %v9636 = vadd.f32 %v9613, %v9634
    %v9637 = vadd.f32 %v9614, %v9634
    %v9638 = vadd.f32 %v9615, %v9634
    %v9639 = vadd.f32 %v9616, %v9634
    %v9640 = vadd.f32 %v9617, %v9634
    %v9641 = vadd.f32 %v9618, %v9634
    %v9642 = vadd.f32 %v9619, %v9634
    %v9643 = vadd.f32 %v9620, %v9634
    %v9644 = vadd.f32 %v9621, %v9634
    %v9645 = vadd.f32 %v9622, %v9634
    %v9646 = vadd.f32 %v9623, %v9634
    %v9647 = vadd.f32 %v9624, %v9634
    %v9648 = vadd.f32 %v9625, %v9634
    %v9649 = vadd.f32 %v9626, %v9634
    %v9650 = vadd.f32 %v9627, %v9634
    %v9651 = vadd.f32 %v9628, %v9634
    %vm9652 = vcmask 130048
    %v9653 = vsel %vm9652, %v9636, 0.0
    %v9654 = vsel %vm9652, %v9637, 0.0
    %v9655 = vadd.f32 %v9653, %v9654
    %v9656 = vsel %vm9652, %v9638, 0.0
    %v9657 = vadd.f32 %v9655, %v9656
    %v9658 = vsel %vm9652, %v9639, 0.0
    %v9659 = vadd.f32 %v9657, %v9658
    %v9660 = vsel %vm9652, %v9640, 0.0
    %v9661 = vadd.f32 %v9659, %v9660
    %v9662 = vsel %vm9652, %v9641, 0.0
    %v9663 = vadd.f32 %v9661, %v9662
    %v9664 = vsel %vm9652, %v9642, 0.0
    %v9665 = vadd.f32 %v9663, %v9664
    %v9666 = vsel %vm9652, %v9643, 0.0
    %v9667 = vadd.f32 %v9665, %v9666
    %v9668 = vsel %vm9652, %v9644, 0.0
    %v9669 = vadd.f32 %v9667, %v9668
    %v9670 = vsel %vm9652, %v9645, 0.0
    %v9671 = vadd.f32 %v9669, %v9670
    %v9672 = vsel %vm9652, %v9646, 0.0
    %v9673 = vadd.f32 %v9671, %v9672
    %v9674 = vsel %vm9652, %v9647, 0.0
    %v9675 = vadd.f32 %v9673, %v9674
    %v9676 = vsel %vm9652, %v9648, 0.0
    %v9677 = vadd.f32 %v9675, %v9676
    %v9678 = vsel %vm9652, %v9649, 0.0
    %v9679 = vadd.f32 %v9677, %v9678
    %v9680 = vsel %vm9652, %v9650, 0.0
    %v9681 = vadd.f32 %v9679, %v9680
    %v9682 = vsel %vm9652, %v9651, 0.0
    %v9683 = vadd.f32 %v9681, %v9682
    %v9684 = vrot.slane %v9683, 4
    %v9685 = vadd.f32 %v9683, %v9684
    %v9686 = vrot.slane %v9685, 2
    %v9687 = vadd.f32 %v9685, %v9686
    %v9688 = vrot.slane %v9687, 1
    %v9689 = vadd.f32 %v9687, %v9688
    %v9690 = vmul.f32 %v9689, 0.0078125
    %v9691 = vmul.f32 %v9636, %v9636
    %v9692 = vmul.f32 %v9637, %v9637
    %v9693 = vmul.f32 %v9638, %v9638
    %v9694 = vmul.f32 %v9639, %v9639
    %v9695 = vmul.f32 %v9640, %v9640
    %v9696 = vmul.f32 %v9641, %v9641
    %v9697 = vmul.f32 %v9642, %v9642
    %v9698 = vmul.f32 %v9643, %v9643
    %v9699 = vmul.f32 %v9644, %v9644
    %v9700 = vmul.f32 %v9645, %v9645
    %v9701 = vmul.f32 %v9646, %v9646
    %v9702 = vmul.f32 %v9647, %v9647
    %v9703 = vmul.f32 %v9648, %v9648
    %v9704 = vmul.f32 %v9649, %v9649
    %v9705 = vmul.f32 %v9650, %v9650
    %v9706 = vmul.f32 %v9651, %v9651
    %v9707 = vsel %vm9652, %v9691, 0.0
    %v9708 = vsel %vm9652, %v9692, 0.0
    %v9709 = vadd.f32 %v9707, %v9708
    %v9710 = vsel %vm9652, %v9693, 0.0
    %v9711 = vadd.f32 %v9709, %v9710
    %v9712 = vsel %vm9652, %v9694, 0.0
    %v9713 = vadd.f32 %v9711, %v9712
    %v9714 = vsel %vm9652, %v9695, 0.0
    %v9715 = vadd.f32 %v9713, %v9714
    %v9716 = vsel %vm9652, %v9696, 0.0
    %v9717 = vadd.f32 %v9715, %v9716
    %v9718 = vsel %vm9652, %v9697, 0.0
    %v9719 = vadd.f32 %v9717, %v9718
    %v9720 = vsel %vm9652, %v9698, 0.0
    %v9721 = vadd.f32 %v9719, %v9720
    %v9722 = vsel %vm9652, %v9699, 0.0
    %v9723 = vadd.f32 %v9721, %v9722
    %v9724 = vsel %vm9652, %v9700, 0.0
    %v9725 = vadd.f32 %v9723, %v9724
    %v9726 = vsel %vm9652, %v9701, 0.0
    %v9727 = vadd.f32 %v9725, %v9726
    %v9728 = vsel %vm9652, %v9702, 0.0
    %v9729 = vadd.f32 %v9727, %v9728
    %v9730 = vsel %vm9652, %v9703, 0.0
    %v9731 = vadd.f32 %v9729, %v9730
    %v9732 = vsel %vm9652, %v9704, 0.0
    %v9733 = vadd.f32 %v9731, %v9732
    %v9734 = vsel %vm9652, %v9705, 0.0
    %v9735 = vadd.f32 %v9733, %v9734
    %v9736 = vsel %vm9652, %v9706, 0.0
    %v9737 = vadd.f32 %v9735, %v9736
    %v9738 = vrot.slane %v9737, 4
    %v9739 = vadd.f32 %v9737, %v9738
    %v9740 = vrot.slane %v9739, 2
    %v9741 = vadd.f32 %v9739, %v9740
    %v9742 = vrot.slane %v9741, 1
    %v9743 = vadd.f32 %v9741, %v9742
    %v9744 = vmul.f32 %v9743, 0.0078125
    %v9745 = vmul.f32 %v9690, %v9690
    %v9746 = vsub.f32 %v9744, %v9745
    %v9747 = vsub.f32 %v9636, %v9690
    %v9748 = vsub.f32 %v9637, %v9690
    %v9749 = vsub.f32 %v9638, %v9690
    %v9750 = vsub.f32 %v9639, %v9690
    %v9751 = vsub.f32 %v9640, %v9690
    %v9752 = vsub.f32 %v9641, %v9690
    %v9753 = vsub.f32 %v9642, %v9690
    %v9754 = vsub.f32 %v9643, %v9690
    %v9755 = vsub.f32 %v9644, %v9690
    %v9756 = vsub.f32 %v9645, %v9690
    %v9757 = vsub.f32 %v9646, %v9690
    %v9758 = vsub.f32 %v9647, %v9690
    %v9759 = vsub.f32 %v9648, %v9690
    %v9760 = vsub.f32 %v9649, %v9690
    %v9761 = vsub.f32 %v9650, %v9690
    %v9762 = vsub.f32 %v9651, %v9690
    %v9763 = vadd.f32 %v9746, 1e-05
    %v9764 = vrsqrt.pop %v9763
    %v9765 = vmul.f32 %v9747, %v9764
    %v9766 = vmul.f32 %v9748, %v9764
    %v9767 = vmul.f32 %v9749, %v9764
    %v9768 = vmul.f32 %v9750, %v9764
    %v9769 = vmul.f32 %v9751, %v9764
    %v9770 = vmul.f32 %v9752, %v9764
    %v9771 = vmul.f32 %v9753, %v9764
    %v9772 = vmul.f32 %v9754, %v9764
    %v9773 = vmul.f32 %v9755, %v9764
    %v9774 = vmul.f32 %v9756, %v9764
    %v9775 = vmul.f32 %v9757, %v9764
    %v9776 = vmul.f32 %v9758, %v9764
    %v9777 = vmul.f32 %v9759, %v9764
    %v9778 = vmul.f32 %v9760, %v9764
    %v9779 = vmul.f32 %v9761, %v9764
    %v9780 = vmul.f32 %v9762, %v9764
    %v9781 = vld [vmem:[%s7] sm:$0x1]
    %v9783 = vlaneseq
    %v9784 = vshrl.u32 %v9783, 7
    %v9785 = vsub.s32 0, %v9784
    %v9786 = vrot.slane %v9781, %v9785
    %v9788 = vmul.f32 %v9765, %v9786
    %v9789 = vmul.f32 %v9766, %v9786
    %v9790 = vmul.f32 %v9767, %v9786
    %v9791 = vmul.f32 %v9768, %v9786
    %v9792 = vmul.f32 %v9769, %v9786
    %v9793 = vmul.f32 %v9770, %v9786
    %v9794 = vmul.f32 %v9771, %v9786
    %v9795 = vmul.f32 %v9772, %v9786
    %v9796 = vmul.f32 %v9773, %v9786
    %v9797 = vmul.f32 %v9774, %v9786
    %v9798 = vmul.f32 %v9775, %v9786
    %v9799 = vmul.f32 %v9776, %v9786
    %v9800 = vmul.f32 %v9777, %v9786
    %v9801 = vmul.f32 %v9778, %v9786
    %v9802 = vmul.f32 %v9779, %v9786
    %v9803 = vmul.f32 %v9780, %v9786
    %v9804 = vld [vmem:[%s8] sm:$0x1]
    %v9806 = vlaneseq
    %v9807 = vshrl.u32 %v9806, 7
    %v9808 = vsub.s32 0, %v9807
    %v9809 = vrot.slane %v9804, %v9808
    %v9811 = vadd.f32 %v9788, %v9809
    %v9812 = vadd.f32 %v9789, %v9809
    %v9813 = vadd.f32 %v9790, %v9809
    %v9814 = vadd.f32 %v9791, %v9809
    %v9815 = vadd.f32 %v9792, %v9809
    %v9816 = vadd.f32 %v9793, %v9809
    %v9817 = vadd.f32 %v9794, %v9809
    %v9818 = vadd.f32 %v9795, %v9809
    %v9819 = vadd.f32 %v9796, %v9809
    %v9820 = vadd.f32 %v9797, %v9809
    %v9821 = vadd.f32 %v9798, %v9809
    %v9822 = vadd.f32 %v9799, %v9809
    %v9823 = vadd.f32 %v9800, %v9809
    %v9824 = vadd.f32 %v9801, %v9809
    %v9825 = vadd.f32 %v9802, %v9809
    %v9826 = vadd.f32 %v9803, %v9809
    %v9827 = vmax.f32 %v9811, 0.0
    %v9828 = vmax.f32 %v9812, 0.0
    %v9829 = vmax.f32 %v9813, 0.0
    %v9830 = vmax.f32 %v9814, 0.0
    %v9831 = vmax.f32 %v9815, 0.0
    %v9832 = vmax.f32 %v9816, 0.0
    %v9833 = vmax.f32 %v9817, 0.0
    %v9834 = vmax.f32 %v9818, 0.0
    %v9835 = vmax.f32 %v9819, 0.0
    %v9836 = vmax.f32 %v9820, 0.0
    %v9837 = vmax.f32 %v9821, 0.0
    %v9838 = vmax.f32 %v9822, 0.0
    %v9839 = vmax.f32 %v9823, 0.0
    %v9840 = vmax.f32 %v9824, 0.0
    %v9841 = vmax.f32 %v9825, 0.0
    %v9842 = vmax.f32 %v9826, 0.0
    %9843 = vst.msk [vmem:[#allocation5] sm:$0xff] %vm9652, %v9827
    %9844 = vst.msk [vmem:[#allocation5 + $0x8] sm:$0xff] %vm9652, %v9828
    %9845 = vst.msk [vmem:[#allocation5 + $0x10] sm:$0xff] %vm9652, %v9829
    %9846 = vst.msk [vmem:[#allocation5 + $0x18] sm:$0xff] %vm9652, %v9830
    %9847 = vst.msk [vmem:[#allocation5 + $0x20] sm:$0xff] %vm9652, %v9831
    %9848 = vst.msk [vmem:[#allocation5 + $0x28] sm:$0xff] %vm9652, %v9832
    %9849 = vst.msk [vmem:[#allocation5 + $0x30] sm:$0xff] %vm9652, %v9833
    %9850 = vst.msk [vmem:[#allocation5 + $0x38] sm:$0xff] %vm9652, %v9834
    %9851 = vst.msk [vmem:[#allocation5 + $0x40] sm:$0xff] %vm9652, %v9835
    %9852 = vst.msk [vmem:[#allocation5 + $0x48] sm:$0xff] %vm9652, %v9836
    %9853 = vst.msk [vmem:[#allocation5 + $0x50] sm:$0xff] %vm9652, %v9837
    %9854 = vst.msk [vmem:[#allocation5 + $0x58] sm:$0xff] %vm9652, %v9838
    %9855 = vst.msk [vmem:[#allocation5 + $0x60] sm:$0xff] %vm9652, %v9839
    %9856 = vst.msk [vmem:[#allocation5 + $0x68] sm:$0xff] %vm9652, %v9840
    %9857 = vst.msk [vmem:[#allocation5 + $0x70] sm:$0xff] %vm9652, %v9841
    %9858 = vst.msk [vmem:[#allocation5 + $0x78] sm:$0xff] %vm9652, %v9842
    %v9859 = vld [vmem:[#allocation5] ss:$2 sm:$0xf]
    %s9860 = scalar_lea.vmem [#allocation5], 8
    %v9861 = vld [vmem:[%s9860] ss:$2 sm:$0xf]
    %s9862 = scalar_lea.vmem [#allocation5], 16
    %v9863 = vld [vmem:[%s9862] ss:$2 sm:$0xf]
    %s9864 = scalar_lea.vmem [#allocation5], 24
    %v9865 = vld [vmem:[%s9864] ss:$2 sm:$0xf]
    %s9866 = scalar_lea.vmem [#allocation5], 32
    %v9867 = vld [vmem:[%s9866] ss:$2 sm:$0xf]
    %s9868 = scalar_lea.vmem [#allocation5], 40
    %v9869 = vld [vmem:[%s9868] ss:$2 sm:$0xf]
    %s9870 = scalar_lea.vmem [#allocation5], 48
    %v9871 = vld [vmem:[%s9870] ss:$2 sm:$0xf]
    %s9872 = scalar_lea.vmem [#allocation5], 56
    %v9873 = vld [vmem:[%s9872] ss:$2 sm:$0xf]
    %s9874 = scalar_lea.vmem [#allocation5], 64
    %v9875 = vld [vmem:[%s9874] ss:$2 sm:$0xf]
    %s9876 = scalar_lea.vmem [#allocation5], 72
    %v9877 = vld [vmem:[%s9876] ss:$2 sm:$0xf]
    %s9878 = scalar_lea.vmem [#allocation5], 80
    %v9879 = vld [vmem:[%s9878] ss:$2 sm:$0xf]
    %s9880 = scalar_lea.vmem [#allocation5], 88
    %v9881 = vld [vmem:[%s9880] ss:$2 sm:$0xf]
    %s9882 = scalar_lea.vmem [#allocation5], 96
    %v9883 = vld [vmem:[%s9882] ss:$2 sm:$0xf]
    %s9884 = scalar_lea.vmem [#allocation5], 104
    %v9885 = vld [vmem:[%s9884] ss:$2 sm:$0xf]
    %s9886 = scalar_lea.vmem [#allocation5], 112
    %v9887 = vld [vmem:[%s9886] ss:$2 sm:$0xf]
    %s9888 = scalar_lea.vmem [#allocation5], 120
    %v9889 = vld [vmem:[%s9888] ss:$2 sm:$0xf]
    %s9890 = scalar_lea.vmem [#allocation5], 1
    %v9891 = vld [vmem:[%s9890] ss:$2 sm:$0xf]
    %s9892 = scalar_lea.vmem [#allocation5], 9
    %v9893 = vld [vmem:[%s9892] ss:$2 sm:$0xf]
    %s9894 = scalar_lea.vmem [#allocation5], 17
    %v9895 = vld [vmem:[%s9894] ss:$2 sm:$0xf]
    %s9896 = scalar_lea.vmem [#allocation5], 25
    %v9897 = vld [vmem:[%s9896] ss:$2 sm:$0xf]
    %s9898 = scalar_lea.vmem [#allocation5], 33
    %v9899 = vld [vmem:[%s9898] ss:$2 sm:$0xf]
    %s9900 = scalar_lea.vmem [#allocation5], 41
    %v9901 = vld [vmem:[%s9900] ss:$2 sm:$0xf]
    %s9902 = scalar_lea.vmem [#allocation5], 49
    %v9903 = vld [vmem:[%s9902] ss:$2 sm:$0xf]
    %s9904 = scalar_lea.vmem [#allocation5], 57
    %v9905 = vld [vmem:[%s9904] ss:$2 sm:$0xf]
    %s9906 = scalar_lea.vmem [#allocation5], 65
    %v9907 = vld [vmem:[%s9906] ss:$2 sm:$0xf]
    %s9908 = scalar_lea.vmem [#allocation5], 73
    %v9909 = vld [vmem:[%s9908] ss:$2 sm:$0xf]
    %s9910 = scalar_lea.vmem [#allocation5], 81
    %v9911 = vld [vmem:[%s9910] ss:$2 sm:$0xf]
    %s9912 = scalar_lea.vmem [#allocation5], 89
    %v9913 = vld [vmem:[%s9912] ss:$2 sm:$0xf]
    %s9914 = scalar_lea.vmem [#allocation5], 97
    %v9915 = vld [vmem:[%s9914] ss:$2 sm:$0xf]
    %s9916 = scalar_lea.vmem [#allocation5], 105
    %v9917 = vld [vmem:[%s9916] ss:$2 sm:$0xf]
    %s9918 = scalar_lea.vmem [#allocation5], 113
    %v9919 = vld [vmem:[%s9918] ss:$2 sm:$0xf]
    %s9920 = scalar_lea.vmem [#allocation5], 121
    %v9921 = vld [vmem:[%s9920] ss:$2 sm:$0xf]
    %v9922 = vmax.f32 %v9859, %v9891
    %v9923 = vmax.f32 %v9861, %v9893
    %v9924 = vmax.f32 %v9863, %v9895
    %v9925 = vmax.f32 %v9865, %v9897
    %v9926 = vmax.f32 %v9867, %v9899
    %v9927 = vmax.f32 %v9869, %v9901
    %v9928 = vmax.f32 %v9871, %v9903
    %v9929 = vmax.f32 %v9873, %v9905
    %v9930 = vmax.f32 %v9875, %v9907
    %v9931 = vmax.f32 %v9877, %v9909
    %v9932 = vmax.f32 %v9879, %v9911
    %v9933 = vmax.f32 %v9881, %v9913
    %v9934 = vmax.f32 %v9883, %v9915
    %v9935 = vmax.f32 %v9885, %v9917
    %v9936 = vmax.f32 %v9887, %v9919
    %v9937 = vmax.f32 %v9889, %v9921
    %vm9938 = vcmask 125952
    %v9939 = vsel %vm9938, %v9922, -inf
    %v9940 = vsel %vm9938, %v9923, -inf
    %v9941 = vmax.f32 %v9939, %v9940
    %v9942 = vsel %vm9938, %v9924, -inf
    %v9943 = vsel %vm9938, %v9925, -inf
    %v9944 = vmax.f32 %v9942, %v9943
    %v9945 = vsel %vm9938, %v9926, -inf
    %v9946 = vsel %vm9938, %v9927, -inf
    %v9947 = vmax.f32 %v9945, %v9946
    %v9948 = vsel %vm9938, %v9928, -inf
    %v9949 = vsel %vm9938, %v9929, -inf
    %v9950 = vmax.f32 %v9948, %v9949
    %v9951 = vsel %vm9938, %v9930, -inf
    %v9952 = vsel %vm9938, %v9931, -inf
    %v9953 = vmax.f32 %v9951, %v9952
    %v9954 = vsel %vm9938, %v9932, -inf
    %v9955 = vsel %vm9938, %v9933, -inf
    %v9956 = vmax.f32 %v9954, %v9955
    %v9957 = vsel %vm9938, %v9934, -inf
    %v9958 = vsel %vm9938, %v9935, -inf
    %v9959 = vmax.f32 %v9957, %v9958
    %v9960 = vsel %vm9938, %v9936, -inf
    %v9961 = vsel %vm9938, %v9937, -inf
    %v9962 = vmax.f32 %v9960, %v9961
    %9963 = vst.msk [vmem:[#allocation6] sm:$0xf] %vm9938, %v9941
    %9964 = vst.msk [vmem:[#allocation6 + $0x4] sm:$0xf] %vm9938, %v9944
    %9965 = vst.msk [vmem:[#allocation6 + $0x8] sm:$0xf] %vm9938, %v9947
    %9966 = vst.msk [vmem:[#allocation6 + $0xc] sm:$0xf] %vm9938, %v9950
    %9967 = vst.msk [vmem:[#allocation6 + $0x10] sm:$0xf] %vm9938, %v9953
    %9968 = vst.msk [vmem:[#allocation6 + $0x14] sm:$0xf] %vm9938, %v9956
    %9969 = vst.msk [vmem:[#allocation6 + $0x18] sm:$0xf] %vm9938, %v9959
    %9970 = vst.msk [vmem:[#allocation6 + $0x1c] sm:$0xf] %vm9938, %v9962
    %v9971 = vld [vmem:[#allocation6] sm:$0x1]
    %v9972 = vld [vmem:[#allocation6 + $0x10] sm:$0x1]
    %v9973 = vld [vmem:[%s9] sm:$0xff]
    %v9974 = vld [vmem:[%s9 + $0x8] sm:$0xff]
    %v9975 = vld [vmem:[#allocation6 + $0x1] sm:$0x1]
    %v9976 = vld [vmem:[#allocation6 + $0x11] sm:$0x1]
    %s9977 = scalar_lea.vmem %s9, 16
    %v9978 = vld [vmem:[%s9977] sm:$0xff]
    %v9979 = vld [vmem:[%s9977 + $0x8] sm:$0xff]
    %v9982 = vrot.slane %v9976, 7
    %vm9983 = vcmask 1041409
    %v9984 = vsel %vm9983, %v9982, %v9975
    %v9985 = vsel %vm9652, %v9984, 0
    %9987 = vmatprep.subr.mxu0 0.0
    %9988 = vmatpush1.msra.mxu0 0.0
    %9989 = vmatprep.subr.mxu0 0.0
    %9990 = vmatpush1.msra.mxu0 0.0
    %9991 = vmatprep.subr.mxu0 0.0
    %9992 = vmatpush1.msra.mxu0 0.0
    %9993 = vmatprep.subr.mxu0 0.0
    %9994 = vmatpush1.msra.mxu0 0.0
    %9995 = vmatprep.subr.mxu0 0.0
    %9996 = vmatpush1.msra.mxu0 0.0
    %9997 = vmatprep.subr.mxu0 0.0
    %9998 = vmatpush1.msra.mxu0 0.0
    %9999 = vmatprep.subr.mxu0 0.0
    %10000 = vmatpush1.msra.mxu0 0.0
    %10001 = vmatprep.subr.mxu0 0.0
    %10002 = vmatpush1.msra.mxu0 0.0
    %10003 = vmatprep.subr.mxu0 0.0
    %10004 = vmatpush1.msra.mxu0 0.0
    %10005 = vmatprep.subr.mxu0 0.0
    %10006 = vmatpush1.msra.mxu0 0.0
    %10007 = vmatprep.subr.mxu0 0.0
    %10008 = vmatpush1.msra.mxu0 0.0
    %10009 = vmatprep.subr.mxu0 0.0
    %10010 = vmatpush1.msra.mxu0 0.0
    %10011 = vmatprep.subr.mxu0 0.0
    %10012 = vmatpush1.msra.mxu0 0.0
    %10013 = vmatprep.subr.mxu0 0.0
    %10014 = vmatpush1.msra.mxu0 0.0
    %10015 = vmatprep.subr.mxu0 0.0
    %10016 = vmatpush1.msra.mxu0 %v9979
    %10017 = vmatprep.subr.mxu0 0.0
    %10018 = vmatpush1.msra.mxu0 %v9978
    %10019 = vmatprep.subr.mxu0 0.0
    %10020 = vmatpush2.msra.mxu0 0.0
    %10021 = vmatprep.subr.mxu0 0.0
    %10022 = vmatpush2.msra.mxu0 0.0
    %10023 = vmatprep.subr.mxu0 0.0
    %10024 = vmatpush2.msra.mxu0 0.0
    %10025 = vmatprep.subr.mxu0 0.0
    %10026 = vmatpush2.msra.mxu0 0.0
    %10027 = vmatprep.subr.mxu0 0.0
    %10028 = vmatpush2.msra.mxu0 0.0
    %10029 = vmatprep.subr.mxu0 0.0
    %10030 = vmatpush2.msra.mxu0 0.0
    %10031 = vmatprep.subr.mxu0 0.0
    %10032 = vmatpush2.msra.mxu0 0.0
    %10033 = vmatprep.subr.mxu0 0.0
    %10034 = vmatpush2.msra.mxu0 0.0
    %10035 = vmatprep.subr.mxu0 0.0
    %10036 = vmatpush2.msra.mxu0 0.0
    %10037 = vmatprep.subr.mxu0 0.0
    %10038 = vmatpush2.msra.mxu0 0.0
    %10039 = vmatprep.subr.mxu0 0.0
    %10040 = vmatpush2.msra.mxu0 0.0
    %10041 = vmatprep.subr.mxu0 0.0
    %10042 = vmatpush2.msra.mxu0 0.0
    %10043 = vmatprep.subr.mxu0 0.0
    %10044 = vmatpush2.msra.mxu0 0.0
    %10045 = vmatprep.subr.mxu0 0.0
    %10046 = vmatpush2.msra.mxu0 0.0
    %10047 = vmatprep.subr.mxu0 0.0
    %10048 = vmatpush2.msra.mxu0 0.0
    %10049 = vmatprep.subr.mxu0 0.0
    %10050 = vmatpush2.msra.mxu0 0.0
    %10051 = vmatprep.mubr.f32.mxu0 0.0
    %10052 = vmatmul.mubr.f32.gmra.mxu0 %v9985
    %v10053 = vpop.f32.mrf.mxu0
    %v10054 = vadd.f32 0.0, %v10053
    %v10055 = vpop.f32.mrf.mxu0
    %10056 = vdwg.mxu0
    %v10059 = vrot.slane %v9972, 7
    %v10060 = vsel %vm9983, %v10059, %v9971
    %v10061 = vsel %vm9652, %v10060, 0
    %10063 = vmatprep.subr.mxu0 0.0
    %10064 = vmatpush1.msra.mxu0 0.0
    %10065 = vmatprep.subr.mxu0 0.0
    %10066 = vmatpush1.msra.mxu0 0.0
    %10067 = vmatprep.subr.mxu0 0.0
    %10068 = vmatpush1.msra.mxu0 0.0
    %10069 = vmatprep.subr.mxu0 0.0
    %10070 = vmatpush1.msra.mxu0 0.0
    %10071 = vmatprep.subr.mxu0 0.0
    %10072 = vmatpush1.msra.mxu0 0.0
    %10073 = vmatprep.subr.mxu0 0.0
    %10074 = vmatpush1.msra.mxu0 0.0
    %10075 = vmatprep.subr.mxu0 0.0
    %10076 = vmatpush1.msra.mxu0 0.0
    %10077 = vmatprep.subr.mxu0 0.0
    %10078 = vmatpush1.msra.mxu0 0.0
    %10079 = vmatprep.subr.mxu0 0.0
    %10080 = vmatpush1.msra.mxu0 0.0
    %10081 = vmatprep.subr.mxu0 0.0
    %10082 = vmatpush1.msra.mxu0 0.0
    %10083 = vmatprep.subr.mxu0 0.0
    %10084 = vmatpush1.msra.mxu0 0.0
    %10085 = vmatprep.subr.mxu0 0.0
    %10086 = vmatpush1.msra.mxu0 0.0
    %10087 = vmatprep.subr.mxu0 0.0
    %10088 = vmatpush1.msra.mxu0 0.0
    %10089 = vmatprep.subr.mxu0 0.0
    %10090 = vmatpush1.msra.mxu0 0.0
    %10091 = vmatprep.subr.mxu0 0.0
    %10092 = vmatpush1.msra.mxu0 %v9974
    %10093 = vmatprep.subr.mxu0 0.0
    %10094 = vmatpush1.msra.mxu0 %v9973
    %10095 = vmatprep.subr.mxu0 0.0
    %10096 = vmatpush2.msra.mxu0 0.0
    %10097 = vmatprep.subr.mxu0 0.0
    %10098 = vmatpush2.msra.mxu0 0.0
    %10099 = vmatprep.subr.mxu0 0.0
    %10100 = vmatpush2.msra.mxu0 0.0
    %10101 = vmatprep.subr.mxu0 0.0
    %10102 = vmatpush2.msra.mxu0 0.0
    %10103 = vmatprep.subr.mxu0 0.0
    %10104 = vmatpush2.msra.mxu0 0.0
    %10105 = vmatprep.subr.mxu0 0.0
    %10106 = vmatpush2.msra.mxu0 0.0
    %10107 = vmatprep.subr.mxu0 0.0
    %10108 = vmatpush2.msra.mxu0 0.0
    %10109 = vmatprep.subr.mxu0 0.0
    %10110 = vmatpush2.msra.mxu0 0.0
    %10111 = vmatprep.subr.mxu0 0.0
    %10112 = vmatpush2.msra.mxu0 0.0
    %10113 = vmatprep.subr.mxu0 0.0
    %10114 = vmatpush2.msra.mxu0 0.0
    %10115 = vmatprep.subr.mxu0 0.0
    %10116 = vmatpush2.msra.mxu0 0.0
    %10117 = vmatprep.subr.mxu0 0.0
    %10118 = vmatpush2.msra.mxu0 0.0
    %10119 = vmatprep.subr.mxu0 0.0
    %10120 = vmatpush2.msra.mxu0 0.0
    %10121 = vmatprep.subr.mxu0 0.0
    %10122 = vmatpush2.msra.mxu0 0.0
    %10123 = vmatprep.subr.mxu0 0.0
    %10124 = vmatpush2.msra.mxu0 0.0
    %10125 = vmatprep.subr.mxu0 0.0
    %10126 = vmatpush2.msra.mxu0 0.0
    %10127 = vmatprep.mubr.f32.mxu0 0.0
    %10128 = vmatmul.mubr.f32.gmra.mxu0 %v10061
    %v10129 = vpop.f32.mrf.mxu0
    %v10130 = vadd.f32 %v10054, %v10129
    %v10131 = vpop.f32.mrf.mxu0
    %10132 = vdwg.mxu0
    %v10133 = vld [vmem:[#allocation6 + $0x2] sm:$0x1]
    %v10134 = vld [vmem:[#allocation6 + $0x12] sm:$0x1]
    %s10135 = scalar_lea.vmem %s9, 32
    %v10136 = vld [vmem:[%s10135] sm:$0xff]
    %v10137 = vld [vmem:[%s10135 + $0x8] sm:$0xff]
    %v10140 = vrot.slane %v10134, 7
    %v10141 = vsel %vm9983, %v10140, %v10133
    %v10142 = vsel %vm9652, %v10141, 0
    %10144 = vmatprep.subr.mxu0 0.0
    %10145 = vmatpush1.msra.mxu0 0.0
    %10146 = vmatprep.subr.mxu0 0.0
    %10147 = vmatpush1.msra.mxu0 0.0
    %10148 = vmatprep.subr.mxu0 0.0
    %10149 = vmatpush1.msra.mxu0 0.0
    %10150 = vmatprep.subr.mxu0 0.0
    %10151 = vmatpush1.msra.mxu0 0.0
    %10152 = vmatprep.subr.mxu0 0.0
    %10153 = vmatpush1.msra.mxu0 0.0
    %10154 = vmatprep.subr.mxu0 0.0
    %10155 = vmatpush1.msra.mxu0 0.0
    %10156 = vmatprep.subr.mxu0 0.0
    %10157 = vmatpush1.msra.mxu0 0.0
    %10158 = vmatprep.subr.mxu0 0.0
    %10159 = vmatpush1.msra.mxu0 0.0
    %10160 = vmatprep.subr.mxu0 0.0
    %10161 = vmatpush1.msra.mxu0 0.0
    %10162 = vmatprep.subr.mxu0 0.0
    %10163 = vmatpush1.msra.mxu0 0.0
    %10164 = vmatprep.subr.mxu0 0.0
    %10165 = vmatpush1.msra.mxu0 0.0
    %10166 = vmatprep.subr.mxu0 0.0
    %10167 = vmatpush1.msra.mxu0 0.0
    %10168 = vmatprep.subr.mxu0 0.0
    %10169 = vmatpush1.msra.mxu0 0.0
    %10170 = vmatprep.subr.mxu0 0.0
    %10171 = vmatpush1.msra.mxu0 0.0
    %10172 = vmatprep.subr.mxu0 0.0
    %10173 = vmatpush1.msra.mxu0 %v10137
    %10174 = vmatprep.subr.mxu0 0.0
    %10175 = vmatpush1.msra.mxu0 %v10136
    %10176 = vmatprep.subr.mxu0 0.0
    %10177 = vmatpush2.msra.mxu0 0.0
    %10178 = vmatprep.subr.mxu0 0.0
    %10179 = vmatpush2.msra.mxu0 0.0
    %10180 = vmatprep.subr.mxu0 0.0
    %10181 = vmatpush2.msra.mxu0 0.0
    %10182 = vmatprep.subr.mxu0 0.0
    %10183 = vmatpush2.msra.mxu0 0.0
    %10184 = vmatprep.subr.mxu0 0.0
    %10185 = vmatpush2.msra.mxu0 0.0
    %10186 = vmatprep.subr.mxu0 0.0
    %10187 = vmatpush2.msra.mxu0 0.0
    %10188 = vmatprep.subr.mxu0 0.0
    %10189 = vmatpush2.msra.mxu0 0.0
    %10190 = vmatprep.subr.mxu0 0.0
    %10191 = vmatpush2.msra.mxu0 0.0
    %10192 = vmatprep.subr.mxu0 0.0
    %10193 = vmatpush2.msra.mxu0 0.0
    %10194 = vmatprep.subr.mxu0 0.0
    %10195 = vmatpush2.msra.mxu0 0.0
    %10196 = vmatprep.subr.mxu0 0.0
    %10197 = vmatpush2.msra.mxu0 0.0
    %10198 = vmatprep.subr.mxu0 0.0
    %10199 = vmatpush2.msra.mxu0 0.0
    %10200 = vmatprep.subr.mxu0 0.0
    %10201 = vmatpush2.msra.mxu0 0.0
    %10202 = vmatprep.subr.mxu0 0.0
    %10203 = vmatpush2.msra.mxu0 0.0
    %10204 = vmatprep.subr.mxu0 0.0
    %10205 = vmatpush2.msra.mxu0 0.0
    %10206 = vmatprep.subr.mxu0 0.0
    %10207 = vmatpush2.msra.mxu0 0.0
    %10208 = vmatprep.mubr.f32.mxu0 0.0
    %10209 = vmatmul.mubr.f32.gmra.mxu0 %v10142
    %v10210 = vpop.f32.mrf.mxu0
    %v10211 = vadd.f32 0.0, %v10210
    %v10212 = vpop.f32.mrf.mxu0
    %10213 = vdwg.mxu0
    %v10214 = vadd.f32 %v10130, %v10211
    %v10215 = vld [vmem:[#allocation6 + $0x3] sm:$0x1]
    %v10216 = vld [vmem:[#allocation6 + $0x13] sm:$0x1]
    %s10217 = scalar_lea.vmem %s9, 48
    %v10218 = vld [vmem:[%s10217] sm:$0xff]
    %v10219 = vld [vmem:[%s10217 + $0x8] sm:$0xff]
    %v10222 = vrot.slane %v10216, 7
    %v10223 = vsel %vm9983, %v10222, %v10215
    %v10224 = vsel %vm9652, %v10223, 0
    %10226 = vmatprep.subr.mxu0 0.0
    %10227 = vmatpush1.msra.mxu0 0.0
    %10228 = vmatprep.subr.mxu0 0.0
    %10229 = vmatpush1.msra.mxu0 0.0
    %10230 = vmatprep.subr.mxu0 0.0
    %10231 = vmatpush1.msra.mxu0 0.0
    %10232 = vmatprep.subr.mxu0 0.0
    %10233 = vmatpush1.msra.mxu0 0.0
    %10234 = vmatprep.subr.mxu0 0.0
    %10235 = vmatpush1.msra.mxu0 0.0
    %10236 = vmatprep.subr.mxu0 0.0
    %10237 = vmatpush1.msra.mxu0 0.0
    %10238 = vmatprep.subr.mxu0 0.0
    %10239 = vmatpush1.msra.mxu0 0.0
    %10240 = vmatprep.subr.mxu0 0.0
    %10241 = vmatpush1.msra.mxu0 0.0
    %10242 = vmatprep.subr.mxu0 0.0
    %10243 = vmatpush1.msra.mxu0 0.0
    %10244 = vmatprep.subr.mxu0 0.0
    %10245 = vmatpush1.msra.mxu0 0.0
    %10246 = vmatprep.subr.mxu0 0.0
    %10247 = vmatpush1.msra.mxu0 0.0
    %10248 = vmatprep.subr.mxu0 0.0
    %10249 = vmatpush1.msra.mxu0 0.0
    %10250 = vmatprep.subr.mxu0 0.0
    %10251 = vmatpush1.msra.mxu0 0.0
    %10252 = vmatprep.subr.mxu0 0.0
    %10253 = vmatpush1.msra.mxu0 0.0
    %10254 = vmatprep.subr.mxu0 0.0
    %10255 = vmatpush1.msra.mxu0 %v10219
    %10256 = vmatprep.subr.mxu0 0.0
    %10257 = vmatpush1.msra.mxu0 %v10218
    %10258 = vmatprep.subr.mxu0 0.0
    %10259 = vmatpush2.msra.mxu0 0.0
    %10260 = vmatprep.subr.mxu0 0.0
    %10261 = vmatpush2.msra.mxu0 0.0
    %10262 = vmatprep.subr.mxu0 0.0
    %10263 = vmatpush2.msra.mxu0 0.0
    %10264 = vmatprep.subr.mxu0 0.0
    %10265 = vmatpush2.msra.mxu0 0.0
    %10266 = vmatprep.subr.mxu0 0.0
    %10267 = vmatpush2.msra.mxu0 0.0
    %10268 = vmatprep.subr.mxu0 0.0
    %10269 = vmatpush2.msra.mxu0 0.0
    %10270 = vmatprep.subr.mxu0 0.0
    %10271 = vmatpush2.msra.mxu0 0.0
    %10272 = vmatprep.subr.mxu0 0.0
    %10273 = vmatpush2.msra.mxu0 0.0
    %10274 = vmatprep.subr.mxu0 0.0
    %10275 = vmatpush2.msra.mxu0 0.0
    %10276 = vmatprep.subr.mxu0 0.0
    %10277 = vmatpush2.msra.mxu0 0.0
    %10278 = vmatprep.subr.mxu0 0.0
    %10279 = vmatpush2.msra.mxu0 0.0
    %10280 = vmatprep.subr.mxu0 0.0
    %10281 = vmatpush2.msra.mxu0 0.0
    %10282 = vmatprep.subr.mxu0 0.0
    %10283 = vmatpush2.msra.mxu0 0.0
    %10284 = vmatprep.subr.mxu0 0.0
    %10285 = vmatpush2.msra.mxu0 0.0
    %10286 = vmatprep.subr.mxu0 0.0
    %10287 = vmatpush2.msra.mxu0 0.0
    %10288 = vmatprep.subr.mxu0 0.0
    %10289 = vmatpush2.msra.mxu0 0.0
    %10290 = vmatprep.mubr.f32.mxu0 0.0
    %10291 = vmatmul.mubr.f32.gmra.mxu0 %v10224
    %v10292 = vpop.f32.mrf.mxu0
    %v10293 = vadd.f32 0.0, %v10292
    %v10294 = vpop.f32.mrf.mxu0
    %10295 = vdwg.mxu0
    %v10296 = vadd.f32 %v10214, %v10293
    %s10297 = scalar_lea.vmem [#allocation6], 4
    %v10298 = vld [vmem:[%s10297] sm:$0x1]
    %v10299 = vld [vmem:[%s10297 + $0x10] sm:$0x1]
    %s10300 = scalar_lea.vmem %s9, 64
    %v10301 = vld [vmem:[%s10300] sm:$0xff]
    %v10302 = vld [vmem:[%s10300 + $0x8] sm:$0xff]
    %v10305 = vrot.slane %v10299, 7
    %v10306 = vsel %vm9983, %v10305, %v10298
    %v10307 = vsel %vm9652, %v10306, 0
    %10309 = vmatprep.subr.mxu0 0.0
    %10310 = vmatpush1.msra.mxu0 0.0
    %10311 = vmatprep.subr.mxu0 0.0
    %10312 = vmatpush1.msra.mxu0 0.0
    %10313 = vmatprep.subr.mxu0 0.0
    %10314 = vmatpush1.msra.mxu0 0.0
    %10315 = vmatprep.subr.mxu0 0.0
    %10316 = vmatpush1.msra.mxu0 0.0
    %10317 = vmatprep.subr.mxu0 0.0
    %10318 = vmatpush1.msra.mxu0 0.0
    %10319 = vmatprep.subr.mxu0 0.0
    %10320 = vmatpush1.msra.mxu0 0.0
    %10321 = vmatprep.subr.mxu0 0.0
    %10322 = vmatpush1.msra.mxu0 0.0
    %10323 = vmatprep.subr.mxu0 0.0
    %10324 = vmatpush1.msra.mxu0 0.0
    %10325 = vmatprep.subr.mxu0 0.0
    %10326 = vmatpush1.msra.mxu0 0.0
    %10327 = vmatprep.subr.mxu0 0.0
    %10328 = vmatpush1.msra.mxu0 0.0
    %10329 = vmatprep.subr.mxu0 0.0
    %10330 = vmatpush1.msra.mxu0 0.0
    %10331 = vmatprep.subr.mxu0 0.0
    %10332 = vmatpush1.msra.mxu0 0.0
    %10333 = vmatprep.subr.mxu0 0.0
    %10334 = vmatpush1.msra.mxu0 0.0
    %10335 = vmatprep.subr.mxu0 0.0
    %10336 = vmatpush1.msra.mxu0 0.0
    %10337 = vmatprep.subr.mxu0 0.0
    %10338 = vmatpush1.msra.mxu0 %v10302
    %10339 = vmatprep.subr.mxu0 0.0
    %10340 = vmatpush1.msra.mxu0 %v10301
    %10341 = vmatprep.subr.mxu0 0.0
    %10342 = vmatpush2.msra.mxu0 0.0
    %10343 = vmatprep.subr.mxu0 0.0
    %10344 = vmatpush2.msra.mxu0 0.0
    %10345 = vmatprep.subr.mxu0 0.0
    %10346 = vmatpush2.msra.mxu0 0.0
    %10347 = vmatprep.subr.mxu0 0.0
    %10348 = vmatpush2.msra.mxu0 0.0
    %10349 = vmatprep.subr.mxu0 0.0
    %10350 = vmatpush2.msra.mxu0 0.0
    %10351 = vmatprep.subr.mxu0 0.0
    %10352 = vmatpush2.msra.mxu0 0.0
    %10353 = vmatprep.subr.mxu0 0.0
    %10354 = vmatpush2.msra.mxu0 0.0
    %10355 = vmatprep.subr.mxu0 0.0
    %10356 = vmatpush2.msra.mxu0 0.0
    %10357 = vmatprep.subr.mxu0 0.0
    %10358 = vmatpush2.msra.mxu0 0.0
    %10359 = vmatprep.subr.mxu0 0.0
    %10360 = vmatpush2.msra.mxu0 0.0
    %10361 = vmatprep.subr.mxu0 0.0
    %10362 = vmatpush2.msra.mxu0 0.0
    %10363 = vmatprep.subr.mxu0 0.0
    %10364 = vmatpush2.msra.mxu0 0.0
    %10365 = vmatprep.subr.mxu0 0.0
    %10366 = vmatpush2.msra.mxu0 0.0
    %10367 = vmatprep.subr.mxu0 0.0
    %10368 = vmatpush2.msra.mxu0 0.0
    %10369 = vmatprep.subr.mxu0 0.0
    %10370 = vmatpush2.msra.mxu0 0.0
    %10371 = vmatprep.subr.mxu0 0.0
    %10372 = vmatpush2.msra.mxu0 0.0
    %10373 = vmatprep.mubr.f32.mxu0 0.0
    %10374 = vmatmul.mubr.f32.gmra.mxu0 %v10307
    %v10375 = vpop.f32.mrf.mxu0
    %v10376 = vadd.f32 0.0, %v10375
    %v10377 = vpop.f32.mrf.mxu0
    %10378 = vdwg.mxu0
    %v10379 = vadd.f32 %v10296, %v10376
    %v10380 = vld [vmem:[%s10297 + $0x1] sm:$0x1]
    %v10381 = vld [vmem:[%s10297 + $0x11] sm:$0x1]
    %s10382 = scalar_lea.vmem %s9, 80
    %v10383 = vld [vmem:[%s10382] sm:$0xff]
    %v10384 = vld [vmem:[%s10382 + $0x8] sm:$0xff]
    %v10387 = vrot.slane %v10381, 7
    %v10388 = vsel %vm9983, %v10387, %v10380
    %v10389 = vsel %vm9652, %v10388, 0
    %10391 = vmatprep.subr.mxu0 0.0
    %10392 = vmatpush1.msra.mxu0 0.0
    %10393 = vmatprep.subr.mxu0 0.0
    %10394 = vmatpush1.msra.mxu0 0.0
    %10395 = vmatprep.subr.mxu0 0.0
    %10396 = vmatpush1.msra.mxu0 0.0
    %10397 = vmatprep.subr.mxu0 0.0
    %10398 = vmatpush1.msra.mxu0 0.0
    %10399 = vmatprep.subr.mxu0 0.0
    %10400 = vmatpush1.msra.mxu0 0.0
    %10401 = vmatprep.subr.mxu0 0.0
    %10402 = vmatpush1.msra.mxu0 0.0
    %10403 = vmatprep.subr.mxu0 0.0
    %10404 = vmatpush1.msra.mxu0 0.0
    %10405 = vmatprep.subr.mxu0 0.0
    %10406 = vmatpush1.msra.mxu0 0.0
    %10407 = vmatprep.subr.mxu0 0.0
    %10408 = vmatpush1.msra.mxu0 0.0
    %10409 = vmatprep.subr.mxu0 0.0
    %10410 = vmatpush1.msra.mxu0 0.0
    %10411 = vmatprep.subr.mxu0 0.0
    %10412 = vmatpush1.msra.mxu0 0.0
    %10413 = vmatprep.subr.mxu0 0.0
    %10414 = vmatpush1.msra.mxu0 0.0
    %10415 = vmatprep.subr.mxu0 0.0
    %10416 = vmatpush1.msra.mxu0 0.0
    %10417 = vmatprep.subr.mxu0 0.0
    %10418 = vmatpush1.msra.mxu0 0.0
    %10419 = vmatprep.subr.mxu0 0.0
    %10420 = vmatpush1.msra.mxu0 %v10384
    %10421 = vmatprep.subr.mxu0 0.0
    %10422 = vmatpush1.msra.mxu0 %v10383
    %10423 = vmatprep.subr.mxu0 0.0
    %10424 = vmatpush2.msra.mxu0 0.0
    %10425 = vmatprep.subr.mxu0 0.0
    %10426 = vmatpush2.msra.mxu0 0.0
    %10427 = vmatprep.subr.mxu0 0.0
    %10428 = vmatpush2.msra.mxu0 0.0
    %10429 = vmatprep.subr.mxu0 0.0
    %10430 = vmatpush2.msra.mxu0 0.0
    %10431 = vmatprep.subr.mxu0 0.0
    %10432 = vmatpush2.msra.mxu0 0.0
    %10433 = vmatprep.subr.mxu0 0.0
    %10434 = vmatpush2.msra.mxu0 0.0
    %10435 = vmatprep.subr.mxu0 0.0
    %10436 = vmatpush2.msra.mxu0 0.0
    %10437 = vmatprep.subr.mxu0 0.0
    %10438 = vmatpush2.msra.mxu0 0.0
    %10439 = vmatprep.subr.mxu0 0.0
    %10440 = vmatpush2.msra.mxu0 0.0
    %10441 = vmatprep.subr.mxu0 0.0
    %10442 = vmatpush2.msra.mxu0 0.0
    %10443 = vmatprep.subr.mxu0 0.0
    %10444 = vmatpush2.msra.mxu0 0.0
    %10445 = vmatprep.subr.mxu0 0.0
    %10446 = vmatpush2.msra.mxu0 0.0
    %10447 = vmatprep.subr.mxu0 0.0
    %10448 = vmatpush2.msra.mxu0 0.0
    %10449 = vmatprep.subr.mxu0 0.0
    %10450 = vmatpush2.msra.mxu0 0.0
    %10451 = vmatprep.subr.mxu0 0.0
    %10452 = vmatpush2.msra.mxu0 0.0
    %10453 = vmatprep.subr.mxu0 0.0
    %10454 = vmatpush2.msra.mxu0 0.0
    %10455 = vmatprep.mubr.f32.mxu0 0.0
    %10456 = vmatmul.mubr.f32.gmra.mxu0 %v10389
    %v10457 = vpop.f32.mrf.mxu0
    %v10458 = vadd.f32 0.0, %v10457
    %v10459 = vpop.f32.mrf.mxu0
    %10460 = vdwg.mxu0
    %v10461 = vadd.f32 %v10379, %v10458
    %v10462 = vld [vmem:[%s10297 + $0x2] sm:$0x1]
    %v10463 = vld [vmem:[%s10297 + $0x12] sm:$0x1]
    %s10464 = scalar_lea.vmem %s9, 96
    %v10465 = vld [vmem:[%s10464] sm:$0xff]
    %v10466 = vld [vmem:[%s10464 + $0x8] sm:$0xff]
    %v10469 = vrot.slane %v10463, 7
    %v10470 = vsel %vm9983, %v10469, %v10462
    %v10471 = vsel %vm9652, %v10470, 0
    %10473 = vmatprep.subr.mxu0 0.0
    %10474 = vmatpush1.msra.mxu0 0.0
    %10475 = vmatprep.subr.mxu0 0.0
    %10476 = vmatpush1.msra.mxu0 0.0
    %10477 = vmatprep.subr.mxu0 0.0
    %10478 = vmatpush1.msra.mxu0 0.0
    %10479 = vmatprep.subr.mxu0 0.0
    %10480 = vmatpush1.msra.mxu0 0.0
    %10481 = vmatprep.subr.mxu0 0.0
    %10482 = vmatpush1.msra.mxu0 0.0
    %10483 = vmatprep.subr.mxu0 0.0
    %10484 = vmatpush1.msra.mxu0 0.0
    %10485 = vmatprep.subr.mxu0 0.0
    %10486 = vmatpush1.msra.mxu0 0.0
    %10487 = vmatprep.subr.mxu0 0.0
    %10488 = vmatpush1.msra.mxu0 0.0
    %10489 = vmatprep.subr.mxu0 0.0
    %10490 = vmatpush1.msra.mxu0 0.0
    %10491 = vmatprep.subr.mxu0 0.0
    %10492 = vmatpush1.msra.mxu0 0.0
    %10493 = vmatprep.subr.mxu0 0.0
    %10494 = vmatpush1.msra.mxu0 0.0
    %10495 = vmatprep.subr.mxu0 0.0
    %10496 = vmatpush1.msra.mxu0 0.0
    %10497 = vmatprep.subr.mxu0 0.0
    %10498 = vmatpush1.msra.mxu0 0.0
    %10499 = vmatprep.subr.mxu0 0.0
    %10500 = vmatpush1.msra.mxu0 0.0
    %10501 = vmatprep.subr.mxu0 0.0
    %10502 = vmatpush1.msra.mxu0 %v10466
    %10503 = vmatprep.subr.mxu0 0.0
    %10504 = vmatpush1.msra.mxu0 %v10465
    %10505 = vmatprep.subr.mxu0 0.0
    %10506 = vmatpush2.msra.mxu0 0.0
    %10507 = vmatprep.subr.mxu0 0.0
    %10508 = vmatpush2.msra.mxu0 0.0
    %10509 = vmatprep.subr.mxu0 0.0
    %10510 = vmatpush2.msra.mxu0 0.0
    %10511 = vmatprep.subr.mxu0 0.0
    %10512 = vmatpush2.msra.mxu0 0.0
    %10513 = vmatprep.subr.mxu0 0.0
    %10514 = vmatpush2.msra.mxu0 0.0
    %10515 = vmatprep.subr.mxu0 0.0
    %10516 = vmatpush2.msra.mxu0 0.0
    %10517 = vmatprep.subr.mxu0 0.0
    %10518 = vmatpush2.msra.mxu0 0.0
    %10519 = vmatprep.subr.mxu0 0.0
    %10520 = vmatpush2.msra.mxu0 0.0
    %10521 = vmatprep.subr.mxu0 0.0
    %10522 = vmatpush2.msra.mxu0 0.0
    %10523 = vmatprep.subr.mxu0 0.0
    %10524 = vmatpush2.msra.mxu0 0.0
    %10525 = vmatprep.subr.mxu0 0.0
    %10526 = vmatpush2.msra.mxu0 0.0
    %10527 = vmatprep.subr.mxu0 0.0
    %10528 = vmatpush2.msra.mxu0 0.0
    %10529 = vmatprep.subr.mxu0 0.0
    %10530 = vmatpush2.msra.mxu0 0.0
    %10531 = vmatprep.subr.mxu0 0.0
    %10532 = vmatpush2.msra.mxu0 0.0
    %10533 = vmatprep.subr.mxu0 0.0
    %10534 = vmatpush2.msra.mxu0 0.0
    %10535 = vmatprep.subr.mxu0 0.0
    %10536 = vmatpush2.msra.mxu0 0.0
    %10537 = vmatprep.mubr.f32.mxu0 0.0
    %10538 = vmatmul.mubr.f32.gmra.mxu0 %v10471
    %v10539 = vpop.f32.mrf.mxu0
    %v10540 = vadd.f32 0.0, %v10539
    %v10541 = vpop.f32.mrf.mxu0
    %10542 = vdwg.mxu0
    %v10543 = vadd.f32 %v10461, %v10540
    %v10544 = vld [vmem:[%s10297 + $0x3] sm:$0x1]
    %v10545 = vld [vmem:[%s10297 + $0x13] sm:$0x1]
    %s10546 = scalar_lea.vmem %s9, 112
    %v10547 = vld [vmem:[%s10546] sm:$0xff]
    %v10548 = vld [vmem:[%s10546 + $0x8] sm:$0xff]
    %v10551 = vrot.slane %v10545, 7
    %v10552 = vsel %vm9983, %v10551, %v10544
    %v10553 = vsel %vm9652, %v10552, 0
    %10555 = vmatprep.subr.mxu0 0.0
    %10556 = vmatpush1.msra.mxu0 0.0
    %10557 = vmatprep.subr.mxu0 0.0
    %10558 = vmatpush1.msra.mxu0 0.0
    %10559 = vmatprep.subr.mxu0 0.0
    %10560 = vmatpush1.msra.mxu0 0.0
    %10561 = vmatprep.subr.mxu0 0.0
    %10562 = vmatpush1.msra.mxu0 0.0
    %10563 = vmatprep.subr.mxu0 0.0
    %10564 = vmatpush1.msra.mxu0 0.0
    %10565 = vmatprep.subr.mxu0 0.0
    %10566 = vmatpush1.msra.mxu0 0.0
    %10567 = vmatprep.subr.mxu0 0.0
    %10568 = vmatpush1.msra.mxu0 0.0
    %10569 = vmatprep.subr.mxu0 0.0
    %10570 = vmatpush1.msra.mxu0 0.0
    %10571 = vmatprep.subr.mxu0 0.0
    %10572 = vmatpush1.msra.mxu0 0.0
    %10573 = vmatprep.subr.mxu0 0.0
    %10574 = vmatpush1.msra.mxu0 0.0
    %10575 = vmatprep.subr.mxu0 0.0
    %10576 = vmatpush1.msra.mxu0 0.0
    %10577 = vmatprep.subr.mxu0 0.0
    %10578 = vmatpush1.msra.mxu0 0.0
    %10579 = vmatprep.subr.mxu0 0.0
    %10580 = vmatpush1.msra.mxu0 0.0
    %10581 = vmatprep.subr.mxu0 0.0
    %10582 = vmatpush1.msra.mxu0 0.0
    %10583 = vmatprep.subr.mxu0 0.0
    %10584 = vmatpush1.msra.mxu0 %v10548
    %10585 = vmatprep.subr.mxu0 0.0
    %10586 = vmatpush1.msra.mxu0 %v10547
    %10587 = vmatprep.subr.mxu0 0.0
    %10588 = vmatpush2.msra.mxu0 0.0
    %10589 = vmatprep.subr.mxu0 0.0
    %10590 = vmatpush2.msra.mxu0 0.0
    %10591 = vmatprep.subr.mxu0 0.0
    %10592 = vmatpush2.msra.mxu0 0.0
    %10593 = vmatprep.subr.mxu0 0.0
    %10594 = vmatpush2.msra.mxu0 0.0
    %10595 = vmatprep.subr.mxu0 0.0
    %10596 = vmatpush2.msra.mxu0 0.0
    %10597 = vmatprep.subr.mxu0 0.0
    %10598 = vmatpush2.msra.mxu0 0.0
    %10599 = vmatprep.subr.mxu0 0.0
    %10600 = vmatpush2.msra.mxu0 0.0
    %10601 = vmatprep.subr.mxu0 0.0
    %10602 = vmatpush2.msra.mxu0 0.0
    %10603 = vmatprep.subr.mxu0 0.0
    %10604 = vmatpush2.msra.mxu0 0.0
    %10605 = vmatprep.subr.mxu0 0.0
    %10606 = vmatpush2.msra.mxu0 0.0
    %10607 = vmatprep.subr.mxu0 0.0
    %10608 = vmatpush2.msra.mxu0 0.0
    %10609 = vmatprep.subr.mxu0 0.0
    %10610 = vmatpush2.msra.mxu0 0.0
    %10611 = vmatprep.subr.mxu0 0.0
    %10612 = vmatpush2.msra.mxu0 0.0
    %10613 = vmatprep.subr.mxu0 0.0
    %10614 = vmatpush2.msra.mxu0 0.0
    %10615 = vmatprep.subr.mxu0 0.0
    %10616 = vmatpush2.msra.mxu0 0.0
    %10617 = vmatprep.subr.mxu0 0.0
    %10618 = vmatpush2.msra.mxu0 0.0
    %10619 = vmatprep.mubr.f32.mxu0 0.0
    %10620 = vmatmul.mubr.f32.gmra.mxu0 %v10553
    %v10621 = vpop.f32.mrf.mxu0
    %v10622 = vadd.f32 0.0, %v10621
    %v10623 = vpop.f32.mrf.mxu0
    %10624 = vdwg.mxu0
    %v10625 = vadd.f32 %v10543, %v10622
    %s10626 = scalar_lea.vmem [#allocation6], 8
    %v10627 = vld [vmem:[%s10626] sm:$0x1]
    %v10628 = vld [vmem:[%s10626 + $0x10] sm:$0x1]
    %s10629 = scalar_lea.vmem %s9, 128
    %v10630 = vld [vmem:[%s10629] sm:$0xff]
    %v10631 = vld [vmem:[%s10629 + $0x8] sm:$0xff]
    %v10634 = vrot.slane %v10628, 7
    %v10635 = vsel %vm9983, %v10634, %v10627
    %v10636 = vsel %vm9652, %v10635, 0
    %10638 = vmatprep.subr.mxu0 0.0
    %10639 = vmatpush1.msra.mxu0 0.0
    %10640 = vmatprep.subr.mxu0 0.0
    %10641 = vmatpush1.msra.mxu0 0.0
    %10642 = vmatprep.subr.mxu0 0.0
    %10643 = vmatpush1.msra.mxu0 0.0
    %10644 = vmatprep.subr.mxu0 0.0
    %10645 = vmatpush1.msra.mxu0 0.0
    %10646 = vmatprep.subr.mxu0 0.0
    %10647 = vmatpush1.msra.mxu0 0.0
    %10648 = vmatprep.subr.mxu0 0.0
    %10649 = vmatpush1.msra.mxu0 0.0
    %10650 = vmatprep.subr.mxu0 0.0
    %10651 = vmatpush1.msra.mxu0 0.0
    %10652 = vmatprep.subr.mxu0 0.0
    %10653 = vmatpush1.msra.mxu0 0.0
    %10654 = vmatprep.subr.mxu0 0.0
    %10655 = vmatpush1.msra.mxu0 0.0
    %10656 = vmatprep.subr.mxu0 0.0
    %10657 = vmatpush1.msra.mxu0 0.0
    %10658 = vmatprep.subr.mxu0 0.0
    %10659 = vmatpush1.msra.mxu0 0.0
    %10660 = vmatprep.subr.mxu0 0.0
    %10661 = vmatpush1.msra.mxu0 0.0
    %10662 = vmatprep.subr.mxu0 0.0
    %10663 = vmatpush1.msra.mxu0 0.0
    %10664 = vmatprep.subr.mxu0 0.0
    %10665 = vmatpush1.msra.mxu0 0.0
    %10666 = vmatprep.subr.mxu0 0.0
    %10667 = vmatpush1.msra.mxu0 %v10631
    %10668 = vmatprep.subr.mxu0 0.0
    %10669 = vmatpush1.msra.mxu0 %v10630
    %10670 = vmatprep.subr.mxu0 0.0
    %10671 = vmatpush2.msra.mxu0 0.0
    %10672 = vmatprep.subr.mxu0 0.0
    %10673 = vmatpush2.msra.mxu0 0.0
    %10674 = vmatprep.subr.mxu0 0.0
    %10675 = vmatpush2.msra.mxu0 0.0
    %10676 = vmatprep.subr.mxu0 0.0
    %10677 = vmatpush2.msra.mxu0 0.0
    %10678 = vmatprep.subr.mxu0 0.0
    %10679 = vmatpush2.msra.mxu0 0.0
    %10680 = vmatprep.subr.mxu0 0.0
    %10681 = vmatpush2.msra.mxu0 0.0
    %10682 = vmatprep.subr.mxu0 0.0
    %10683 = vmatpush2.msra.mxu0 0.0
    %10684 = vmatprep.subr.mxu0 0.0
    %10685 = vmatpush2.msra.mxu0 0.0
    %10686 = vmatprep.subr.mxu0 0.0
    %10687 = vmatpush2.msra.mxu0 0.0
    %10688 = vmatprep.subr.mxu0 0.0
    %10689 = vmatpush2.msra.mxu0 0.0
    %10690 = vmatprep.subr.mxu0 0.0
    %10691 = vmatpush2.msra.mxu0 0.0
    %10692 = vmatprep.subr.mxu0 0.0
    %10693 = vmatpush2.msra.mxu0 0.0
    %10694 = vmatprep.subr.mxu0 0.0
    %10695 = vmatpush2.msra.mxu0 0.0
    %10696 = vmatprep.subr.mxu0 0.0
    %10697 = vmatpush2.msra.mxu0 0.0
    %10698 = vmatprep.subr.mxu0 0.0
    %10699 = vmatpush2.msra.mxu0 0.0
    %10700 = vmatprep.subr.mxu0 0.0
    %10701 = vmatpush2.msra.mxu0 0.0
    %10702 = vmatprep.mubr.f32.mxu0 0.0
    %10703 = vmatmul.mubr.f32.gmra.mxu0 %v10636
    %v10704 = vpop.f32.mrf.mxu0
    %v10705 = vadd.f32 0.0, %v10704
    %v10706 = vpop.f32.mrf.mxu0
    %10707 = vdwg.mxu0
    %v10708 = vadd.f32 %v10625, %v10705
    %v10709 = vld [vmem:[%s10626 + $0x1] sm:$0x1]
    %v10710 = vld [vmem:[%s10626 + $0x11] sm:$0x1]
    %s10711 = scalar_lea.vmem %s9, 144
    %v10712 = vld [vmem:[%s10711] sm:$0xff]
    %v10713 = vld [vmem:[%s10711 + $0x8] sm:$0xff]
    %v10716 = vrot.slane %v10710, 7
    %v10717 = vsel %vm9983, %v10716, %v10709
    %v10718 = vsel %vm9652, %v10717, 0
    %10720 = vmatprep.subr.mxu0 0.0
    %10721 = vmatpush1.msra.mxu0 0.0
    %10722 = vmatprep.subr.mxu0 0.0
    %10723 = vmatpush1.msra.mxu0 0.0
    %10724 = vmatprep.subr.mxu0 0.0
    %10725 = vmatpush1.msra.mxu0 0.0
    %10726 = vmatprep.subr.mxu0 0.0
    %10727 = vmatpush1.msra.mxu0 0.0
    %10728 = vmatprep.subr.mxu0 0.0
    %10729 = vmatpush1.msra.mxu0 0.0
    %10730 = vmatprep.subr.mxu0 0.0
    %10731 = vmatpush1.msra.mxu0 0.0
    %10732 = vmatprep.subr.mxu0 0.0
    %10733 = vmatpush1.msra.mxu0 0.0
    %10734 = vmatprep.subr.mxu0 0.0
    %10735 = vmatpush1.msra.mxu0 0.0
    %10736 = vmatprep.subr.mxu0 0.0
    %10737 = vmatpush1.msra.mxu0 0.0
    %10738 = vmatprep.subr.mxu0 0.0
    %10739 = vmatpush1.msra.mxu0 0.0
    %10740 = vmatprep.subr.mxu0 0.0
    %10741 = vmatpush1.msra.mxu0 0.0
    %10742 = vmatprep.subr.mxu0 0.0
    %10743 = vmatpush1.msra.mxu0 0.0
    %10744 = vmatprep.subr.mxu0 0.0
    %10745 = vmatpush1.msra.mxu0 0.0
    %10746 = vmatprep.subr.mxu0 0.0
    %10747 = vmatpush1.msra.mxu0 0.0
    %10748 = vmatprep.subr.mxu0 0.0
    %10749 = vmatpush1.msra.mxu0 %v10713
    %10750 = vmatprep.subr.mxu0 0.0
    %10751 = vmatpush1.msra.mxu0 %v10712
    %10752 = vmatprep.subr.mxu0 0.0
    %10753 = vmatpush2.msra.mxu0 0.0
    %10754 = vmatprep.subr.mxu0 0.0
    %10755 = vmatpush2.msra.mxu0 0.0
    %10756 = vmatprep.subr.mxu0 0.0
    %10757 = vmatpush2.msra.mxu0 0.0
    %10758 = vmatprep.subr.mxu0 0.0
    %10759 = vmatpush2.msra.mxu0 0.0
    %10760 = vmatprep.subr.mxu0 0.0
    %10761 = vmatpush2.msra.mxu0 0.0
    %10762 = vmatprep.subr.mxu0 0.0
    %10763 = vmatpush2.msra.mxu0 0.0
    %10764 = vmatprep.subr.mxu0 0.0
    %10765 = vmatpush2.msra.mxu0 0.0
    %10766 = vmatprep.subr.mxu0 0.0
    %10767 = vmatpush2.msra.mxu0 0.0
    %10768 = vmatprep.subr.mxu0 0.0
    %10769 = vmatpush2.msra.mxu0 0.0
    %10770 = vmatprep.subr.mxu0 0.0
    %10771 = vmatpush2.msra.mxu0 0.0
    %10772 = vmatprep.subr.mxu0 0.0
    %10773 = vmatpush2.msra.mxu0 0.0
    %10774 = vmatprep.subr.mxu0 0.0
    %10775 = vmatpush2.msra.mxu0 0.0
    %10776 = vmatprep.subr.mxu0 0.0
    %10777 = vmatpush2.msra.mxu0 0.0
    %10778 = vmatprep.subr.mxu0 0.0
    %10779 = vmatpush2.msra.mxu0 0.0
    %10780 = vmatprep.subr.mxu0 0.0
    %10781 = vmatpush2.msra.mxu0 0.0
    %10782 = vmatprep.subr.mxu0 0.0
    %10783 = vmatpush2.msra.mxu0 0.0
    %10784 = vmatprep.mubr.f32.mxu0 0.0
    %10785 = vmatmul.mubr.f32.gmra.mxu0 %v10718
    %v10786 = vpop.f32.mrf.mxu0
    %v10787 = vadd.f32 0.0, %v10786
    %v10788 = vpop.f32.mrf.mxu0
    %10789 = vdwg.mxu0
    %v10790 = vadd.f32 %v10708, %v10787
    %v10791 = vld [vmem:[%s10626 + $0x2] sm:$0x1]
    %v10792 = vld [vmem:[%s10626 + $0x12] sm:$0x1]
    %s10793 = scalar_lea.vmem %s9, 160
    %v10794 = vld [vmem:[%s10793] sm:$0xff]
    %v10795 = vld [vmem:[%s10793 + $0x8] sm:$0xff]
    %v10798 = vrot.slane %v10792, 7
    %v10799 = vsel %vm9983, %v10798, %v10791
    %v10800 = vsel %vm9652, %v10799, 0
    %10802 = vmatprep.subr.mxu0 0.0
    %10803 = vmatpush1.msra.mxu0 0.0
    %10804 = vmatprep.subr.mxu0 0.0
    %10805 = vmatpush1.msra.mxu0 0.0
    %10806 = vmatprep.subr.mxu0 0.0
    %10807 = vmatpush1.msra.mxu0 0.0
    %10808 = vmatprep.subr.mxu0 0.0
    %10809 = vmatpush1.msra.mxu0 0.0
    %10810 = vmatprep.subr.mxu0 0.0
    %10811 = vmatpush1.msra.mxu0 0.0
    %10812 = vmatprep.subr.mxu0 0.0
    %10813 = vmatpush1.msra.mxu0 0.0
    %10814 = vmatprep.subr.mxu0 0.0
    %10815 = vmatpush1.msra.mxu0 0.0
    %10816 = vmatprep.subr.mxu0 0.0
    %10817 = vmatpush1.msra.mxu0 0.0
    %10818 = vmatprep.subr.mxu0 0.0
    %10819 = vmatpush1.msra.mxu0 0.0
    %10820 = vmatprep.subr.mxu0 0.0
    %10821 = vmatpush1.msra.mxu0 0.0
    %10822 = vmatprep.subr.mxu0 0.0
    %10823 = vmatpush1.msra.mxu0 0.0
    %10824 = vmatprep.subr.mxu0 0.0
    %10825 = vmatpush1.msra.mxu0 0.0
    %10826 = vmatprep.subr.mxu0 0.0
    %10827 = vmatpush1.msra.mxu0 0.0
    %10828 = vmatprep.subr.mxu0 0.0
    %10829 = vmatpush1.msra.mxu0 0.0
    %10830 = vmatprep.subr.mxu0 0.0
    %10831 = vmatpush1.msra.mxu0 %v10795
    %10832 = vmatprep.subr.mxu0 0.0
    %10833 = vmatpush1.msra.mxu0 %v10794
    %10834 = vmatprep.subr.mxu0 0.0
    %10835 = vmatpush2.msra.mxu0 0.0
    %10836 = vmatprep.subr.mxu0 0.0
    %10837 = vmatpush2.msra.mxu0 0.0
    %10838 = vmatprep.subr.mxu0 0.0
    %10839 = vmatpush2.msra.mxu0 0.0
    %10840 = vmatprep.subr.mxu0 0.0
    %10841 = vmatpush2.msra.mxu0 0.0
    %10842 = vmatprep.subr.mxu0 0.0
    %10843 = vmatpush2.msra.mxu0 0.0
    %10844 = vmatprep.subr.mxu0 0.0
    %10845 = vmatpush2.msra.mxu0 0.0
    %10846 = vmatprep.subr.mxu0 0.0
    %10847 = vmatpush2.msra.mxu0 0.0
    %10848 = vmatprep.subr.mxu0 0.0
    %10849 = vmatpush2.msra.mxu0 0.0
    %10850 = vmatprep.subr.mxu0 0.0
    %10851 = vmatpush2.msra.mxu0 0.0
    %10852 = vmatprep.subr.mxu0 0.0
    %10853 = vmatpush2.msra.mxu0 0.0
    %10854 = vmatprep.subr.mxu0 0.0
    %10855 = vmatpush2.msra.mxu0 0.0
    %10856 = vmatprep.subr.mxu0 0.0
    %10857 = vmatpush2.msra.mxu0 0.0
    %10858 = vmatprep.subr.mxu0 0.0
    %10859 = vmatpush2.msra.mxu0 0.0
    %10860 = vmatprep.subr.mxu0 0.0
    %10861 = vmatpush2.msra.mxu0 0.0
    %10862 = vmatprep.subr.mxu0 0.0
    %10863 = vmatpush2.msra.mxu0 0.0
    %10864 = vmatprep.subr.mxu0 0.0
    %10865 = vmatpush2.msra.mxu0 0.0
    %10866 = vmatprep.mubr.f32.mxu0 0.0
    %10867 = vmatmul.mubr.f32.gmra.mxu0 %v10800
    %v10868 = vpop.f32.mrf.mxu0
    %v10869 = vadd.f32 0.0, %v10868
    %v10870 = vpop.f32.mrf.mxu0
    %10871 = vdwg.mxu0
    %v10872 = vadd.f32 %v10790, %v10869
    %v10873 = vld [vmem:[%s10626 + $0x3] sm:$0x1]
    %v10874 = vld [vmem:[%s10626 + $0x13] sm:$0x1]
    %s10875 = scalar_lea.vmem %s9, 176
    %v10876 = vld [vmem:[%s10875] sm:$0xff]
    %v10877 = vld [vmem:[%s10875 + $0x8] sm:$0xff]
    %v10880 = vrot.slane %v10874, 7
    %v10881 = vsel %vm9983, %v10880, %v10873
    %v10882 = vsel %vm9652, %v10881, 0
    %10884 = vmatprep.subr.mxu0 0.0
    %10885 = vmatpush1.msra.mxu0 0.0
    %10886 = vmatprep.subr.mxu0 0.0
    %10887 = vmatpush1.msra.mxu0 0.0
    %10888 = vmatprep.subr.mxu0 0.0
    %10889 = vmatpush1.msra.mxu0 0.0
    %10890 = vmatprep.subr.mxu0 0.0
    %10891 = vmatpush1.msra.mxu0 0.0
    %10892 = vmatprep.subr.mxu0 0.0
    %10893 = vmatpush1.msra.mxu0 0.0
    %10894 = vmatprep.subr.mxu0 0.0
    %10895 = vmatpush1.msra.mxu0 0.0
    %10896 = vmatprep.subr.mxu0 0.0
    %10897 = vmatpush1.msra.mxu0 0.0
    %10898 = vmatprep.subr.mxu0 0.0
    %10899 = vmatpush1.msra.mxu0 0.0
    %10900 = vmatprep.subr.mxu0 0.0
    %10901 = vmatpush1.msra.mxu0 0.0
    %10902 = vmatprep.subr.mxu0 0.0
    %10903 = vmatpush1.msra.mxu0 0.0
    %10904 = vmatprep.subr.mxu0 0.0
    %10905 = vmatpush1.msra.mxu0 0.0
    %10906 = vmatprep.subr.mxu0 0.0
    %10907 = vmatpush1.msra.mxu0 0.0
    %10908 = vmatprep.subr.mxu0 0.0
    %10909 = vmatpush1.msra.mxu0 0.0
    %10910 = vmatprep.subr.mxu0 0.0
    %10911 = vmatpush1.msra.mxu0 0.0
    %10912 = vmatprep.subr.mxu0 0.0
    %10913 = vmatpush1.msra.mxu0 %v10877
    %10914 = vmatprep.subr.mxu0 0.0
    %10915 = vmatpush1.msra.mxu0 %v10876
    %10916 = vmatprep.subr.mxu0 0.0
    %10917 = vmatpush2.msra.mxu0 0.0
    %10918 = vmatprep.subr.mxu0 0.0
    %10919 = vmatpush2.msra.mxu0 0.0
    %10920 = vmatprep.subr.mxu0 0.0
    %10921 = vmatpush2.msra.mxu0 0.0
    %10922 = vmatprep.subr.mxu0 0.0
    %10923 = vmatpush2.msra.mxu0 0.0
    %10924 = vmatprep.subr.mxu0 0.0
    %10925 = vmatpush2.msra.mxu0 0.0
    %10926 = vmatprep.subr.mxu0 0.0
    %10927 = vmatpush2.msra.mxu0 0.0
    %10928 = vmatprep.subr.mxu0 0.0
    %10929 = vmatpush2.msra.mxu0 0.0
    %10930 = vmatprep.subr.mxu0 0.0
    %10931 = vmatpush2.msra.mxu0 0.0
    %10932 = vmatprep.subr.mxu0 0.0
    %10933 = vmatpush2.msra.mxu0 0.0
    %10934 = vmatprep.subr.mxu0 0.0
    %10935 = vmatpush2.msra.mxu0 0.0
    %10936 = vmatprep.subr.mxu0 0.0
    %10937 = vmatpush2.msra.mxu0 0.0
    %10938 = vmatprep.subr.mxu0 0.0
    %10939 = vmatpush2.msra.mxu0 0.0
    %10940 = vmatprep.subr.mxu0 0.0
    %10941 = vmatpush2.msra.mxu0 0.0
    %10942 = vmatprep.subr.mxu0 0.0
    %10943 = vmatpush2.msra.mxu0 0.0
    %10944 = vmatprep.subr.mxu0 0.0
    %10945 = vmatpush2.msra.mxu0 0.0
    %10946 = vmatprep.subr.mxu0 0.0
    %10947 = vmatpush2.msra.mxu0 0.0
    %10948 = vmatprep.mubr.f32.mxu0 0.0
    %10949 = vmatmul.mubr.f32.gmra.mxu0 %v10882
    %v10950 = vpop.f32.mrf.mxu0
    %v10951 = vadd.f32 0.0, %v10950
    %v10952 = vpop.f32.mrf.mxu0
    %10953 = vdwg.mxu0
    %v10954 = vadd.f32 %v10872, %v10951
    %s10955 = scalar_lea.vmem [#allocation6], 12
    %v10956 = vld [vmem:[%s10955] sm:$0x1]
    %v10957 = vld [vmem:[%s10955 + $0x10] sm:$0x1]
    %s10958 = scalar_lea.vmem %s9, 192
    %v10959 = vld [vmem:[%s10958] sm:$0xff]
    %v10960 = vld [vmem:[%s10958 + $0x8] sm:$0xff]
    %v10963 = vrot.slane %v10957, 7
    %v10964 = vsel %vm9983, %v10963, %v10956
    %v10965 = vsel %vm9652, %v10964, 0
    %10967 = vmatprep.subr.mxu0 0.0
    %10968 = vmatpush1.msra.mxu0 0.0
    %10969 = vmatprep.subr.mxu0 0.0
    %10970 = vmatpush1.msra.mxu0 0.0
    %10971 = vmatprep.subr.mxu0 0.0
    %10972 = vmatpush1.msra.mxu0 0.0
    %10973 = vmatprep.subr.mxu0 0.0
    %10974 = vmatpush1.msra.mxu0 0.0
    %10975 = vmatprep.subr.mxu0 0.0
    %10976 = vmatpush1.msra.mxu0 0.0
    %10977 = vmatprep.subr.mxu0 0.0
    %10978 = vmatpush1.msra.mxu0 0.0
    %10979 = vmatprep.subr.mxu0 0.0
    %10980 = vmatpush1.msra.mxu0 0.0
    %10981 = vmatprep.subr.mxu0 0.0
    %10982 = vmatpush1.msra.mxu0 0.0
    %10983 = vmatprep.subr.mxu0 0.0
    %10984 = vmatpush1.msra.mxu0 0.0
    %10985 = vmatprep.subr.mxu0 0.0
    %10986 = vmatpush1.msra.mxu0 0.0
    %10987 = vmatprep.subr.mxu0 0.0
    %10988 = vmatpush1.msra.mxu0 0.0
    %10989 = vmatprep.subr.mxu0 0.0
    %10990 = vmatpush1.msra.mxu0 0.0
    %10991 = vmatprep.subr.mxu0 0.0
    %10992 = vmatpush1.msra.mxu0 0.0
    %10993 = vmatprep.subr.mxu0 0.0
    %10994 = vmatpush1.msra.mxu0 0.0
    %10995 = vmatprep.subr.mxu0 0.0
    %10996 = vmatpush1.msra.mxu0 %v10960
    %10997 = vmatprep.subr.mxu0 0.0
    %10998 = vmatpush1.msra.mxu0 %v10959
    %10999 = vmatprep.subr.mxu0 0.0
    %11000 = vmatpush2.msra.mxu0 0.0
    %11001 = vmatprep.subr.mxu0 0.0
    %11002 = vmatpush2.msra.mxu0 0.0
    %11003 = vmatprep.subr.mxu0 0.0
    %11004 = vmatpush2.msra.mxu0 0.0
    %11005 = vmatprep.subr.mxu0 0.0
    %11006 = vmatpush2.msra.mxu0 0.0
    %11007 = vmatprep.subr.mxu0 0.0
    %11008 = vmatpush2.msra.mxu0 0.0
    %11009 = vmatprep.subr.mxu0 0.0
    %11010 = vmatpush2.msra.mxu0 0.0
    %11011 = vmatprep.subr.mxu0 0.0
    %11012 = vmatpush2.msra.mxu0 0.0
    %11013 = vmatprep.subr.mxu0 0.0
    %11014 = vmatpush2.msra.mxu0 0.0
    %11015 = vmatprep.subr.mxu0 0.0
    %11016 = vmatpush2.msra.mxu0 0.0
    %11017 = vmatprep.subr.mxu0 0.0
    %11018 = vmatpush2.msra.mxu0 0.0
    %11019 = vmatprep.subr.mxu0 0.0
    %11020 = vmatpush2.msra.mxu0 0.0
    %11021 = vmatprep.subr.mxu0 0.0
    %11022 = vmatpush2.msra.mxu0 0.0
    %11023 = vmatprep.subr.mxu0 0.0
    %11024 = vmatpush2.msra.mxu0 0.0
    %11025 = vmatprep.subr.mxu0 0.0
    %11026 = vmatpush2.msra.mxu0 0.0
    %11027 = vmatprep.subr.mxu0 0.0
    %11028 = vmatpush2.msra.mxu0 0.0
    %11029 = vmatprep.subr.mxu0 0.0
    %11030 = vmatpush2.msra.mxu0 0.0
    %11031 = vmatprep.mubr.f32.mxu0 0.0
    %11032 = vmatmul.mubr.f32.gmra.mxu0 %v10965
    %v11033 = vpop.f32.mrf.mxu0
    %v11034 = vadd.f32 0.0, %v11033
    %v11035 = vpop.f32.mrf.mxu0
    %11036 = vdwg.mxu0
    %v11037 = vadd.f32 %v10954, %v11034
    %v11038 = vld [vmem:[%s10955 + $0x1] sm:$0x1]
    %v11039 = vld [vmem:[%s10955 + $0x11] sm:$0x1]
    %s11040 = scalar_lea.vmem %s9, 208
    %v11041 = vld [vmem:[%s11040] sm:$0xff]
    %v11042 = vld [vmem:[%s11040 + $0x8] sm:$0xff]
    %v11045 = vrot.slane %v11039, 7
    %v11046 = vsel %vm9983, %v11045, %v11038
    %v11047 = vsel %vm9652, %v11046, 0
    %11049 = vmatprep.subr.mxu0 0.0
    %11050 = vmatpush1.msra.mxu0 0.0
    %11051 = vmatprep.subr.mxu0 0.0
    %11052 = vmatpush1.msra.mxu0 0.0
    %11053 = vmatprep.subr.mxu0 0.0
    %11054 = vmatpush1.msra.mxu0 0.0
    %11055 = vmatprep.subr.mxu0 0.0
    %11056 = vmatpush1.msra.mxu0 0.0
    %11057 = vmatprep.subr.mxu0 0.0
    %11058 = vmatpush1.msra.mxu0 0.0
    %11059 = vmatprep.subr.mxu0 0.0
    %11060 = vmatpush1.msra.mxu0 0.0
    %11061 = vmatprep.subr.mxu0 0.0
    %11062 = vmatpush1.msra.mxu0 0.0
    %11063 = vmatprep.subr.mxu0 0.0
    %11064 = vmatpush1.msra.mxu0 0.0
    %11065 = vmatprep.subr.mxu0 0.0
    %11066 = vmatpush1.msra.mxu0 0.0
    %11067 = vmatprep.subr.mxu0 0.0
    %11068 = vmatpush1.msra.mxu0 0.0
    %11069 = vmatprep.subr.mxu0 0.0
    %11070 = vmatpush1.msra.mxu0 0.0
    %11071 = vmatprep.subr.mxu0 0.0
    %11072 = vmatpush1.msra.mxu0 0.0
    %11073 = vmatprep.subr.mxu0 0.0
    %11074 = vmatpush1.msra.mxu0 0.0
    %11075 = vmatprep.subr.mxu0 0.0
    %11076 = vmatpush1.msra.mxu0 0.0
    %11077 = vmatprep.subr.mxu0 0.0
    %11078 = vmatpush1.msra.mxu0 %v11042
    %11079 = vmatprep.subr.mxu0 0.0
    %11080 = vmatpush1.msra.mxu0 %v11041
    %11081 = vmatprep.subr.mxu0 0.0
    %11082 = vmatpush2.msra.mxu0 0.0
    %11083 = vmatprep.subr.mxu0 0.0
    %11084 = vmatpush2.msra.mxu0 0.0
    %11085 = vmatprep.subr.mxu0 0.0
    %11086 = vmatpush2.msra.mxu0 0.0
    %11087 = vmatprep.subr.mxu0 0.0
    %11088 = vmatpush2.msra.mxu0 0.0
    %11089 = vmatprep.subr.mxu0 0.0
    %11090 = vmatpush2.msra.mxu0 0.0
    %11091 = vmatprep.subr.mxu0 0.0
    %11092 = vmatpush2.msra.mxu0 0.0
    %11093 = vmatprep.subr.mxu0 0.0
    %11094 = vmatpush2.msra.mxu0 0.0
    %11095 = vmatprep.subr.mxu0 0.0
    %11096 = vmatpush2.msra.mxu0 0.0
    %11097 = vmatprep.subr.mxu0 0.0
    %11098 = vmatpush2.msra.mxu0 0.0
    %11099 = vmatprep.subr.mxu0 0.0
    %11100 = vmatpush2.msra.mxu0 0.0
    %11101 = vmatprep.subr.mxu0 0.0
    %11102 = vmatpush2.msra.mxu0 0.0
    %11103 = vmatprep.subr.mxu0 0.0
    %11104 = vmatpush2.msra.mxu0 0.0
    %11105 = vmatprep.subr.mxu0 0.0
    %11106 = vmatpush2.msra.mxu0 0.0
    %11107 = vmatprep.subr.mxu0 0.0
    %11108 = vmatpush2.msra.mxu0 0.0
    %11109 = vmatprep.subr.mxu0 0.0
    %11110 = vmatpush2.msra.mxu0 0.0
    %11111 = vmatprep.subr.mxu0 0.0
    %11112 = vmatpush2.msra.mxu0 0.0
    %11113 = vmatprep.mubr.f32.mxu0 0.0
    %11114 = vmatmul.mubr.f32.gmra.mxu0 %v11047
    %v11115 = vpop.f32.mrf.mxu0
    %v11116 = vadd.f32 0.0, %v11115
    %v11117 = vpop.f32.mrf.mxu0
    %11118 = vdwg.mxu0
    %v11119 = vadd.f32 %v11037, %v11116
    %v11120 = vld [vmem:[%s10955 + $0x2] sm:$0x1]
    %v11121 = vld [vmem:[%s10955 + $0x12] sm:$0x1]
    %s11122 = scalar_lea.vmem %s9, 224
    %v11123 = vld [vmem:[%s11122] sm:$0xff]
    %v11124 = vld [vmem:[%s11122 + $0x8] sm:$0xff]
    %v11127 = vrot.slane %v11121, 7
    %v11128 = vsel %vm9983, %v11127, %v11120
    %v11129 = vsel %vm9652, %v11128, 0
    %11131 = vmatprep.subr.mxu0 0.0
    %11132 = vmatpush1.msra.mxu0 0.0
    %11133 = vmatprep.subr.mxu0 0.0
    %11134 = vmatpush1.msra.mxu0 0.0
    %11135 = vmatprep.subr.mxu0 0.0
    %11136 = vmatpush1.msra.mxu0 0.0
    %11137 = vmatprep.subr.mxu0 0.0
    %11138 = vmatpush1.msra.mxu0 0.0
    %11139 = vmatprep.subr.mxu0 0.0
    %11140 = vmatpush1.msra.mxu0 0.0
    %11141 = vmatprep.subr.mxu0 0.0
    %11142 = vmatpush1.msra.mxu0 0.0
    %11143 = vmatprep.subr.mxu0 0.0
    %11144 = vmatpush1.msra.mxu0 0.0
    %11145 = vmatprep.subr.mxu0 0.0
    %11146 = vmatpush1.msra.mxu0 0.0
    %11147 = vmatprep.subr.mxu0 0.0
    %11148 = vmatpush1.msra.mxu0 0.0
    %11149 = vmatprep.subr.mxu0 0.0
    %11150 = vmatpush1.msra.mxu0 0.0
    %11151 = vmatprep.subr.mxu0 0.0
    %11152 = vmatpush1.msra.mxu0 0.0
    %11153 = vmatprep.subr.mxu0 0.0
    %11154 = vmatpush1.msra.mxu0 0.0
    %11155 = vmatprep.subr.mxu0 0.0
    %11156 = vmatpush1.msra.mxu0 0.0
    %11157 = vmatprep.subr.mxu0 0.0
    %11158 = vmatpush1.msra.mxu0 0.0
    %11159 = vmatprep.subr.mxu0 0.0
    %11160 = vmatpush1.msra.mxu0 %v11124
    %11161 = vmatprep.subr.mxu0 0.0
    %11162 = vmatpush1.msra.mxu0 %v11123
    %11163 = vmatprep.subr.mxu0 0.0
    %11164 = vmatpush2.msra.mxu0 0.0
    %11165 = vmatprep.subr.mxu0 0.0
    %11166 = vmatpush2.msra.mxu0 0.0
    %11167 = vmatprep.subr.mxu0 0.0
    %11168 = vmatpush2.msra.mxu0 0.0
    %11169 = vmatprep.subr.mxu0 0.0
    %11170 = vmatpush2.msra.mxu0 0.0
    %11171 = vmatprep.subr.mxu0 0.0
    %11172 = vmatpush2.msra.mxu0 0.0
    %11173 = vmatprep.subr.mxu0 0.0
    %11174 = vmatpush2.msra.mxu0 0.0
    %11175 = vmatprep.subr.mxu0 0.0
    %11176 = vmatpush2.msra.mxu0 0.0
    %11177 = vmatprep.subr.mxu0 0.0
    %11178 = vmatpush2.msra.mxu0 0.0
    %11179 = vmatprep.subr.mxu0 0.0
    %11180 = vmatpush2.msra.mxu0 0.0
    %11181 = vmatprep.subr.mxu0 0.0
    %11182 = vmatpush2.msra.mxu0 0.0
    %11183 = vmatprep.subr.mxu0 0.0
    %11184 = vmatpush2.msra.mxu0 0.0
    %11185 = vmatprep.subr.mxu0 0.0
    %11186 = vmatpush2.msra.mxu0 0.0
    %11187 = vmatprep.subr.mxu0 0.0
    %11188 = vmatpush2.msra.mxu0 0.0
    %11189 = vmatprep.subr.mxu0 0.0
    %11190 = vmatpush2.msra.mxu0 0.0
    %11191 = vmatprep.subr.mxu0 0.0
    %11192 = vmatpush2.msra.mxu0 0.0
    %11193 = vmatprep.subr.mxu0 0.0
    %11194 = vmatpush2.msra.mxu0 0.0
    %11195 = vmatprep.mubr.f32.mxu0 0.0
    %11196 = vmatmul.mubr.f32.gmra.mxu0 %v11129
    %v11197 = vpop.f32.mrf.mxu0
    %v11198 = vadd.f32 0.0, %v11197
    %v11199 = vpop.f32.mrf.mxu0
    %11200 = vdwg.mxu0
    %v11201 = vadd.f32 %v11119, %v11198
    %v11202 = vld [vmem:[%s10955 + $0x3] sm:$0x1]
    %v11203 = vld [vmem:[%s10955 + $0x13] sm:$0x1]
    %s11204 = scalar_lea.vmem %s9, 240
    %v11205 = vld [vmem:[%s11204] sm:$0xff]
    %v11206 = vld [vmem:[%s11204 + $0x8] sm:$0xff]
    %v11209 = vrot.slane %v11203, 7
    %v11210 = vsel %vm9983, %v11209, %v11202
    %v11211 = vsel %vm9652, %v11210, 0
    %11213 = vmatprep.subr.mxu0 0.0
    %11214 = vmatpush1.msra.mxu0 0.0
    %11215 = vmatprep.subr.mxu0 0.0
    %11216 = vmatpush1.msra.mxu0 0.0
    %11217 = vmatprep.subr.mxu0 0.0
    %11218 = vmatpush1.msra.mxu0 0.0
    %11219 = vmatprep.subr.mxu0 0.0
    %11220 = vmatpush1.msra.mxu0 0.0
    %11221 = vmatprep.subr.mxu0 0.0
    %11222 = vmatpush1.msra.mxu0 0.0
    %11223 = vmatprep.subr.mxu0 0.0
    %11224 = vmatpush1.msra.mxu0 0.0
    %11225 = vmatprep.subr.mxu0 0.0
    %11226 = vmatpush1.msra.mxu0 0.0
    %11227 = vmatprep.subr.mxu0 0.0
    %11228 = vmatpush1.msra.mxu0 0.0
    %11229 = vmatprep.subr.mxu0 0.0
    %11230 = vmatpush1.msra.mxu0 0.0
    %11231 = vmatprep.subr.mxu0 0.0
    %11232 = vmatpush1.msra.mxu0 0.0
    %11233 = vmatprep.subr.mxu0 0.0
    %11234 = vmatpush1.msra.mxu0 0.0
    %11235 = vmatprep.subr.mxu0 0.0
    %11236 = vmatpush1.msra.mxu0 0.0
    %11237 = vmatprep.subr.mxu0 0.0
    %11238 = vmatpush1.msra.mxu0 0.0
    %11239 = vmatprep.subr.mxu0 0.0
    %11240 = vmatpush1.msra.mxu0 0.0
    %11241 = vmatprep.subr.mxu0 0.0
    %11242 = vmatpush1.msra.mxu0 %v11206
    %11243 = vmatprep.subr.mxu0 0.0
    %11244 = vmatpush1.msra.mxu0 %v11205
    %11245 = vmatprep.subr.mxu0 0.0
    %11246 = vmatpush2.msra.mxu0 0.0
    %11247 = vmatprep.subr.mxu0 0.0
    %11248 = vmatpush2.msra.mxu0 0.0
    %11249 = vmatprep.subr.mxu0 0.0
    %11250 = vmatpush2.msra.mxu0 0.0
    %11251 = vmatprep.subr.mxu0 0.0
    %11252 = vmatpush2.msra.mxu0 0.0
    %11253 = vmatprep.subr.mxu0 0.0
    %11254 = vmatpush2.msra.mxu0 0.0
    %11255 = vmatprep.subr.mxu0 0.0
    %11256 = vmatpush2.msra.mxu0 0.0
    %11257 = vmatprep.subr.mxu0 0.0
    %11258 = vmatpush2.msra.mxu0 0.0
    %11259 = vmatprep.subr.mxu0 0.0
    %11260 = vmatpush2.msra.mxu0 0.0
    %11261 = vmatprep.subr.mxu0 0.0
    %11262 = vmatpush2.msra.mxu0 0.0
    %11263 = vmatprep.subr.mxu0 0.0
    %11264 = vmatpush2.msra.mxu0 0.0
    %11265 = vmatprep.subr.mxu0 0.0
    %11266 = vmatpush2.msra.mxu0 0.0
    %11267 = vmatprep.subr.mxu0 0.0
    %11268 = vmatpush2.msra.mxu0 0.0
    %11269 = vmatprep.subr.mxu0 0.0
    %11270 = vmatpush2.msra.mxu0 0.0
    %11271 = vmatprep.subr.mxu0 0.0
    %11272 = vmatpush2.msra.mxu0 0.0
    %11273 = vmatprep.subr.mxu0 0.0
    %11274 = vmatpush2.msra.mxu0 0.0
    %11275 = vmatprep.subr.mxu0 0.0
    %11276 = vmatpush2.msra.mxu0 0.0
    %11277 = vmatprep.mubr.f32.mxu0 0.0
    %11278 = vmatmul.mubr.f32.gmra.mxu0 %v11211
    %v11279 = vpop.f32.mrf.mxu0
    %v11280 = vadd.f32 0.0, %v11279
    %v11281 = vpop.f32.mrf.mxu0
    %11282 = vdwg.mxu0
    %v11283 = vadd.f32 %v11201, %v11280
    %v11284 = vld [vmem:[%s10] sm:$0x1]
    %v11286 = vlaneseq
    %v11287 = vshrl.u32 %v11286, 7
    %v11288 = vsub.s32 0, %v11287
    %v11289 = vrot.slane %v11284, %v11288
    %v11291 = vadd.f32 %v11283, %v11289
    %v11292 = vmax.f32 %v11291, 0.0
    %v11293 = vld [vmem:[%s11] sm:$0xff]
    %v11294 = vld [vmem:[%s11 + $0x8] sm:$0xff]
    %v11295 = vld [vmem:[%s11 + $0x10] sm:$0xff]
    %v11296 = vld [vmem:[%s11 + $0x18] sm:$0xff]
    %v11297 = vld [vmem:[%s12] sm:$0x1]
    %v11299 = vlaneseq
    %v11300 = vshrl.u32 %v11299, 7
    %v11301 = vsub.s32 0, %v11300
    %v11302 = vrot.slane %v11297, %v11301
    %vm11304 = vcmask 261120
    %v11306 = vsel %vm11304, %v11292, 0
    %11308 = vmatprep.subr.mxu0 0.0
    %11309 = vmatpush1.msra.mxu0 0.0
    %11310 = vmatprep.subr.mxu0 0.0
    %11311 = vmatpush1.msra.mxu0 0.0
    %11312 = vmatprep.subr.mxu0 0.0
    %11313 = vmatpush1.msra.mxu0 0.0
    %11314 = vmatprep.subr.mxu0 0.0
    %11315 = vmatpush1.msra.mxu0 0.0
    %11316 = vmatprep.subr.mxu0 0.0
    %11317 = vmatpush1.msra.mxu0 0.0
    %11318 = vmatprep.subr.mxu0 0.0
    %11319 = vmatpush1.msra.mxu0 0.0
    %11320 = vmatprep.subr.mxu0 0.0
    %11321 = vmatpush1.msra.mxu0 0.0
    %11322 = vmatprep.subr.mxu0 0.0
    %11323 = vmatpush1.msra.mxu0 0.0
    %11324 = vmatprep.subr.mxu0 0.0
    %11325 = vmatpush1.msra.mxu0 0.0
    %11326 = vmatprep.subr.mxu0 0.0
    %11327 = vmatpush1.msra.mxu0 0.0
    %11328 = vmatprep.subr.mxu0 0.0
    %11329 = vmatpush1.msra.mxu0 0.0
    %11330 = vmatprep.subr.mxu0 0.0
    %11331 = vmatpush1.msra.mxu0 0.0
    %11332 = vmatprep.subr.mxu0 0.0
    %11333 = vmatpush1.msra.mxu0 %v11296
    %11334 = vmatprep.subr.mxu0 0.0
    %11335 = vmatpush1.msra.mxu0 %v11295
    %11336 = vmatprep.subr.mxu0 0.0
    %11337 = vmatpush1.msra.mxu0 %v11294
    %11338 = vmatprep.subr.mxu0 0.0
    %11339 = vmatpush1.msra.mxu0 %v11293
    %11340 = vmatprep.subr.mxu0 0.0
    %11341 = vmatpush2.msra.mxu0 0.0
    %11342 = vmatprep.subr.mxu0 0.0
    %11343 = vmatpush2.msra.mxu0 0.0
    %11344 = vmatprep.subr.mxu0 0.0
    %11345 = vmatpush2.msra.mxu0 0.0
    %11346 = vmatprep.subr.mxu0 0.0
    %11347 = vmatpush2.msra.mxu0 0.0
    %11348 = vmatprep.subr.mxu0 0.0
    %11349 = vmatpush2.msra.mxu0 0.0
    %11350 = vmatprep.subr.mxu0 0.0
    %11351 = vmatpush2.msra.mxu0 0.0
    %11352 = vmatprep.subr.mxu0 0.0
    %11353 = vmatpush2.msra.mxu0 0.0
    %11354 = vmatprep.subr.mxu0 0.0
    %11355 = vmatpush2.msra.mxu0 0.0
    %11356 = vmatprep.subr.mxu0 0.0
    %11357 = vmatpush2.msra.mxu0 0.0
    %11358 = vmatprep.subr.mxu0 0.0
    %11359 = vmatpush2.msra.mxu0 0.0
    %11360 = vmatprep.subr.mxu0 0.0
    %11361 = vmatpush2.msra.mxu0 0.0
    %11362 = vmatprep.subr.mxu0 0.0
    %11363 = vmatpush2.msra.mxu0 0.0
    %11364 = vmatprep.subr.mxu0 0.0
    %11365 = vmatpush2.msra.mxu0 0.0
    %11366 = vmatprep.subr.mxu0 0.0
    %11367 = vmatpush2.msra.mxu0 0.0
    %11368 = vmatprep.subr.mxu0 0.0
    %11369 = vmatpush2.msra.mxu0 0.0
    %11370 = vmatprep.subr.mxu0 0.0
    %11371 = vmatpush2.msra.mxu0 0.0
    %11372 = vmatprep.mubr.f32.mxu0 0.0
    %11373 = vmatmul.mubr.f32.gmra.mxu0 %v11306
    %v11374 = vpop.f32.mrf.mxu0
    %v11375 = vadd.f32 %v11302, %v11374
    %v11376 = vpop.f32.mrf.mxu0
    %11377 = vdwg.mxu0
    %vm11378 = vcmask 74752
    %11379 = vst.msk [vmem:[#allocation7] sm:$0x3] %vm11378, %v11375
    // Predicated region
    $region54: #{cnn_forward.1} parent=1 // pred_check
      _
    $region55: #{cnn_forward.1} parent=1 // pred_check_branch
      %11381 = sbr.rel (0) target = $region57
    $region56: #{cnn_forward.1} parent=1 // pred_region
      %s11383 = ssub.s32 32, 32
      %11384 = vsyncadd [#allocation8], %s11383
      %s11386 = sshll.u32 [#allocation7], 4
      %s11387 = int_to_ptr.vmem [resolvable:$true] %s11386
      %11389 = dma.vmem_to_hbm [thread:$0]  %s11387, 32, %s13, [#allocation8]
    $region57: #{cnn_forward.1} parent=1 // pred_fallthru
      _
    // Predicated region
    $region58: #{cnn_forward.1} parent=1 // pred_check
      _
    $region59: #{cnn_forward.1} parent=1 // pred_check_branch
      %11391 = sbr.rel (0) target = $region61
    $region60: #{cnn_forward.1} parent=1 // pred_region
      %11392 = dma.done [#allocation8], 32
    $region61: #{cnn_forward.1} parent=1 // pred_fallthru
      _
    %11393 = vsyncpa [#allocation8], 1

</llo_original>
